<compile_context>
chip_gen: v7x
topology: tpu7x:2x2x1
jax: 0.10.0
libtpu: 0.0.40
codegen_flags: <defaults>
</compile_context>

<pallas_src>
import jax
import jax.numpy as jnp
from jax import lax
from jax.experimental import pallas as pl
from jax.experimental.pallas import tpu as pltpu

_EPS = 1e-5            # torch BatchNorm1d eps
_SP_THRESH = 20.0      # torch.nn.Softplus default threshold

_STAGE_DIMS = [(1024, 512), (512, 256), (256, 128), (128, 32)]
_NUM_BLOCKS = 17       # 4 stages x (1 + 3 residual) + final gc5
_NUM_BN = 16


def _softplus(x):
    # matches torch.nn.Softplus(beta=1, threshold=20)
    safe = jnp.minimum(x, _SP_THRESH)
    return jnp.where(x > _SP_THRESH, x, jnp.log1p(jnp.exp(safe)))


# ------------------------------ fused kernel ----------------------------------

def _fused_kernel(feat_ref, hb_ref, g_ref, b_ref, *rest):
    w_hbm = rest[:_NUM_BLOCKS]                               # 17 HBM weight refs
    out_ref = rest[_NUM_BLOCKS]                              # (B, N, 1) f32
    w_vmem = rest[_NUM_BLOCKS + 1: 2 * _NUM_BLOCKS + 1]      # 17 VMEM scratch bufs
    sem = rest[2 * _NUM_BLOCKS + 1]                          # (17,) DMA semaphores

    # Issue all weight DMAs immediately, in order of use.  Later copies overlap
    # with earlier stages' compute; only the first (1 MiB) copy is exposed.
    copies = []
    for i in range(_NUM_BLOCKS):
        cp = pltpu.make_async_copy(w_hbm[i], w_vmem[i], sem.at[i])
        cp.start()
        copies.append(cp)

    def wait_w(i):
        copies[i].wait()
        return w_vmem[i][...]                                # bf16 weight tile

    hb = hb_ref[...]                                         # (B*N, B*N) bf16 block-diag H
    x = feat_ref[...]                                        # (B, N, 1024) f32

    def gc_block(x3d, w_bf16, bn_idx, residual):
        B, N, Cin = x3d.shape
        Cout = w_bf16.shape[1]
        # support = x @ W   -- one wide 2D MXU matmul, bf16 in / f32 acc
        s = jnp.dot(
            x3d.reshape(B * N, Cin).astype(jnp.bfloat16), w_bf16,
            preferred_element_type=jnp.float32)              # (B*N, Cout)
        # y = H @ support   -- block-diagonal H, single 2D MXU matmul
        y = jnp.dot(
            hb, s.astype(jnp.bfloat16),
            preferred_element_type=jnp.float32)              # (B*N, Cout)
        y = y.reshape(B, N, Cout)

        if bn_idx is not None:
            # Single-pass training-mode BatchNorm1d(img_len): per-node stats
            # over (batch, channel), biased variance, f32 math; gamma/beta
            # folded so the apply is a single FMA.
            inv_cnt = 1.0 / float(B * Cout)
            s1 = jnp.sum(y, axis=(0, 2), keepdims=True)          # (1,N,1)
            s2 = jnp.sum(y * y, axis=(0, 2), keepdims=True)      # (1,N,1)
            mean = s1 * inv_cnt
            var = s2 * inv_cnt - mean * mean
            scale = g_ref[bn_idx][None, :, :] * lax.rsqrt(var + _EPS)
            shift = b_ref[bn_idx][None, :, :] - mean * scale
            y = y * scale + shift

        if residual is not None:
            y = y + residual
        return _softplus(y)

    wi = 0
    bi = 0
    for _stage in range(4):
        # leading GC + BN + Softplus
        x = gc_block(x, wait_w(wi), bi, None)
        wi += 1
        bi += 1
        # HGCN_layer: three residual GC + BN + Softplus blocks (residual is the
        # layer input, matching torch: relu(feature + gc_k))
        feat = x
        for _ in range(3):
            x = gc_block(x, wait_w(wi), bi, feat)
            wi += 1
            bi += 1
    # gc5 + Softplus, no BN
    out_ref[...] = gc_block(x, wait_w(wi), None, None)


# ----------------------------- parameter layout --------------------------------

def _weight_keys():
    keys = []
    for i in range(1, 5):
        keys.append(f"gc{i}_w")
        for j in range(1, 4):
            keys.append(f"h{i}_gc{j}_w")
    keys.append("gc5_w")
    return keys


def _weight_shapes():
    shapes = []
    for cin, cout in _STAGE_DIMS:
        shapes.append((cin, cout))
        for _ in range(3):
            shapes.append((cout, cout))
    shapes.append((32, 1))
    return shapes


def _bn_keys():
    g, b = [], []
    for i in range(1, 5):
        g.append(f"bn{i}_g")
        b.append(f"bn{i}_b")
        for j in range(1, 4):
            g.append(f"h{i}_bn{j}_g")
            b.append(f"h{i}_bn{j}_b")
    return g, b


def _xavier_normal(key, fan_in, fan_out):
    std = (2.0 / (fan_in + fan_out)) ** 0.5
    return std * jax.random.normal(key, (fan_in, fan_out), jnp.float32)


def init_params(key, img_len):
    params = {}
    keys = iter(jax.random.split(key, 64))
    for i, (cin, cout) in enumerate(_STAGE_DIMS, start=1):
        params[f"gc{i}_w"] = _xavier_normal(next(keys), cin, cout)
        params[f"bn{i}_g"] = 1.0 + 0.1 * jax.random.normal(next(keys), (img_len,), jnp.float32)
        params[f"bn{i}_b"] = 0.1 * jax.random.normal(next(keys), (img_len,), jnp.float32)
        for j in range(1, 4):
            params[f"h{i}_gc{j}_w"] = _xavier_normal(next(keys), cout, cout)
            params[f"h{i}_bn{j}_g"] = 1.0 + 0.1 * jax.random.normal(next(keys), (img_len,), jnp.float32)
            params[f"h{i}_bn{j}_b"] = 0.1 * jax.random.normal(next(keys), (img_len,), jnp.float32)
    params["gc5_w"] = _xavier_normal(next(keys), 32, 1)
    return params


# ---------------------- one-time preprocessing (hoisted) -----------------------

def prepare_inputs(params, H, batch_size):
    """Everything that only changes when params / H / batch size change:
    bf16 weight casts, BN gamma/beta stacking, block-diagonal Hb = I_B (x) H.
    Call once; reuse the result across forward calls."""
    N = H.shape[0]
    hb = jnp.kron(jnp.eye(batch_size, dtype=jnp.float32),
                  H.astype(jnp.float32)).astype(jnp.bfloat16)
    weights = tuple(params[k].astype(jnp.bfloat16) for k in _weight_keys())
    gk, bk = _bn_keys()
    gamma = jnp.stack([params[k] for k in gk]).reshape(_NUM_BN, N, 1)
    beta = jnp.stack([params[k] for k in bk]).reshape(_NUM_BN, N, 1)
    return {"hb": hb, "weights": weights, "gamma": gamma, "beta": beta}


# ------------------------------- forward pass ----------------------------------

def _build_forward(B, N):
    vmem = pl.BlockSpec(memory_space=pltpu.MemorySpace.VMEM)
    hbm = pl.BlockSpec(memory_space=pl.ANY)    # raw HBM refs, manual DMA inside
    scratch = [pltpu.VMEM(s, jnp.bfloat16) for s in _weight_shapes()]
    scratch.append(pltpu.SemaphoreType.DMA((_NUM_BLOCKS,)))
    return pl.pallas_call(
        _fused_kernel,
        out_shape=jax.ShapeDtypeStruct((B, N, 1), jnp.float32),
        in_specs=[vmem, vmem, vmem, vmem] + [hbm] * _NUM_BLOCKS,
        out_specs=vmem,
        scratch_shapes=scratch,
        compiler_params=pltpu.CompilerParams(
            vmem_limit_bytes=32 * 1024 * 1024),   # keep 32 MiB: v7x-safe
    )


@jax.jit
def hgcnnet_forward(feature, prep):
    B, N, _ = feature.shape
    call = _build_forward(B, N)
    return call(feature.astype(jnp.float32), prep["hb"],
                prep["gamma"], prep["beta"], *prep["weights"])


# ------------------------- pure-JAX reference (check) ---------------------------

def _ref_forward(feature, H, params):
    h16 = H.astype(jnp.bfloat16)

    def gc(x, w):
        s = jnp.einsum("bnc,cd->bnd", x.astype(jnp.bfloat16),
                       w.astype(jnp.bfloat16),
                       preferred_element_type=jnp.float32)
        return jnp.einsum("nm,bmd->bnd", h16, s.astype(jnp.bfloat16),
                          preferred_element_type=jnp.float32)

    def bn(y, g, b):
        mean = jnp.mean(y, axis=(0, 2), keepdims=True)
        var = jnp.mean((y - mean) ** 2, axis=(0, 2), keepdims=True)
        return ((y - mean) * lax.rsqrt(var + _EPS)) * g[None, :, None] + b[None, :, None]

    x = feature.astype(jnp.float32)
    for i in range(1, 5):
        x = _softplus(bn(gc(x, params[f"gc{i}_w"]),
                         params[f"bn{i}_g"], params[f"bn{i}_b"]))
        feat = x
        for j in range(1, 4):
            x = _softplus(feat + bn(gc(x, params[f"h{i}_gc{j}_w"]),
                                    params[f"h{i}_bn{j}_g"], params[f"h{i}_bn{j}_b"]))
    return _softplus(gc(x, params["gc5_w"]))


if __name__ == "__main__":
    B, N = 2, 8          # img_len = N; input channels fixed at 1024 by the module
    key = jax.random.PRNGKey(0)
    kf, kh, kp = jax.random.split(key, 3)

    feature = jax.random.normal(kf, (B, N, 1024), jnp.float32)
    H = jax.random.uniform(kh, (N, N), jnp.float32)   # (hyper)graph adjacency
    params = init_params(kp, N)

    prep = prepare_inputs(params, H, B)               # hoisted, one-time
    out = jax.block_until_ready(hgcnnet_forward(feature, prep))

    assert out.shape == (B, N, 1)
    assert bool(jnp.all(jnp.isfinite(out)))

    ref = _ref_forward(feature, H, params)
    max_err = float(jnp.max(jnp.abs(out - ref)))
    assert bool(jnp.allclose(out, ref, rtol=2e-2, atol=2e-2)), max_err

    print("KERNEL_OK")
</pallas_src>

<mosaic_0001>
module attributes {stable_mosaic.version = 11 : i64} {
  func.func @_fused_kernel(%arg0: memref<2x8x1024xf32, #tpu.memory_space<vmem>>, %arg1: memref<16x16xbf16, #tpu.memory_space<vmem>>, %arg2: memref<16x8x1xf32, #tpu.memory_space<vmem>>, %arg3: memref<16x8x1xf32, #tpu.memory_space<vmem>>, %arg4: memref<1024x512xbf16, #tpu.memory_space<any>>, %arg5: memref<512x512xbf16, #tpu.memory_space<any>>, %arg6: memref<512x512xbf16, #tpu.memory_space<any>>, %arg7: memref<512x512xbf16, #tpu.memory_space<any>>, %arg8: memref<512x256xbf16, #tpu.memory_space<any>>, %arg9: memref<256x256xbf16, #tpu.memory_space<any>>, %arg10: memref<256x256xbf16, #tpu.memory_space<any>>, %arg11: memref<256x256xbf16, #tpu.memory_space<any>>, %arg12: memref<256x128xbf16, #tpu.memory_space<any>>, %arg13: memref<128x128xbf16, #tpu.memory_space<any>>, %arg14: memref<128x128xbf16, #tpu.memory_space<any>>, %arg15: memref<128x128xbf16, #tpu.memory_space<any>>, %arg16: memref<128x32xbf16, #tpu.memory_space<any>>, %arg17: memref<32x32xbf16, #tpu.memory_space<any>>, %arg18: memref<32x32xbf16, #tpu.memory_space<any>>, %arg19: memref<32x32xbf16, #tpu.memory_space<any>>, %arg20: memref<32x1xbf16, #tpu.memory_space<any>>, %arg21: memref<2x8x1xf32, #tpu.memory_space<vmem>>, %arg22: memref<1024x512xbf16, #tpu.memory_space<vmem>>, %arg23: memref<512x512xbf16, #tpu.memory_space<vmem>>, %arg24: memref<512x512xbf16, #tpu.memory_space<vmem>>, %arg25: memref<512x512xbf16, #tpu.memory_space<vmem>>, %arg26: memref<512x256xbf16, #tpu.memory_space<vmem>>, %arg27: memref<256x256xbf16, #tpu.memory_space<vmem>>, %arg28: memref<256x256xbf16, #tpu.memory_space<vmem>>, %arg29: memref<256x256xbf16, #tpu.memory_space<vmem>>, %arg30: memref<256x128xbf16, #tpu.memory_space<vmem>>, %arg31: memref<128x128xbf16, #tpu.memory_space<vmem>>, %arg32: memref<128x128xbf16, #tpu.memory_space<vmem>>, %arg33: memref<128x128xbf16, #tpu.memory_space<vmem>>, %arg34: memref<128x32xbf16, #tpu.memory_space<vmem>>, %arg35: memref<32x32xbf16, #tpu.memory_space<vmem>>, %arg36: memref<32x32xbf16, #tpu.memory_space<vmem>>, %arg37: memref<32x32xbf16, #tpu.memory_space<vmem>>, %arg38: memref<32x1xbf16, #tpu.memory_space<vmem>>, %arg39: memref<17x!tpu.dma_semaphore, #tpu.memory_space<semaphore_mem>>) attributes {dimension_semantics = [], scalar_prefetch = 0 : i64, scratch_operands = 18 : i64, tpu.core_type = #tpu.core_type<tc>} {
    %c0_i32 = arith.constant 0 : i32
    %0 = tpu.memref_slice %arg39[%c0_i32] : memref<17x!tpu.dma_semaphore, #tpu.memory_space<semaphore_mem>> -> memref<1x!tpu.dma_semaphore, #tpu.memory_space<semaphore_mem>>
    %1 = tpu.memref_squeeze %0 : memref<1x!tpu.dma_semaphore, #tpu.memory_space<semaphore_mem>> -> memref<!tpu.dma_semaphore, #tpu.memory_space<semaphore_mem>>
    tpu.enqueue_dma source(%arg4 : memref<1024x512xbf16, #tpu.memory_space<any>>) target(%arg22 : memref<1024x512xbf16, #tpu.memory_space<vmem>>) target_semaphore(%1 : memref<!tpu.dma_semaphore, #tpu.memory_space<semaphore_mem>>)
    %c1_i32 = arith.constant 1 : i32
    %2 = tpu.memref_slice %arg39[%c1_i32] : memref<17x!tpu.dma_semaphore, #tpu.memory_space<semaphore_mem>> -> memref<1x!tpu.dma_semaphore, #tpu.memory_space<semaphore_mem>>
    %3 = tpu.memref_squeeze %2 : memref<1x!tpu.dma_semaphore, #tpu.memory_space<semaphore_mem>> -> memref<!tpu.dma_semaphore, #tpu.memory_space<semaphore_mem>>
    tpu.enqueue_dma source(%arg5 : memref<512x512xbf16, #tpu.memory_space<any>>) target(%arg23 : memref<512x512xbf16, #tpu.memory_space<vmem>>) target_semaphore(%3 : memref<!tpu.dma_semaphore, #tpu.memory_space<semaphore_mem>>)
    %c2_i32 = arith.constant 2 : i32
    %4 = tpu.memref_slice %arg39[%c2_i32] : memref<17x!tpu.dma_semaphore, #tpu.memory_space<semaphore_mem>> -> memref<1x!tpu.dma_semaphore, #tpu.memory_space<semaphore_mem>>
    %5 = tpu.memref_squeeze %4 : memref<1x!tpu.dma_semaphore, #tpu.memory_space<semaphore_mem>> -> memref<!tpu.dma_semaphore, #tpu.memory_space<semaphore_mem>>
    tpu.enqueue_dma source(%arg6 : memref<512x512xbf16, #tpu.memory_space<any>>) target(%arg24 : memref<512x512xbf16, #tpu.memory_space<vmem>>) target_semaphore(%5 : memref<!tpu.dma_semaphore, #tpu.memory_space<semaphore_mem>>)
    %c3_i32 = arith.constant 3 : i32
    %6 = tpu.memref_slice %arg39[%c3_i32] : memref<17x!tpu.dma_semaphore, #tpu.memory_space<semaphore_mem>> -> memref<1x!tpu.dma_semaphore, #tpu.memory_space<semaphore_mem>>
    %7 = tpu.memref_squeeze %6 : memref<1x!tpu.dma_semaphore, #tpu.memory_space<semaphore_mem>> -> memref<!tpu.dma_semaphore, #tpu.memory_space<semaphore_mem>>
    tpu.enqueue_dma source(%arg7 : memref<512x512xbf16, #tpu.memory_space<any>>) target(%arg25 : memref<512x512xbf16, #tpu.memory_space<vmem>>) target_semaphore(%7 : memref<!tpu.dma_semaphore, #tpu.memory_space<semaphore_mem>>)
    %c4_i32 = arith.constant 4 : i32
    %8 = tpu.memref_slice %arg39[%c4_i32] : memref<17x!tpu.dma_semaphore, #tpu.memory_space<semaphore_mem>> -> memref<1x!tpu.dma_semaphore, #tpu.memory_space<semaphore_mem>>
    %9 = tpu.memref_squeeze %8 : memref<1x!tpu.dma_semaphore, #tpu.memory_space<semaphore_mem>> -> memref<!tpu.dma_semaphore, #tpu.memory_space<semaphore_mem>>
    tpu.enqueue_dma source(%arg8 : memref<512x256xbf16, #tpu.memory_space<any>>) target(%arg26 : memref<512x256xbf16, #tpu.memory_space<vmem>>) target_semaphore(%9 : memref<!tpu.dma_semaphore, #tpu.memory_space<semaphore_mem>>)
    %c5_i32 = arith.constant 5 : i32
    %10 = tpu.memref_slice %arg39[%c5_i32] : memref<17x!tpu.dma_semaphore, #tpu.memory_space<semaphore_mem>> -> memref<1x!tpu.dma_semaphore, #tpu.memory_space<semaphore_mem>>
    %11 = tpu.memref_squeeze %10 : memref<1x!tpu.dma_semaphore, #tpu.memory_space<semaphore_mem>> -> memref<!tpu.dma_semaphore, #tpu.memory_space<semaphore_mem>>
    tpu.enqueue_dma source(%arg9 : memref<256x256xbf16, #tpu.memory_space<any>>) target(%arg27 : memref<256x256xbf16, #tpu.memory_space<vmem>>) target_semaphore(%11 : memref<!tpu.dma_semaphore, #tpu.memory_space<semaphore_mem>>)
    %c6_i32 = arith.constant 6 : i32
    %12 = tpu.memref_slice %arg39[%c6_i32] : memref<17x!tpu.dma_semaphore, #tpu.memory_space<semaphore_mem>> -> memref<1x!tpu.dma_semaphore, #tpu.memory_space<semaphore_mem>>
    %13 = tpu.memref_squeeze %12 : memref<1x!tpu.dma_semaphore, #tpu.memory_space<semaphore_mem>> -> memref<!tpu.dma_semaphore, #tpu.memory_space<semaphore_mem>>
    tpu.enqueue_dma source(%arg10 : memref<256x256xbf16, #tpu.memory_space<any>>) target(%arg28 : memref<256x256xbf16, #tpu.memory_space<vmem>>) target_semaphore(%13 : memref<!tpu.dma_semaphore, #tpu.memory_space<semaphore_mem>>)
    %c7_i32 = arith.constant 7 : i32
    %14 = tpu.memref_slice %arg39[%c7_i32] : memref<17x!tpu.dma_semaphore, #tpu.memory_space<semaphore_mem>> -> memref<1x!tpu.dma_semaphore, #tpu.memory_space<semaphore_mem>>
    %15 = tpu.memref_squeeze %14 : memref<1x!tpu.dma_semaphore, #tpu.memory_space<semaphore_mem>> -> memref<!tpu.dma_semaphore, #tpu.memory_space<semaphore_mem>>
    tpu.enqueue_dma source(%arg11 : memref<256x256xbf16, #tpu.memory_space<any>>) target(%arg29 : memref<256x256xbf16, #tpu.memory_space<vmem>>) target_semaphore(%15 : memref<!tpu.dma_semaphore, #tpu.memory_space<semaphore_mem>>)
    %c8_i32 = arith.constant 8 : i32
    %16 = tpu.memref_slice %arg39[%c8_i32] : memref<17x!tpu.dma_semaphore, #tpu.memory_space<semaphore_mem>> -> memref<1x!tpu.dma_semaphore, #tpu.memory_space<semaphore_mem>>
    %17 = tpu.memref_squeeze %16 : memref<1x!tpu.dma_semaphore, #tpu.memory_space<semaphore_mem>> -> memref<!tpu.dma_semaphore, #tpu.memory_space<semaphore_mem>>
    tpu.enqueue_dma source(%arg12 : memref<256x128xbf16, #tpu.memory_space<any>>) target(%arg30 : memref<256x128xbf16, #tpu.memory_space<vmem>>) target_semaphore(%17 : memref<!tpu.dma_semaphore, #tpu.memory_space<semaphore_mem>>)
    %c9_i32 = arith.constant 9 : i32
    %18 = tpu.memref_slice %arg39[%c9_i32] : memref<17x!tpu.dma_semaphore, #tpu.memory_space<semaphore_mem>> -> memref<1x!tpu.dma_semaphore, #tpu.memory_space<semaphore_mem>>
    %19 = tpu.memref_squeeze %18 : memref<1x!tpu.dma_semaphore, #tpu.memory_space<semaphore_mem>> -> memref<!tpu.dma_semaphore, #tpu.memory_space<semaphore_mem>>
    tpu.enqueue_dma source(%arg13 : memref<128x128xbf16, #tpu.memory_space<any>>) target(%arg31 : memref<128x128xbf16, #tpu.memory_space<vmem>>) target_semaphore(%19 : memref<!tpu.dma_semaphore, #tpu.memory_space<semaphore_mem>>)
    %c10_i32 = arith.constant 10 : i32
    %20 = tpu.memref_slice %arg39[%c10_i32] : memref<17x!tpu.dma_semaphore, #tpu.memory_space<semaphore_mem>> -> memref<1x!tpu.dma_semaphore, #tpu.memory_space<semaphore_mem>>
    %21 = tpu.memref_squeeze %20 : memref<1x!tpu.dma_semaphore, #tpu.memory_space<semaphore_mem>> -> memref<!tpu.dma_semaphore, #tpu.memory_space<semaphore_mem>>
    tpu.enqueue_dma source(%arg14 : memref<128x128xbf16, #tpu.memory_space<any>>) target(%arg32 : memref<128x128xbf16, #tpu.memory_space<vmem>>) target_semaphore(%21 : memref<!tpu.dma_semaphore, #tpu.memory_space<semaphore_mem>>)
    %c11_i32 = arith.constant 11 : i32
    %22 = tpu.memref_slice %arg39[%c11_i32] : memref<17x!tpu.dma_semaphore, #tpu.memory_space<semaphore_mem>> -> memref<1x!tpu.dma_semaphore, #tpu.memory_space<semaphore_mem>>
    %23 = tpu.memref_squeeze %22 : memref<1x!tpu.dma_semaphore, #tpu.memory_space<semaphore_mem>> -> memref<!tpu.dma_semaphore, #tpu.memory_space<semaphore_mem>>
    tpu.enqueue_dma source(%arg15 : memref<128x128xbf16, #tpu.memory_space<any>>) target(%arg33 : memref<128x128xbf16, #tpu.memory_space<vmem>>) target_semaphore(%23 : memref<!tpu.dma_semaphore, #tpu.memory_space<semaphore_mem>>)
    %c12_i32 = arith.constant 12 : i32
    %24 = tpu.memref_slice %arg39[%c12_i32] : memref<17x!tpu.dma_semaphore, #tpu.memory_space<semaphore_mem>> -> memref<1x!tpu.dma_semaphore, #tpu.memory_space<semaphore_mem>>
    %25 = tpu.memref_squeeze %24 : memref<1x!tpu.dma_semaphore, #tpu.memory_space<semaphore_mem>> -> memref<!tpu.dma_semaphore, #tpu.memory_space<semaphore_mem>>
    tpu.enqueue_dma source(%arg16 : memref<128x32xbf16, #tpu.memory_space<any>>) target(%arg34 : memref<128x32xbf16, #tpu.memory_space<vmem>>) target_semaphore(%25 : memref<!tpu.dma_semaphore, #tpu.memory_space<semaphore_mem>>)
    %c13_i32 = arith.constant 13 : i32
    %26 = tpu.memref_slice %arg39[%c13_i32] : memref<17x!tpu.dma_semaphore, #tpu.memory_space<semaphore_mem>> -> memref<1x!tpu.dma_semaphore, #tpu.memory_space<semaphore_mem>>
    %27 = tpu.memref_squeeze %26 : memref<1x!tpu.dma_semaphore, #tpu.memory_space<semaphore_mem>> -> memref<!tpu.dma_semaphore, #tpu.memory_space<semaphore_mem>>
    tpu.enqueue_dma source(%arg17 : memref<32x32xbf16, #tpu.memory_space<any>>) target(%arg35 : memref<32x32xbf16, #tpu.memory_space<vmem>>) target_semaphore(%27 : memref<!tpu.dma_semaphore, #tpu.memory_space<semaphore_mem>>)
    %c14_i32 = arith.constant 14 : i32
    %28 = tpu.memref_slice %arg39[%c14_i32] : memref<17x!tpu.dma_semaphore, #tpu.memory_space<semaphore_mem>> -> memref<1x!tpu.dma_semaphore, #tpu.memory_space<semaphore_mem>>
    %29 = tpu.memref_squeeze %28 : memref<1x!tpu.dma_semaphore, #tpu.memory_space<semaphore_mem>> -> memref<!tpu.dma_semaphore, #tpu.memory_space<semaphore_mem>>
    tpu.enqueue_dma source(%arg18 : memref<32x32xbf16, #tpu.memory_space<any>>) target(%arg36 : memref<32x32xbf16, #tpu.memory_space<vmem>>) target_semaphore(%29 : memref<!tpu.dma_semaphore, #tpu.memory_space<semaphore_mem>>)
    %c15_i32 = arith.constant 15 : i32
    %30 = tpu.memref_slice %arg39[%c15_i32] : memref<17x!tpu.dma_semaphore, #tpu.memory_space<semaphore_mem>> -> memref<1x!tpu.dma_semaphore, #tpu.memory_space<semaphore_mem>>
    %31 = tpu.memref_squeeze %30 : memref<1x!tpu.dma_semaphore, #tpu.memory_space<semaphore_mem>> -> memref<!tpu.dma_semaphore, #tpu.memory_space<semaphore_mem>>
    tpu.enqueue_dma source(%arg19 : memref<32x32xbf16, #tpu.memory_space<any>>) target(%arg37 : memref<32x32xbf16, #tpu.memory_space<vmem>>) target_semaphore(%31 : memref<!tpu.dma_semaphore, #tpu.memory_space<semaphore_mem>>)
    %c16_i32 = arith.constant 16 : i32
    %32 = tpu.memref_slice %arg39[%c16_i32] : memref<17x!tpu.dma_semaphore, #tpu.memory_space<semaphore_mem>> -> memref<1x!tpu.dma_semaphore, #tpu.memory_space<semaphore_mem>>
    %33 = tpu.memref_squeeze %32 : memref<1x!tpu.dma_semaphore, #tpu.memory_space<semaphore_mem>> -> memref<!tpu.dma_semaphore, #tpu.memory_space<semaphore_mem>>
    tpu.enqueue_dma source(%arg20 : memref<32x1xbf16, #tpu.memory_space<any>>) target(%arg38 : memref<32x1xbf16, #tpu.memory_space<vmem>>) target_semaphore(%33 : memref<!tpu.dma_semaphore, #tpu.memory_space<semaphore_mem>>)
    %c0 = arith.constant 0 : index
    %c0_0 = arith.constant 0 : index
    %34 = vector.load %arg1[%c0, %c0_0] : memref<16x16xbf16, #tpu.memory_space<vmem>>, vector<16x16xbf16>
    %c0_1 = arith.constant 0 : index
    %c0_2 = arith.constant 0 : index
    %c0_3 = arith.constant 0 : index
    %35 = vector.load %arg0[%c0_1, %c0_2, %c0_3] : memref<2x8x1024xf32, #tpu.memory_space<vmem>>, vector<2x8x1024xf32>
    %c0_i32_4 = arith.constant 0 : i32
    %36 = tpu.memref_slice %arg39[%c0_i32_4] : memref<17x!tpu.dma_semaphore, #tpu.memory_space<semaphore_mem>> -> memref<1x!tpu.dma_semaphore, #tpu.memory_space<semaphore_mem>>
    %37 = tpu.memref_squeeze %36 : memref<1x!tpu.dma_semaphore, #tpu.memory_space<semaphore_mem>> -> memref<!tpu.dma_semaphore, #tpu.memory_space<semaphore_mem>>
    tpu.wait_dma2 semaphore(%37 : memref<!tpu.dma_semaphore, #tpu.memory_space<semaphore_mem>>) src(%arg4 : memref<1024x512xbf16, #tpu.memory_space<any>>) dst(%arg22 : memref<1024x512xbf16, #tpu.memory_space<vmem>>)
    %c0_5 = arith.constant 0 : index
    %c0_6 = arith.constant 0 : index
    %38 = vector.load %arg22[%c0_5, %c0_6] : memref<1024x512xbf16, #tpu.memory_space<vmem>>, vector<1024x512xbf16>
    %39 = vector.shape_cast %35 : vector<2x8x1024xf32> to vector<16x1024xf32>
    %40 = arith.truncf %39 : vector<16x1024xf32> to vector<16x1024xbf16>
    %cst = arith.constant dense<0.000000e+00> : vector<16x512xf32>
    %41 = tpu.matmul %40, %38, %cst {dimension_numbers = #tpu.dot_dimension_numbers<[1], [0], [0], [1], [0, 0, 1, 1], [], []>} : vector<16x1024xbf16>, vector<1024x512xbf16>, vector<16x512xf32> -> vector<16x512xf32>
    %42 = arith.truncf %41 : vector<16x512xf32> to vector<16x512xbf16>
    %cst_7 = arith.constant dense<0.000000e+00> : vector<16x512xf32>
    %43 = tpu.matmul %34, %42, %cst_7 {dimension_numbers = #tpu.dot_dimension_numbers<[1], [0], [0], [1], [0, 0, 1, 1], [], []>} : vector<16x16xbf16>, vector<16x512xbf16>, vector<16x512xf32> -> vector<16x512xf32>
    %44 = vector.shape_cast %43 : vector<16x512xf32> to vector<2x8x512xf32>
    %cst_8 = arith.constant dense<0.000000e+00> : vector<8xf32>
    %45 = vector.multi_reduction <add>, %44, %cst_8 [0, 2] : vector<2x8x512xf32> to vector<8xf32>
    %46 = vector.shape_cast %45 : vector<8xf32> to vector<1x8x1xf32>
    %47 = arith.mulf %44, %44 : vector<2x8x512xf32>
    %cst_9 = arith.constant dense<0.000000e+00> : vector<8xf32>
    %48 = vector.multi_reduction <add>, %47, %cst_9 [0, 2] : vector<2x8x512xf32> to vector<8xf32>
    %49 = vector.shape_cast %48 : vector<8xf32> to vector<1x8x1xf32>
    %cst_10 = arith.constant 9.765625E-4 : f32
    %50 = vector.broadcast %cst_10 : f32 to vector<1x8x1xf32>
    %51 = arith.mulf %46, %50 : vector<1x8x1xf32>
    %cst_11 = arith.constant 9.765625E-4 : f32
    %52 = vector.broadcast %cst_11 : f32 to vector<1x8x1xf32>
    %53 = arith.mulf %49, %52 : vector<1x8x1xf32>
    %54 = arith.mulf %51, %51 : vector<1x8x1xf32>
    %55 = arith.subf %53, %54 : vector<1x8x1xf32>
    %c0_12 = arith.constant 0 : index
    %c0_13 = arith.constant 0 : index
    %c0_14 = arith.constant 0 : index
    %56 = vector.load %arg2[%c0_12, %c0_13, %c0_14] : memref<16x8x1xf32, #tpu.memory_space<vmem>>, vector<1x8x1xf32>
    %57 = vector.shape_cast %56 : vector<1x8x1xf32> to vector<8x1xf32>
    %58 = vector.shape_cast %57 : vector<8x1xf32> to vector<1x8x1xf32>
    %cst_15 = arith.constant 9.99999974E-6 : f32
    %59 = vector.broadcast %cst_15 : f32 to vector<1x8x1xf32>
    %60 = arith.addf %55, %59 : vector<1x8x1xf32>
    %61 = math.rsqrt %60 : vector<1x8x1xf32>
    %62 = arith.mulf %58, %61 : vector<1x8x1xf32>
    %c0_16 = arith.constant 0 : index
    %c0_17 = arith.constant 0 : index
    %c0_18 = arith.constant 0 : index
    %63 = vector.load %arg3[%c0_16, %c0_17, %c0_18] : memref<16x8x1xf32, #tpu.memory_space<vmem>>, vector<1x8x1xf32>
    %64 = vector.shape_cast %63 : vector<1x8x1xf32> to vector<8x1xf32>
    %65 = vector.shape_cast %64 : vector<8x1xf32> to vector<1x8x1xf32>
    %66 = arith.mulf %51, %62 : vector<1x8x1xf32>
    %67 = arith.subf %65, %66 : vector<1x8x1xf32>
    %68 = vector.broadcast %62 : vector<1x8x1xf32> to vector<2x8x512xf32>
    %69 = arith.mulf %44, %68 : vector<2x8x512xf32>
    %70 = vector.broadcast %67 : vector<1x8x1xf32> to vector<2x8x512xf32>
    %71 = arith.addf %69, %70 : vector<2x8x512xf32>
    %cst_19 = arith.constant 2.000000e+01 : f32
    %72 = vector.broadcast %cst_19 : f32 to vector<2x8x512xf32>
    %73 = arith.minimumf %71, %72 : vector<2x8x512xf32>
    %cst_20 = arith.constant 2.000000e+01 : f32
    %74 = vector.broadcast %cst_20 : f32 to vector<2x8x512xf32>
    %75 = arith.cmpf ogt, %71, %74 : vector<2x8x512xf32>
    %76 = math.exp %73 : vector<2x8x512xf32>
    %77 = math.log1p %76 : vector<2x8x512xf32>
    %78 = arith.select %75, %71, %77 : vector<2x8x512xi1>, vector<2x8x512xf32>
    %c1_i32_21 = arith.constant 1 : i32
    %79 = tpu.memref_slice %arg39[%c1_i32_21] : memref<17x!tpu.dma_semaphore, #tpu.memory_space<semaphore_mem>> -> memref<1x!tpu.dma_semaphore, #tpu.memory_space<semaphore_mem>>
    %80 = tpu.memref_squeeze %79 : memref<1x!tpu.dma_semaphore, #tpu.memory_space<semaphore_mem>> -> memref<!tpu.dma_semaphore, #tpu.memory_space<semaphore_mem>>
    tpu.wait_dma2 semaphore(%80 : memref<!tpu.dma_semaphore, #tpu.memory_space<semaphore_mem>>) src(%arg5 : memref<512x512xbf16, #tpu.memory_space<any>>) dst(%arg23 : memref<512x512xbf16, #tpu.memory_space<vmem>>)
    %c0_22 = arith.constant 0 : index
    %c0_23 = arith.constant 0 : index
    %81 = vector.load %arg23[%c0_22, %c0_23] : memref<512x512xbf16, #tpu.memory_space<vmem>>, vector<512x512xbf16>
    %82 = vector.shape_cast %78 : vector<2x8x512xf32> to vector<16x512xf32>
    %83 = arith.truncf %82 : vector<16x512xf32> to vector<16x512xbf16>
    %cst_24 = arith.constant dense<0.000000e+00> : vector<16x512xf32>
    %84 = tpu.matmul %83, %81, %cst_24 {dimension_numbers = #tpu.dot_dimension_numbers<[1], [0], [0], [1], [0, 0, 1, 1], [], []>} : vector<16x512xbf16>, vector<512x512xbf16>, vector<16x512xf32> -> vector<16x512xf32>
    %85 = arith.truncf %84 : vector<16x512xf32> to vector<16x512xbf16>
    %cst_25 = arith.constant dense<0.000000e+00> : vector<16x512xf32>
    %86 = tpu.matmul %34, %85, %cst_25 {dimension_numbers = #tpu.dot_dimension_numbers<[1], [0], [0], [1], [0, 0, 1, 1], [], []>} : vector<16x16xbf16>, vector<16x512xbf16>, vector<16x512xf32> -> vector<16x512xf32>
    %87 = vector.shape_cast %86 : vector<16x512xf32> to vector<2x8x512xf32>
    %cst_26 = arith.constant dense<0.000000e+00> : vector<8xf32>
    %88 = vector.multi_reduction <add>, %87, %cst_26 [0, 2] : vector<2x8x512xf32> to vector<8xf32>
    %89 = vector.shape_cast %88 : vector<8xf32> to vector<1x8x1xf32>
    %90 = arith.mulf %87, %87 : vector<2x8x512xf32>
    %cst_27 = arith.constant dense<0.000000e+00> : vector<8xf32>
    %91 = vector.multi_reduction <add>, %90, %cst_27 [0, 2] : vector<2x8x512xf32> to vector<8xf32>
    %92 = vector.shape_cast %91 : vector<8xf32> to vector<1x8x1xf32>
    %cst_28 = arith.constant 9.765625E-4 : f32
    %93 = vector.broadcast %cst_28 : f32 to vector<1x8x1xf32>
    %94 = arith.mulf %89, %93 : vector<1x8x1xf32>
    %cst_29 = arith.constant 9.765625E-4 : f32
    %95 = vector.broadcast %cst_29 : f32 to vector<1x8x1xf32>
    %96 = arith.mulf %92, %95 : vector<1x8x1xf32>
    %97 = arith.mulf %94, %94 : vector<1x8x1xf32>
    %98 = arith.subf %96, %97 : vector<1x8x1xf32>
    %c1 = arith.constant 1 : index
    %c0_30 = arith.constant 0 : index
    %c0_31 = arith.constant 0 : index
    %99 = vector.load %arg2[%c1, %c0_30, %c0_31] : memref<16x8x1xf32, #tpu.memory_space<vmem>>, vector<1x8x1xf32>
    %100 = vector.shape_cast %99 : vector<1x8x1xf32> to vector<8x1xf32>
    %101 = vector.shape_cast %100 : vector<8x1xf32> to vector<1x8x1xf32>
    %cst_32 = arith.constant 9.99999974E-6 : f32
    %102 = vector.broadcast %cst_32 : f32 to vector<1x8x1xf32>
    %103 = arith.addf %98, %102 : vector<1x8x1xf32>
    %104 = math.rsqrt %103 : vector<1x8x1xf32>
    %105 = arith.mulf %101, %104 : vector<1x8x1xf32>
    %c1_33 = arith.constant 1 : index
    %c0_34 = arith.constant 0 : index
    %c0_35 = arith.constant 0 : index
    %106 = vector.load %arg3[%c1_33, %c0_34, %c0_35] : memref<16x8x1xf32, #tpu.memory_space<vmem>>, vector<1x8x1xf32>
    %107 = vector.shape_cast %106 : vector<1x8x1xf32> to vector<8x1xf32>
    %108 = vector.shape_cast %107 : vector<8x1xf32> to vector<1x8x1xf32>
    %109 = arith.mulf %94, %105 : vector<1x8x1xf32>
    %110 = arith.subf %108, %109 : vector<1x8x1xf32>
    %111 = vector.broadcast %105 : vector<1x8x1xf32> to vector<2x8x512xf32>
    %112 = arith.mulf %87, %111 : vector<2x8x512xf32>
    %113 = vector.broadcast %110 : vector<1x8x1xf32> to vector<2x8x512xf32>
    %114 = arith.addf %112, %113 : vector<2x8x512xf32>
    %115 = arith.addf %114, %78 : vector<2x8x512xf32>
    %cst_36 = arith.constant 2.000000e+01 : f32
    %116 = vector.broadcast %cst_36 : f32 to vector<2x8x512xf32>
    %117 = arith.minimumf %115, %116 : vector<2x8x512xf32>
    %cst_37 = arith.constant 2.000000e+01 : f32
    %118 = vector.broadcast %cst_37 : f32 to vector<2x8x512xf32>
    %119 = arith.cmpf ogt, %115, %118 : vector<2x8x512xf32>
    %120 = math.exp %117 : vector<2x8x512xf32>
    %121 = math.log1p %120 : vector<2x8x512xf32>
    %122 = arith.select %119, %115, %121 : vector<2x8x512xi1>, vector<2x8x512xf32>
    %c2_i32_38 = arith.constant 2 : i32
    %123 = tpu.memref_slice %arg39[%c2_i32_38] : memref<17x!tpu.dma_semaphore, #tpu.memory_space<semaphore_mem>> -> memref<1x!tpu.dma_semaphore, #tpu.memory_space<semaphore_mem>>
    %124 = tpu.memref_squeeze %123 : memref<1x!tpu.dma_semaphore, #tpu.memory_space<semaphore_mem>> -> memref<!tpu.dma_semaphore, #tpu.memory_space<semaphore_mem>>
    tpu.wait_dma2 semaphore(%124 : memref<!tpu.dma_semaphore, #tpu.memory_space<semaphore_mem>>) src(%arg6 : memref<512x512xbf16, #tpu.memory_space<any>>) dst(%arg24 : memref<512x512xbf16, #tpu.memory_space<vmem>>)
    %c0_39 = arith.constant 0 : index
    %c0_40 = arith.constant 0 : index
    %125 = vector.load %arg24[%c0_39, %c0_40] : memref<512x512xbf16, #tpu.memory_space<vmem>>, vector<512x512xbf16>
    %126 = vector.shape_cast %122 : vector<2x8x512xf32> to vector<16x512xf32>
    %127 = arith.truncf %126 : vector<16x512xf32> to vector<16x512xbf16>
    %cst_41 = arith.constant dense<0.000000e+00> : vector<16x512xf32>
    %128 = tpu.matmul %127, %125, %cst_41 {dimension_numbers = #tpu.dot_dimension_numbers<[1], [0], [0], [1], [0, 0, 1, 1], [], []>} : vector<16x512xbf16>, vector<512x512xbf16>, vector<16x512xf32> -> vector<16x512xf32>
    %129 = arith.truncf %128 : vector<16x512xf32> to vector<16x512xbf16>
    %cst_42 = arith.constant dense<0.000000e+00> : vector<16x512xf32>
    %130 = tpu.matmul %34, %129, %cst_42 {dimension_numbers = #tpu.dot_dimension_numbers<[1], [0], [0], [1], [0, 0, 1, 1], [], []>} : vector<16x16xbf16>, vector<16x512xbf16>, vector<16x512xf32> -> vector<16x512xf32>
    %131 = vector.shape_cast %130 : vector<16x512xf32> to vector<2x8x512xf32>
    %cst_43 = arith.constant dense<0.000000e+00> : vector<8xf32>
    %132 = vector.multi_reduction <add>, %131, %cst_43 [0, 2] : vector<2x8x512xf32> to vector<8xf32>
    %133 = vector.shape_cast %132 : vector<8xf32> to vector<1x8x1xf32>
    %134 = arith.mulf %131, %131 : vector<2x8x512xf32>
    %cst_44 = arith.constant dense<0.000000e+00> : vector<8xf32>
    %135 = vector.multi_reduction <add>, %134, %cst_44 [0, 2] : vector<2x8x512xf32> to vector<8xf32>
    %136 = vector.shape_cast %135 : vector<8xf32> to vector<1x8x1xf32>
    %cst_45 = arith.constant 9.765625E-4 : f32
    %137 = vector.broadcast %cst_45 : f32 to vector<1x8x1xf32>
    %138 = arith.mulf %133, %137 : vector<1x8x1xf32>
    %cst_46 = arith.constant 9.765625E-4 : f32
    %139 = vector.broadcast %cst_46 : f32 to vector<1x8x1xf32>
    %140 = arith.mulf %136, %139 : vector<1x8x1xf32>
    %141 = arith.mulf %138, %138 : vector<1x8x1xf32>
    %142 = arith.subf %140, %141 : vector<1x8x1xf32>
    %c2 = arith.constant 2 : index
    %c0_47 = arith.constant 0 : index
    %c0_48 = arith.constant 0 : index
    %143 = vector.load %arg2[%c2, %c0_47, %c0_48] : memref<16x8x1xf32, #tpu.memory_space<vmem>>, vector<1x8x1xf32>
    %144 = vector.shape_cast %143 : vector<1x8x1xf32> to vector<8x1xf32>
    %145 = vector.shape_cast %144 : vector<8x1xf32> to vector<1x8x1xf32>
    %cst_49 = arith.constant 9.99999974E-6 : f32
    %146 = vector.broadcast %cst_49 : f32 to vector<1x8x1xf32>
    %147 = arith.addf %142, %146 : vector<1x8x1xf32>
    %148 = math.rsqrt %147 : vector<1x8x1xf32>
    %149 = arith.mulf %145, %148 : vector<1x8x1xf32>
    %c2_50 = arith.constant 2 : index
    %c0_51 = arith.constant 0 : index
    %c0_52 = arith.constant 0 : index
    %150 = vector.load %arg3[%c2_50, %c0_51, %c0_52] : memref<16x8x1xf32, #tpu.memory_space<vmem>>, vector<1x8x1xf32>
    %151 = vector.shape_cast %150 : vector<1x8x1xf32> to vector<8x1xf32>
    %152 = vector.shape_cast %151 : vector<8x1xf32> to vector<1x8x1xf32>
    %153 = arith.mulf %138, %149 : vector<1x8x1xf32>
    %154 = arith.subf %152, %153 : vector<1x8x1xf32>
    %155 = vector.broadcast %149 : vector<1x8x1xf32> to vector<2x8x512xf32>
    %156 = arith.mulf %131, %155 : vector<2x8x512xf32>
    %157 = vector.broadcast %154 : vector<1x8x1xf32> to vector<2x8x512xf32>
    %158 = arith.addf %156, %157 : vector<2x8x512xf32>
    %159 = arith.addf %158, %78 : vector<2x8x512xf32>
    %cst_53 = arith.constant 2.000000e+01 : f32
    %160 = vector.broadcast %cst_53 : f32 to vector<2x8x512xf32>
    %161 = arith.minimumf %159, %160 : vector<2x8x512xf32>
    %cst_54 = arith.constant 2.000000e+01 : f32
    %162 = vector.broadcast %cst_54 : f32 to vector<2x8x512xf32>
    %163 = arith.cmpf ogt, %159, %162 : vector<2x8x512xf32>
    %164 = math.exp %161 : vector<2x8x512xf32>
    %165 = math.log1p %164 : vector<2x8x512xf32>
    %166 = arith.select %163, %159, %165 : vector<2x8x512xi1>, vector<2x8x512xf32>
    %c3_i32_55 = arith.constant 3 : i32
    %167 = tpu.memref_slice %arg39[%c3_i32_55] : memref<17x!tpu.dma_semaphore, #tpu.memory_space<semaphore_mem>> -> memref<1x!tpu.dma_semaphore, #tpu.memory_space<semaphore_mem>>
    %168 = tpu.memref_squeeze %167 : memref<1x!tpu.dma_semaphore, #tpu.memory_space<semaphore_mem>> -> memref<!tpu.dma_semaphore, #tpu.memory_space<semaphore_mem>>
    tpu.wait_dma2 semaphore(%168 : memref<!tpu.dma_semaphore, #tpu.memory_space<semaphore_mem>>) src(%arg7 : memref<512x512xbf16, #tpu.memory_space<any>>) dst(%arg25 : memref<512x512xbf16, #tpu.memory_space<vmem>>)
    %c0_56 = arith.constant 0 : index
    %c0_57 = arith.constant 0 : index
    %169 = vector.load %arg25[%c0_56, %c0_57] : memref<512x512xbf16, #tpu.memory_space<vmem>>, vector<512x512xbf16>
    %170 = vector.shape_cast %166 : vector<2x8x512xf32> to vector<16x512xf32>
    %171 = arith.truncf %170 : vector<16x512xf32> to vector<16x512xbf16>
    %cst_58 = arith.constant dense<0.000000e+00> : vector<16x512xf32>
    %172 = tpu.matmul %171, %169, %cst_58 {dimension_numbers = #tpu.dot_dimension_numbers<[1], [0], [0], [1], [0, 0, 1, 1], [], []>} : vector<16x512xbf16>, vector<512x512xbf16>, vector<16x512xf32> -> vector<16x512xf32>
    %173 = arith.truncf %172 : vector<16x512xf32> to vector<16x512xbf16>
    %cst_59 = arith.constant dense<0.000000e+00> : vector<16x512xf32>
    %174 = tpu.matmul %34, %173, %cst_59 {dimension_numbers = #tpu.dot_dimension_numbers<[1], [0], [0], [1], [0, 0, 1, 1], [], []>} : vector<16x16xbf16>, vector<16x512xbf16>, vector<16x512xf32> -> vector<16x512xf32>
    %175 = vector.shape_cast %174 : vector<16x512xf32> to vector<2x8x512xf32>
    %cst_60 = arith.constant dense<0.000000e+00> : vector<8xf32>
    %176 = vector.multi_reduction <add>, %175, %cst_60 [0, 2] : vector<2x8x512xf32> to vector<8xf32>
    %177 = vector.shape_cast %176 : vector<8xf32> to vector<1x8x1xf32>
    %178 = arith.mulf %175, %175 : vector<2x8x512xf32>
    %cst_61 = arith.constant dense<0.000000e+00> : vector<8xf32>
    %179 = vector.multi_reduction <add>, %178, %cst_61 [0, 2] : vector<2x8x512xf32> to vector<8xf32>
    %180 = vector.shape_cast %179 : vector<8xf32> to vector<1x8x1xf32>
    %cst_62 = arith.constant 9.765625E-4 : f32
    %181 = vector.broadcast %cst_62 : f32 to vector<1x8x1xf32>
    %182 = arith.mulf %177, %181 : vector<1x8x1xf32>
    %cst_63 = arith.constant 9.765625E-4 : f32
    %183 = vector.broadcast %cst_63 : f32 to vector<1x8x1xf32>
    %184 = arith.mulf %180, %183 : vector<1x8x1xf32>
    %185 = arith.mulf %182, %182 : vector<1x8x1xf32>
    %186 = arith.subf %184, %185 : vector<1x8x1xf32>
    %c3 = arith.constant 3 : index
    %c0_64 = arith.constant 0 : index
    %c0_65 = arith.constant 0 : index
    %187 = vector.load %arg2[%c3, %c0_64, %c0_65] : memref<16x8x1xf32, #tpu.memory_space<vmem>>, vector<1x8x1xf32>
    %188 = vector.shape_cast %187 : vector<1x8x1xf32> to vector<8x1xf32>
    %189 = vector.shape_cast %188 : vector<8x1xf32> to vector<1x8x1xf32>
    %cst_66 = arith.constant 9.99999974E-6 : f32
    %190 = vector.broadcast %cst_66 : f32 to vector<1x8x1xf32>
    %191 = arith.addf %186, %190 : vector<1x8x1xf32>
    %192 = math.rsqrt %191 : vector<1x8x1xf32>
    %193 = arith.mulf %189, %192 : vector<1x8x1xf32>
    %c3_67 = arith.constant 3 : index
    %c0_68 = arith.constant 0 : index
    %c0_69 = arith.constant 0 : index
    %194 = vector.load %arg3[%c3_67, %c0_68, %c0_69] : memref<16x8x1xf32, #tpu.memory_space<vmem>>, vector<1x8x1xf32>
    %195 = vector.shape_cast %194 : vector<1x8x1xf32> to vector<8x1xf32>
    %196 = vector.shape_cast %195 : vector<8x1xf32> to vector<1x8x1xf32>
    %197 = arith.mulf %182, %193 : vector<1x8x1xf32>
    %198 = arith.subf %196, %197 : vector<1x8x1xf32>
    %199 = vector.broadcast %193 : vector<1x8x1xf32> to vector<2x8x512xf32>
    %200 = arith.mulf %175, %199 : vector<2x8x512xf32>
    %201 = vector.broadcast %198 : vector<1x8x1xf32> to vector<2x8x512xf32>
    %202 = arith.addf %200, %201 : vector<2x8x512xf32>
    %203 = arith.addf %202, %78 : vector<2x8x512xf32>
    %cst_70 = arith.constant 2.000000e+01 : f32
    %204 = vector.broadcast %cst_70 : f32 to vector<2x8x512xf32>
    %205 = arith.minimumf %203, %204 : vector<2x8x512xf32>
    %cst_71 = arith.constant 2.000000e+01 : f32
    %206 = vector.broadcast %cst_71 : f32 to vector<2x8x512xf32>
    %207 = arith.cmpf ogt, %203, %206 : vector<2x8x512xf32>
    %208 = math.exp %205 : vector<2x8x512xf32>
    %209 = math.log1p %208 : vector<2x8x512xf32>
    %210 = arith.select %207, %203, %209 : vector<2x8x512xi1>, vector<2x8x512xf32>
    %c4_i32_72 = arith.constant 4 : i32
    %211 = tpu.memref_slice %arg39[%c4_i32_72] : memref<17x!tpu.dma_semaphore, #tpu.memory_space<semaphore_mem>> -> memref<1x!tpu.dma_semaphore, #tpu.memory_space<semaphore_mem>>
    %212 = tpu.memref_squeeze %211 : memref<1x!tpu.dma_semaphore, #tpu.memory_space<semaphore_mem>> -> memref<!tpu.dma_semaphore, #tpu.memory_space<semaphore_mem>>
    tpu.wait_dma2 semaphore(%212 : memref<!tpu.dma_semaphore, #tpu.memory_space<semaphore_mem>>) src(%arg8 : memref<512x256xbf16, #tpu.memory_space<any>>) dst(%arg26 : memref<512x256xbf16, #tpu.memory_space<vmem>>)
    %c0_73 = arith.constant 0 : index
    %c0_74 = arith.constant 0 : index
    %213 = vector.load %arg26[%c0_73, %c0_74] : memref<512x256xbf16, #tpu.memory_space<vmem>>, vector<512x256xbf16>
    %214 = vector.shape_cast %210 : vector<2x8x512xf32> to vector<16x512xf32>
    %215 = arith.truncf %214 : vector<16x512xf32> to vector<16x512xbf16>
    %cst_75 = arith.constant dense<0.000000e+00> : vector<16x256xf32>
    %216 = tpu.matmul %215, %213, %cst_75 {dimension_numbers = #tpu.dot_dimension_numbers<[1], [0], [0], [1], [0, 0, 1, 1], [], []>} : vector<16x512xbf16>, vector<512x256xbf16>, vector<16x256xf32> -> vector<16x256xf32>
    %217 = arith.truncf %216 : vector<16x256xf32> to vector<16x256xbf16>
    %cst_76 = arith.constant dense<0.000000e+00> : vector<16x256xf32>
    %218 = tpu.matmul %34, %217, %cst_76 {dimension_numbers = #tpu.dot_dimension_numbers<[1], [0], [0], [1], [0, 0, 1, 1], [], []>} : vector<16x16xbf16>, vector<16x256xbf16>, vector<16x256xf32> -> vector<16x256xf32>
    %219 = vector.shape_cast %218 : vector<16x256xf32> to vector<2x8x256xf32>
    %cst_77 = arith.constant dense<0.000000e+00> : vector<8xf32>
    %220 = vector.multi_reduction <add>, %219, %cst_77 [0, 2] : vector<2x8x256xf32> to vector<8xf32>
    %221 = vector.shape_cast %220 : vector<8xf32> to vector<1x8x1xf32>
    %222 = arith.mulf %219, %219 : vector<2x8x256xf32>
    %cst_78 = arith.constant dense<0.000000e+00> : vector<8xf32>
    %223 = vector.multi_reduction <add>, %222, %cst_78 [0, 2] : vector<2x8x256xf32> to vector<8xf32>
    %224 = vector.shape_cast %223 : vector<8xf32> to vector<1x8x1xf32>
    %cst_79 = arith.constant 0.001953125 : f32
    %225 = vector.broadcast %cst_79 : f32 to vector<1x8x1xf32>
    %226 = arith.mulf %221, %225 : vector<1x8x1xf32>
    %cst_80 = arith.constant 0.001953125 : f32
    %227 = vector.broadcast %cst_80 : f32 to vector<1x8x1xf32>
    %228 = arith.mulf %224, %227 : vector<1x8x1xf32>
    %229 = arith.mulf %226, %226 : vector<1x8x1xf32>
    %230 = arith.subf %228, %229 : vector<1x8x1xf32>
    %c4 = arith.constant 4 : index
    %c0_81 = arith.constant 0 : index
    %c0_82 = arith.constant 0 : index
    %231 = vector.load %arg2[%c4, %c0_81, %c0_82] : memref<16x8x1xf32, #tpu.memory_space<vmem>>, vector<1x8x1xf32>
    %232 = vector.shape_cast %231 : vector<1x8x1xf32> to vector<8x1xf32>
    %233 = vector.shape_cast %232 : vector<8x1xf32> to vector<1x8x1xf32>
    %cst_83 = arith.constant 9.99999974E-6 : f32
    %234 = vector.broadcast %cst_83 : f32 to vector<1x8x1xf32>
    %235 = arith.addf %230, %234 : vector<1x8x1xf32>
    %236 = math.rsqrt %235 : vector<1x8x1xf32>
    %237 = arith.mulf %233, %236 : vector<1x8x1xf32>
    %c4_84 = arith.constant 4 : index
    %c0_85 = arith.constant 0 : index
    %c0_86 = arith.constant 0 : index
    %238 = vector.load %arg3[%c4_84, %c0_85, %c0_86] : memref<16x8x1xf32, #tpu.memory_space<vmem>>, vector<1x8x1xf32>
    %239 = vector.shape_cast %238 : vector<1x8x1xf32> to vector<8x1xf32>
    %240 = vector.shape_cast %239 : vector<8x1xf32> to vector<1x8x1xf32>
    %241 = arith.mulf %226, %237 : vector<1x8x1xf32>
    %242 = arith.subf %240, %241 : vector<1x8x1xf32>
    %243 = vector.broadcast %237 : vector<1x8x1xf32> to vector<2x8x256xf32>
    %244 = arith.mulf %219, %243 : vector<2x8x256xf32>
    %245 = vector.broadcast %242 : vector<1x8x1xf32> to vector<2x8x256xf32>
    %246 = arith.addf %244, %245 : vector<2x8x256xf32>
    %cst_87 = arith.constant 2.000000e+01 : f32
    %247 = vector.broadcast %cst_87 : f32 to vector<2x8x256xf32>
    %248 = arith.minimumf %246, %247 : vector<2x8x256xf32>
    %cst_88 = arith.constant 2.000000e+01 : f32
    %249 = vector.broadcast %cst_88 : f32 to vector<2x8x256xf32>
    %250 = arith.cmpf ogt, %246, %249 : vector<2x8x256xf32>
    %251 = math.exp %248 : vector<2x8x256xf32>
    %252 = math.log1p %251 : vector<2x8x256xf32>
    %253 = arith.select %250, %246, %252 : vector<2x8x256xi1>, vector<2x8x256xf32>
    %c5_i32_89 = arith.constant 5 : i32
    %254 = tpu.memref_slice %arg39[%c5_i32_89] : memref<17x!tpu.dma_semaphore, #tpu.memory_space<semaphore_mem>> -> memref<1x!tpu.dma_semaphore, #tpu.memory_space<semaphore_mem>>
    %255 = tpu.memref_squeeze %254 : memref<1x!tpu.dma_semaphore, #tpu.memory_space<semaphore_mem>> -> memref<!tpu.dma_semaphore, #tpu.memory_space<semaphore_mem>>
    tpu.wait_dma2 semaphore(%255 : memref<!tpu.dma_semaphore, #tpu.memory_space<semaphore_mem>>) src(%arg9 : memref<256x256xbf16, #tpu.memory_space<any>>) dst(%arg27 : memref<256x256xbf16, #tpu.memory_space<vmem>>)
    %c0_90 = arith.constant 0 : index
    %c0_91 = arith.constant 0 : index
    %256 = vector.load %arg27[%c0_90, %c0_91] : memref<256x256xbf16, #tpu.memory_space<vmem>>, vector<256x256xbf16>
    %257 = vector.shape_cast %253 : vector<2x8x256xf32> to vector<16x256xf32>
    %258 = arith.truncf %257 : vector<16x256xf32> to vector<16x256xbf16>
    %cst_92 = arith.constant dense<0.000000e+00> : vector<16x256xf32>
    %259 = tpu.matmul %258, %256, %cst_92 {dimension_numbers = #tpu.dot_dimension_numbers<[1], [0], [0], [1], [0, 0, 1, 1], [], []>} : vector<16x256xbf16>, vector<256x256xbf16>, vector<16x256xf32> -> vector<16x256xf32>
    %260 = arith.truncf %259 : vector<16x256xf32> to vector<16x256xbf16>
    %cst_93 = arith.constant dense<0.000000e+00> : vector<16x256xf32>
    %261 = tpu.matmul %34, %260, %cst_93 {dimension_numbers = #tpu.dot_dimension_numbers<[1], [0], [0], [1], [0, 0, 1, 1], [], []>} : vector<16x16xbf16>, vector<16x256xbf16>, vector<16x256xf32> -> vector<16x256xf32>
    %262 = vector.shape_cast %261 : vector<16x256xf32> to vector<2x8x256xf32>
    %cst_94 = arith.constant dense<0.000000e+00> : vector<8xf32>
    %263 = vector.multi_reduction <add>, %262, %cst_94 [0, 2] : vector<2x8x256xf32> to vector<8xf32>
    %264 = vector.shape_cast %263 : vector<8xf32> to vector<1x8x1xf32>
    %265 = arith.mulf %262, %262 : vector<2x8x256xf32>
    %cst_95 = arith.constant dense<0.000000e+00> : vector<8xf32>
    %266 = vector.multi_reduction <add>, %265, %cst_95 [0, 2] : vector<2x8x256xf32> to vector<8xf32>
    %267 = vector.shape_cast %266 : vector<8xf32> to vector<1x8x1xf32>
    %cst_96 = arith.constant 0.001953125 : f32
    %268 = vector.broadcast %cst_96 : f32 to vector<1x8x1xf32>
    %269 = arith.mulf %264, %268 : vector<1x8x1xf32>
    %cst_97 = arith.constant 0.001953125 : f32
    %270 = vector.broadcast %cst_97 : f32 to vector<1x8x1xf32>
    %271 = arith.mulf %267, %270 : vector<1x8x1xf32>
    %272 = arith.mulf %269, %269 : vector<1x8x1xf32>
    %273 = arith.subf %271, %272 : vector<1x8x1xf32>
    %c5 = arith.constant 5 : index
    %c0_98 = arith.constant 0 : index
    %c0_99 = arith.constant 0 : index
    %274 = vector.load %arg2[%c5, %c0_98, %c0_99] : memref<16x8x1xf32, #tpu.memory_space<vmem>>, vector<1x8x1xf32>
    %275 = vector.shape_cast %274 : vector<1x8x1xf32> to vector<8x1xf32>
    %276 = vector.shape_cast %275 : vector<8x1xf32> to vector<1x8x1xf32>
    %cst_100 = arith.constant 9.99999974E-6 : f32
    %277 = vector.broadcast %cst_100 : f32 to vector<1x8x1xf32>
    %278 = arith.addf %273, %277 : vector<1x8x1xf32>
    %279 = math.rsqrt %278 : vector<1x8x1xf32>
    %280 = arith.mulf %276, %279 : vector<1x8x1xf32>
    %c5_101 = arith.constant 5 : index
    %c0_102 = arith.constant 0 : index
    %c0_103 = arith.constant 0 : index
    %281 = vector.load %arg3[%c5_101, %c0_102, %c0_103] : memref<16x8x1xf32, #tpu.memory_space<vmem>>, vector<1x8x1xf32>
    %282 = vector.shape_cast %281 : vector<1x8x1xf32> to vector<8x1xf32>
    %283 = vector.shape_cast %282 : vector<8x1xf32> to vector<1x8x1xf32>
    %284 = arith.mulf %269, %280 : vector<1x8x1xf32>
    %285 = arith.subf %283, %284 : vector<1x8x1xf32>
    %286 = vector.broadcast %280 : vector<1x8x1xf32> to vector<2x8x256xf32>
    %287 = arith.mulf %262, %286 : vector<2x8x256xf32>
    %288 = vector.broadcast %285 : vector<1x8x1xf32> to vector<2x8x256xf32>
    %289 = arith.addf %287, %288 : vector<2x8x256xf32>
    %290 = arith.addf %289, %253 : vector<2x8x256xf32>
    %cst_104 = arith.constant 2.000000e+01 : f32
    %291 = vector.broadcast %cst_104 : f32 to vector<2x8x256xf32>
    %292 = arith.minimumf %290, %291 : vector<2x8x256xf32>
    %cst_105 = arith.constant 2.000000e+01 : f32
    %293 = vector.broadcast %cst_105 : f32 to vector<2x8x256xf32>
    %294 = arith.cmpf ogt, %290, %293 : vector<2x8x256xf32>
    %295 = math.exp %292 : vector<2x8x256xf32>
    %296 = math.log1p %295 : vector<2x8x256xf32>
    %297 = arith.select %294, %290, %296 : vector<2x8x256xi1>, vector<2x8x256xf32>
    %c6_i32_106 = arith.constant 6 : i32
    %298 = tpu.memref_slice %arg39[%c6_i32_106] : memref<17x!tpu.dma_semaphore, #tpu.memory_space<semaphore_mem>> -> memref<1x!tpu.dma_semaphore, #tpu.memory_space<semaphore_mem>>
    %299 = tpu.memref_squeeze %298 : memref<1x!tpu.dma_semaphore, #tpu.memory_space<semaphore_mem>> -> memref<!tpu.dma_semaphore, #tpu.memory_space<semaphore_mem>>
    tpu.wait_dma2 semaphore(%299 : memref<!tpu.dma_semaphore, #tpu.memory_space<semaphore_mem>>) src(%arg10 : memref<256x256xbf16, #tpu.memory_space<any>>) dst(%arg28 : memref<256x256xbf16, #tpu.memory_space<vmem>>)
    %c0_107 = arith.constant 0 : index
    %c0_108 = arith.constant 0 : index
    %300 = vector.load %arg28[%c0_107, %c0_108] : memref<256x256xbf16, #tpu.memory_space<vmem>>, vector<256x256xbf16>
    %301 = vector.shape_cast %297 : vector<2x8x256xf32> to vector<16x256xf32>
    %302 = arith.truncf %301 : vector<16x256xf32> to vector<16x256xbf16>
    %cst_109 = arith.constant dense<0.000000e+00> : vector<16x256xf32>
    %303 = tpu.matmul %302, %300, %cst_109 {dimension_numbers = #tpu.dot_dimension_numbers<[1], [0], [0], [1], [0, 0, 1, 1], [], []>} : vector<16x256xbf16>, vector<256x256xbf16>, vector<16x256xf32> -> vector<16x256xf32>
    %304 = arith.truncf %303 : vector<16x256xf32> to vector<16x256xbf16>
    %cst_110 = arith.constant dense<0.000000e+00> : vector<16x256xf32>
    %305 = tpu.matmul %34, %304, %cst_110 {dimension_numbers = #tpu.dot_dimension_numbers<[1], [0], [0], [1], [0, 0, 1, 1], [], []>} : vector<16x16xbf16>, vector<16x256xbf16>, vector<16x256xf32> -> vector<16x256xf32>
    %306 = vector.shape_cast %305 : vector<16x256xf32> to vector<2x8x256xf32>
    %cst_111 = arith.constant dense<0.000000e+00> : vector<8xf32>
    %307 = vector.multi_reduction <add>, %306, %cst_111 [0, 2] : vector<2x8x256xf32> to vector<8xf32>
    %308 = vector.shape_cast %307 : vector<8xf32> to vector<1x8x1xf32>
    %309 = arith.mulf %306, %306 : vector<2x8x256xf32>
    %cst_112 = arith.constant dense<0.000000e+00> : vector<8xf32>
    %310 = vector.multi_reduction <add>, %309, %cst_112 [0, 2] : vector<2x8x256xf32> to vector<8xf32>
    %311 = vector.shape_cast %310 : vector<8xf32> to vector<1x8x1xf32>
    %cst_113 = arith.constant 0.001953125 : f32
    %312 = vector.broadcast %cst_113 : f32 to vector<1x8x1xf32>
    %313 = arith.mulf %308, %312 : vector<1x8x1xf32>
    %cst_114 = arith.constant 0.001953125 : f32
    %314 = vector.broadcast %cst_114 : f32 to vector<1x8x1xf32>
    %315 = arith.mulf %311, %314 : vector<1x8x1xf32>
    %316 = arith.mulf %313, %313 : vector<1x8x1xf32>
    %317 = arith.subf %315, %316 : vector<1x8x1xf32>
    %c6 = arith.constant 6 : index
    %c0_115 = arith.constant 0 : index
    %c0_116 = arith.constant 0 : index
    %318 = vector.load %arg2[%c6, %c0_115, %c0_116] : memref<16x8x1xf32, #tpu.memory_space<vmem>>, vector<1x8x1xf32>
    %319 = vector.shape_cast %318 : vector<1x8x1xf32> to vector<8x1xf32>
    %320 = vector.shape_cast %319 : vector<8x1xf32> to vector<1x8x1xf32>
    %cst_117 = arith.constant 9.99999974E-6 : f32
    %321 = vector.broadcast %cst_117 : f32 to vector<1x8x1xf32>
    %322 = arith.addf %317, %321 : vector<1x8x1xf32>
    %323 = math.rsqrt %322 : vector<1x8x1xf32>
    %324 = arith.mulf %320, %323 : vector<1x8x1xf32>
    %c6_118 = arith.constant 6 : index
    %c0_119 = arith.constant 0 : index
    %c0_120 = arith.constant 0 : index
    %325 = vector.load %arg3[%c6_118, %c0_119, %c0_120] : memref<16x8x1xf32, #tpu.memory_space<vmem>>, vector<1x8x1xf32>
    %326 = vector.shape_cast %325 : vector<1x8x1xf32> to vector<8x1xf32>
    %327 = vector.shape_cast %326 : vector<8x1xf32> to vector<1x8x1xf32>
    %328 = arith.mulf %313, %324 : vector<1x8x1xf32>
    %329 = arith.subf %327, %328 : vector<1x8x1xf32>
    %330 = vector.broadcast %324 : vector<1x8x1xf32> to vector<2x8x256xf32>
    %331 = arith.mulf %306, %330 : vector<2x8x256xf32>
    %332 = vector.broadcast %329 : vector<1x8x1xf32> to vector<2x8x256xf32>
    %333 = arith.addf %331, %332 : vector<2x8x256xf32>
    %334 = arith.addf %333, %253 : vector<2x8x256xf32>
    %cst_121 = arith.constant 2.000000e+01 : f32
    %335 = vector.broadcast %cst_121 : f32 to vector<2x8x256xf32>
    %336 = arith.minimumf %334, %335 : vector<2x8x256xf32>
    %cst_122 = arith.constant 2.000000e+01 : f32
    %337 = vector.broadcast %cst_122 : f32 to vector<2x8x256xf32>
    %338 = arith.cmpf ogt, %334, %337 : vector<2x8x256xf32>
    %339 = math.exp %336 : vector<2x8x256xf32>
    %340 = math.log1p %339 : vector<2x8x256xf32>
    %341 = arith.select %338, %334, %340 : vector<2x8x256xi1>, vector<2x8x256xf32>
    %c7_i32_123 = arith.constant 7 : i32
    %342 = tpu.memref_slice %arg39[%c7_i32_123] : memref<17x!tpu.dma_semaphore, #tpu.memory_space<semaphore_mem>> -> memref<1x!tpu.dma_semaphore, #tpu.memory_space<semaphore_mem>>
    %343 = tpu.memref_squeeze %342 : memref<1x!tpu.dma_semaphore, #tpu.memory_space<semaphore_mem>> -> memref<!tpu.dma_semaphore, #tpu.memory_space<semaphore_mem>>
    tpu.wait_dma2 semaphore(%343 : memref<!tpu.dma_semaphore, #tpu.memory_space<semaphore_mem>>) src(%arg11 : memref<256x256xbf16, #tpu.memory_space<any>>) dst(%arg29 : memref<256x256xbf16, #tpu.memory_space<vmem>>)
    %c0_124 = arith.constant 0 : index
    %c0_125 = arith.constant 0 : index
    %344 = vector.load %arg29[%c0_124, %c0_125] : memref<256x256xbf16, #tpu.memory_space<vmem>>, vector<256x256xbf16>
    %345 = vector.shape_cast %341 : vector<2x8x256xf32> to vector<16x256xf32>
    %346 = arith.truncf %345 : vector<16x256xf32> to vector<16x256xbf16>
    %cst_126 = arith.constant dense<0.000000e+00> : vector<16x256xf32>
    %347 = tpu.matmul %346, %344, %cst_126 {dimension_numbers = #tpu.dot_dimension_numbers<[1], [0], [0], [1], [0, 0, 1, 1], [], []>} : vector<16x256xbf16>, vector<256x256xbf16>, vector<16x256xf32> -> vector<16x256xf32>
    %348 = arith.truncf %347 : vector<16x256xf32> to vector<16x256xbf16>
    %cst_127 = arith.constant dense<0.000000e+00> : vector<16x256xf32>
    %349 = tpu.matmul %34, %348, %cst_127 {dimension_numbers = #tpu.dot_dimension_numbers<[1], [0], [0], [1], [0, 0, 1, 1], [], []>} : vector<16x16xbf16>, vector<16x256xbf16>, vector<16x256xf32> -> vector<16x256xf32>
    %350 = vector.shape_cast %349 : vector<16x256xf32> to vector<2x8x256xf32>
    %cst_128 = arith.constant dense<0.000000e+00> : vector<8xf32>
    %351 = vector.multi_reduction <add>, %350, %cst_128 [0, 2] : vector<2x8x256xf32> to vector<8xf32>
    %352 = vector.shape_cast %351 : vector<8xf32> to vector<1x8x1xf32>
    %353 = arith.mulf %350, %350 : vector<2x8x256xf32>
    %cst_129 = arith.constant dense<0.000000e+00> : vector<8xf32>
    %354 = vector.multi_reduction <add>, %353, %cst_129 [0, 2] : vector<2x8x256xf32> to vector<8xf32>
    %355 = vector.shape_cast %354 : vector<8xf32> to vector<1x8x1xf32>
    %cst_130 = arith.constant 0.001953125 : f32
    %356 = vector.broadcast %cst_130 : f32 to vector<1x8x1xf32>
    %357 = arith.mulf %352, %356 : vector<1x8x1xf32>
    %cst_131 = arith.constant 0.001953125 : f32
    %358 = vector.broadcast %cst_131 : f32 to vector<1x8x1xf32>
    %359 = arith.mulf %355, %358 : vector<1x8x1xf32>
    %360 = arith.mulf %357, %357 : vector<1x8x1xf32>
    %361 = arith.subf %359, %360 : vector<1x8x1xf32>
    %c7 = arith.constant 7 : index
    %c0_132 = arith.constant 0 : index
    %c0_133 = arith.constant 0 : index
    %362 = vector.load %arg2[%c7, %c0_132, %c0_133] : memref<16x8x1xf32, #tpu.memory_space<vmem>>, vector<1x8x1xf32>
    %363 = vector.shape_cast %362 : vector<1x8x1xf32> to vector<8x1xf32>
    %364 = vector.shape_cast %363 : vector<8x1xf32> to vector<1x8x1xf32>
    %cst_134 = arith.constant 9.99999974E-6 : f32
    %365 = vector.broadcast %cst_134 : f32 to vector<1x8x1xf32>
    %366 = arith.addf %361, %365 : vector<1x8x1xf32>
    %367 = math.rsqrt %366 : vector<1x8x1xf32>
    %368 = arith.mulf %364, %367 : vector<1x8x1xf32>
    %c7_135 = arith.constant 7 : index
    %c0_136 = arith.constant 0 : index
    %c0_137 = arith.constant 0 : index
    %369 = vector.load %arg3[%c7_135, %c0_136, %c0_137] : memref<16x8x1xf32, #tpu.memory_space<vmem>>, vector<1x8x1xf32>
    %370 = vector.shape_cast %369 : vector<1x8x1xf32> to vector<8x1xf32>
    %371 = vector.shape_cast %370 : vector<8x1xf32> to vector<1x8x1xf32>
    %372 = arith.mulf %357, %368 : vector<1x8x1xf32>
    %373 = arith.subf %371, %372 : vector<1x8x1xf32>
    %374 = vector.broadcast %368 : vector<1x8x1xf32> to vector<2x8x256xf32>
    %375 = arith.mulf %350, %374 : vector<2x8x256xf32>
    %376 = vector.broadcast %373 : vector<1x8x1xf32> to vector<2x8x256xf32>
    %377 = arith.addf %375, %376 : vector<2x8x256xf32>
    %378 = arith.addf %377, %253 : vector<2x8x256xf32>
    %cst_138 = arith.constant 2.000000e+01 : f32
    %379 = vector.broadcast %cst_138 : f32 to vector<2x8x256xf32>
    %380 = arith.minimumf %378, %379 : vector<2x8x256xf32>
    %cst_139 = arith.constant 2.000000e+01 : f32
    %381 = vector.broadcast %cst_139 : f32 to vector<2x8x256xf32>
    %382 = arith.cmpf ogt, %378, %381 : vector<2x8x256xf32>
    %383 = math.exp %380 : vector<2x8x256xf32>
    %384 = math.log1p %383 : vector<2x8x256xf32>
    %385 = arith.select %382, %378, %384 : vector<2x8x256xi1>, vector<2x8x256xf32>
    %c8_i32_140 = arith.constant 8 : i32
    %386 = tpu.memref_slice %arg39[%c8_i32_140] : memref<17x!tpu.dma_semaphore, #tpu.memory_space<semaphore_mem>> -> memref<1x!tpu.dma_semaphore, #tpu.memory_space<semaphore_mem>>
    %387 = tpu.memref_squeeze %386 : memref<1x!tpu.dma_semaphore, #tpu.memory_space<semaphore_mem>> -> memref<!tpu.dma_semaphore, #tpu.memory_space<semaphore_mem>>
    tpu.wait_dma2 semaphore(%387 : memref<!tpu.dma_semaphore, #tpu.memory_space<semaphore_mem>>) src(%arg12 : memref<256x128xbf16, #tpu.memory_space<any>>) dst(%arg30 : memref<256x128xbf16, #tpu.memory_space<vmem>>)
    %c0_141 = arith.constant 0 : index
    %c0_142 = arith.constant 0 : index
    %388 = vector.load %arg30[%c0_141, %c0_142] : memref<256x128xbf16, #tpu.memory_space<vmem>>, vector<256x128xbf16>
    %389 = vector.shape_cast %385 : vector<2x8x256xf32> to vector<16x256xf32>
    %390 = arith.truncf %389 : vector<16x256xf32> to vector<16x256xbf16>
    %cst_143 = arith.constant dense<0.000000e+00> : vector<16x128xf32>
    %391 = tpu.matmul %390, %388, %cst_143 {dimension_numbers = #tpu.dot_dimension_numbers<[1], [0], [0], [1], [0, 0, 1, 1], [], []>} : vector<16x256xbf16>, vector<256x128xbf16>, vector<16x128xf32> -> vector<16x128xf32>
    %392 = arith.truncf %391 : vector<16x128xf32> to vector<16x128xbf16>
    %cst_144 = arith.constant dense<0.000000e+00> : vector<16x128xf32>
    %393 = tpu.matmul %34, %392, %cst_144 {dimension_numbers = #tpu.dot_dimension_numbers<[1], [0], [0], [1], [0, 0, 1, 1], [], []>} : vector<16x16xbf16>, vector<16x128xbf16>, vector<16x128xf32> -> vector<16x128xf32>
    %394 = vector.shape_cast %393 : vector<16x128xf32> to vector<2x8x128xf32>
    %cst_145 = arith.constant dense<0.000000e+00> : vector<8xf32>
    %395 = vector.multi_reduction <add>, %394, %cst_145 [0, 2] : vector<2x8x128xf32> to vector<8xf32>
    %396 = vector.shape_cast %395 : vector<8xf32> to vector<1x8x1xf32>
    %397 = arith.mulf %394, %394 : vector<2x8x128xf32>
    %cst_146 = arith.constant dense<0.000000e+00> : vector<8xf32>
    %398 = vector.multi_reduction <add>, %397, %cst_146 [0, 2] : vector<2x8x128xf32> to vector<8xf32>
    %399 = vector.shape_cast %398 : vector<8xf32> to vector<1x8x1xf32>
    %cst_147 = arith.constant 3.906250e-03 : f32
    %400 = vector.broadcast %cst_147 : f32 to vector<1x8x1xf32>
    %401 = arith.mulf %396, %400 : vector<1x8x1xf32>
    %cst_148 = arith.constant 3.906250e-03 : f32
    %402 = vector.broadcast %cst_148 : f32 to vector<1x8x1xf32>
    %403 = arith.mulf %399, %402 : vector<1x8x1xf32>
    %404 = arith.mulf %401, %401 : vector<1x8x1xf32>
    %405 = arith.subf %403, %404 : vector<1x8x1xf32>
    %c8 = arith.constant 8 : index
    %c0_149 = arith.constant 0 : index
    %c0_150 = arith.constant 0 : index
    %406 = vector.load %arg2[%c8, %c0_149, %c0_150] : memref<16x8x1xf32, #tpu.memory_space<vmem>>, vector<1x8x1xf32>
    %407 = vector.shape_cast %406 : vector<1x8x1xf32> to vector<8x1xf32>
    %408 = vector.shape_cast %407 : vector<8x1xf32> to vector<1x8x1xf32>
    %cst_151 = arith.constant 9.99999974E-6 : f32
    %409 = vector.broadcast %cst_151 : f32 to vector<1x8x1xf32>
    %410 = arith.addf %405, %409 : vector<1x8x1xf32>
    %411 = math.rsqrt %410 : vector<1x8x1xf32>
    %412 = arith.mulf %408, %411 : vector<1x8x1xf32>
    %c8_152 = arith.constant 8 : index
    %c0_153 = arith.constant 0 : index
    %c0_154 = arith.constant 0 : index
    %413 = vector.load %arg3[%c8_152, %c0_153, %c0_154] : memref<16x8x1xf32, #tpu.memory_space<vmem>>, vector<1x8x1xf32>
    %414 = vector.shape_cast %413 : vector<1x8x1xf32> to vector<8x1xf32>
    %415 = vector.shape_cast %414 : vector<8x1xf32> to vector<1x8x1xf32>
    %416 = arith.mulf %401, %412 : vector<1x8x1xf32>
    %417 = arith.subf %415, %416 : vector<1x8x1xf32>
    %418 = vector.broadcast %412 : vector<1x8x1xf32> to vector<2x8x128xf32>
    %419 = arith.mulf %394, %418 : vector<2x8x128xf32>
    %420 = vector.broadcast %417 : vector<1x8x1xf32> to vector<2x8x128xf32>
    %421 = arith.addf %419, %420 : vector<2x8x128xf32>
    %cst_155 = arith.constant 2.000000e+01 : f32
    %422 = vector.broadcast %cst_155 : f32 to vector<2x8x128xf32>
    %423 = arith.minimumf %421, %422 : vector<2x8x128xf32>
    %cst_156 = arith.constant 2.000000e+01 : f32
    %424 = vector.broadcast %cst_156 : f32 to vector<2x8x128xf32>
    %425 = arith.cmpf ogt, %421, %424 : vector<2x8x128xf32>
    %426 = math.exp %423 : vector<2x8x128xf32>
    %427 = math.log1p %426 : vector<2x8x128xf32>
    %428 = arith.select %425, %421, %427 : vector<2x8x128xi1>, vector<2x8x128xf32>
    %c9_i32_157 = arith.constant 9 : i32
    %429 = tpu.memref_slice %arg39[%c9_i32_157] : memref<17x!tpu.dma_semaphore, #tpu.memory_space<semaphore_mem>> -> memref<1x!tpu.dma_semaphore, #tpu.memory_space<semaphore_mem>>
    %430 = tpu.memref_squeeze %429 : memref<1x!tpu.dma_semaphore, #tpu.memory_space<semaphore_mem>> -> memref<!tpu.dma_semaphore, #tpu.memory_space<semaphore_mem>>
    tpu.wait_dma2 semaphore(%430 : memref<!tpu.dma_semaphore, #tpu.memory_space<semaphore_mem>>) src(%arg13 : memref<128x128xbf16, #tpu.memory_space<any>>) dst(%arg31 : memref<128x128xbf16, #tpu.memory_space<vmem>>)
    %c0_158 = arith.constant 0 : index
    %c0_159 = arith.constant 0 : index
    %431 = vector.load %arg31[%c0_158, %c0_159] : memref<128x128xbf16, #tpu.memory_space<vmem>>, vector<128x128xbf16>
    %432 = vector.shape_cast %428 : vector<2x8x128xf32> to vector<16x128xf32>
    %433 = arith.truncf %432 : vector<16x128xf32> to vector<16x128xbf16>
    %cst_160 = arith.constant dense<0.000000e+00> : vector<16x128xf32>
    %434 = tpu.matmul %433, %431, %cst_160 {dimension_numbers = #tpu.dot_dimension_numbers<[1], [0], [0], [1], [0, 0, 1, 1], [], []>} : vector<16x128xbf16>, vector<128x128xbf16>, vector<16x128xf32> -> vector<16x128xf32>
    %435 = arith.truncf %434 : vector<16x128xf32> to vector<16x128xbf16>
    %cst_161 = arith.constant dense<0.000000e+00> : vector<16x128xf32>
    %436 = tpu.matmul %34, %435, %cst_161 {dimension_numbers = #tpu.dot_dimension_numbers<[1], [0], [0], [1], [0, 0, 1, 1], [], []>} : vector<16x16xbf16>, vector<16x128xbf16>, vector<16x128xf32> -> vector<16x128xf32>
    %437 = vector.shape_cast %436 : vector<16x128xf32> to vector<2x8x128xf32>
    %cst_162 = arith.constant dense<0.000000e+00> : vector<8xf32>
    %438 = vector.multi_reduction <add>, %437, %cst_162 [0, 2] : vector<2x8x128xf32> to vector<8xf32>
    %439 = vector.shape_cast %438 : vector<8xf32> to vector<1x8x1xf32>
    %440 = arith.mulf %437, %437 : vector<2x8x128xf32>
    %cst_163 = arith.constant dense<0.000000e+00> : vector<8xf32>
    %441 = vector.multi_reduction <add>, %440, %cst_163 [0, 2] : vector<2x8x128xf32> to vector<8xf32>
    %442 = vector.shape_cast %441 : vector<8xf32> to vector<1x8x1xf32>
    %cst_164 = arith.constant 3.906250e-03 : f32
    %443 = vector.broadcast %cst_164 : f32 to vector<1x8x1xf32>
    %444 = arith.mulf %439, %443 : vector<1x8x1xf32>
    %cst_165 = arith.constant 3.906250e-03 : f32
    %445 = vector.broadcast %cst_165 : f32 to vector<1x8x1xf32>
    %446 = arith.mulf %442, %445 : vector<1x8x1xf32>
    %447 = arith.mulf %444, %444 : vector<1x8x1xf32>
    %448 = arith.subf %446, %447 : vector<1x8x1xf32>
    %c9 = arith.constant 9 : index
    %c0_166 = arith.constant 0 : index
    %c0_167 = arith.constant 0 : index
    %449 = vector.load %arg2[%c9, %c0_166, %c0_167] : memref<16x8x1xf32, #tpu.memory_space<vmem>>, vector<1x8x1xf32>
    %450 = vector.shape_cast %449 : vector<1x8x1xf32> to vector<8x1xf32>
    %451 = vector.shape_cast %450 : vector<8x1xf32> to vector<1x8x1xf32>
    %cst_168 = arith.constant 9.99999974E-6 : f32
    %452 = vector.broadcast %cst_168 : f32 to vector<1x8x1xf32>
    %453 = arith.addf %448, %452 : vector<1x8x1xf32>
    %454 = math.rsqrt %453 : vector<1x8x1xf32>
    %455 = arith.mulf %451, %454 : vector<1x8x1xf32>
    %c9_169 = arith.constant 9 : index
    %c0_170 = arith.constant 0 : index
    %c0_171 = arith.constant 0 : index
    %456 = vector.load %arg3[%c9_169, %c0_170, %c0_171] : memref<16x8x1xf32, #tpu.memory_space<vmem>>, vector<1x8x1xf32>
    %457 = vector.shape_cast %456 : vector<1x8x1xf32> to vector<8x1xf32>
    %458 = vector.shape_cast %457 : vector<8x1xf32> to vector<1x8x1xf32>
    %459 = arith.mulf %444, %455 : vector<1x8x1xf32>
    %460 = arith.subf %458, %459 : vector<1x8x1xf32>
    %461 = vector.broadcast %455 : vector<1x8x1xf32> to vector<2x8x128xf32>
    %462 = arith.mulf %437, %461 : vector<2x8x128xf32>
    %463 = vector.broadcast %460 : vector<1x8x1xf32> to vector<2x8x128xf32>
    %464 = arith.addf %462, %463 : vector<2x8x128xf32>
    %465 = arith.addf %464, %428 : vector<2x8x128xf32>
    %cst_172 = arith.constant 2.000000e+01 : f32
    %466 = vector.broadcast %cst_172 : f32 to vector<2x8x128xf32>
    %467 = arith.minimumf %465, %466 : vector<2x8x128xf32>
    %cst_173 = arith.constant 2.000000e+01 : f32
    %468 = vector.broadcast %cst_173 : f32 to vector<2x8x128xf32>
    %469 = arith.cmpf ogt, %465, %468 : vector<2x8x128xf32>
    %470 = math.exp %467 : vector<2x8x128xf32>
    %471 = math.log1p %470 : vector<2x8x128xf32>
    %472 = arith.select %469, %465, %471 : vector<2x8x128xi1>, vector<2x8x128xf32>
    %c10_i32_174 = arith.constant 10 : i32
    %473 = tpu.memref_slice %arg39[%c10_i32_174] : memref<17x!tpu.dma_semaphore, #tpu.memory_space<semaphore_mem>> -> memref<1x!tpu.dma_semaphore, #tpu.memory_space<semaphore_mem>>
    %474 = tpu.memref_squeeze %473 : memref<1x!tpu.dma_semaphore, #tpu.memory_space<semaphore_mem>> -> memref<!tpu.dma_semaphore, #tpu.memory_space<semaphore_mem>>
    tpu.wait_dma2 semaphore(%474 : memref<!tpu.dma_semaphore, #tpu.memory_space<semaphore_mem>>) src(%arg14 : memref<128x128xbf16, #tpu.memory_space<any>>) dst(%arg32 : memref<128x128xbf16, #tpu.memory_space<vmem>>)
    %c0_175 = arith.constant 0 : index
    %c0_176 = arith.constant 0 : index
    %475 = vector.load %arg32[%c0_175, %c0_176] : memref<128x128xbf16, #tpu.memory_space<vmem>>, vector<128x128xbf16>
    %476 = vector.shape_cast %472 : vector<2x8x128xf32> to vector<16x128xf32>
    %477 = arith.truncf %476 : vector<16x128xf32> to vector<16x128xbf16>
    %cst_177 = arith.constant dense<0.000000e+00> : vector<16x128xf32>
    %478 = tpu.matmul %477, %475, %cst_177 {dimension_numbers = #tpu.dot_dimension_numbers<[1], [0], [0], [1], [0, 0, 1, 1], [], []>} : vector<16x128xbf16>, vector<128x128xbf16>, vector<16x128xf32> -> vector<16x128xf32>
    %479 = arith.truncf %478 : vector<16x128xf32> to vector<16x128xbf16>
    %cst_178 = arith.constant dense<0.000000e+00> : vector<16x128xf32>
    %480 = tpu.matmul %34, %479, %cst_178 {dimension_numbers = #tpu.dot_dimension_numbers<[1], [0], [0], [1], [0, 0, 1, 1], [], []>} : vector<16x16xbf16>, vector<16x128xbf16>, vector<16x128xf32> -> vector<16x128xf32>
    %481 = vector.shape_cast %480 : vector<16x128xf32> to vector<2x8x128xf32>
    %cst_179 = arith.constant dense<0.000000e+00> : vector<8xf32>
    %482 = vector.multi_reduction <add>, %481, %cst_179 [0, 2] : vector<2x8x128xf32> to vector<8xf32>
    %483 = vector.shape_cast %482 : vector<8xf32> to vector<1x8x1xf32>
    %484 = arith.mulf %481, %481 : vector<2x8x128xf32>
    %cst_180 = arith.constant dense<0.000000e+00> : vector<8xf32>
    %485 = vector.multi_reduction <add>, %484, %cst_180 [0, 2] : vector<2x8x128xf32> to vector<8xf32>
    %486 = vector.shape_cast %485 : vector<8xf32> to vector<1x8x1xf32>
    %cst_181 = arith.constant 3.906250e-03 : f32
    %487 = vector.broadcast %cst_181 : f32 to vector<1x8x1xf32>
    %488 = arith.mulf %483, %487 : vector<1x8x1xf32>
    %cst_182 = arith.constant 3.906250e-03 : f32
    %489 = vector.broadcast %cst_182 : f32 to vector<1x8x1xf32>
    %490 = arith.mulf %486, %489 : vector<1x8x1xf32>
    %491 = arith.mulf %488, %488 : vector<1x8x1xf32>
    %492 = arith.subf %490, %491 : vector<1x8x1xf32>
    %c10 = arith.constant 10 : index
    %c0_183 = arith.constant 0 : index
    %c0_184 = arith.constant 0 : index
    %493 = vector.load %arg2[%c10, %c0_183, %c0_184] : memref<16x8x1xf32, #tpu.memory_space<vmem>>, vector<1x8x1xf32>
    %494 = vector.shape_cast %493 : vector<1x8x1xf32> to vector<8x1xf32>
    %495 = vector.shape_cast %494 : vector<8x1xf32> to vector<1x8x1xf32>
    %cst_185 = arith.constant 9.99999974E-6 : f32
    %496 = vector.broadcast %cst_185 : f32 to vector<1x8x1xf32>
    %497 = arith.addf %492, %496 : vector<1x8x1xf32>
    %498 = math.rsqrt %497 : vector<1x8x1xf32>
    %499 = arith.mulf %495, %498 : vector<1x8x1xf32>
    %c10_186 = arith.constant 10 : index
    %c0_187 = arith.constant 0 : index
    %c0_188 = arith.constant 0 : index
    %500 = vector.load %arg3[%c10_186, %c0_187, %c0_188] : memref<16x8x1xf32, #tpu.memory_space<vmem>>, vector<1x8x1xf32>
    %501 = vector.shape_cast %500 : vector<1x8x1xf32> to vector<8x1xf32>
    %502 = vector.shape_cast %501 : vector<8x1xf32> to vector<1x8x1xf32>
    %503 = arith.mulf %488, %499 : vector<1x8x1xf32>
    %504 = arith.subf %502, %503 : vector<1x8x1xf32>
    %505 = vector.broadcast %499 : vector<1x8x1xf32> to vector<2x8x128xf32>
    %506 = arith.mulf %481, %505 : vector<2x8x128xf32>
    %507 = vector.broadcast %504 : vector<1x8x1xf32> to vector<2x8x128xf32>
    %508 = arith.addf %506, %507 : vector<2x8x128xf32>
    %509 = arith.addf %508, %428 : vector<2x8x128xf32>
    %cst_189 = arith.constant 2.000000e+01 : f32
    %510 = vector.broadcast %cst_189 : f32 to vector<2x8x128xf32>
    %511 = arith.minimumf %509, %510 : vector<2x8x128xf32>
    %cst_190 = arith.constant 2.000000e+01 : f32
    %512 = vector.broadcast %cst_190 : f32 to vector<2x8x128xf32>
    %513 = arith.cmpf ogt, %509, %512 : vector<2x8x128xf32>
    %514 = math.exp %511 : vector<2x8x128xf32>
    %515 = math.log1p %514 : vector<2x8x128xf32>
    %516 = arith.select %513, %509, %515 : vector<2x8x128xi1>, vector<2x8x128xf32>
    %c11_i32_191 = arith.constant 11 : i32
    %517 = tpu.memref_slice %arg39[%c11_i32_191] : memref<17x!tpu.dma_semaphore, #tpu.memory_space<semaphore_mem>> -> memref<1x!tpu.dma_semaphore, #tpu.memory_space<semaphore_mem>>
    %518 = tpu.memref_squeeze %517 : memref<1x!tpu.dma_semaphore, #tpu.memory_space<semaphore_mem>> -> memref<!tpu.dma_semaphore, #tpu.memory_space<semaphore_mem>>
    tpu.wait_dma2 semaphore(%518 : memref<!tpu.dma_semaphore, #tpu.memory_space<semaphore_mem>>) src(%arg15 : memref<128x128xbf16, #tpu.memory_space<any>>) dst(%arg33 : memref<128x128xbf16, #tpu.memory_space<vmem>>)
    %c0_192 = arith.constant 0 : index
    %c0_193 = arith.constant 0 : index
    %519 = vector.load %arg33[%c0_192, %c0_193] : memref<128x128xbf16, #tpu.memory_space<vmem>>, vector<128x128xbf16>
    %520 = vector.shape_cast %516 : vector<2x8x128xf32> to vector<16x128xf32>
    %521 = arith.truncf %520 : vector<16x128xf32> to vector<16x128xbf16>
    %cst_194 = arith.constant dense<0.000000e+00> : vector<16x128xf32>
    %522 = tpu.matmul %521, %519, %cst_194 {dimension_numbers = #tpu.dot_dimension_numbers<[1], [0], [0], [1], [0, 0, 1, 1], [], []>} : vector<16x128xbf16>, vector<128x128xbf16>, vector<16x128xf32> -> vector<16x128xf32>
    %523 = arith.truncf %522 : vector<16x128xf32> to vector<16x128xbf16>
    %cst_195 = arith.constant dense<0.000000e+00> : vector<16x128xf32>
    %524 = tpu.matmul %34, %523, %cst_195 {dimension_numbers = #tpu.dot_dimension_numbers<[1], [0], [0], [1], [0, 0, 1, 1], [], []>} : vector<16x16xbf16>, vector<16x128xbf16>, vector<16x128xf32> -> vector<16x128xf32>
    %525 = vector.shape_cast %524 : vector<16x128xf32> to vector<2x8x128xf32>
    %cst_196 = arith.constant dense<0.000000e+00> : vector<8xf32>
    %526 = vector.multi_reduction <add>, %525, %cst_196 [0, 2] : vector<2x8x128xf32> to vector<8xf32>
    %527 = vector.shape_cast %526 : vector<8xf32> to vector<1x8x1xf32>
    %528 = arith.mulf %525, %525 : vector<2x8x128xf32>
    %cst_197 = arith.constant dense<0.000000e+00> : vector<8xf32>
    %529 = vector.multi_reduction <add>, %528, %cst_197 [0, 2] : vector<2x8x128xf32> to vector<8xf32>
    %530 = vector.shape_cast %529 : vector<8xf32> to vector<1x8x1xf32>
    %cst_198 = arith.constant 3.906250e-03 : f32
    %531 = vector.broadcast %cst_198 : f32 to vector<1x8x1xf32>
    %532 = arith.mulf %527, %531 : vector<1x8x1xf32>
    %cst_199 = arith.constant 3.906250e-03 : f32
    %533 = vector.broadcast %cst_199 : f32 to vector<1x8x1xf32>
    %534 = arith.mulf %530, %533 : vector<1x8x1xf32>
    %535 = arith.mulf %532, %532 : vector<1x8x1xf32>
    %536 = arith.subf %534, %535 : vector<1x8x1xf32>
    %c11 = arith.constant 11 : index
    %c0_200 = arith.constant 0 : index
    %c0_201 = arith.constant 0 : index
    %537 = vector.load %arg2[%c11, %c0_200, %c0_201] : memref<16x8x1xf32, #tpu.memory_space<vmem>>, vector<1x8x1xf32>
    %538 = vector.shape_cast %537 : vector<1x8x1xf32> to vector<8x1xf32>
    %539 = vector.shape_cast %538 : vector<8x1xf32> to vector<1x8x1xf32>
    %cst_202 = arith.constant 9.99999974E-6 : f32
    %540 = vector.broadcast %cst_202 : f32 to vector<1x8x1xf32>
    %541 = arith.addf %536, %540 : vector<1x8x1xf32>
    %542 = math.rsqrt %541 : vector<1x8x1xf32>
    %543 = arith.mulf %539, %542 : vector<1x8x1xf32>
    %c11_203 = arith.constant 11 : index
    %c0_204 = arith.constant 0 : index
    %c0_205 = arith.constant 0 : index
    %544 = vector.load %arg3[%c11_203, %c0_204, %c0_205] : memref<16x8x1xf32, #tpu.memory_space<vmem>>, vector<1x8x1xf32>
    %545 = vector.shape_cast %544 : vector<1x8x1xf32> to vector<8x1xf32>
    %546 = vector.shape_cast %545 : vector<8x1xf32> to vector<1x8x1xf32>
    %547 = arith.mulf %532, %543 : vector<1x8x1xf32>
    %548 = arith.subf %546, %547 : vector<1x8x1xf32>
    %549 = vector.broadcast %543 : vector<1x8x1xf32> to vector<2x8x128xf32>
    %550 = arith.mulf %525, %549 : vector<2x8x128xf32>
    %551 = vector.broadcast %548 : vector<1x8x1xf32> to vector<2x8x128xf32>
    %552 = arith.addf %550, %551 : vector<2x8x128xf32>
    %553 = arith.addf %552, %428 : vector<2x8x128xf32>
    %cst_206 = arith.constant 2.000000e+01 : f32
    %554 = vector.broadcast %cst_206 : f32 to vector<2x8x128xf32>
    %555 = arith.minimumf %553, %554 : vector<2x8x128xf32>
    %cst_207 = arith.constant 2.000000e+01 : f32
    %556 = vector.broadcast %cst_207 : f32 to vector<2x8x128xf32>
    %557 = arith.cmpf ogt, %553, %556 : vector<2x8x128xf32>
    %558 = math.exp %555 : vector<2x8x128xf32>
    %559 = math.log1p %558 : vector<2x8x128xf32>
    %560 = arith.select %557, %553, %559 : vector<2x8x128xi1>, vector<2x8x128xf32>
    %c12_i32_208 = arith.constant 12 : i32
    %561 = tpu.memref_slice %arg39[%c12_i32_208] : memref<17x!tpu.dma_semaphore, #tpu.memory_space<semaphore_mem>> -> memref<1x!tpu.dma_semaphore, #tpu.memory_space<semaphore_mem>>
    %562 = tpu.memref_squeeze %561 : memref<1x!tpu.dma_semaphore, #tpu.memory_space<semaphore_mem>> -> memref<!tpu.dma_semaphore, #tpu.memory_space<semaphore_mem>>
    tpu.wait_dma2 semaphore(%562 : memref<!tpu.dma_semaphore, #tpu.memory_space<semaphore_mem>>) src(%arg16 : memref<128x32xbf16, #tpu.memory_space<any>>) dst(%arg34 : memref<128x32xbf16, #tpu.memory_space<vmem>>)
    %c0_209 = arith.constant 0 : index
    %c0_210 = arith.constant 0 : index
    %563 = vector.load %arg34[%c0_209, %c0_210] : memref<128x32xbf16, #tpu.memory_space<vmem>>, vector<128x32xbf16>
    %564 = vector.shape_cast %560 : vector<2x8x128xf32> to vector<16x128xf32>
    %565 = arith.truncf %564 : vector<16x128xf32> to vector<16x128xbf16>
    %cst_211 = arith.constant dense<0.000000e+00> : vector<16x32xf32>
    %566 = tpu.matmul %565, %563, %cst_211 {dimension_numbers = #tpu.dot_dimension_numbers<[1], [0], [0], [1], [0, 0, 1, 1], [], []>} : vector<16x128xbf16>, vector<128x32xbf16>, vector<16x32xf32> -> vector<16x32xf32>
    %567 = arith.truncf %566 : vector<16x32xf32> to vector<16x32xbf16>
    %cst_212 = arith.constant dense<0.000000e+00> : vector<16x32xf32>
    %568 = tpu.matmul %34, %567, %cst_212 {dimension_numbers = #tpu.dot_dimension_numbers<[1], [0], [0], [1], [0, 0, 1, 1], [], []>} : vector<16x16xbf16>, vector<16x32xbf16>, vector<16x32xf32> -> vector<16x32xf32>
    %569 = vector.shape_cast %568 : vector<16x32xf32> to vector<2x8x32xf32>
    %cst_213 = arith.constant dense<0.000000e+00> : vector<8xf32>
    %570 = vector.multi_reduction <add>, %569, %cst_213 [0, 2] : vector<2x8x32xf32> to vector<8xf32>
    %571 = vector.shape_cast %570 : vector<8xf32> to vector<1x8x1xf32>
    %572 = arith.mulf %569, %569 : vector<2x8x32xf32>
    %cst_214 = arith.constant dense<0.000000e+00> : vector<8xf32>
    %573 = vector.multi_reduction <add>, %572, %cst_214 [0, 2] : vector<2x8x32xf32> to vector<8xf32>
    %574 = vector.shape_cast %573 : vector<8xf32> to vector<1x8x1xf32>
    %cst_215 = arith.constant 1.562500e-02 : f32
    %575 = vector.broadcast %cst_215 : f32 to vector<1x8x1xf32>
    %576 = arith.mulf %571, %575 : vector<1x8x1xf32>
    %cst_216 = arith.constant 1.562500e-02 : f32
    %577 = vector.broadcast %cst_216 : f32 to vector<1x8x1xf32>
    %578 = arith.mulf %574, %577 : vector<1x8x1xf32>
    %579 = arith.mulf %576, %576 : vector<1x8x1xf32>
    %580 = arith.subf %578, %579 : vector<1x8x1xf32>
    %c12 = arith.constant 12 : index
    %c0_217 = arith.constant 0 : index
    %c0_218 = arith.constant 0 : index
    %581 = vector.load %arg2[%c12, %c0_217, %c0_218] : memref<16x8x1xf32, #tpu.memory_space<vmem>>, vector<1x8x1xf32>
    %582 = vector.shape_cast %581 : vector<1x8x1xf32> to vector<8x1xf32>
    %583 = vector.shape_cast %582 : vector<8x1xf32> to vector<1x8x1xf32>
    %cst_219 = arith.constant 9.99999974E-6 : f32
    %584 = vector.broadcast %cst_219 : f32 to vector<1x8x1xf32>
    %585 = arith.addf %580, %584 : vector<1x8x1xf32>
    %586 = math.rsqrt %585 : vector<1x8x1xf32>
    %587 = arith.mulf %583, %586 : vector<1x8x1xf32>
    %c12_220 = arith.constant 12 : index
    %c0_221 = arith.constant 0 : index
    %c0_222 = arith.constant 0 : index
    %588 = vector.load %arg3[%c12_220, %c0_221, %c0_222] : memref<16x8x1xf32, #tpu.memory_space<vmem>>, vector<1x8x1xf32>
    %589 = vector.shape_cast %588 : vector<1x8x1xf32> to vector<8x1xf32>
    %590 = vector.shape_cast %589 : vector<8x1xf32> to vector<1x8x1xf32>
    %591 = arith.mulf %576, %587 : vector<1x8x1xf32>
    %592 = arith.subf %590, %591 : vector<1x8x1xf32>
    %593 = vector.broadcast %587 : vector<1x8x1xf32> to vector<2x8x32xf32>
    %594 = arith.mulf %569, %593 : vector<2x8x32xf32>
    %595 = vector.broadcast %592 : vector<1x8x1xf32> to vector<2x8x32xf32>
    %596 = arith.addf %594, %595 : vector<2x8x32xf32>
    %cst_223 = arith.constant 2.000000e+01 : f32
    %597 = vector.broadcast %cst_223 : f32 to vector<2x8x32xf32>
    %598 = arith.minimumf %596, %597 : vector<2x8x32xf32>
    %cst_224 = arith.constant 2.000000e+01 : f32
    %599 = vector.broadcast %cst_224 : f32 to vector<2x8x32xf32>
    %600 = arith.cmpf ogt, %596, %599 : vector<2x8x32xf32>
    %601 = math.exp %598 : vector<2x8x32xf32>
    %602 = math.log1p %601 : vector<2x8x32xf32>
    %603 = arith.select %600, %596, %602 : vector<2x8x32xi1>, vector<2x8x32xf32>
    %c13_i32_225 = arith.constant 13 : i32
    %604 = tpu.memref_slice %arg39[%c13_i32_225] : memref<17x!tpu.dma_semaphore, #tpu.memory_space<semaphore_mem>> -> memref<1x!tpu.dma_semaphore, #tpu.memory_space<semaphore_mem>>
    %605 = tpu.memref_squeeze %604 : memref<1x!tpu.dma_semaphore, #tpu.memory_space<semaphore_mem>> -> memref<!tpu.dma_semaphore, #tpu.memory_space<semaphore_mem>>
    tpu.wait_dma2 semaphore(%605 : memref<!tpu.dma_semaphore, #tpu.memory_space<semaphore_mem>>) src(%arg17 : memref<32x32xbf16, #tpu.memory_space<any>>) dst(%arg35 : memref<32x32xbf16, #tpu.memory_space<vmem>>)
    %c0_226 = arith.constant 0 : index
    %c0_227 = arith.constant 0 : index
    %606 = vector.load %arg35[%c0_226, %c0_227] : memref<32x32xbf16, #tpu.memory_space<vmem>>, vector<32x32xbf16>
    %607 = vector.shape_cast %603 : vector<2x8x32xf32> to vector<16x32xf32>
    %608 = arith.truncf %607 : vector<16x32xf32> to vector<16x32xbf16>
    %cst_228 = arith.constant dense<0.000000e+00> : vector<16x32xf32>
    %609 = tpu.matmul %608, %606, %cst_228 {dimension_numbers = #tpu.dot_dimension_numbers<[1], [0], [0], [1], [0, 0, 1, 1], [], []>} : vector<16x32xbf16>, vector<32x32xbf16>, vector<16x32xf32> -> vector<16x32xf32>
    %610 = arith.truncf %609 : vector<16x32xf32> to vector<16x32xbf16>
    %cst_229 = arith.constant dense<0.000000e+00> : vector<16x32xf32>
    %611 = tpu.matmul %34, %610, %cst_229 {dimension_numbers = #tpu.dot_dimension_numbers<[1], [0], [0], [1], [0, 0, 1, 1], [], []>} : vector<16x16xbf16>, vector<16x32xbf16>, vector<16x32xf32> -> vector<16x32xf32>
    %612 = vector.shape_cast %611 : vector<16x32xf32> to vector<2x8x32xf32>
    %cst_230 = arith.constant dense<0.000000e+00> : vector<8xf32>
    %613 = vector.multi_reduction <add>, %612, %cst_230 [0, 2] : vector<2x8x32xf32> to vector<8xf32>
    %614 = vector.shape_cast %613 : vector<8xf32> to vector<1x8x1xf32>
    %615 = arith.mulf %612, %612 : vector<2x8x32xf32>
    %cst_231 = arith.constant dense<0.000000e+00> : vector<8xf32>
    %616 = vector.multi_reduction <add>, %615, %cst_231 [0, 2] : vector<2x8x32xf32> to vector<8xf32>
    %617 = vector.shape_cast %616 : vector<8xf32> to vector<1x8x1xf32>
    %cst_232 = arith.constant 1.562500e-02 : f32
    %618 = vector.broadcast %cst_232 : f32 to vector<1x8x1xf32>
    %619 = arith.mulf %614, %618 : vector<1x8x1xf32>
    %cst_233 = arith.constant 1.562500e-02 : f32
    %620 = vector.broadcast %cst_233 : f32 to vector<1x8x1xf32>
    %621 = arith.mulf %617, %620 : vector<1x8x1xf32>
    %622 = arith.mulf %619, %619 : vector<1x8x1xf32>
    %623 = arith.subf %621, %622 : vector<1x8x1xf32>
    %c13 = arith.constant 13 : index
    %c0_234 = arith.constant 0 : index
    %c0_235 = arith.constant 0 : index
    %624 = vector.load %arg2[%c13, %c0_234, %c0_235] : memref<16x8x1xf32, #tpu.memory_space<vmem>>, vector<1x8x1xf32>
    %625 = vector.shape_cast %624 : vector<1x8x1xf32> to vector<8x1xf32>
    %626 = vector.shape_cast %625 : vector<8x1xf32> to vector<1x8x1xf32>
    %cst_236 = arith.constant 9.99999974E-6 : f32
    %627 = vector.broadcast %cst_236 : f32 to vector<1x8x1xf32>
    %628 = arith.addf %623, %627 : vector<1x8x1xf32>
    %629 = math.rsqrt %628 : vector<1x8x1xf32>
    %630 = arith.mulf %626, %629 : vector<1x8x1xf32>
    %c13_237 = arith.constant 13 : index
    %c0_238 = arith.constant 0 : index
    %c0_239 = arith.constant 0 : index
    %631 = vector.load %arg3[%c13_237, %c0_238, %c0_239] : memref<16x8x1xf32, #tpu.memory_space<vmem>>, vector<1x8x1xf32>
    %632 = vector.shape_cast %631 : vector<1x8x1xf32> to vector<8x1xf32>
    %633 = vector.shape_cast %632 : vector<8x1xf32> to vector<1x8x1xf32>
    %634 = arith.mulf %619, %630 : vector<1x8x1xf32>
    %635 = arith.subf %633, %634 : vector<1x8x1xf32>
    %636 = vector.broadcast %630 : vector<1x8x1xf32> to vector<2x8x32xf32>
    %637 = arith.mulf %612, %636 : vector<2x8x32xf32>
    %638 = vector.broadcast %635 : vector<1x8x1xf32> to vector<2x8x32xf32>
    %639 = arith.addf %637, %638 : vector<2x8x32xf32>
    %640 = arith.addf %639, %603 : vector<2x8x32xf32>
    %cst_240 = arith.constant 2.000000e+01 : f32
    %641 = vector.broadcast %cst_240 : f32 to vector<2x8x32xf32>
    %642 = arith.minimumf %640, %641 : vector<2x8x32xf32>
    %cst_241 = arith.constant 2.000000e+01 : f32
    %643 = vector.broadcast %cst_241 : f32 to vector<2x8x32xf32>
    %644 = arith.cmpf ogt, %640, %643 : vector<2x8x32xf32>
    %645 = math.exp %642 : vector<2x8x32xf32>
    %646 = math.log1p %645 : vector<2x8x32xf32>
    %647 = arith.select %644, %640, %646 : vector<2x8x32xi1>, vector<2x8x32xf32>
    %c14_i32_242 = arith.constant 14 : i32
    %648 = tpu.memref_slice %arg39[%c14_i32_242] : memref<17x!tpu.dma_semaphore, #tpu.memory_space<semaphore_mem>> -> memref<1x!tpu.dma_semaphore, #tpu.memory_space<semaphore_mem>>
    %649 = tpu.memref_squeeze %648 : memref<1x!tpu.dma_semaphore, #tpu.memory_space<semaphore_mem>> -> memref<!tpu.dma_semaphore, #tpu.memory_space<semaphore_mem>>
    tpu.wait_dma2 semaphore(%649 : memref<!tpu.dma_semaphore, #tpu.memory_space<semaphore_mem>>) src(%arg18 : memref<32x32xbf16, #tpu.memory_space<any>>) dst(%arg36 : memref<32x32xbf16, #tpu.memory_space<vmem>>)
    %c0_243 = arith.constant 0 : index
    %c0_244 = arith.constant 0 : index
    %650 = vector.load %arg36[%c0_243, %c0_244] : memref<32x32xbf16, #tpu.memory_space<vmem>>, vector<32x32xbf16>
    %651 = vector.shape_cast %647 : vector<2x8x32xf32> to vector<16x32xf32>
    %652 = arith.truncf %651 : vector<16x32xf32> to vector<16x32xbf16>
    %cst_245 = arith.constant dense<0.000000e+00> : vector<16x32xf32>
    %653 = tpu.matmul %652, %650, %cst_245 {dimension_numbers = #tpu.dot_dimension_numbers<[1], [0], [0], [1], [0, 0, 1, 1], [], []>} : vector<16x32xbf16>, vector<32x32xbf16>, vector<16x32xf32> -> vector<16x32xf32>
    %654 = arith.truncf %653 : vector<16x32xf32> to vector<16x32xbf16>
    %cst_246 = arith.constant dense<0.000000e+00> : vector<16x32xf32>
    %655 = tpu.matmul %34, %654, %cst_246 {dimension_numbers = #tpu.dot_dimension_numbers<[1], [0], [0], [1], [0, 0, 1, 1], [], []>} : vector<16x16xbf16>, vector<16x32xbf16>, vector<16x32xf32> -> vector<16x32xf32>
    %656 = vector.shape_cast %655 : vector<16x32xf32> to vector<2x8x32xf32>
    %cst_247 = arith.constant dense<0.000000e+00> : vector<8xf32>
    %657 = vector.multi_reduction <add>, %656, %cst_247 [0, 2] : vector<2x8x32xf32> to vector<8xf32>
    %658 = vector.shape_cast %657 : vector<8xf32> to vector<1x8x1xf32>
    %659 = arith.mulf %656, %656 : vector<2x8x32xf32>
    %cst_248 = arith.constant dense<0.000000e+00> : vector<8xf32>
    %660 = vector.multi_reduction <add>, %659, %cst_248 [0, 2] : vector<2x8x32xf32> to vector<8xf32>
    %661 = vector.shape_cast %660 : vector<8xf32> to vector<1x8x1xf32>
    %cst_249 = arith.constant 1.562500e-02 : f32
    %662 = vector.broadcast %cst_249 : f32 to vector<1x8x1xf32>
    %663 = arith.mulf %658, %662 : vector<1x8x1xf32>
    %cst_250 = arith.constant 1.562500e-02 : f32
    %664 = vector.broadcast %cst_250 : f32 to vector<1x8x1xf32>
    %665 = arith.mulf %661, %664 : vector<1x8x1xf32>
    %666 = arith.mulf %663, %663 : vector<1x8x1xf32>
    %667 = arith.subf %665, %666 : vector<1x8x1xf32>
    %c14 = arith.constant 14 : index
    %c0_251 = arith.constant 0 : index
    %c0_252 = arith.constant 0 : index
    %668 = vector.load %arg2[%c14, %c0_251, %c0_252] : memref<16x8x1xf32, #tpu.memory_space<vmem>>, vector<1x8x1xf32>
    %669 = vector.shape_cast %668 : vector<1x8x1xf32> to vector<8x1xf32>
    %670 = vector.shape_cast %669 : vector<8x1xf32> to vector<1x8x1xf32>
    %cst_253 = arith.constant 9.99999974E-6 : f32
    %671 = vector.broadcast %cst_253 : f32 to vector<1x8x1xf32>
    %672 = arith.addf %667, %671 : vector<1x8x1xf32>
    %673 = math.rsqrt %672 : vector<1x8x1xf32>
    %674 = arith.mulf %670, %673 : vector<1x8x1xf32>
    %c14_254 = arith.constant 14 : index
    %c0_255 = arith.constant 0 : index
    %c0_256 = arith.constant 0 : index
    %675 = vector.load %arg3[%c14_254, %c0_255, %c0_256] : memref<16x8x1xf32, #tpu.memory_space<vmem>>, vector<1x8x1xf32>
    %676 = vector.shape_cast %675 : vector<1x8x1xf32> to vector<8x1xf32>
    %677 = vector.shape_cast %676 : vector<8x1xf32> to vector<1x8x1xf32>
    %678 = arith.mulf %663, %674 : vector<1x8x1xf32>
    %679 = arith.subf %677, %678 : vector<1x8x1xf32>
    %680 = vector.broadcast %674 : vector<1x8x1xf32> to vector<2x8x32xf32>
    %681 = arith.mulf %656, %680 : vector<2x8x32xf32>
    %682 = vector.broadcast %679 : vector<1x8x1xf32> to vector<2x8x32xf32>
    %683 = arith.addf %681, %682 : vector<2x8x32xf32>
    %684 = arith.addf %683, %603 : vector<2x8x32xf32>
    %cst_257 = arith.constant 2.000000e+01 : f32
    %685 = vector.broadcast %cst_257 : f32 to vector<2x8x32xf32>
    %686 = arith.minimumf %684, %685 : vector<2x8x32xf32>
    %cst_258 = arith.constant 2.000000e+01 : f32
    %687 = vector.broadcast %cst_258 : f32 to vector<2x8x32xf32>
    %688 = arith.cmpf ogt, %684, %687 : vector<2x8x32xf32>
    %689 = math.exp %686 : vector<2x8x32xf32>
    %690 = math.log1p %689 : vector<2x8x32xf32>
    %691 = arith.select %688, %684, %690 : vector<2x8x32xi1>, vector<2x8x32xf32>
    %c15_i32_259 = arith.constant 15 : i32
    %692 = tpu.memref_slice %arg39[%c15_i32_259] : memref<17x!tpu.dma_semaphore, #tpu.memory_space<semaphore_mem>> -> memref<1x!tpu.dma_semaphore, #tpu.memory_space<semaphore_mem>>
    %693 = tpu.memref_squeeze %692 : memref<1x!tpu.dma_semaphore, #tpu.memory_space<semaphore_mem>> -> memref<!tpu.dma_semaphore, #tpu.memory_space<semaphore_mem>>
    tpu.wait_dma2 semaphore(%693 : memref<!tpu.dma_semaphore, #tpu.memory_space<semaphore_mem>>) src(%arg19 : memref<32x32xbf16, #tpu.memory_space<any>>) dst(%arg37 : memref<32x32xbf16, #tpu.memory_space<vmem>>)
    %c0_260 = arith.constant 0 : index
    %c0_261 = arith.constant 0 : index
    %694 = vector.load %arg37[%c0_260, %c0_261] : memref<32x32xbf16, #tpu.memory_space<vmem>>, vector<32x32xbf16>
    %695 = vector.shape_cast %691 : vector<2x8x32xf32> to vector<16x32xf32>
    %696 = arith.truncf %695 : vector<16x32xf32> to vector<16x32xbf16>
    %cst_262 = arith.constant dense<0.000000e+00> : vector<16x32xf32>
    %697 = tpu.matmul %696, %694, %cst_262 {dimension_numbers = #tpu.dot_dimension_numbers<[1], [0], [0], [1], [0, 0, 1, 1], [], []>} : vector<16x32xbf16>, vector<32x32xbf16>, vector<16x32xf32> -> vector<16x32xf32>
    %698 = arith.truncf %697 : vector<16x32xf32> to vector<16x32xbf16>
    %cst_263 = arith.constant dense<0.000000e+00> : vector<16x32xf32>
    %699 = tpu.matmul %34, %698, %cst_263 {dimension_numbers = #tpu.dot_dimension_numbers<[1], [0], [0], [1], [0, 0, 1, 1], [], []>} : vector<16x16xbf16>, vector<16x32xbf16>, vector<16x32xf32> -> vector<16x32xf32>
    %700 = vector.shape_cast %699 : vector<16x32xf32> to vector<2x8x32xf32>
    %cst_264 = arith.constant dense<0.000000e+00> : vector<8xf32>
    %701 = vector.multi_reduction <add>, %700, %cst_264 [0, 2] : vector<2x8x32xf32> to vector<8xf32>
    %702 = vector.shape_cast %701 : vector<8xf32> to vector<1x8x1xf32>
    %703 = arith.mulf %700, %700 : vector<2x8x32xf32>
    %cst_265 = arith.constant dense<0.000000e+00> : vector<8xf32>
    %704 = vector.multi_reduction <add>, %703, %cst_265 [0, 2] : vector<2x8x32xf32> to vector<8xf32>
    %705 = vector.shape_cast %704 : vector<8xf32> to vector<1x8x1xf32>
    %cst_266 = arith.constant 1.562500e-02 : f32
    %706 = vector.broadcast %cst_266 : f32 to vector<1x8x1xf32>
    %707 = arith.mulf %702, %706 : vector<1x8x1xf32>
    %cst_267 = arith.constant 1.562500e-02 : f32
    %708 = vector.broadcast %cst_267 : f32 to vector<1x8x1xf32>
    %709 = arith.mulf %705, %708 : vector<1x8x1xf32>
    %710 = arith.mulf %707, %707 : vector<1x8x1xf32>
    %711 = arith.subf %709, %710 : vector<1x8x1xf32>
    %c15 = arith.constant 15 : index
    %c0_268 = arith.constant 0 : index
    %c0_269 = arith.constant 0 : index
    %712 = vector.load %arg2[%c15, %c0_268, %c0_269] : memref<16x8x1xf32, #tpu.memory_space<vmem>>, vector<1x8x1xf32>
    %713 = vector.shape_cast %712 : vector<1x8x1xf32> to vector<8x1xf32>
    %714 = vector.shape_cast %713 : vector<8x1xf32> to vector<1x8x1xf32>
    %cst_270 = arith.constant 9.99999974E-6 : f32
    %715 = vector.broadcast %cst_270 : f32 to vector<1x8x1xf32>
    %716 = arith.addf %711, %715 : vector<1x8x1xf32>
    %717 = math.rsqrt %716 : vector<1x8x1xf32>
    %718 = arith.mulf %714, %717 : vector<1x8x1xf32>
    %c15_271 = arith.constant 15 : index
    %c0_272 = arith.constant 0 : index
    %c0_273 = arith.constant 0 : index
    %719 = vector.load %arg3[%c15_271, %c0_272, %c0_273] : memref<16x8x1xf32, #tpu.memory_space<vmem>>, vector<1x8x1xf32>
    %720 = vector.shape_cast %719 : vector<1x8x1xf32> to vector<8x1xf32>
    %721 = vector.shape_cast %720 : vector<8x1xf32> to vector<1x8x1xf32>
    %722 = arith.mulf %707, %718 : vector<1x8x1xf32>
    %723 = arith.subf %721, %722 : vector<1x8x1xf32>
    %724 = vector.broadcast %718 : vector<1x8x1xf32> to vector<2x8x32xf32>
    %725 = arith.mulf %700, %724 : vector<2x8x32xf32>
    %726 = vector.broadcast %723 : vector<1x8x1xf32> to vector<2x8x32xf32>
    %727 = arith.addf %725, %726 : vector<2x8x32xf32>
    %728 = arith.addf %727, %603 : vector<2x8x32xf32>
    %cst_274 = arith.constant 2.000000e+01 : f32
    %729 = vector.broadcast %cst_274 : f32 to vector<2x8x32xf32>
    %730 = arith.minimumf %728, %729 : vector<2x8x32xf32>
    %cst_275 = arith.constant 2.000000e+01 : f32
    %731 = vector.broadcast %cst_275 : f32 to vector<2x8x32xf32>
    %732 = arith.cmpf ogt, %728, %731 : vector<2x8x32xf32>
    %733 = math.exp %730 : vector<2x8x32xf32>
    %734 = math.log1p %733 : vector<2x8x32xf32>
    %735 = arith.select %732, %728, %734 : vector<2x8x32xi1>, vector<2x8x32xf32>
    %c16_i32_276 = arith.constant 16 : i32
    %736 = tpu.memref_slice %arg39[%c16_i32_276] : memref<17x!tpu.dma_semaphore, #tpu.memory_space<semaphore_mem>> -> memref<1x!tpu.dma_semaphore, #tpu.memory_space<semaphore_mem>>
    %737 = tpu.memref_squeeze %736 : memref<1x!tpu.dma_semaphore, #tpu.memory_space<semaphore_mem>> -> memref<!tpu.dma_semaphore, #tpu.memory_space<semaphore_mem>>
    tpu.wait_dma2 semaphore(%737 : memref<!tpu.dma_semaphore, #tpu.memory_space<semaphore_mem>>) src(%arg20 : memref<32x1xbf16, #tpu.memory_space<any>>) dst(%arg38 : memref<32x1xbf16, #tpu.memory_space<vmem>>)
    %c0_277 = arith.constant 0 : index
    %c0_278 = arith.constant 0 : index
    %738 = vector.load %arg38[%c0_277, %c0_278] : memref<32x1xbf16, #tpu.memory_space<vmem>>, vector<32x1xbf16>
    %739 = vector.shape_cast %735 : vector<2x8x32xf32> to vector<16x32xf32>
    %740 = arith.truncf %739 : vector<16x32xf32> to vector<16x32xbf16>
    %cst_279 = arith.constant dense<0.000000e+00> : vector<16x1xf32>
    %741 = tpu.matmul %740, %738, %cst_279 {dimension_numbers = #tpu.dot_dimension_numbers<[1], [0], [0], [1], [0, 0, 1, 1], [], []>} : vector<16x32xbf16>, vector<32x1xbf16>, vector<16x1xf32> -> vector<16x1xf32>
    %742 = arith.truncf %741 : vector<16x1xf32> to vector<16x1xbf16>
    %cst_280 = arith.constant dense<0.000000e+00> : vector<16x1xf32>
    %743 = tpu.matmul %34, %742, %cst_280 {dimension_numbers = #tpu.dot_dimension_numbers<[1], [0], [0], [1], [0, 0, 1, 1], [], []>} : vector<16x16xbf16>, vector<16x1xbf16>, vector<16x1xf32> -> vector<16x1xf32>
    %744 = vector.shape_cast %743 : vector<16x1xf32> to vector<2x8x1xf32>
    %cst_281 = arith.constant 2.000000e+01 : f32
    %745 = vector.broadcast %cst_281 : f32 to vector<2x8x1xf32>
    %746 = arith.minimumf %744, %745 : vector<2x8x1xf32>
    %cst_282 = arith.constant 2.000000e+01 : f32
    %747 = vector.broadcast %cst_282 : f32 to vector<2x8x1xf32>
    %748 = arith.cmpf ogt, %744, %747 : vector<2x8x1xf32>
    %749 = math.exp %746 : vector<2x8x1xf32>
    %750 = math.log1p %749 : vector<2x8x1xf32>
    %751 = arith.select %748, %744, %750 : vector<2x8x1xi1>, vector<2x8x1xf32>
    %c0_283 = arith.constant 0 : index
    %c0_284 = arith.constant 0 : index
    %c0_285 = arith.constant 0 : index
    %752 = vector.load %arg21[%c0_283, %c0_284, %c0_285] : memref<2x8x1xf32, #tpu.memory_space<vmem>>, vector<2x8x1xf32>
    tpu.vector_store %arg21[%c0_283, %c0_284, %c0_285], %751 {strides = array<i32>} : memref<2x8x1xf32, #tpu.memory_space<vmem>>, vector<2x8x1xf32>,
    return
  }
}

</mosaic_0001>

<llo_original>
// kernel: hgcnnet_forward.1
$region0: #{hgcnnet_forward.1}
  #allocation0 [shape = 'u32[]', space=smem, size = 0x4, offset = 0x4, fixed_abs, tag = 'smem constant byte address 0x4 - core index']
  #allocation1 [shape = 'u32[144,128]{1,0:T(1,128)}', space=vmem, size = 0x12000, scoped, tag = 'internal scratch']
  #allocation2 [shape = 'bf16[1024,512]{1,0:T(16,128)(2,1)}', space=vmem, size = 0x100000, scoped, tag = 'scratch operand']
  #allocation3 [shape = 'bf16[512,512]{1,0:T(16,128)(2,1)}', space=vmem, size = 0x80000, scoped, tag = 'scratch operand']
  #allocation4 [shape = 'bf16[512,512]{1,0:T(16,128)(2,1)}', space=vmem, size = 0x80000, scoped, tag = 'scratch operand']
  #allocation5 [shape = 'bf16[512,512]{1,0:T(16,128)(2,1)}', space=vmem, size = 0x80000, scoped, tag = 'scratch operand']
  #allocation6 [shape = 'bf16[512,256]{1,0:T(16,128)(2,1)}', space=vmem, size = 0x40000, scoped, tag = 'scratch operand']
  #allocation7 [shape = 'bf16[256,256]{1,0:T(16,128)(2,1)}', space=vmem, size = 0x20000, scoped, tag = 'scratch operand']
  #allocation8 [shape = 'bf16[256,256]{1,0:T(16,128)(2,1)}', space=vmem, size = 0x20000, scoped, tag = 'scratch operand']
  #allocation9 [shape = 'bf16[256,256]{1,0:T(16,128)(2,1)}', space=vmem, size = 0x20000, scoped, tag = 'scratch operand']
  #allocation10 [shape = 'bf16[256,128]{1,0:T(16,128)(2,1)}', space=vmem, size = 0x10000, scoped, tag = 'scratch operand']
  #allocation11 [shape = 'bf16[128,128]{1,0:T(16,128)(2,1)}', space=vmem, size = 0x8000, scoped, tag = 'scratch operand']
  #allocation12 [shape = 'bf16[128,128]{1,0:T(16,128)(2,1)}', space=vmem, size = 0x8000, scoped, tag = 'scratch operand']
  #allocation13 [shape = 'bf16[128,128]{1,0:T(16,128)(2,1)}', space=vmem, size = 0x8000, scoped, tag = 'scratch operand']
  #allocation14 [shape = 'bf16[128,32]{1,0:T(16,128)(2,1)}', space=vmem, size = 0x8000, scoped, tag = 'scratch operand']
  #allocation15 [shape = 'bf16[32,32]{1,0:T(16,128)(2,1)}', space=vmem, size = 0x2000, scoped, tag = 'scratch operand']
  #allocation16 [shape = 'bf16[32,32]{1,0:T(16,128)(2,1)}', space=vmem, size = 0x2000, scoped, tag = 'scratch operand']
  #allocation17 [shape = 'bf16[32,32]{1,0:T(16,128)(2,1)}', space=vmem, size = 0x2000, scoped, tag = 'scratch operand']
  #allocation18 [shape = 'bf16[32,1]{1,0:T(16,128)(2,1)}', space=vmem, size = 0x2000, scoped, tag = 'scratch operand']
  #allocation19 [shape = 's32[17]{0}', space=sflag, size = 0x44, scoped, tag = 'scratch operand']
  #allocation22 [shape = 's32[]', space=sflag, size = 0x4, offset = 0, fixed_abs, tag = 'sflag constant byte address 0x0 - dummy sync flag']
  #allocation24 [shape = 's32[]', space=sflag, size = 0x4, offset = 0, fixed_abs, tag = 'sflag constant byte address 0x0 - dummy sync flag']
  #allocation26 [shape = 's32[]', space=sflag, size = 0x4, offset = 0, fixed_abs, tag = 'sflag constant byte address 0x0 - dummy sync flag']
  #allocation28 [shape = 's32[]', space=sflag, size = 0x4, offset = 0, fixed_abs, tag = 'sflag constant byte address 0x0 - dummy sync flag']
  #allocation30 [shape = 's32[]', space=sflag, size = 0x4, offset = 0, fixed_abs, tag = 'sflag constant byte address 0x0 - dummy sync flag']
  #allocation32 [shape = 's32[]', space=sflag, size = 0x4, offset = 0, fixed_abs, tag = 'sflag constant byte address 0x0 - dummy sync flag']
  #allocation33 [shape = 's32[]', space=sflag, size = 0x4, offset = 0, fixed_abs, tag = 'sflag constant byte address 0x0 - dummy sync flag']
  #allocation35 [shape = 's32[]', space=sflag, size = 0x4, offset = 0, fixed_abs, tag = 'sflag constant byte address 0x0 - dummy sync flag']
  #allocation37 [shape = 's32[]', space=sflag, size = 0x4, offset = 0, fixed_abs, tag = 'sflag constant byte address 0x0 - dummy sync flag']
  #allocation38 [shape = 's32[]', space=sflag, size = 0x4, offset = 0, fixed_abs, tag = 'sflag constant byte address 0x0 - dummy sync flag']
  #allocation39 [shape = 'u32[]', space=smem, size = 0x4, offset = 0x44, fixed_abs, tag = 'smem constant byte address 0x44 - assertion arg 0']
  #allocation40 [shape = 'u32[]', space=smem, size = 0x4, offset = 0x48, fixed_abs, tag = 'smem constant byte address 0x48 - assertion arg 1']
  #allocation41 [shape = 's32[]', space=sflag, size = 0x4, offset = 0, fixed_abs, tag = 'sflag constant byte address 0x0 - dummy sync flag']
  #allocation42 [shape = 's32[]', space=sflag, size = 0x4, offset = 0, fixed_abs, tag = 'sflag constant byte address 0x0 - dummy sync flag']
  #allocation43 [shape = 's32[]', space=sflag, size = 0x4, offset = 0, fixed_abs, tag = 'sflag constant byte address 0x0 - dummy sync flag']
  #allocation44 [shape = 's32[]', space=sflag, size = 0x4, offset = 0, fixed_abs, tag = 'sflag constant byte address 0x0 - dummy sync flag']
  #allocation45 [shape = 's32[]', space=sflag, size = 0x4, offset = 0, fixed_abs, tag = 'sflag constant byte address 0x0 - dummy sync flag']
  #allocation46 [shape = 's32[]', space=sflag, size = 0x4, offset = 0, fixed_abs, tag = 'sflag constant byte address 0x0 - dummy sync flag']
  #allocation47 [shape = 's32[]', space=sflag, size = 0x4, offset = 0, fixed_abs, tag = 'sflag constant byte address 0x0 - dummy sync flag']
  #allocation48 [shape = 's32[]', space=sflag, size = 0x4, offset = 0, fixed_abs, tag = 'sflag constant byte address 0x0 - dummy sync flag']
  #allocation49 [shape = 's32[]', space=sflag, size = 0x4, offset = 0, fixed_abs, tag = 'sflag constant byte address 0x0 - dummy sync flag']
  #allocation50 [shape = 's32[]', space=sflag, size = 0x4, offset = 0, fixed_abs, tag = 'sflag constant byte address 0x0 - dummy sync flag']
  #allocation51 [shape = 's32[]', space=sflag, size = 0x4, offset = 0, fixed_abs, tag = 'sflag constant byte address 0x0 - dummy sync flag']
  %s0 = inlined_call_operand.vmem [shape: f32[2,8,1024], index: 0, kind: input, shape index: {}]
  %s1 = inlined_call_operand.hbm [shape: bf16[16,16], index: 1, kind: input, shape index: {}]
  %s2 = inlined_call_operand.vmem [shape: f32[16,8,1], index: 2, kind: input, shape index: {}]
  %s3 = inlined_call_operand.vmem [shape: f32[16,8,1], index: 3, kind: input, shape index: {}]
  %s4 = inlined_call_operand.hbm [shape: bf16[1024,512], index: 4, kind: input, shape index: {}]
  %s5 = inlined_call_operand.hbm [shape: bf16[512,512], index: 5, kind: input, shape index: {}]
  %s6 = inlined_call_operand.hbm [shape: bf16[512,512], index: 6, kind: input, shape index: {}]
  %s7 = inlined_call_operand.hbm [shape: bf16[512,512], index: 7, kind: input, shape index: {}]
  %s8 = inlined_call_operand.hbm [shape: bf16[512,256], index: 8, kind: input, shape index: {}]
  %s9 = inlined_call_operand.vmem [shape: bf16[256,256], index: 9, kind: input, shape index: {}]
  %s10 = inlined_call_operand.hbm [shape: bf16[256,256], index: 10, kind: input, shape index: {}]
  %s11 = inlined_call_operand.hbm [shape: bf16[256,256], index: 11, kind: input, shape index: {}]
  %s12 = inlined_call_operand.hbm [shape: bf16[256,128], index: 12, kind: input, shape index: {}]
  %s13 = inlined_call_operand.hbm [shape: bf16[128,128], index: 13, kind: input, shape index: {}]
  %s14 = inlined_call_operand.hbm [shape: bf16[128,128], index: 14, kind: input, shape index: {}]
  %s15 = inlined_call_operand.hbm [shape: bf16[128,128], index: 15, kind: input, shape index: {}]
  %s16 = inlined_call_operand.vmem [shape: bf16[128,32], index: 16, kind: input, shape index: {}]
  %s17 = inlined_call_operand.vmem [shape: bf16[32,32], index: 17, kind: input, shape index: {}]
  %s18 = inlined_call_operand.vmem [shape: bf16[32,32], index: 18, kind: input, shape index: {}]
  %s19 = inlined_call_operand.vmem [shape: bf16[32,32], index: 19, kind: input, shape index: {}]
  %s20 = inlined_call_operand.vmem [shape: bf16[32,1], index: 20, kind: input, shape index: {}]
  %s21 = inlined_call_operand.vmem [shape: f32[2,8,1], index: 21, kind: output, shape index: {}]
  %s22 = sld [smem:[#allocation0]]
  $region253: #{hgcnnet_forward.1} parent=0
    _
  %s24 = ssub.s32 1, %s22
  %s25 = scalar_select 0, %s24, %s22
  $region1: #{hgcnnet_forward.1} parent=0
    #allocation20 [shape = 'u8[4096]{0}', space=vmem, size = 0x1000, scoped, tag = 'input window, operand 1, single buffered']
    #allocation21 [shape = 's32[1]{0}', space=sflag, size = 0x4, scoped, tag = 'scoped memory for hgcnnet_forward.1']
    #allocation23 [shape = 'u32[9]{0}', space=smem, size = 0x24, scoped, tag = 'DMA stride descriptor']
    #allocation25 [shape = 'u32[9]{0}', space=smem, size = 0x24, scoped, tag = 'DMA stride descriptor']
    #allocation27 [shape = 'u32[9]{0}', space=smem, size = 0x24, scoped, tag = 'DMA stride descriptor']
    #allocation29 [shape = 'u32[9]{0}', space=smem, size = 0x24, scoped, tag = 'DMA stride descriptor']
    #allocation31 [shape = 'u32[9]{0}', space=smem, size = 0x24, scoped, tag = 'DMA stride descriptor']
    #allocation34 [shape = 'u32[9]{0}', space=smem, size = 0x24, scoped, tag = 'DMA stride descriptor']
    #allocation36 [shape = 'u32[9]{0}', space=smem, size = 0x24, scoped, tag = 'DMA stride descriptor']
    %26 = vsyncpa [#allocation21], 0
    // Predicated region
    $region2: #{hgcnnet_forward.1} parent=1 // pred_check
      _
    $region3: #{hgcnnet_forward.1} parent=1 // pred_check_branch
      %28 = sbr.rel (0) target = $region5
    $region4: #{hgcnnet_forward.1} parent=1 // pred_region
      _
    $region5: #{hgcnnet_forward.1} parent=1 // pred_fallthru
      _
    // Predicated region
    $region6: #{hgcnnet_forward.1} parent=1 // pred_check
      _
    $region7: #{hgcnnet_forward.1} parent=1 // pred_check_branch
      %30 = sbr.rel (0) target = $region9
    $region8: #{hgcnnet_forward.1} parent=1 // pred_region
      %s32 = ssub.s32 128, 128
      %33 = vsyncadd [#allocation21], %s32
      %s34 = sshll.u32 [#allocation20], 4
      %s35 = int_to_ptr.vmem [resolvable:$true] %s34
      %40 = dma.hbm_to_vmem [thread:$0]  %s1, 128, %s35, [#allocation21], 64, 64, 4
    $region9: #{hgcnnet_forward.1} parent=1 // pred_fallthru
      _
    // Predicated region
    $region10: #{hgcnnet_forward.1} parent=1 // pred_check
      _
    $region11: #{hgcnnet_forward.1} parent=1 // pred_check_branch
      %42 = sbr.rel (0) target = $region13
    $region12: #{hgcnnet_forward.1} parent=1 // pred_region
      _
    $region13: #{hgcnnet_forward.1} parent=1 // pred_fallthru
      _
    // Predicated region
    $region14: #{hgcnnet_forward.1} parent=1 // pred_check
      _
    $region15: #{hgcnnet_forward.1} parent=1 // pred_check_branch
      %44 = sbr.rel (0) target = $region17
    $region16: #{hgcnnet_forward.1} parent=1 // pred_region
      _
    $region17: #{hgcnnet_forward.1} parent=1 // pred_fallthru
      _
    // Predicated region
    $region18: #{hgcnnet_forward.1} parent=1 // pred_check
      _
    $region19: #{hgcnnet_forward.1} parent=1 // pred_check_branch
      %46 = sbr.rel (0) target = $region21
    $region20: #{hgcnnet_forward.1} parent=1 // pred_region
      %47 = dma.done [#allocation21], 128
    $region21: #{hgcnnet_forward.1} parent=1 // pred_fallthru
      _
    %s50 = sshll.u32 1, 14
    %s51 = sxor.u32 4294967295, %s50
    %s53 = sld [smem:[#allocation0]]
    %s54 = sadd.s32 2, %s53
    %s56 = sshll.u32 7, 26
    %s57 = sxor.u32 4294967295, %s56
    %s58 = sand.u32 0, %s57
    %s59 = sshll.u32 %s54, 26
    %s60 = sor.u32 %s58, %s59
    %s61 = sshll.u32 [#allocation2], 4
    %s62 = int_to_ptr.vmem [resolvable:$true] %s61
    %65 = sst [smem:[#allocation23]] 512
    %s66 = scalar_lea.smem [#allocation23], 1
    %67 = sst [smem:[%s66]] 512
    %s68 = scalar_lea.smem [#allocation23], 2
    %69 = sst [smem:[%s68]] 4
    %s70 = scalar_lea.smem [#allocation23], 3
    %71 = sst [smem:[%s70]] 64
    %s72 = scalar_lea.smem [#allocation23], 4
    %73 = sst [smem:[%s72]] 128
    %s74 = scalar_lea.smem [#allocation23], 5
    %75 = sst [smem:[%s74]] 2
    %s76 = scalar_lea.smem [#allocation23], 6
    %77 = sst [smem:[%s76]] 256
    %s78 = scalar_lea.smem [#allocation23], 7
    %79 = sst [smem:[%s78]] 64
    %s80 = scalar_lea.smem [#allocation23], 8
    %81 = sst [smem:[%s80]] 4
    %83 = dma.general %s4, 32768, %s62, [#allocation19], [#allocation22], [#allocation23], %s60, 0
    %s84 = scalar_lea.sflag [#allocation19], 1
    %s86 = sshll.u32 1, 14
    %s87 = sxor.u32 4294967295, %s86
    %s89 = sadd.s32 2, %s53
    %s91 = sshll.u32 7, 26
    %s92 = sxor.u32 4294967295, %s91
    %s93 = sand.u32 0, %s92
    %s94 = sshll.u32 %s89, 26
    %s95 = sor.u32 %s93, %s94
    %s96 = sshll.u32 [#allocation3], 4
    %s97 = int_to_ptr.vmem [resolvable:$true] %s96
    %100 = sst [smem:[#allocation25]] 512
    %s101 = scalar_lea.smem [#allocation25], 1
    %102 = sst [smem:[%s101]] 512
    %s103 = scalar_lea.smem [#allocation25], 2
    %104 = sst [smem:[%s103]] 4
    %s105 = scalar_lea.smem [#allocation25], 3
    %106 = sst [smem:[%s105]] 64
    %s107 = scalar_lea.smem [#allocation25], 4
    %108 = sst [smem:[%s107]] 128
    %s109 = scalar_lea.smem [#allocation25], 5
    %110 = sst [smem:[%s109]] 2
    %s111 = scalar_lea.smem [#allocation25], 6
    %112 = sst [smem:[%s111]] 256
    %s113 = scalar_lea.smem [#allocation25], 7
    %114 = sst [smem:[%s113]] 64
    %s115 = scalar_lea.smem [#allocation25], 8
    %116 = sst [smem:[%s115]] 4
    %118 = dma.general %s5, 16384, %s97, %s84, [#allocation24], [#allocation25], %s95, 0
    %s119 = scalar_lea.sflag [#allocation19], 2
    %s121 = sshll.u32 1, 14
    %s122 = sxor.u32 4294967295, %s121
    %s124 = sadd.s32 2, %s53
    %s126 = sshll.u32 7, 26
    %s127 = sxor.u32 4294967295, %s126
    %s128 = sand.u32 0, %s127
    %s129 = sshll.u32 %s124, 26
    %s130 = sor.u32 %s128, %s129
    %s131 = sshll.u32 [#allocation4], 4
    %s132 = int_to_ptr.vmem [resolvable:$true] %s131
    %135 = sst [smem:[#allocation27]] 512
    %s136 = scalar_lea.smem [#allocation27], 1
    %137 = sst [smem:[%s136]] 512
    %s138 = scalar_lea.smem [#allocation27], 2
    %139 = sst [smem:[%s138]] 4
    %s140 = scalar_lea.smem [#allocation27], 3
    %141 = sst [smem:[%s140]] 64
    %s142 = scalar_lea.smem [#allocation27], 4
    %143 = sst [smem:[%s142]] 128
    %s144 = scalar_lea.smem [#allocation27], 5
    %145 = sst [smem:[%s144]] 2
    %s146 = scalar_lea.smem [#allocation27], 6
    %147 = sst [smem:[%s146]] 256
    %s148 = scalar_lea.smem [#allocation27], 7
    %149 = sst [smem:[%s148]] 64
    %s150 = scalar_lea.smem [#allocation27], 8
    %151 = sst [smem:[%s150]] 4
    %153 = dma.general %s6, 16384, %s132, %s119, [#allocation26], [#allocation27], %s130, 0
    %s154 = scalar_lea.sflag [#allocation19], 3
    %s156 = sshll.u32 1, 14
    %s157 = sxor.u32 4294967295, %s156
    %s159 = sadd.s32 2, %s53
    %s161 = sshll.u32 7, 26
    %s162 = sxor.u32 4294967295, %s161
    %s163 = sand.u32 0, %s162
    %s164 = sshll.u32 %s159, 26
    %s165 = sor.u32 %s163, %s164
    %s166 = sshll.u32 [#allocation5], 4
    %s167 = int_to_ptr.vmem [resolvable:$true] %s166
    %170 = sst [smem:[#allocation29]] 512
    %s171 = scalar_lea.smem [#allocation29], 1
    %172 = sst [smem:[%s171]] 512
    %s173 = scalar_lea.smem [#allocation29], 2
    %174 = sst [smem:[%s173]] 4
    %s175 = scalar_lea.smem [#allocation29], 3
    %176 = sst [smem:[%s175]] 64
    %s177 = scalar_lea.smem [#allocation29], 4
    %178 = sst [smem:[%s177]] 128
    %s179 = scalar_lea.smem [#allocation29], 5
    %180 = sst [smem:[%s179]] 2
    %s181 = scalar_lea.smem [#allocation29], 6
    %182 = sst [smem:[%s181]] 256
    %s183 = scalar_lea.smem [#allocation29], 7
    %184 = sst [smem:[%s183]] 64
    %s185 = scalar_lea.smem [#allocation29], 8
    %186 = sst [smem:[%s185]] 4
    %188 = dma.general %s7, 16384, %s167, %s154, [#allocation28], [#allocation29], %s165, 0
    %s189 = scalar_lea.sflag [#allocation19], 4
    %s191 = sshll.u32 1, 14
    %s192 = sxor.u32 4294967295, %s191
    %s194 = sadd.s32 2, %s53
    %s196 = sshll.u32 7, 26
    %s197 = sxor.u32 4294967295, %s196
    %s198 = sand.u32 0, %s197
    %s199 = sshll.u32 %s194, 26
    %s200 = sor.u32 %s198, %s199
    %s201 = sshll.u32 [#allocation6], 4
    %s202 = int_to_ptr.vmem [resolvable:$true] %s201
    %205 = sst [smem:[#allocation31]] 256
    %s206 = scalar_lea.smem [#allocation31], 1
    %207 = sst [smem:[%s206]] 256
    %s208 = scalar_lea.smem [#allocation31], 2
    %209 = sst [smem:[%s208]] 2
    %s210 = scalar_lea.smem [#allocation31], 3
    %211 = sst [smem:[%s210]] 64
    %s212 = scalar_lea.smem [#allocation31], 4
    %213 = sst [smem:[%s212]] 128
    %s214 = scalar_lea.smem [#allocation31], 5
    %215 = sst [smem:[%s214]] 2
    %s216 = scalar_lea.smem [#allocation31], 6
    %217 = sst [smem:[%s216]] 128
    %s218 = scalar_lea.smem [#allocation31], 7
    %219 = sst [smem:[%s218]] 64
    %s220 = scalar_lea.smem [#allocation31], 8
    %221 = sst [smem:[%s220]] 4
    %223 = dma.general %s8, 8192, %s202, %s189, [#allocation30], [#allocation31], %s200, 0
    %s224 = scalar_lea.sflag [#allocation19], 5
    %p226 = scmp.lt.u32.totalorder 4, 8
    %p227 = pneg %p226
    // Predicated region
    $region22: #{hgcnnet_forward.1} parent=1 // pred_check
      _
    $region23: #{hgcnnet_forward.1} parent=1 // pred_check_branch
      %229 = sbr.rel (%p226) target = $region25
    $region24: #{hgcnnet_forward.1} parent=1 // pred_region
      %s370 = sand.u32 4, 7
      %p371 = scmp.eq.s32.totalorder %s370, 0
      %p372 = pneg %p371
      // Predicated region
      $region37: #{hgcnnet_forward.1} parent=24 // pred_check
        _
      $region38: #{hgcnnet_forward.1} parent=24 // pred_check_branch
        %374 = sbr.rel (%p371) target = $region40
      $region39: #{hgcnnet_forward.1} parent=24 // pred_region
        %s375 = sand.u32 4, 7
        %s376 = ssub.s32 4, %s375
        %s377 = scalar_lea.vmem %s9, %s376
        %s378 = ssub.s32 4, %s375
        %s379 = scalar_lea.vmem [#allocation7], %s378
        loop: start=0, step=1, limit=1
        $region41: #{hgcnnet_forward.1} parent=39 // loop_pre_header
          _
        $region42: #{hgcnnet_forward.1} parent=39 // loop_header
          %s381 = sphi 0, %s385
          %p382 = scmp.ge.s32.totalorder %s381, 1
          %s386 = sphi %s9, %s9
          %s387 = sphi [#allocation7], [#allocation7]
        $region43: #{hgcnnet_forward.1} parent=39 // loop_header_branch
          %384 = sbr.rel (%p382) target = $region47
        $region44: #{hgcnnet_forward.1} parent=39 // loop_body
          _
        $region45: #{hgcnnet_forward.1} parent=39 // loop_footer
          %s385 = sadd.s32 1, %s381
        $region46: #{hgcnnet_forward.1} parent=39 // loop_footer_branch
          %380 = sbr.rel target = $region42
        $region47: #{hgcnnet_forward.1} parent=39 // loop_exit
          _
        %s388 = sshllo.u32 0, %s375
        loop: start=0, step=1, limit=1
        $region48: #{hgcnnet_forward.1} parent=39 // loop_pre_header
          _
        $region49: #{hgcnnet_forward.1} parent=39 // loop_header
          %s390 = sphi 0, %s394
          %p391 = scmp.ge.s32.totalorder %s390, 1
          %s395 = sphi %s377, %s377
          %s396 = sphi %s379, %s379
        $region50: #{hgcnnet_forward.1} parent=39 // loop_header_branch
          %393 = sbr.rel (%p391) target = $region54
        $region51: #{hgcnnet_forward.1} parent=39 // loop_body
          %v397 = vld [vmem:[%s395] sm:%s388]
          %398 = vst [vmem:[%s396] sm:%s388] %v397
          %v399 = vld [vmem:[%s395 + $0x8] sm:%s388]
          %400 = vst [vmem:[%s396 + $0x4] sm:%s388] %v399
          %v401 = vld [vmem:[%s395 + $0x4] sm:%s388]
          %402 = vst [vmem:[%s396 + $0x8] sm:%s388] %v401
          %v403 = vld [vmem:[%s395 + $0xc] sm:%s388]
          %404 = vst [vmem:[%s396 + $0xc] sm:%s388] %v403
          %v405 = vld [vmem:[%s395 + $0x10] sm:%s388]
          %406 = vst [vmem:[%s396 + $0x10] sm:%s388] %v405
          %v407 = vld [vmem:[%s395 + $0x18] sm:%s388]
          %408 = vst [vmem:[%s396 + $0x14] sm:%s388] %v407
          %v409 = vld [vmem:[%s395 + $0x14] sm:%s388]
          %410 = vst [vmem:[%s396 + $0x18] sm:%s388] %v409
          %v411 = vld [vmem:[%s395 + $0x1c] sm:%s388]
          %412 = vst [vmem:[%s396 + $0x1c] sm:%s388] %v411
          %v413 = vld [vmem:[%s395 + $0x20] sm:%s388]
          %414 = vst [vmem:[%s396 + $0x20] sm:%s388] %v413
          %v415 = vld [vmem:[%s395 + $0x28] sm:%s388]
          %416 = vst [vmem:[%s396 + $0x24] sm:%s388] %v415
          %v417 = vld [vmem:[%s395 + $0x24] sm:%s388]
          %418 = vst [vmem:[%s396 + $0x28] sm:%s388] %v417
          %v419 = vld [vmem:[%s395 + $0x2c] sm:%s388]
          %420 = vst [vmem:[%s396 + $0x2c] sm:%s388] %v419
          %v421 = vld [vmem:[%s395 + $0x30] sm:%s388]
          %422 = vst [vmem:[%s396 + $0x30] sm:%s388] %v421
          %v423 = vld [vmem:[%s395 + $0x38] sm:%s388]
          %424 = vst [vmem:[%s396 + $0x34] sm:%s388] %v423
          %v425 = vld [vmem:[%s395 + $0x34] sm:%s388]
          %426 = vst [vmem:[%s396 + $0x38] sm:%s388] %v425
          %v427 = vld [vmem:[%s395 + $0x3c] sm:%s388]
          %428 = vst [vmem:[%s396 + $0x3c] sm:%s388] %v427
          %v429 = vld [vmem:[%s395 + $0x40] sm:%s388]
          %430 = vst [vmem:[%s396 + $0x40] sm:%s388] %v429
          %v431 = vld [vmem:[%s395 + $0x48] sm:%s388]
          %432 = vst [vmem:[%s396 + $0x44] sm:%s388] %v431
          %v433 = vld [vmem:[%s395 + $0x44] sm:%s388]
          %434 = vst [vmem:[%s396 + $0x48] sm:%s388] %v433
          %v435 = vld [vmem:[%s395 + $0x4c] sm:%s388]
          %436 = vst [vmem:[%s396 + $0x4c] sm:%s388] %v435
          %v437 = vld [vmem:[%s395 + $0x50] sm:%s388]
          %438 = vst [vmem:[%s396 + $0x50] sm:%s388] %v437
          %v439 = vld [vmem:[%s395 + $0x58] sm:%s388]
          %440 = vst [vmem:[%s396 + $0x54] sm:%s388] %v439
          %v441 = vld [vmem:[%s395 + $0x54] sm:%s388]
          %442 = vst [vmem:[%s396 + $0x58] sm:%s388] %v441
          %v443 = vld [vmem:[%s395 + $0x5c] sm:%s388]
          %444 = vst [vmem:[%s396 + $0x5c] sm:%s388] %v443
          %v445 = vld [vmem:[%s395 + $0x60] sm:%s388]
          %446 = vst [vmem:[%s396 + $0x60] sm:%s388] %v445
          %v447 = vld [vmem:[%s395 + $0x68] sm:%s388]
          %448 = vst [vmem:[%s396 + $0x64] sm:%s388] %v447
          %v449 = vld [vmem:[%s395 + $0x64] sm:%s388]
          %450 = vst [vmem:[%s396 + $0x68] sm:%s388] %v449
          %v451 = vld [vmem:[%s395 + $0x6c] sm:%s388]
          %452 = vst [vmem:[%s396 + $0x6c] sm:%s388] %v451
          %v453 = vld [vmem:[%s395 + $0x70] sm:%s388]
          %454 = vst [vmem:[%s396 + $0x70] sm:%s388] %v453
          %v455 = vld [vmem:[%s395 + $0x78] sm:%s388]
          %456 = vst [vmem:[%s396 + $0x74] sm:%s388] %v455
          %v457 = vld [vmem:[%s395 + $0x74] sm:%s388]
          %458 = vst [vmem:[%s396 + $0x78] sm:%s388] %v457
          %v459 = vld [vmem:[%s395 + $0x7c] sm:%s388]
          %460 = vst [vmem:[%s396 + $0x7c] sm:%s388] %v459
          %v461 = vld [vmem:[%s395 + $0x80] sm:%s388]
          %462 = vst [vmem:[%s396 + $0x80] sm:%s388] %v461
          %v463 = vld [vmem:[%s395 + $0x88] sm:%s388]
          %464 = vst [vmem:[%s396 + $0x84] sm:%s388] %v463
          %v465 = vld [vmem:[%s395 + $0x84] sm:%s388]
          %466 = vst [vmem:[%s396 + $0x88] sm:%s388] %v465
          %v467 = vld [vmem:[%s395 + $0x8c] sm:%s388]
          %468 = vst [vmem:[%s396 + $0x8c] sm:%s388] %v467
          %v469 = vld [vmem:[%s395 + $0x90] sm:%s388]
          %470 = vst [vmem:[%s396 + $0x90] sm:%s388] %v469
          %v471 = vld [vmem:[%s395 + $0x98] sm:%s388]
          %472 = vst [vmem:[%s396 + $0x94] sm:%s388] %v471
          %v473 = vld [vmem:[%s395 + $0x94] sm:%s388]
          %474 = vst [vmem:[%s396 + $0x98] sm:%s388] %v473
          %v475 = vld [vmem:[%s395 + $0x9c] sm:%s388]
          %476 = vst [vmem:[%s396 + $0x9c] sm:%s388] %v475
          %v477 = vld [vmem:[%s395 + $0xa0] sm:%s388]
          %478 = vst [vmem:[%s396 + $0xa0] sm:%s388] %v477
          %v479 = vld [vmem:[%s395 + $0xa8] sm:%s388]
          %480 = vst [vmem:[%s396 + $0xa4] sm:%s388] %v479
          %v481 = vld [vmem:[%s395 + $0xa4] sm:%s388]
          %482 = vst [vmem:[%s396 + $0xa8] sm:%s388] %v481
          %v483 = vld [vmem:[%s395 + $0xac] sm:%s388]
          %484 = vst [vmem:[%s396 + $0xac] sm:%s388] %v483
          %v485 = vld [vmem:[%s395 + $0xb0] sm:%s388]
          %486 = vst [vmem:[%s396 + $0xb0] sm:%s388] %v485
          %v487 = vld [vmem:[%s395 + $0xb8] sm:%s388]
          %488 = vst [vmem:[%s396 + $0xb4] sm:%s388] %v487
          %v489 = vld [vmem:[%s395 + $0xb4] sm:%s388]
          %490 = vst [vmem:[%s396 + $0xb8] sm:%s388] %v489
          %v491 = vld [vmem:[%s395 + $0xbc] sm:%s388]
          %492 = vst [vmem:[%s396 + $0xbc] sm:%s388] %v491
          %v493 = vld [vmem:[%s395 + $0xc0] sm:%s388]
          %494 = vst [vmem:[%s396 + $0xc0] sm:%s388] %v493
          %v495 = vld [vmem:[%s395 + $0xc8] sm:%s388]
          %496 = vst [vmem:[%s396 + $0xc4] sm:%s388] %v495
          %v497 = vld [vmem:[%s395 + $0xc4] sm:%s388]
          %498 = vst [vmem:[%s396 + $0xc8] sm:%s388] %v497
          %v499 = vld [vmem:[%s395 + $0xcc] sm:%s388]
          %500 = vst [vmem:[%s396 + $0xcc] sm:%s388] %v499
          %v501 = vld [vmem:[%s395 + $0xd0] sm:%s388]
          %502 = vst [vmem:[%s396 + $0xd0] sm:%s388] %v501
          %v503 = vld [vmem:[%s395 + $0xd8] sm:%s388]
          %504 = vst [vmem:[%s396 + $0xd4] sm:%s388] %v503
          %v505 = vld [vmem:[%s395 + $0xd4] sm:%s388]
          %506 = vst [vmem:[%s396 + $0xd8] sm:%s388] %v505
          %v507 = vld [vmem:[%s395 + $0xdc] sm:%s388]
          %508 = vst [vmem:[%s396 + $0xdc] sm:%s388] %v507
          %v509 = vld [vmem:[%s395 + $0xe0] sm:%s388]
          %510 = vst [vmem:[%s396 + $0xe0] sm:%s388] %v509
          %v511 = vld [vmem:[%s395 + $0xe8] sm:%s388]
          %512 = vst [vmem:[%s396 + $0xe4] sm:%s388] %v511
          %v513 = vld [vmem:[%s395 + $0xe4] sm:%s388]
          %514 = vst [vmem:[%s396 + $0xe8] sm:%s388] %v513
          %v515 = vld [vmem:[%s395 + $0xec] sm:%s388]
          %516 = vst [vmem:[%s396 + $0xec] sm:%s388] %v515
          %v517 = vld [vmem:[%s395 + $0xf0] sm:%s388]
          %518 = vst [vmem:[%s396 + $0xf0] sm:%s388] %v517
          %v519 = vld [vmem:[%s395 + $0xf8] sm:%s388]
          %520 = vst [vmem:[%s396 + $0xf4] sm:%s388] %v519
          %v521 = vld [vmem:[%s395 + $0xf4] sm:%s388]
          %522 = vst [vmem:[%s396 + $0xf8] sm:%s388] %v521
          %v523 = vld [vmem:[%s395 + $0xfc] sm:%s388]
          %524 = vst [vmem:[%s396 + $0xfc] sm:%s388] %v523
        $region52: #{hgcnnet_forward.1} parent=39 // loop_footer
          %s394 = sadd.s32 1, %s390
        $region53: #{hgcnnet_forward.1} parent=39 // loop_footer_branch
          %389 = sbr.rel target = $region49
        $region54: #{hgcnnet_forward.1} parent=39 // loop_exit
          _
      $region40: #{hgcnnet_forward.1} parent=24 // pred_fallthru
        _
    $region25: #{hgcnnet_forward.1} parent=1 // pred_fallthru
      _
    // Predicated region
    $region26: #{hgcnnet_forward.1} parent=1 // pred_check
      %p230 = pneg %p226
    $region27: #{hgcnnet_forward.1} parent=1 // pred_check_branch
      %232 = sbr.rel (%p230) target = $region29
    $region28: #{hgcnnet_forward.1} parent=1 // pred_region
      %s233 = sshllo.u32 0, 4
      loop: start=0, step=1, limit=1
      $region30: #{hgcnnet_forward.1} parent=28 // loop_pre_header
        _
      $region31: #{hgcnnet_forward.1} parent=28 // loop_header
        %s235 = sphi 0, %s239
        %p236 = scmp.ge.s32.totalorder %s235, 1
        %s240 = sphi %s9, %s9
        %s241 = sphi [#allocation7], [#allocation7]
      $region32: #{hgcnnet_forward.1} parent=28 // loop_header_branch
        %238 = sbr.rel (%p236) target = $region36
      $region33: #{hgcnnet_forward.1} parent=28 // loop_body
        %v242 = vld [vmem:[%s240] sm:%s233]
        %243 = vst [vmem:[%s241] sm:%s233] %v242
        %v244 = vld [vmem:[%s240 + $0x8] sm:%s233]
        %245 = vst [vmem:[%s241 + $0x4] sm:%s233] %v244
        %v246 = vld [vmem:[%s240 + $0x4] sm:%s233]
        %247 = vst [vmem:[%s241 + $0x8] sm:%s233] %v246
        %v248 = vld [vmem:[%s240 + $0xc] sm:%s233]
        %249 = vst [vmem:[%s241 + $0xc] sm:%s233] %v248
        %v250 = vld [vmem:[%s240 + $0x10] sm:%s233]
        %251 = vst [vmem:[%s241 + $0x10] sm:%s233] %v250
        %v252 = vld [vmem:[%s240 + $0x18] sm:%s233]
        %253 = vst [vmem:[%s241 + $0x14] sm:%s233] %v252
        %v254 = vld [vmem:[%s240 + $0x14] sm:%s233]
        %255 = vst [vmem:[%s241 + $0x18] sm:%s233] %v254
        %v256 = vld [vmem:[%s240 + $0x1c] sm:%s233]
        %257 = vst [vmem:[%s241 + $0x1c] sm:%s233] %v256
        %v258 = vld [vmem:[%s240 + $0x20] sm:%s233]
        %259 = vst [vmem:[%s241 + $0x20] sm:%s233] %v258
        %v260 = vld [vmem:[%s240 + $0x28] sm:%s233]
        %261 = vst [vmem:[%s241 + $0x24] sm:%s233] %v260
        %v262 = vld [vmem:[%s240 + $0x24] sm:%s233]
        %263 = vst [vmem:[%s241 + $0x28] sm:%s233] %v262
        %v264 = vld [vmem:[%s240 + $0x2c] sm:%s233]
        %265 = vst [vmem:[%s241 + $0x2c] sm:%s233] %v264
        %v266 = vld [vmem:[%s240 + $0x30] sm:%s233]
        %267 = vst [vmem:[%s241 + $0x30] sm:%s233] %v266
        %v268 = vld [vmem:[%s240 + $0x38] sm:%s233]
        %269 = vst [vmem:[%s241 + $0x34] sm:%s233] %v268
        %v270 = vld [vmem:[%s240 + $0x34] sm:%s233]
        %271 = vst [vmem:[%s241 + $0x38] sm:%s233] %v270
        %v272 = vld [vmem:[%s240 + $0x3c] sm:%s233]
        %273 = vst [vmem:[%s241 + $0x3c] sm:%s233] %v272
        %v274 = vld [vmem:[%s240 + $0x40] sm:%s233]
        %275 = vst [vmem:[%s241 + $0x40] sm:%s233] %v274
        %v276 = vld [vmem:[%s240 + $0x48] sm:%s233]
        %277 = vst [vmem:[%s241 + $0x44] sm:%s233] %v276
        %v278 = vld [vmem:[%s240 + $0x44] sm:%s233]
        %279 = vst [vmem:[%s241 + $0x48] sm:%s233] %v278
        %v280 = vld [vmem:[%s240 + $0x4c] sm:%s233]
        %281 = vst [vmem:[%s241 + $0x4c] sm:%s233] %v280
        %v282 = vld [vmem:[%s240 + $0x50] sm:%s233]
        %283 = vst [vmem:[%s241 + $0x50] sm:%s233] %v282
        %v284 = vld [vmem:[%s240 + $0x58] sm:%s233]
        %285 = vst [vmem:[%s241 + $0x54] sm:%s233] %v284
        %v286 = vld [vmem:[%s240 + $0x54] sm:%s233]
        %287 = vst [vmem:[%s241 + $0x58] sm:%s233] %v286
        %v288 = vld [vmem:[%s240 + $0x5c] sm:%s233]
        %289 = vst [vmem:[%s241 + $0x5c] sm:%s233] %v288
        %v290 = vld [vmem:[%s240 + $0x60] sm:%s233]
        %291 = vst [vmem:[%s241 + $0x60] sm:%s233] %v290
        %v292 = vld [vmem:[%s240 + $0x68] sm:%s233]
        %293 = vst [vmem:[%s241 + $0x64] sm:%s233] %v292
        %v294 = vld [vmem:[%s240 + $0x64] sm:%s233]
        %295 = vst [vmem:[%s241 + $0x68] sm:%s233] %v294
        %v296 = vld [vmem:[%s240 + $0x6c] sm:%s233]
        %297 = vst [vmem:[%s241 + $0x6c] sm:%s233] %v296
        %v298 = vld [vmem:[%s240 + $0x70] sm:%s233]
        %299 = vst [vmem:[%s241 + $0x70] sm:%s233] %v298
        %v300 = vld [vmem:[%s240 + $0x78] sm:%s233]
        %301 = vst [vmem:[%s241 + $0x74] sm:%s233] %v300
        %v302 = vld [vmem:[%s240 + $0x74] sm:%s233]
        %303 = vst [vmem:[%s241 + $0x78] sm:%s233] %v302
        %v304 = vld [vmem:[%s240 + $0x7c] sm:%s233]
        %305 = vst [vmem:[%s241 + $0x7c] sm:%s233] %v304
        %v306 = vld [vmem:[%s240 + $0x80] sm:%s233]
        %307 = vst [vmem:[%s241 + $0x80] sm:%s233] %v306
        %v308 = vld [vmem:[%s240 + $0x88] sm:%s233]
        %309 = vst [vmem:[%s241 + $0x84] sm:%s233] %v308
        %v310 = vld [vmem:[%s240 + $0x84] sm:%s233]
        %311 = vst [vmem:[%s241 + $0x88] sm:%s233] %v310
        %v312 = vld [vmem:[%s240 + $0x8c] sm:%s233]
        %313 = vst [vmem:[%s241 + $0x8c] sm:%s233] %v312
        %v314 = vld [vmem:[%s240 + $0x90] sm:%s233]
        %315 = vst [vmem:[%s241 + $0x90] sm:%s233] %v314
        %v316 = vld [vmem:[%s240 + $0x98] sm:%s233]
        %317 = vst [vmem:[%s241 + $0x94] sm:%s233] %v316
        %v318 = vld [vmem:[%s240 + $0x94] sm:%s233]
        %319 = vst [vmem:[%s241 + $0x98] sm:%s233] %v318
        %v320 = vld [vmem:[%s240 + $0x9c] sm:%s233]
        %321 = vst [vmem:[%s241 + $0x9c] sm:%s233] %v320
        %v322 = vld [vmem:[%s240 + $0xa0] sm:%s233]
        %323 = vst [vmem:[%s241 + $0xa0] sm:%s233] %v322
        %v324 = vld [vmem:[%s240 + $0xa8] sm:%s233]
        %325 = vst [vmem:[%s241 + $0xa4] sm:%s233] %v324
        %v326 = vld [vmem:[%s240 + $0xa4] sm:%s233]
        %327 = vst [vmem:[%s241 + $0xa8] sm:%s233] %v326
        %v328 = vld [vmem:[%s240 + $0xac] sm:%s233]
        %329 = vst [vmem:[%s241 + $0xac] sm:%s233] %v328
        %v330 = vld [vmem:[%s240 + $0xb0] sm:%s233]
        %331 = vst [vmem:[%s241 + $0xb0] sm:%s233] %v330
        %v332 = vld [vmem:[%s240 + $0xb8] sm:%s233]
        %333 = vst [vmem:[%s241 + $0xb4] sm:%s233] %v332
        %v334 = vld [vmem:[%s240 + $0xb4] sm:%s233]
        %335 = vst [vmem:[%s241 + $0xb8] sm:%s233] %v334
        %v336 = vld [vmem:[%s240 + $0xbc] sm:%s233]
        %337 = vst [vmem:[%s241 + $0xbc] sm:%s233] %v336
        %v338 = vld [vmem:[%s240 + $0xc0] sm:%s233]
        %339 = vst [vmem:[%s241 + $0xc0] sm:%s233] %v338
        %v340 = vld [vmem:[%s240 + $0xc8] sm:%s233]
        %341 = vst [vmem:[%s241 + $0xc4] sm:%s233] %v340
        %v342 = vld [vmem:[%s240 + $0xc4] sm:%s233]
        %343 = vst [vmem:[%s241 + $0xc8] sm:%s233] %v342
        %v344 = vld [vmem:[%s240 + $0xcc] sm:%s233]
        %345 = vst [vmem:[%s241 + $0xcc] sm:%s233] %v344
        %v346 = vld [vmem:[%s240 + $0xd0] sm:%s233]
        %347 = vst [vmem:[%s241 + $0xd0] sm:%s233] %v346
        %v348 = vld [vmem:[%s240 + $0xd8] sm:%s233]
        %349 = vst [vmem:[%s241 + $0xd4] sm:%s233] %v348
        %v350 = vld [vmem:[%s240 + $0xd4] sm:%s233]
        %351 = vst [vmem:[%s241 + $0xd8] sm:%s233] %v350
        %v352 = vld [vmem:[%s240 + $0xdc] sm:%s233]
        %353 = vst [vmem:[%s241 + $0xdc] sm:%s233] %v352
        %v354 = vld [vmem:[%s240 + $0xe0] sm:%s233]
        %355 = vst [vmem:[%s241 + $0xe0] sm:%s233] %v354
        %v356 = vld [vmem:[%s240 + $0xe8] sm:%s233]
        %357 = vst [vmem:[%s241 + $0xe4] sm:%s233] %v356
        %v358 = vld [vmem:[%s240 + $0xe4] sm:%s233]
        %359 = vst [vmem:[%s241 + $0xe8] sm:%s233] %v358
        %v360 = vld [vmem:[%s240 + $0xec] sm:%s233]
        %361 = vst [vmem:[%s241 + $0xec] sm:%s233] %v360
        %v362 = vld [vmem:[%s240 + $0xf0] sm:%s233]
        %363 = vst [vmem:[%s241 + $0xf0] sm:%s233] %v362
        %v364 = vld [vmem:[%s240 + $0xf8] sm:%s233]
        %365 = vst [vmem:[%s241 + $0xf4] sm:%s233] %v364
        %v366 = vld [vmem:[%s240 + $0xf4] sm:%s233]
        %367 = vst [vmem:[%s241 + $0xf8] sm:%s233] %v366
        %v368 = vld [vmem:[%s240 + $0xfc] sm:%s233]
        %369 = vst [vmem:[%s241 + $0xfc] sm:%s233] %v368
      $region34: #{hgcnnet_forward.1} parent=28 // loop_footer
        %s239 = sadd.s32 1, %s235
      $region35: #{hgcnnet_forward.1} parent=28 // loop_footer_branch
        %234 = sbr.rel target = $region31
      $region36: #{hgcnnet_forward.1} parent=28 // loop_exit
        _
    $region29: #{hgcnnet_forward.1} parent=1 // pred_fallthru
      _
    // Predicated region
    $region55: #{hgcnnet_forward.1} parent=1 // pred_check
      _
    $region56: #{hgcnnet_forward.1} parent=1 // pred_check_branch
      %527 = sbr.rel (0) target = $region58
    $region57: #{hgcnnet_forward.1} parent=1 // pred_region
      %528 = vsyncadd %s224, 4096
    $region58: #{hgcnnet_forward.1} parent=1 // pred_fallthru
      _
    %s529 = scalar_lea.sflag [#allocation19], 6
    %s531 = sshll.u32 1, 14
    %s532 = sxor.u32 4294967295, %s531
    %s534 = sadd.s32 2, %s53
    %s536 = sshll.u32 7, 26
    %s537 = sxor.u32 4294967295, %s536
    %s538 = sand.u32 0, %s537
    %s539 = sshll.u32 %s534, 26
    %s540 = sor.u32 %s538, %s539
    %s541 = sshll.u32 [#allocation8], 4
    %s542 = int_to_ptr.vmem [resolvable:$true] %s541
    %545 = sst [smem:[#allocation34]] 256
    %s546 = scalar_lea.smem [#allocation34], 1
    %547 = sst [smem:[%s546]] 256
    %s548 = scalar_lea.smem [#allocation34], 2
    %549 = sst [smem:[%s548]] 2
    %s550 = scalar_lea.smem [#allocation34], 3
    %551 = sst [smem:[%s550]] 64
    %s552 = scalar_lea.smem [#allocation34], 4
    %553 = sst [smem:[%s552]] 128
    %s554 = scalar_lea.smem [#allocation34], 5
    %555 = sst [smem:[%s554]] 2
    %s556 = scalar_lea.smem [#allocation34], 6
    %557 = sst [smem:[%s556]] 128
    %s558 = scalar_lea.smem [#allocation34], 7
    %559 = sst [smem:[%s558]] 64
    %s560 = scalar_lea.smem [#allocation34], 8
    %561 = sst [smem:[%s560]] 4
    %563 = dma.general %s10, 4096, %s542, %s529, [#allocation33], [#allocation34], %s540, 0
    %s564 = scalar_lea.sflag [#allocation19], 7
    %s566 = sshll.u32 1, 14
    %s567 = sxor.u32 4294967295, %s566
    %s569 = sadd.s32 2, %s53
    %s571 = sshll.u32 7, 26
    %s572 = sxor.u32 4294967295, %s571
    %s573 = sand.u32 0, %s572
    %s574 = sshll.u32 %s569, 26
    %s575 = sor.u32 %s573, %s574
    %s576 = sshll.u32 [#allocation9], 4
    %s577 = int_to_ptr.vmem [resolvable:$true] %s576
    %580 = sst [smem:[#allocation36]] 256
    %s581 = scalar_lea.smem [#allocation36], 1
    %582 = sst [smem:[%s581]] 256
    %s583 = scalar_lea.smem [#allocation36], 2
    %584 = sst [smem:[%s583]] 2
    %s585 = scalar_lea.smem [#allocation36], 3
    %586 = sst [smem:[%s585]] 64
    %s587 = scalar_lea.smem [#allocation36], 4
    %588 = sst [smem:[%s587]] 128
    %s589 = scalar_lea.smem [#allocation36], 5
    %590 = sst [smem:[%s589]] 2
    %s591 = scalar_lea.smem [#allocation36], 6
    %592 = sst [smem:[%s591]] 128
    %s593 = scalar_lea.smem [#allocation36], 7
    %594 = sst [smem:[%s593]] 64
    %s595 = scalar_lea.smem [#allocation36], 8
    %596 = sst [smem:[%s595]] 4
    %598 = dma.general %s11, 4096, %s577, %s564, [#allocation35], [#allocation36], %s575, 0
    %s599 = scalar_lea.sflag [#allocation19], 8
    // Predicated region
    $region59: #{hgcnnet_forward.1} parent=1 // pred_check
      _
    $region60: #{hgcnnet_forward.1} parent=1 // pred_check_branch
      %601 = sbr.rel target = $region62
    $region61: #{hgcnnet_forward.1} parent=1 // pred_region
      %602 = sst [smem:[#allocation39]] [#allocation38]
      %603 = sst [smem:[#allocation40]] [#allocation37]
    $region62: #{hgcnnet_forward.1} parent=1 // pred_fallthru
      _
    %605 = shalt.err (0)
    %s607 = sshll.u32 [#allocation10], 4
    %s608 = int_to_ptr.vmem [resolvable:$true] %s607
    %610 = dma.hbm_to_vmem [thread:$0]  %s12, 2048, %s608, %s599
    %s611 = scalar_lea.sflag [#allocation19], 9
    // Predicated region
    $region63: #{hgcnnet_forward.1} parent=1 // pred_check
      _
    $region64: #{hgcnnet_forward.1} parent=1 // pred_check_branch
      %613 = sbr.rel target = $region66
    $region65: #{hgcnnet_forward.1} parent=1 // pred_region
      %614 = sst [smem:[#allocation39]] [#allocation42]
      %615 = sst [smem:[#allocation40]] [#allocation41]
    $region66: #{hgcnnet_forward.1} parent=1 // pred_fallthru
      _
    %617 = shalt.err (0)
    %s619 = sshll.u32 [#allocation11], 4
    %s620 = int_to_ptr.vmem [resolvable:$true] %s619
    %622 = dma.hbm_to_vmem [thread:$0]  %s13, 1024, %s620, %s611
    %s623 = scalar_lea.sflag [#allocation19], 10
    // Predicated region
    $region67: #{hgcnnet_forward.1} parent=1 // pred_check
      _
    $region68: #{hgcnnet_forward.1} parent=1 // pred_check_branch
      %625 = sbr.rel target = $region70
    $region69: #{hgcnnet_forward.1} parent=1 // pred_region
      %626 = sst [smem:[#allocation39]] [#allocation44]
      %627 = sst [smem:[#allocation40]] [#allocation43]
    $region70: #{hgcnnet_forward.1} parent=1 // pred_fallthru
      _
    %629 = shalt.err (0)
    %s631 = sshll.u32 [#allocation12], 4
    %s632 = int_to_ptr.vmem [resolvable:$true] %s631
    %634 = dma.hbm_to_vmem [thread:$0]  %s14, 1024, %s632, %s623
    %s635 = scalar_lea.sflag [#allocation19], 11
    // Predicated region
    $region71: #{hgcnnet_forward.1} parent=1 // pred_check
      _
    $region72: #{hgcnnet_forward.1} parent=1 // pred_check_branch
      %637 = sbr.rel target = $region74
    $region73: #{hgcnnet_forward.1} parent=1 // pred_region
      %638 = sst [smem:[#allocation39]] [#allocation46]
      %639 = sst [smem:[#allocation40]] [#allocation45]
    $region74: #{hgcnnet_forward.1} parent=1 // pred_fallthru
      _
    %641 = shalt.err (0)
    %s643 = sshll.u32 [#allocation13], 4
    %s644 = int_to_ptr.vmem [resolvable:$true] %s643
    %646 = dma.hbm_to_vmem [thread:$0]  %s15, 1024, %s644, %s635
    %s647 = scalar_lea.sflag [#allocation19], 12
    %p649 = scmp.lt.u32.totalorder 64, 8
    %p650 = pneg %p649
    // Predicated region
    $region75: #{hgcnnet_forward.1} parent=1 // pred_check
      _
    $region76: #{hgcnnet_forward.1} parent=1 // pred_check_branch
      %652 = sbr.rel (%p649) target = $region78
    $region77: #{hgcnnet_forward.1} parent=1 // pred_region
      %s667 = sand.u32 64, 7
      %p668 = scmp.eq.s32.totalorder %s667, 0
      // Predicated region
      $region90: #{hgcnnet_forward.1} parent=77 // pred_check
        %p669 = pneg %p668
      $region91: #{hgcnnet_forward.1} parent=77 // pred_check_branch
        %671 = sbr.rel (%p669) target = $region93
      $region92: #{hgcnnet_forward.1} parent=77 // pred_region
        loop: start=0, step=1, limit=1
        $region94: #{hgcnnet_forward.1} parent=92 // loop_pre_header
          _
        $region95: #{hgcnnet_forward.1} parent=92 // loop_header
          %s673 = sphi 0, %s677
          %p674 = scmp.ge.s32.totalorder %s673, 1
          %s678 = sphi %s16, %s16
          %s679 = sphi [#allocation14], [#allocation14]
        $region96: #{hgcnnet_forward.1} parent=92 // loop_header_branch
          %676 = sbr.rel (%p674) target = $region100
        $region97: #{hgcnnet_forward.1} parent=92 // loop_body
          %v680 = vld [vmem:[%s678] sm:$0xff]
          %681 = vst [vmem:[%s679] sm:$0xff] %v680
          %v682 = vld [vmem:[%s678 + $0x8] sm:$0xff]
          %683 = vst [vmem:[%s679 + $0x8] sm:$0xff] %v682
          %v684 = vld [vmem:[%s678 + $0x10] sm:$0xff]
          %685 = vst [vmem:[%s679 + $0x10] sm:$0xff] %v684
          %v686 = vld [vmem:[%s678 + $0x18] sm:$0xff]
          %687 = vst [vmem:[%s679 + $0x18] sm:$0xff] %v686
          %v688 = vld [vmem:[%s678 + $0x20] sm:$0xff]
          %689 = vst [vmem:[%s679 + $0x20] sm:$0xff] %v688
          %v690 = vld [vmem:[%s678 + $0x28] sm:$0xff]
          %691 = vst [vmem:[%s679 + $0x28] sm:$0xff] %v690
          %v692 = vld [vmem:[%s678 + $0x30] sm:$0xff]
          %693 = vst [vmem:[%s679 + $0x30] sm:$0xff] %v692
          %v694 = vld [vmem:[%s678 + $0x38] sm:$0xff]
          %695 = vst [vmem:[%s679 + $0x38] sm:$0xff] %v694
        $region98: #{hgcnnet_forward.1} parent=92 // loop_footer
          %s677 = sadd.s32 1, %s673
        $region99: #{hgcnnet_forward.1} parent=92 // loop_footer_branch
          %672 = sbr.rel target = $region95
        $region100: #{hgcnnet_forward.1} parent=92 // loop_exit
          _
      $region93: #{hgcnnet_forward.1} parent=77 // pred_fallthru
        _
      %p696 = pneg %p668
      // Predicated region
      $region101: #{hgcnnet_forward.1} parent=77 // pred_check
        _
      $region102: #{hgcnnet_forward.1} parent=77 // pred_check_branch
        %698 = sbr.rel (%p668) target = $region104
      $region103: #{hgcnnet_forward.1} parent=77 // pred_region
        %s699 = sand.u32 64, 7
      $region104: #{hgcnnet_forward.1} parent=77 // pred_fallthru
        _
    $region78: #{hgcnnet_forward.1} parent=1 // pred_fallthru
      _
    // Predicated region
    $region79: #{hgcnnet_forward.1} parent=1 // pred_check
      %p653 = pneg %p649
    $region80: #{hgcnnet_forward.1} parent=1 // pred_check_branch
      %655 = sbr.rel (%p653) target = $region82
    $region81: #{hgcnnet_forward.1} parent=1 // pred_region
      %s656 = sshllo.u32 0, 64
      loop: start=0, step=1, limit=1
      $region83: #{hgcnnet_forward.1} parent=81 // loop_pre_header
        _
      $region84: #{hgcnnet_forward.1} parent=81 // loop_header
        %s658 = sphi 0, %s662
        %p659 = scmp.ge.s32.totalorder %s658, 1
        %s663 = sphi %s16, %s16
        %s664 = sphi [#allocation14], [#allocation14]
      $region85: #{hgcnnet_forward.1} parent=81 // loop_header_branch
        %661 = sbr.rel (%p659) target = $region89
      $region86: #{hgcnnet_forward.1} parent=81 // loop_body
        %v665 = vld [vmem:[%s663] sm:%s656]
        %666 = vst [vmem:[%s664] sm:%s656] %v665
      $region87: #{hgcnnet_forward.1} parent=81 // loop_footer
        %s662 = sadd.s32 1, %s658
      $region88: #{hgcnnet_forward.1} parent=81 // loop_footer_branch
        %657 = sbr.rel target = $region84
      $region89: #{hgcnnet_forward.1} parent=81 // loop_exit
        _
    $region82: #{hgcnnet_forward.1} parent=1 // pred_fallthru
      _
    // Predicated region
    $region105: #{hgcnnet_forward.1} parent=1 // pred_check
      _
    $region106: #{hgcnnet_forward.1} parent=1 // pred_check_branch
      %702 = sbr.rel (0) target = $region108
    $region107: #{hgcnnet_forward.1} parent=1 // pred_region
      %703 = vsyncadd %s647, 1024
    $region108: #{hgcnnet_forward.1} parent=1 // pred_fallthru
      _
    %s704 = scalar_lea.sflag [#allocation19], 13
    %p706 = scmp.lt.u32.totalorder 16, 8
    %p707 = pneg %p706
    // Predicated region
    $region109: #{hgcnnet_forward.1} parent=1 // pred_check
      _
    $region110: #{hgcnnet_forward.1} parent=1 // pred_check_branch
      %709 = sbr.rel (%p706) target = $region112
    $region111: #{hgcnnet_forward.1} parent=1 // pred_region
      %s724 = sand.u32 16, 7
      %p725 = scmp.eq.s32.totalorder %s724, 0
      // Predicated region
      $region124: #{hgcnnet_forward.1} parent=111 // pred_check
        %p726 = pneg %p725
      $region125: #{hgcnnet_forward.1} parent=111 // pred_check_branch
        %728 = sbr.rel (%p726) target = $region127
      $region126: #{hgcnnet_forward.1} parent=111 // pred_region
        loop: start=0, step=1, limit=1
        $region128: #{hgcnnet_forward.1} parent=126 // loop_pre_header
          _
        $region129: #{hgcnnet_forward.1} parent=126 // loop_header
          %s730 = sphi 0, %s734
          %p731 = scmp.ge.s32.totalorder %s730, 1
          %s735 = sphi %s17, %s17
          %s736 = sphi [#allocation15], [#allocation15]
        $region130: #{hgcnnet_forward.1} parent=126 // loop_header_branch
          %733 = sbr.rel (%p731) target = $region134
        $region131: #{hgcnnet_forward.1} parent=126 // loop_body
          %v737 = vld [vmem:[%s735] sm:$0xff]
          %738 = vst [vmem:[%s736] sm:$0xff] %v737
          %v739 = vld [vmem:[%s735 + $0x8] sm:$0xff]
          %740 = vst [vmem:[%s736 + $0x8] sm:$0xff] %v739
        $region132: #{hgcnnet_forward.1} parent=126 // loop_footer
          %s734 = sadd.s32 1, %s730
        $region133: #{hgcnnet_forward.1} parent=126 // loop_footer_branch
          %729 = sbr.rel target = $region129
        $region134: #{hgcnnet_forward.1} parent=126 // loop_exit
          _
      $region127: #{hgcnnet_forward.1} parent=111 // pred_fallthru
        _
      %p741 = pneg %p725
      // Predicated region
      $region135: #{hgcnnet_forward.1} parent=111 // pred_check
        _
      $region136: #{hgcnnet_forward.1} parent=111 // pred_check_branch
        %743 = sbr.rel (%p725) target = $region138
      $region137: #{hgcnnet_forward.1} parent=111 // pred_region
        %s744 = sand.u32 16, 7
      $region138: #{hgcnnet_forward.1} parent=111 // pred_fallthru
        _
    $region112: #{hgcnnet_forward.1} parent=1 // pred_fallthru
      _
    // Predicated region
    $region113: #{hgcnnet_forward.1} parent=1 // pred_check
      %p710 = pneg %p706
    $region114: #{hgcnnet_forward.1} parent=1 // pred_check_branch
      %712 = sbr.rel (%p710) target = $region116
    $region115: #{hgcnnet_forward.1} parent=1 // pred_region
      %s713 = sshllo.u32 0, 16
      loop: start=0, step=1, limit=1
      $region117: #{hgcnnet_forward.1} parent=115 // loop_pre_header
        _
      $region118: #{hgcnnet_forward.1} parent=115 // loop_header
        %s715 = sphi 0, %s719
        %p716 = scmp.ge.s32.totalorder %s715, 1
        %s720 = sphi %s17, %s17
        %s721 = sphi [#allocation15], [#allocation15]
      $region119: #{hgcnnet_forward.1} parent=115 // loop_header_branch
        %718 = sbr.rel (%p716) target = $region123
      $region120: #{hgcnnet_forward.1} parent=115 // loop_body
        %v722 = vld [vmem:[%s720] sm:%s713]
        %723 = vst [vmem:[%s721] sm:%s713] %v722
      $region121: #{hgcnnet_forward.1} parent=115 // loop_footer
        %s719 = sadd.s32 1, %s715
      $region122: #{hgcnnet_forward.1} parent=115 // loop_footer_branch
        %714 = sbr.rel target = $region118
      $region123: #{hgcnnet_forward.1} parent=115 // loop_exit
        _
    $region116: #{hgcnnet_forward.1} parent=1 // pred_fallthru
      _
    // Predicated region
    $region139: #{hgcnnet_forward.1} parent=1 // pred_check
      _
    $region140: #{hgcnnet_forward.1} parent=1 // pred_check_branch
      %747 = sbr.rel (0) target = $region142
    $region141: #{hgcnnet_forward.1} parent=1 // pred_region
      %748 = vsyncadd %s704, 256
    $region142: #{hgcnnet_forward.1} parent=1 // pred_fallthru
      _
    %s749 = scalar_lea.sflag [#allocation19], 14
    %p751 = scmp.lt.u32.totalorder 16, 8
    %p752 = pneg %p751
    // Predicated region
    $region143: #{hgcnnet_forward.1} parent=1 // pred_check
      _
    $region144: #{hgcnnet_forward.1} parent=1 // pred_check_branch
      %754 = sbr.rel (%p751) target = $region146
    $region145: #{hgcnnet_forward.1} parent=1 // pred_region
      %s769 = sand.u32 16, 7
      %p770 = scmp.eq.s32.totalorder %s769, 0
      // Predicated region
      $region158: #{hgcnnet_forward.1} parent=145 // pred_check
        %p771 = pneg %p770
      $region159: #{hgcnnet_forward.1} parent=145 // pred_check_branch
        %773 = sbr.rel (%p771) target = $region161
      $region160: #{hgcnnet_forward.1} parent=145 // pred_region
        loop: start=0, step=1, limit=1
        $region162: #{hgcnnet_forward.1} parent=160 // loop_pre_header
          _
        $region163: #{hgcnnet_forward.1} parent=160 // loop_header
          %s775 = sphi 0, %s779
          %p776 = scmp.ge.s32.totalorder %s775, 1
          %s780 = sphi %s18, %s18
          %s781 = sphi [#allocation16], [#allocation16]
        $region164: #{hgcnnet_forward.1} parent=160 // loop_header_branch
          %778 = sbr.rel (%p776) target = $region168
        $region165: #{hgcnnet_forward.1} parent=160 // loop_body
          %v782 = vld [vmem:[%s780] sm:$0xff]
          %783 = vst [vmem:[%s781] sm:$0xff] %v782
          %v784 = vld [vmem:[%s780 + $0x8] sm:$0xff]
          %785 = vst [vmem:[%s781 + $0x8] sm:$0xff] %v784
        $region166: #{hgcnnet_forward.1} parent=160 // loop_footer
          %s779 = sadd.s32 1, %s775
        $region167: #{hgcnnet_forward.1} parent=160 // loop_footer_branch
          %774 = sbr.rel target = $region163
        $region168: #{hgcnnet_forward.1} parent=160 // loop_exit
          _
      $region161: #{hgcnnet_forward.1} parent=145 // pred_fallthru
        _
      %p786 = pneg %p770
      // Predicated region
      $region169: #{hgcnnet_forward.1} parent=145 // pred_check
        _
      $region170: #{hgcnnet_forward.1} parent=145 // pred_check_branch
        %788 = sbr.rel (%p770) target = $region172
      $region171: #{hgcnnet_forward.1} parent=145 // pred_region
        %s789 = sand.u32 16, 7
      $region172: #{hgcnnet_forward.1} parent=145 // pred_fallthru
        _
    $region146: #{hgcnnet_forward.1} parent=1 // pred_fallthru
      _
    // Predicated region
    $region147: #{hgcnnet_forward.1} parent=1 // pred_check
      %p755 = pneg %p751
    $region148: #{hgcnnet_forward.1} parent=1 // pred_check_branch
      %757 = sbr.rel (%p755) target = $region150
    $region149: #{hgcnnet_forward.1} parent=1 // pred_region
      %s758 = sshllo.u32 0, 16
      loop: start=0, step=1, limit=1
      $region151: #{hgcnnet_forward.1} parent=149 // loop_pre_header
        _
      $region152: #{hgcnnet_forward.1} parent=149 // loop_header
        %s760 = sphi 0, %s764
        %p761 = scmp.ge.s32.totalorder %s760, 1
        %s765 = sphi %s18, %s18
        %s766 = sphi [#allocation16], [#allocation16]
      $region153: #{hgcnnet_forward.1} parent=149 // loop_header_branch
        %763 = sbr.rel (%p761) target = $region157
      $region154: #{hgcnnet_forward.1} parent=149 // loop_body
        %v767 = vld [vmem:[%s765] sm:%s758]
        %768 = vst [vmem:[%s766] sm:%s758] %v767
      $region155: #{hgcnnet_forward.1} parent=149 // loop_footer
        %s764 = sadd.s32 1, %s760
      $region156: #{hgcnnet_forward.1} parent=149 // loop_footer_branch
        %759 = sbr.rel target = $region152
      $region157: #{hgcnnet_forward.1} parent=149 // loop_exit
        _
    $region150: #{hgcnnet_forward.1} parent=1 // pred_fallthru
      _
    // Predicated region
    $region173: #{hgcnnet_forward.1} parent=1 // pred_check
      _
    $region174: #{hgcnnet_forward.1} parent=1 // pred_check_branch
      %792 = sbr.rel (0) target = $region176
    $region175: #{hgcnnet_forward.1} parent=1 // pred_region
      %793 = vsyncadd %s749, 256
    $region176: #{hgcnnet_forward.1} parent=1 // pred_fallthru
      _
    %s794 = scalar_lea.sflag [#allocation19], 15
    %p796 = scmp.lt.u32.totalorder 16, 8
    %p797 = pneg %p796
    // Predicated region
    $region177: #{hgcnnet_forward.1} parent=1 // pred_check
      _
    $region178: #{hgcnnet_forward.1} parent=1 // pred_check_branch
      %799 = sbr.rel (%p796) target = $region180
    $region179: #{hgcnnet_forward.1} parent=1 // pred_region
      %s814 = sand.u32 16, 7
      %p815 = scmp.eq.s32.totalorder %s814, 0
      // Predicated region
      $region192: #{hgcnnet_forward.1} parent=179 // pred_check
        %p816 = pneg %p815
      $region193: #{hgcnnet_forward.1} parent=179 // pred_check_branch
        %818 = sbr.rel (%p816) target = $region195
      $region194: #{hgcnnet_forward.1} parent=179 // pred_region
        loop: start=0, step=1, limit=1
        $region196: #{hgcnnet_forward.1} parent=194 // loop_pre_header
          _
        $region197: #{hgcnnet_forward.1} parent=194 // loop_header
          %s820 = sphi 0, %s824
          %p821 = scmp.ge.s32.totalorder %s820, 1
          %s825 = sphi %s19, %s19
          %s826 = sphi [#allocation17], [#allocation17]
        $region198: #{hgcnnet_forward.1} parent=194 // loop_header_branch
          %823 = sbr.rel (%p821) target = $region202
        $region199: #{hgcnnet_forward.1} parent=194 // loop_body
          %v827 = vld [vmem:[%s825] sm:$0xff]
          %828 = vst [vmem:[%s826] sm:$0xff] %v827
          %v829 = vld [vmem:[%s825 + $0x8] sm:$0xff]
          %830 = vst [vmem:[%s826 + $0x8] sm:$0xff] %v829
        $region200: #{hgcnnet_forward.1} parent=194 // loop_footer
          %s824 = sadd.s32 1, %s820
        $region201: #{hgcnnet_forward.1} parent=194 // loop_footer_branch
          %819 = sbr.rel target = $region197
        $region202: #{hgcnnet_forward.1} parent=194 // loop_exit
          _
      $region195: #{hgcnnet_forward.1} parent=179 // pred_fallthru
        _
      %p831 = pneg %p815
      // Predicated region
      $region203: #{hgcnnet_forward.1} parent=179 // pred_check
        _
      $region204: #{hgcnnet_forward.1} parent=179 // pred_check_branch
        %833 = sbr.rel (%p815) target = $region206
      $region205: #{hgcnnet_forward.1} parent=179 // pred_region
        %s834 = sand.u32 16, 7
      $region206: #{hgcnnet_forward.1} parent=179 // pred_fallthru
        _
    $region180: #{hgcnnet_forward.1} parent=1 // pred_fallthru
      _
    // Predicated region
    $region181: #{hgcnnet_forward.1} parent=1 // pred_check
      %p800 = pneg %p796
    $region182: #{hgcnnet_forward.1} parent=1 // pred_check_branch
      %802 = sbr.rel (%p800) target = $region184
    $region183: #{hgcnnet_forward.1} parent=1 // pred_region
      %s803 = sshllo.u32 0, 16
      loop: start=0, step=1, limit=1
      $region185: #{hgcnnet_forward.1} parent=183 // loop_pre_header
        _
      $region186: #{hgcnnet_forward.1} parent=183 // loop_header
        %s805 = sphi 0, %s809
        %p806 = scmp.ge.s32.totalorder %s805, 1
        %s810 = sphi %s19, %s19
        %s811 = sphi [#allocation17], [#allocation17]
      $region187: #{hgcnnet_forward.1} parent=183 // loop_header_branch
        %808 = sbr.rel (%p806) target = $region191
      $region188: #{hgcnnet_forward.1} parent=183 // loop_body
        %v812 = vld [vmem:[%s810] sm:%s803]
        %813 = vst [vmem:[%s811] sm:%s803] %v812
      $region189: #{hgcnnet_forward.1} parent=183 // loop_footer
        %s809 = sadd.s32 1, %s805
      $region190: #{hgcnnet_forward.1} parent=183 // loop_footer_branch
        %804 = sbr.rel target = $region186
      $region191: #{hgcnnet_forward.1} parent=183 // loop_exit
        _
    $region184: #{hgcnnet_forward.1} parent=1 // pred_fallthru
      _
    // Predicated region
    $region207: #{hgcnnet_forward.1} parent=1 // pred_check
      _
    $region208: #{hgcnnet_forward.1} parent=1 // pred_check_branch
      %837 = sbr.rel (0) target = $region210
    $region209: #{hgcnnet_forward.1} parent=1 // pred_region
      %838 = vsyncadd %s794, 256
    $region210: #{hgcnnet_forward.1} parent=1 // pred_fallthru
      _
    %s839 = scalar_lea.sflag [#allocation19], 16
    %p841 = scmp.lt.u32.totalorder 16, 8
    %p842 = pneg %p841
    // Predicated region
    $region211: #{hgcnnet_forward.1} parent=1 // pred_check
      _
    $region212: #{hgcnnet_forward.1} parent=1 // pred_check_branch
      %844 = sbr.rel (%p841) target = $region214
    $region213: #{hgcnnet_forward.1} parent=1 // pred_region
      %s859 = sand.u32 16, 7
      %p860 = scmp.eq.s32.totalorder %s859, 0
      // Predicated region
      $region226: #{hgcnnet_forward.1} parent=213 // pred_check
        %p861 = pneg %p860
      $region227: #{hgcnnet_forward.1} parent=213 // pred_check_branch
        %863 = sbr.rel (%p861) target = $region229
      $region228: #{hgcnnet_forward.1} parent=213 // pred_region
        loop: start=0, step=1, limit=1
        $region230: #{hgcnnet_forward.1} parent=228 // loop_pre_header
          _
        $region231: #{hgcnnet_forward.1} parent=228 // loop_header
          %s865 = sphi 0, %s869
          %p866 = scmp.ge.s32.totalorder %s865, 1
          %s870 = sphi %s20, %s20
          %s871 = sphi [#allocation18], [#allocation18]
        $region232: #{hgcnnet_forward.1} parent=228 // loop_header_branch
          %868 = sbr.rel (%p866) target = $region236
        $region233: #{hgcnnet_forward.1} parent=228 // loop_body
          %v872 = vld [vmem:[%s870] sm:$0xff]
          %873 = vst [vmem:[%s871] sm:$0xff] %v872
          %v874 = vld [vmem:[%s870 + $0x8] sm:$0xff]
          %875 = vst [vmem:[%s871 + $0x8] sm:$0xff] %v874
        $region234: #{hgcnnet_forward.1} parent=228 // loop_footer
          %s869 = sadd.s32 1, %s865
        $region235: #{hgcnnet_forward.1} parent=228 // loop_footer_branch
          %864 = sbr.rel target = $region231
        $region236: #{hgcnnet_forward.1} parent=228 // loop_exit
          _
      $region229: #{hgcnnet_forward.1} parent=213 // pred_fallthru
        _
      %p876 = pneg %p860
      // Predicated region
      $region237: #{hgcnnet_forward.1} parent=213 // pred_check
        _
      $region238: #{hgcnnet_forward.1} parent=213 // pred_check_branch
        %878 = sbr.rel (%p860) target = $region240
      $region239: #{hgcnnet_forward.1} parent=213 // pred_region
        %s879 = sand.u32 16, 7
      $region240: #{hgcnnet_forward.1} parent=213 // pred_fallthru
        _
    $region214: #{hgcnnet_forward.1} parent=1 // pred_fallthru
      _
    // Predicated region
    $region215: #{hgcnnet_forward.1} parent=1 // pred_check
      %p845 = pneg %p841
    $region216: #{hgcnnet_forward.1} parent=1 // pred_check_branch
      %847 = sbr.rel (%p845) target = $region218
    $region217: #{hgcnnet_forward.1} parent=1 // pred_region
      %s848 = sshllo.u32 0, 16
      loop: start=0, step=1, limit=1
      $region219: #{hgcnnet_forward.1} parent=217 // loop_pre_header
        _
      $region220: #{hgcnnet_forward.1} parent=217 // loop_header
        %s850 = sphi 0, %s854
        %p851 = scmp.ge.s32.totalorder %s850, 1
        %s855 = sphi %s20, %s20
        %s856 = sphi [#allocation18], [#allocation18]
      $region221: #{hgcnnet_forward.1} parent=217 // loop_header_branch
        %853 = sbr.rel (%p851) target = $region225
      $region222: #{hgcnnet_forward.1} parent=217 // loop_body
        %v857 = vld [vmem:[%s855] sm:%s848]
        %858 = vst [vmem:[%s856] sm:%s848] %v857
      $region223: #{hgcnnet_forward.1} parent=217 // loop_footer
        %s854 = sadd.s32 1, %s850
      $region224: #{hgcnnet_forward.1} parent=217 // loop_footer_branch
        %849 = sbr.rel target = $region220
      $region225: #{hgcnnet_forward.1} parent=217 // loop_exit
        _
    $region218: #{hgcnnet_forward.1} parent=1 // pred_fallthru
      _
    // Predicated region
    $region241: #{hgcnnet_forward.1} parent=1 // pred_check
      _
    $region242: #{hgcnnet_forward.1} parent=1 // pred_check_branch
      %882 = sbr.rel (0) target = $region244
    $region243: #{hgcnnet_forward.1} parent=1 // pred_region
      %883 = vsyncadd %s839, 256
    $region244: #{hgcnnet_forward.1} parent=1 // pred_fallthru
      _
    %v884 = vld [vmem:[#allocation20] sm:$0xf]
    %v885 = vld [vmem:[#allocation20 + $0x4] sm:$0xf]
    %v886 = vld [vmem:[%s0] sm:$0xff]
    %v887 = vld [vmem:[%s0 + $0x8] sm:$0xff]
    %v888 = vld [vmem:[%s0 + $0x10] sm:$0xff]
    %v889 = vld [vmem:[%s0 + $0x18] sm:$0xff]
    %v890 = vld [vmem:[%s0 + $0x20] sm:$0xff]
    %v891 = vld [vmem:[%s0 + $0x28] sm:$0xff]
    %v892 = vld [vmem:[%s0 + $0x30] sm:$0xff]
    %v893 = vld [vmem:[%s0 + $0x38] sm:$0xff]
    %v894 = vld [vmem:[%s0 + $0x40] sm:$0xff]
    %v895 = vld [vmem:[%s0 + $0x48] sm:$0xff]
    %v896 = vld [vmem:[%s0 + $0x50] sm:$0xff]
    %v897 = vld [vmem:[%s0 + $0x58] sm:$0xff]
    %v898 = vld [vmem:[%s0 + $0x60] sm:$0xff]
    %v899 = vld [vmem:[%s0 + $0x68] sm:$0xff]
    %v900 = vld [vmem:[%s0 + $0x70] sm:$0xff]
    %v901 = vld [vmem:[%s0 + $0x78] sm:$0xff]
    %s902 = smul.u32 4, 128
    %s903 = smul.u32 %s902, 4
    %s904 = sshll.u32 %s903, 4
    %905 = dma.done [#allocation19], %s904
    %v906 = vld [vmem:[#allocation2] sm:$0xff]
    %v907 = vld [vmem:[#allocation2 + $0x8] sm:$0xff]
    %v908 = vld [vmem:[#allocation2 + $0x10] sm:$0xff]
    %v909 = vld [vmem:[#allocation2 + $0x18] sm:$0xff]
    %v910 = vld [vmem:[#allocation2 + $0x20] sm:$0xff]
    %v911 = vld [vmem:[#allocation2 + $0x28] sm:$0xff]
    %v912 = vld [vmem:[#allocation2 + $0x30] sm:$0xff]
    %v913 = vld [vmem:[#allocation2 + $0x38] sm:$0xff]
    %v914 = vld [vmem:[#allocation2 + $0x40] sm:$0xff]
    %v915 = vld [vmem:[#allocation2 + $0x48] sm:$0xff]
    %v916 = vld [vmem:[#allocation2 + $0x50] sm:$0xff]
    %v917 = vld [vmem:[#allocation2 + $0x58] sm:$0xff]
    %v918 = vld [vmem:[#allocation2 + $0x60] sm:$0xff]
    %v919 = vld [vmem:[#allocation2 + $0x68] sm:$0xff]
    %v920 = vld [vmem:[#allocation2 + $0x70] sm:$0xff]
    %v921 = vld [vmem:[#allocation2 + $0x78] sm:$0xff]
    %v922 = vld [vmem:[#allocation2 + $0x80] sm:$0xff]
    %v923 = vld [vmem:[#allocation2 + $0x88] sm:$0xff]
    %v924 = vld [vmem:[#allocation2 + $0x90] sm:$0xff]
    %v925 = vld [vmem:[#allocation2 + $0x98] sm:$0xff]
    %v926 = vld [vmem:[#allocation2 + $0xa0] sm:$0xff]
    %v927 = vld [vmem:[#allocation2 + $0xa8] sm:$0xff]
    %v928 = vld [vmem:[#allocation2 + $0xb0] sm:$0xff]
    %v929 = vld [vmem:[#allocation2 + $0xb8] sm:$0xff]
    %v930 = vld [vmem:[#allocation2 + $0xc0] sm:$0xff]
    %v931 = vld [vmem:[#allocation2 + $0xc8] sm:$0xff]
    %v932 = vld [vmem:[#allocation2 + $0xd0] sm:$0xff]
    %v933 = vld [vmem:[#allocation2 + $0xd8] sm:$0xff]
    %v934 = vld [vmem:[#allocation2 + $0xe0] sm:$0xff]
    %v935 = vld [vmem:[#allocation2 + $0xe8] sm:$0xff]
    %v936 = vld [vmem:[#allocation2 + $0xf0] sm:$0xff]
    %v937 = vld [vmem:[#allocation2 + $0xf8] sm:$0xff]
    %v938 = vld [vmem:[#allocation2 + $0x100] sm:$0xff]
    %v939 = vld [vmem:[#allocation2 + $0x108] sm:$0xff]
    %v940 = vld [vmem:[#allocation2 + $0x110] sm:$0xff]
    %v941 = vld [vmem:[#allocation2 + $0x118] sm:$0xff]
    %v942 = vld [vmem:[#allocation2 + $0x120] sm:$0xff]
    %v943 = vld [vmem:[#allocation2 + $0x128] sm:$0xff]
    %v944 = vld [vmem:[#allocation2 + $0x130] sm:$0xff]
    %v945 = vld [vmem:[#allocation2 + $0x138] sm:$0xff]
    %v946 = vld [vmem:[#allocation2 + $0x140] sm:$0xff]
    %v947 = vld [vmem:[#allocation2 + $0x148] sm:$0xff]
    %v948 = vld [vmem:[#allocation2 + $0x150] sm:$0xff]
    %v949 = vld [vmem:[#allocation2 + $0x158] sm:$0xff]
    %v950 = vld [vmem:[#allocation2 + $0x160] sm:$0xff]
    %v951 = vld [vmem:[#allocation2 + $0x168] sm:$0xff]
    %v952 = vld [vmem:[#allocation2 + $0x170] sm:$0xff]
    %v953 = vld [vmem:[#allocation2 + $0x178] sm:$0xff]
    %v954 = vld [vmem:[#allocation2 + $0x180] sm:$0xff]
    %v955 = vld [vmem:[#allocation2 + $0x188] sm:$0xff]
    %v956 = vld [vmem:[#allocation2 + $0x190] sm:$0xff]
    %v957 = vld [vmem:[#allocation2 + $0x198] sm:$0xff]
    %v958 = vld [vmem:[#allocation2 + $0x1a0] sm:$0xff]
    %v959 = vld [vmem:[#allocation2 + $0x1a8] sm:$0xff]
    %v960 = vld [vmem:[#allocation2 + $0x1b0] sm:$0xff]
    %v961 = vld [vmem:[#allocation2 + $0x1b8] sm:$0xff]
    %v962 = vld [vmem:[#allocation2 + $0x1c0] sm:$0xff]
    %v963 = vld [vmem:[#allocation2 + $0x1c8] sm:$0xff]
    %v964 = vld [vmem:[#allocation2 + $0x1d0] sm:$0xff]
    %v965 = vld [vmem:[#allocation2 + $0x1d8] sm:$0xff]
    %v966 = vld [vmem:[#allocation2 + $0x1e0] sm:$0xff]
    %v967 = vld [vmem:[#allocation2 + $0x1e8] sm:$0xff]
    %v968 = vld [vmem:[#allocation2 + $0x1f0] sm:$0xff]
    %v969 = vld [vmem:[#allocation2 + $0x1f8] sm:$0xff]
    %v970 = vld [vmem:[#allocation2 + $0x200] sm:$0xff]
    %v971 = vld [vmem:[#allocation2 + $0x208] sm:$0xff]
    %v972 = vld [vmem:[#allocation2 + $0x210] sm:$0xff]
    %v973 = vld [vmem:[#allocation2 + $0x218] sm:$0xff]
    %v974 = vld [vmem:[#allocation2 + $0x220] sm:$0xff]
    %v975 = vld [vmem:[#allocation2 + $0x228] sm:$0xff]
    %v976 = vld [vmem:[#allocation2 + $0x230] sm:$0xff]
    %v977 = vld [vmem:[#allocation2 + $0x238] sm:$0xff]
    %v978 = vld [vmem:[#allocation2 + $0x240] sm:$0xff]
    %v979 = vld [vmem:[#allocation2 + $0x248] sm:$0xff]
    %v980 = vld [vmem:[#allocation2 + $0x250] sm:$0xff]
    %v981 = vld [vmem:[#allocation2 + $0x258] sm:$0xff]
    %v982 = vld [vmem:[#allocation2 + $0x260] sm:$0xff]
    %v983 = vld [vmem:[#allocation2 + $0x268] sm:$0xff]
    %v984 = vld [vmem:[#allocation2 + $0x270] sm:$0xff]
    %v985 = vld [vmem:[#allocation2 + $0x278] sm:$0xff]
    %v986 = vld [vmem:[#allocation2 + $0x280] sm:$0xff]
    %v987 = vld [vmem:[#allocation2 + $0x288] sm:$0xff]
    %v988 = vld [vmem:[#allocation2 + $0x290] sm:$0xff]
    %v989 = vld [vmem:[#allocation2 + $0x298] sm:$0xff]
    %v990 = vld [vmem:[#allocation2 + $0x2a0] sm:$0xff]
    %v991 = vld [vmem:[#allocation2 + $0x2a8] sm:$0xff]
    %v992 = vld [vmem:[#allocation2 + $0x2b0] sm:$0xff]
    %v993 = vld [vmem:[#allocation2 + $0x2b8] sm:$0xff]
    %v994 = vld [vmem:[#allocation2 + $0x2c0] sm:$0xff]
    %v995 = vld [vmem:[#allocation2 + $0x2c8] sm:$0xff]
    %v996 = vld [vmem:[#allocation2 + $0x2d0] sm:$0xff]
    %v997 = vld [vmem:[#allocation2 + $0x2d8] sm:$0xff]
    %v998 = vld [vmem:[#allocation2 + $0x2e0] sm:$0xff]
    %v999 = vld [vmem:[#allocation2 + $0x2e8] sm:$0xff]
    %v1000 = vld [vmem:[#allocation2 + $0x2f0] sm:$0xff]
    %v1001 = vld [vmem:[#allocation2 + $0x2f8] sm:$0xff]
    %v1002 = vld [vmem:[#allocation2 + $0x300] sm:$0xff]
    %v1003 = vld [vmem:[#allocation2 + $0x308] sm:$0xff]
    %v1004 = vld [vmem:[#allocation2 + $0x310] sm:$0xff]
    %v1005 = vld [vmem:[#allocation2 + $0x318] sm:$0xff]
    %v1006 = vld [vmem:[#allocation2 + $0x320] sm:$0xff]
    %v1007 = vld [vmem:[#allocation2 + $0x328] sm:$0xff]
    %v1008 = vld [vmem:[#allocation2 + $0x330] sm:$0xff]
    %v1009 = vld [vmem:[#allocation2 + $0x338] sm:$0xff]
    %v1010 = vld [vmem:[#allocation2 + $0x340] sm:$0xff]
    %v1011 = vld [vmem:[#allocation2 + $0x348] sm:$0xff]
    %v1012 = vld [vmem:[#allocation2 + $0x350] sm:$0xff]
    %v1013 = vld [vmem:[#allocation2 + $0x358] sm:$0xff]
    %v1014 = vld [vmem:[#allocation2 + $0x360] sm:$0xff]
    %v1015 = vld [vmem:[#allocation2 + $0x368] sm:$0xff]
    %v1016 = vld [vmem:[#allocation2 + $0x370] sm:$0xff]
    %v1017 = vld [vmem:[#allocation2 + $0x378] sm:$0xff]
    %v1018 = vld [vmem:[#allocation2 + $0x380] sm:$0xff]
    %v1019 = vld [vmem:[#allocation2 + $0x388] sm:$0xff]
    %v1020 = vld [vmem:[#allocation2 + $0x390] sm:$0xff]
    %v1021 = vld [vmem:[#allocation2 + $0x398] sm:$0xff]
    %v1022 = vld [vmem:[#allocation2 + $0x3a0] sm:$0xff]
    %v1023 = vld [vmem:[#allocation2 + $0x3a8] sm:$0xff]
    %v1024 = vld [vmem:[#allocation2 + $0x3b0] sm:$0xff]
    %v1025 = vld [vmem:[#allocation2 + $0x3b8] sm:$0xff]
    %v1026 = vld [vmem:[#allocation2 + $0x3c0] sm:$0xff]
    %v1027 = vld [vmem:[#allocation2 + $0x3c8] sm:$0xff]
    %v1028 = vld [vmem:[#allocation2 + $0x3d0] sm:$0xff]
    %v1029 = vld [vmem:[#allocation2 + $0x3d8] sm:$0xff]
    %v1030 = vld [vmem:[#allocation2 + $0x3e0] sm:$0xff]
    %v1031 = vld [vmem:[#allocation2 + $0x3e8] sm:$0xff]
    %v1032 = vld [vmem:[#allocation2 + $0x3f0] sm:$0xff]
    %v1033 = vld [vmem:[#allocation2 + $0x3f8] sm:$0xff]
    %v1034 = vld [vmem:[#allocation2 + $0x400] sm:$0xff]
    %v1035 = vld [vmem:[#allocation2 + $0x408] sm:$0xff]
    %v1036 = vld [vmem:[#allocation2 + $0x410] sm:$0xff]
    %v1037 = vld [vmem:[#allocation2 + $0x418] sm:$0xff]
    %v1038 = vld [vmem:[#allocation2 + $0x420] sm:$0xff]
    %v1039 = vld [vmem:[#allocation2 + $0x428] sm:$0xff]
    %v1040 = vld [vmem:[#allocation2 + $0x430] sm:$0xff]
    %v1041 = vld [vmem:[#allocation2 + $0x438] sm:$0xff]
    %v1042 = vld [vmem:[#allocation2 + $0x440] sm:$0xff]
    %v1043 = vld [vmem:[#allocation2 + $0x448] sm:$0xff]
    %v1044 = vld [vmem:[#allocation2 + $0x450] sm:$0xff]
    %v1045 = vld [vmem:[#allocation2 + $0x458] sm:$0xff]
    %v1046 = vld [vmem:[#allocation2 + $0x460] sm:$0xff]
    %v1047 = vld [vmem:[#allocation2 + $0x468] sm:$0xff]
    %v1048 = vld [vmem:[#allocation2 + $0x470] sm:$0xff]
    %v1049 = vld [vmem:[#allocation2 + $0x478] sm:$0xff]
    %v1050 = vld [vmem:[#allocation2 + $0x480] sm:$0xff]
    %v1051 = vld [vmem:[#allocation2 + $0x488] sm:$0xff]
    %v1052 = vld [vmem:[#allocation2 + $0x490] sm:$0xff]
    %v1053 = vld [vmem:[#allocation2 + $0x498] sm:$0xff]
    %v1054 = vld [vmem:[#allocation2 + $0x4a0] sm:$0xff]
    %v1055 = vld [vmem:[#allocation2 + $0x4a8] sm:$0xff]
    %v1056 = vld [vmem:[#allocation2 + $0x4b0] sm:$0xff]
    %v1057 = vld [vmem:[#allocation2 + $0x4b8] sm:$0xff]
    %v1058 = vld [vmem:[#allocation2 + $0x4c0] sm:$0xff]
    %v1059 = vld [vmem:[#allocation2 + $0x4c8] sm:$0xff]
    %v1060 = vld [vmem:[#allocation2 + $0x4d0] sm:$0xff]
    %v1061 = vld [vmem:[#allocation2 + $0x4d8] sm:$0xff]
    %v1062 = vld [vmem:[#allocation2 + $0x4e0] sm:$0xff]
    %v1063 = vld [vmem:[#allocation2 + $0x4e8] sm:$0xff]
    %v1064 = vld [vmem:[#allocation2 + $0x4f0] sm:$0xff]
    %v1065 = vld [vmem:[#allocation2 + $0x4f8] sm:$0xff]
    %v1066 = vld [vmem:[#allocation2 + $0x500] sm:$0xff]
    %v1067 = vld [vmem:[#allocation2 + $0x508] sm:$0xff]
    %v1068 = vld [vmem:[#allocation2 + $0x510] sm:$0xff]
    %v1069 = vld [vmem:[#allocation2 + $0x518] sm:$0xff]
    %v1070 = vld [vmem:[#allocation2 + $0x520] sm:$0xff]
    %v1071 = vld [vmem:[#allocation2 + $0x528] sm:$0xff]
    %v1072 = vld [vmem:[#allocation2 + $0x530] sm:$0xff]
    %v1073 = vld [vmem:[#allocation2 + $0x538] sm:$0xff]
    %v1074 = vld [vmem:[#allocation2 + $0x540] sm:$0xff]
    %v1075 = vld [vmem:[#allocation2 + $0x548] sm:$0xff]
    %v1076 = vld [vmem:[#allocation2 + $0x550] sm:$0xff]
    %v1077 = vld [vmem:[#allocation2 + $0x558] sm:$0xff]
    %v1078 = vld [vmem:[#allocation2 + $0x560] sm:$0xff]
    %v1079 = vld [vmem:[#allocation2 + $0x568] sm:$0xff]
    %v1080 = vld [vmem:[#allocation2 + $0x570] sm:$0xff]
    %v1081 = vld [vmem:[#allocation2 + $0x578] sm:$0xff]
    %v1082 = vld [vmem:[#allocation2 + $0x580] sm:$0xff]
    %v1083 = vld [vmem:[#allocation2 + $0x588] sm:$0xff]
    %v1084 = vld [vmem:[#allocation2 + $0x590] sm:$0xff]
    %v1085 = vld [vmem:[#allocation2 + $0x598] sm:$0xff]
    %v1086 = vld [vmem:[#allocation2 + $0x5a0] sm:$0xff]
    %v1087 = vld [vmem:[#allocation2 + $0x5a8] sm:$0xff]
    %v1088 = vld [vmem:[#allocation2 + $0x5b0] sm:$0xff]
    %v1089 = vld [vmem:[#allocation2 + $0x5b8] sm:$0xff]
    %v1090 = vld [vmem:[#allocation2 + $0x5c0] sm:$0xff]
    %v1091 = vld [vmem:[#allocation2 + $0x5c8] sm:$0xff]
    %v1092 = vld [vmem:[#allocation2 + $0x5d0] sm:$0xff]
    %v1093 = vld [vmem:[#allocation2 + $0x5d8] sm:$0xff]
    %v1094 = vld [vmem:[#allocation2 + $0x5e0] sm:$0xff]
    %v1095 = vld [vmem:[#allocation2 + $0x5e8] sm:$0xff]
    %v1096 = vld [vmem:[#allocation2 + $0x5f0] sm:$0xff]
    %v1097 = vld [vmem:[#allocation2 + $0x5f8] sm:$0xff]
    %v1098 = vld [vmem:[#allocation2 + $0x600] sm:$0xff]
    %v1099 = vld [vmem:[#allocation2 + $0x608] sm:$0xff]
    %v1100 = vld [vmem:[#allocation2 + $0x610] sm:$0xff]
    %v1101 = vld [vmem:[#allocation2 + $0x618] sm:$0xff]
    %v1102 = vld [vmem:[#allocation2 + $0x620] sm:$0xff]
    %v1103 = vld [vmem:[#allocation2 + $0x628] sm:$0xff]
    %v1104 = vld [vmem:[#allocation2 + $0x630] sm:$0xff]
    %v1105 = vld [vmem:[#allocation2 + $0x638] sm:$0xff]
    %v1106 = vld [vmem:[#allocation2 + $0x640] sm:$0xff]
    %v1107 = vld [vmem:[#allocation2 + $0x648] sm:$0xff]
    %v1108 = vld [vmem:[#allocation2 + $0x650] sm:$0xff]
    %v1109 = vld [vmem:[#allocation2 + $0x658] sm:$0xff]
    %v1110 = vld [vmem:[#allocation2 + $0x660] sm:$0xff]
    %v1111 = vld [vmem:[#allocation2 + $0x668] sm:$0xff]
    %v1112 = vld [vmem:[#allocation2 + $0x670] sm:$0xff]
    %v1113 = vld [vmem:[#allocation2 + $0x678] sm:$0xff]
    %v1114 = vld [vmem:[#allocation2 + $0x680] sm:$0xff]
    %v1115 = vld [vmem:[#allocation2 + $0x688] sm:$0xff]
    %v1116 = vld [vmem:[#allocation2 + $0x690] sm:$0xff]
    %v1117 = vld [vmem:[#allocation2 + $0x698] sm:$0xff]
    %v1118 = vld [vmem:[#allocation2 + $0x6a0] sm:$0xff]
    %v1119 = vld [vmem:[#allocation2 + $0x6a8] sm:$0xff]
    %v1120 = vld [vmem:[#allocation2 + $0x6b0] sm:$0xff]
    %v1121 = vld [vmem:[#allocation2 + $0x6b8] sm:$0xff]
    %v1122 = vld [vmem:[#allocation2 + $0x6c0] sm:$0xff]
    %v1123 = vld [vmem:[#allocation2 + $0x6c8] sm:$0xff]
    %v1124 = vld [vmem:[#allocation2 + $0x6d0] sm:$0xff]
    %v1125 = vld [vmem:[#allocation2 + $0x6d8] sm:$0xff]
    %v1126 = vld [vmem:[#allocation2 + $0x6e0] sm:$0xff]
    %v1127 = vld [vmem:[#allocation2 + $0x6e8] sm:$0xff]
    %v1128 = vld [vmem:[#allocation2 + $0x6f0] sm:$0xff]
    %v1129 = vld [vmem:[#allocation2 + $0x6f8] sm:$0xff]
    %v1130 = vld [vmem:[#allocation2 + $0x700] sm:$0xff]
    %v1131 = vld [vmem:[#allocation2 + $0x708] sm:$0xff]
    %v1132 = vld [vmem:[#allocation2 + $0x710] sm:$0xff]
    %v1133 = vld [vmem:[#allocation2 + $0x718] sm:$0xff]
    %v1134 = vld [vmem:[#allocation2 + $0x720] sm:$0xff]
    %v1135 = vld [vmem:[#allocation2 + $0x728] sm:$0xff]
    %v1136 = vld [vmem:[#allocation2 + $0x730] sm:$0xff]
    %v1137 = vld [vmem:[#allocation2 + $0x738] sm:$0xff]
    %v1138 = vld [vmem:[#allocation2 + $0x740] sm:$0xff]
    %v1139 = vld [vmem:[#allocation2 + $0x748] sm:$0xff]
    %v1140 = vld [vmem:[#allocation2 + $0x750] sm:$0xff]
    %v1141 = vld [vmem:[#allocation2 + $0x758] sm:$0xff]
    %v1142 = vld [vmem:[#allocation2 + $0x760] sm:$0xff]
    %v1143 = vld [vmem:[#allocation2 + $0x768] sm:$0xff]
    %v1144 = vld [vmem:[#allocation2 + $0x770] sm:$0xff]
    %v1145 = vld [vmem:[#allocation2 + $0x778] sm:$0xff]
    %v1146 = vld [vmem:[#allocation2 + $0x780] sm:$0xff]
    %v1147 = vld [vmem:[#allocation2 + $0x788] sm:$0xff]
    %v1148 = vld [vmem:[#allocation2 + $0x790] sm:$0xff]
    %v1149 = vld [vmem:[#allocation2 + $0x798] sm:$0xff]
    %v1150 = vld [vmem:[#allocation2 + $0x7a0] sm:$0xff]
    %v1151 = vld [vmem:[#allocation2 + $0x7a8] sm:$0xff]
    %v1152 = vld [vmem:[#allocation2 + $0x7b0] sm:$0xff]
    %v1153 = vld [vmem:[#allocation2 + $0x7b8] sm:$0xff]
    %v1154 = vld [vmem:[#allocation2 + $0x7c0] sm:$0xff]
    %v1155 = vld [vmem:[#allocation2 + $0x7c8] sm:$0xff]
    %v1156 = vld [vmem:[#allocation2 + $0x7d0] sm:$0xff]
    %v1157 = vld [vmem:[#allocation2 + $0x7d8] sm:$0xff]
    %v1158 = vld [vmem:[#allocation2 + $0x7e0] sm:$0xff]
    %v1159 = vld [vmem:[#allocation2 + $0x7e8] sm:$0xff]
    %v1160 = vld [vmem:[#allocation2 + $0x7f0] sm:$0xff]
    %v1161 = vld [vmem:[#allocation2 + $0x7f8] sm:$0xff]
    %v1162 = vpack.c.bf16 %v894, %v886
    %v1163 = vpack.c.bf16 %v895, %v887
    %v1164 = vpack.c.bf16 %v896, %v888
    %v1165 = vpack.c.bf16 %v897, %v889
    %v1166 = vpack.c.bf16 %v898, %v890
    %v1167 = vpack.c.bf16 %v899, %v891
    %v1168 = vpack.c.bf16 %v900, %v892
    %v1169 = vpack.c.bf16 %v901, %v893
    %1170 = vmatprep.subr.bf16.mxu0 %v907
    %1171 = vmatpush1.bf16.msra.mxu0 %v906
    %1172 = vmatprep.subr.bf16.mxu0 %v911
    %1173 = vmatpush1.bf16.msra.mxu0 %v910
    %1174 = vmatprep.subr.bf16.mxu0 %v915
    %1175 = vmatpush1.bf16.msra.mxu0 %v914
    %1176 = vmatprep.subr.bf16.mxu0 %v919
    %1177 = vmatpush1.bf16.msra.mxu0 %v918
    %1178 = vmatprep.subr.bf16.mxu0 %v923
    %1179 = vmatpush1.bf16.msra.mxu0 %v922
    %1180 = vmatprep.subr.bf16.mxu0 %v927
    %1181 = vmatpush1.bf16.msra.mxu0 %v926
    %1182 = vmatprep.subr.bf16.mxu0 %v931
    %1183 = vmatpush1.bf16.msra.mxu0 %v930
    %1184 = vmatprep.subr.bf16.mxu0 %v935
    %1185 = vmatpush1.bf16.msra.mxu0 %v934
    %1186 = vmatprep.subr.bf16.mxu0 %v939
    %1187 = vmatpush1.bf16.msra.mxu0 %v938
    %1188 = vmatprep.subr.bf16.mxu0 %v943
    %1189 = vmatpush1.bf16.msra.mxu0 %v942
    %1190 = vmatprep.subr.bf16.mxu0 %v947
    %1191 = vmatpush1.bf16.msra.mxu0 %v946
    %1192 = vmatprep.subr.bf16.mxu0 %v951
    %1193 = vmatpush1.bf16.msra.mxu0 %v950
    %1194 = vmatprep.subr.bf16.mxu0 %v955
    %1195 = vmatpush1.bf16.msra.mxu0 %v954
    %1196 = vmatprep.subr.bf16.mxu0 %v959
    %1197 = vmatpush1.bf16.msra.mxu0 %v958
    %1198 = vmatprep.subr.bf16.mxu0 %v963
    %1199 = vmatpush1.bf16.msra.mxu0 %v962
    %1200 = vmatprep.subr.bf16.mxu0 %v967
    %1201 = vmatpush1.bf16.msra.mxu0 %v966
    %1202 = vmatprep.mubr.bf16.mxu0 %v1163
    %1203 = vmatmul.mubr.bf16.gmra.mrb[0].mxu0 %v1162
    %v1204 = vpop.f32.mrb[0].mxu0
    %v1205 = vadd.f32 0.0, %v1204
    %v1206 = vpop.f32.mrb[0].mxu0
    %v1207 = vadd.f32 0.0, %v1206
    %v1208 = vpop.f32.mrb[0].mxu0
    %v1209 = vadd.f32 0.0, %v1208
    %v1210 = vpop.f32.mrb[0].mxu0
    %v1211 = vadd.f32 0.0, %v1210
    %1212 = vdwg.mxu0
    %1213 = vmatprep.subr.bf16.mxu0 %v971
    %1214 = vmatpush1.bf16.msra.mxu0 %v970
    %1215 = vmatprep.subr.bf16.mxu0 %v975
    %1216 = vmatpush1.bf16.msra.mxu0 %v974
    %1217 = vmatprep.subr.bf16.mxu0 %v979
    %1218 = vmatpush1.bf16.msra.mxu0 %v978
    %1219 = vmatprep.subr.bf16.mxu0 %v983
    %1220 = vmatpush1.bf16.msra.mxu0 %v982
    %1221 = vmatprep.subr.bf16.mxu0 %v987
    %1222 = vmatpush1.bf16.msra.mxu0 %v986
    %1223 = vmatprep.subr.bf16.mxu0 %v991
    %1224 = vmatpush1.bf16.msra.mxu0 %v990
    %1225 = vmatprep.subr.bf16.mxu0 %v995
    %1226 = vmatpush1.bf16.msra.mxu0 %v994
    %1227 = vmatprep.subr.bf16.mxu0 %v999
    %1228 = vmatpush1.bf16.msra.mxu0 %v998
    %1229 = vmatprep.subr.bf16.mxu0 %v1003
    %1230 = vmatpush1.bf16.msra.mxu0 %v1002
    %1231 = vmatprep.subr.bf16.mxu0 %v1007
    %1232 = vmatpush1.bf16.msra.mxu0 %v1006
    %1233 = vmatprep.subr.bf16.mxu0 %v1011
    %1234 = vmatpush1.bf16.msra.mxu0 %v1010
    %1235 = vmatprep.subr.bf16.mxu0 %v1015
    %1236 = vmatpush1.bf16.msra.mxu0 %v1014
    %1237 = vmatprep.subr.bf16.mxu0 %v1019
    %1238 = vmatpush1.bf16.msra.mxu0 %v1018
    %1239 = vmatprep.subr.bf16.mxu0 %v1023
    %1240 = vmatpush1.bf16.msra.mxu0 %v1022
    %1241 = vmatprep.subr.bf16.mxu0 %v1027
    %1242 = vmatpush1.bf16.msra.mxu0 %v1026
    %1243 = vmatprep.subr.bf16.mxu0 %v1031
    %1244 = vmatpush1.bf16.msra.mxu0 %v1030
    %1245 = vmatprep.mubr.bf16.mxu0 %v1165
    %1246 = vmatmul.mubr.bf16.gmra.mrb[0].mxu0 %v1164
    %v1247 = vpop.f32.mrb[0].mxu0
    %v1248 = vadd.f32 %v1205, %v1247
    %v1249 = vpop.f32.mrb[0].mxu0
    %v1250 = vadd.f32 %v1207, %v1249
    %v1251 = vpop.f32.mrb[0].mxu0
    %v1252 = vadd.f32 %v1209, %v1251
    %v1253 = vpop.f32.mrb[0].mxu0
    %v1254 = vadd.f32 %v1211, %v1253
    %1255 = vdwg.mxu0
    %1256 = vmatprep.subr.bf16.mxu0 %v1035
    %1257 = vmatpush1.bf16.msra.mxu0 %v1034
    %1258 = vmatprep.subr.bf16.mxu0 %v1039
    %1259 = vmatpush1.bf16.msra.mxu0 %v1038
    %1260 = vmatprep.subr.bf16.mxu0 %v1043
    %1261 = vmatpush1.bf16.msra.mxu0 %v1042
    %1262 = vmatprep.subr.bf16.mxu0 %v1047
    %1263 = vmatpush1.bf16.msra.mxu0 %v1046
    %1264 = vmatprep.subr.bf16.mxu0 %v1051
    %1265 = vmatpush1.bf16.msra.mxu0 %v1050
    %1266 = vmatprep.subr.bf16.mxu0 %v1055
    %1267 = vmatpush1.bf16.msra.mxu0 %v1054
    %1268 = vmatprep.subr.bf16.mxu0 %v1059
    %1269 = vmatpush1.bf16.msra.mxu0 %v1058
    %1270 = vmatprep.subr.bf16.mxu0 %v1063
    %1271 = vmatpush1.bf16.msra.mxu0 %v1062
    %1272 = vmatprep.subr.bf16.mxu0 %v1067
    %1273 = vmatpush1.bf16.msra.mxu0 %v1066
    %1274 = vmatprep.subr.bf16.mxu0 %v1071
    %1275 = vmatpush1.bf16.msra.mxu0 %v1070
    %1276 = vmatprep.subr.bf16.mxu0 %v1075
    %1277 = vmatpush1.bf16.msra.mxu0 %v1074
    %1278 = vmatprep.subr.bf16.mxu0 %v1079
    %1279 = vmatpush1.bf16.msra.mxu0 %v1078
    %1280 = vmatprep.subr.bf16.mxu0 %v1083
    %1281 = vmatpush1.bf16.msra.mxu0 %v1082
    %1282 = vmatprep.subr.bf16.mxu0 %v1087
    %1283 = vmatpush1.bf16.msra.mxu0 %v1086
    %1284 = vmatprep.subr.bf16.mxu0 %v1091
    %1285 = vmatpush1.bf16.msra.mxu0 %v1090
    %1286 = vmatprep.subr.bf16.mxu0 %v1095
    %1287 = vmatpush1.bf16.msra.mxu0 %v1094
    %1288 = vmatprep.mubr.bf16.mxu0 %v1167
    %1289 = vmatmul.mubr.bf16.gmra.mrb[0].mxu0 %v1166
    %v1290 = vpop.f32.mrb[0].mxu0
    %v1291 = vadd.f32 %v1248, %v1290
    %v1292 = vpop.f32.mrb[0].mxu0
    %v1293 = vadd.f32 %v1250, %v1292
    %v1294 = vpop.f32.mrb[0].mxu0
    %v1295 = vadd.f32 %v1252, %v1294
    %v1296 = vpop.f32.mrb[0].mxu0
    %v1297 = vadd.f32 %v1254, %v1296
    %1298 = vdwg.mxu0
    %1299 = vmatprep.subr.bf16.mxu0 %v1099
    %1300 = vmatpush1.bf16.msra.mxu0 %v1098
    %1301 = vmatprep.subr.bf16.mxu0 %v1103
    %1302 = vmatpush1.bf16.msra.mxu0 %v1102
    %1303 = vmatprep.subr.bf16.mxu0 %v1107
    %1304 = vmatpush1.bf16.msra.mxu0 %v1106
    %1305 = vmatprep.subr.bf16.mxu0 %v1111
    %1306 = vmatpush1.bf16.msra.mxu0 %v1110
    %1307 = vmatprep.subr.bf16.mxu0 %v1115
    %1308 = vmatpush1.bf16.msra.mxu0 %v1114
    %1309 = vmatprep.subr.bf16.mxu0 %v1119
    %1310 = vmatpush1.bf16.msra.mxu0 %v1118
    %1311 = vmatprep.subr.bf16.mxu0 %v1123
    %1312 = vmatpush1.bf16.msra.mxu0 %v1122
    %1313 = vmatprep.subr.bf16.mxu0 %v1127
    %1314 = vmatpush1.bf16.msra.mxu0 %v1126
    %1315 = vmatprep.subr.bf16.mxu0 %v1131
    %1316 = vmatpush1.bf16.msra.mxu0 %v1130
    %1317 = vmatprep.subr.bf16.mxu0 %v1135
    %1318 = vmatpush1.bf16.msra.mxu0 %v1134
    %1319 = vmatprep.subr.bf16.mxu0 %v1139
    %1320 = vmatpush1.bf16.msra.mxu0 %v1138
    %1321 = vmatprep.subr.bf16.mxu0 %v1143
    %1322 = vmatpush1.bf16.msra.mxu0 %v1142
    %1323 = vmatprep.subr.bf16.mxu0 %v1147
    %1324 = vmatpush1.bf16.msra.mxu0 %v1146
    %1325 = vmatprep.subr.bf16.mxu0 %v1151
    %1326 = vmatpush1.bf16.msra.mxu0 %v1150
    %1327 = vmatprep.subr.bf16.mxu0 %v1155
    %1328 = vmatpush1.bf16.msra.mxu0 %v1154
    %1329 = vmatprep.subr.bf16.mxu0 %v1159
    %1330 = vmatpush1.bf16.msra.mxu0 %v1158
    %1331 = vmatprep.mubr.bf16.mxu0 %v1169
    %1332 = vmatmul.mubr.bf16.gmra.mrb[0].mxu0 %v1168
    %v1333 = vpop.f32.mrb[0].mxu0
    %v1334 = vadd.f32 %v1291, %v1333
    %v1335 = vpop.f32.mrb[0].mxu0
    %v1336 = vadd.f32 %v1293, %v1335
    %v1337 = vpop.f32.mrb[0].mxu0
    %v1338 = vadd.f32 %v1295, %v1337
    %v1339 = vpop.f32.mrb[0].mxu0
    %v1340 = vadd.f32 %v1297, %v1339
    %1341 = vdwg.mxu0
    %1342 = vmatprep.subr.bf16.mxu0 %v909
    %1343 = vmatpush1.bf16.msra.mxu0 %v908
    %1344 = vmatprep.subr.bf16.mxu0 %v913
    %1345 = vmatpush1.bf16.msra.mxu0 %v912
    %1346 = vmatprep.subr.bf16.mxu0 %v917
    %1347 = vmatpush1.bf16.msra.mxu0 %v916
    %1348 = vmatprep.subr.bf16.mxu0 %v921
    %1349 = vmatpush1.bf16.msra.mxu0 %v920
    %1350 = vmatprep.subr.bf16.mxu0 %v925
    %1351 = vmatpush1.bf16.msra.mxu0 %v924
    %1352 = vmatprep.subr.bf16.mxu0 %v929
    %1353 = vmatpush1.bf16.msra.mxu0 %v928
    %1354 = vmatprep.subr.bf16.mxu0 %v933
    %1355 = vmatpush1.bf16.msra.mxu0 %v932
    %1356 = vmatprep.subr.bf16.mxu0 %v937
    %1357 = vmatpush1.bf16.msra.mxu0 %v936
    %1358 = vmatprep.subr.bf16.mxu0 %v941
    %1359 = vmatpush1.bf16.msra.mxu0 %v940
    %1360 = vmatprep.subr.bf16.mxu0 %v945
    %1361 = vmatpush1.bf16.msra.mxu0 %v944
    %1362 = vmatprep.subr.bf16.mxu0 %v949
    %1363 = vmatpush1.bf16.msra.mxu0 %v948
    %1364 = vmatprep.subr.bf16.mxu0 %v953
    %1365 = vmatpush1.bf16.msra.mxu0 %v952
    %1366 = vmatprep.subr.bf16.mxu0 %v957
    %1367 = vmatpush1.bf16.msra.mxu0 %v956
    %1368 = vmatprep.subr.bf16.mxu0 %v961
    %1369 = vmatpush1.bf16.msra.mxu0 %v960
    %1370 = vmatprep.subr.bf16.mxu0 %v965
    %1371 = vmatpush1.bf16.msra.mxu0 %v964
    %1372 = vmatprep.subr.bf16.mxu0 %v969
    %1373 = vmatpush1.bf16.msra.mxu0 %v968
    %1374 = vmatprep.mubr.bf16.mxu0 %v1163
    %1375 = vmatmul.mubr.bf16.gmra.mrb[0].mxu0 %v1162
    %v1376 = vpop.f32.mrb[0].mxu0
    %v1377 = vadd.f32 0.0, %v1376
    %v1378 = vpop.f32.mrb[0].mxu0
    %v1379 = vadd.f32 0.0, %v1378
    %v1380 = vpop.f32.mrb[0].mxu0
    %v1381 = vadd.f32 0.0, %v1380
    %v1382 = vpop.f32.mrb[0].mxu0
    %v1383 = vadd.f32 0.0, %v1382
    %1384 = vdwg.mxu0
    %1385 = vmatprep.subr.bf16.mxu0 %v973
    %1386 = vmatpush1.bf16.msra.mxu0 %v972
    %1387 = vmatprep.subr.bf16.mxu0 %v977
    %1388 = vmatpush1.bf16.msra.mxu0 %v976
    %1389 = vmatprep.subr.bf16.mxu0 %v981
    %1390 = vmatpush1.bf16.msra.mxu0 %v980
    %1391 = vmatprep.subr.bf16.mxu0 %v985
    %1392 = vmatpush1.bf16.msra.mxu0 %v984
    %1393 = vmatprep.subr.bf16.mxu0 %v989
    %1394 = vmatpush1.bf16.msra.mxu0 %v988
    %1395 = vmatprep.subr.bf16.mxu0 %v993
    %1396 = vmatpush1.bf16.msra.mxu0 %v992
    %1397 = vmatprep.subr.bf16.mxu0 %v997
    %1398 = vmatpush1.bf16.msra.mxu0 %v996
    %1399 = vmatprep.subr.bf16.mxu0 %v1001
    %1400 = vmatpush1.bf16.msra.mxu0 %v1000
    %1401 = vmatprep.subr.bf16.mxu0 %v1005
    %1402 = vmatpush1.bf16.msra.mxu0 %v1004
    %1403 = vmatprep.subr.bf16.mxu0 %v1009
    %1404 = vmatpush1.bf16.msra.mxu0 %v1008
    %1405 = vmatprep.subr.bf16.mxu0 %v1013
    %1406 = vmatpush1.bf16.msra.mxu0 %v1012
    %1407 = vmatprep.subr.bf16.mxu0 %v1017
    %1408 = vmatpush1.bf16.msra.mxu0 %v1016
    %1409 = vmatprep.subr.bf16.mxu0 %v1021
    %1410 = vmatpush1.bf16.msra.mxu0 %v1020
    %1411 = vmatprep.subr.bf16.mxu0 %v1025
    %1412 = vmatpush1.bf16.msra.mxu0 %v1024
    %1413 = vmatprep.subr.bf16.mxu0 %v1029
    %1414 = vmatpush1.bf16.msra.mxu0 %v1028
    %1415 = vmatprep.subr.bf16.mxu0 %v1033
    %1416 = vmatpush1.bf16.msra.mxu0 %v1032
    %1417 = vmatprep.mubr.bf16.mxu0 %v1165
    %1418 = vmatmul.mubr.bf16.gmra.mrb[0].mxu0 %v1164
    %v1419 = vpop.f32.mrb[0].mxu0
    %v1420 = vadd.f32 %v1377, %v1419
    %v1421 = vpop.f32.mrb[0].mxu0
    %v1422 = vadd.f32 %v1379, %v1421
    %v1423 = vpop.f32.mrb[0].mxu0
    %v1424 = vadd.f32 %v1381, %v1423
    %v1425 = vpop.f32.mrb[0].mxu0
    %v1426 = vadd.f32 %v1383, %v1425
    %1427 = vdwg.mxu0
    %1428 = vmatprep.subr.bf16.mxu0 %v1037
    %1429 = vmatpush1.bf16.msra.mxu0 %v1036
    %1430 = vmatprep.subr.bf16.mxu0 %v1041
    %1431 = vmatpush1.bf16.msra.mxu0 %v1040
    %1432 = vmatprep.subr.bf16.mxu0 %v1045
    %1433 = vmatpush1.bf16.msra.mxu0 %v1044
    %1434 = vmatprep.subr.bf16.mxu0 %v1049
    %1435 = vmatpush1.bf16.msra.mxu0 %v1048
    %1436 = vmatprep.subr.bf16.mxu0 %v1053
    %1437 = vmatpush1.bf16.msra.mxu0 %v1052
    %1438 = vmatprep.subr.bf16.mxu0 %v1057
    %1439 = vmatpush1.bf16.msra.mxu0 %v1056
    %1440 = vmatprep.subr.bf16.mxu0 %v1061
    %1441 = vmatpush1.bf16.msra.mxu0 %v1060
    %1442 = vmatprep.subr.bf16.mxu0 %v1065
    %1443 = vmatpush1.bf16.msra.mxu0 %v1064
    %1444 = vmatprep.subr.bf16.mxu0 %v1069
    %1445 = vmatpush1.bf16.msra.mxu0 %v1068
    %1446 = vmatprep.subr.bf16.mxu0 %v1073
    %1447 = vmatpush1.bf16.msra.mxu0 %v1072
    %1448 = vmatprep.subr.bf16.mxu0 %v1077
    %1449 = vmatpush1.bf16.msra.mxu0 %v1076
    %1450 = vmatprep.subr.bf16.mxu0 %v1081
    %1451 = vmatpush1.bf16.msra.mxu0 %v1080
    %1452 = vmatprep.subr.bf16.mxu0 %v1085
    %1453 = vmatpush1.bf16.msra.mxu0 %v1084
    %1454 = vmatprep.subr.bf16.mxu0 %v1089
    %1455 = vmatpush1.bf16.msra.mxu0 %v1088
    %1456 = vmatprep.subr.bf16.mxu0 %v1093
    %1457 = vmatpush1.bf16.msra.mxu0 %v1092
    %1458 = vmatprep.subr.bf16.mxu0 %v1097
    %1459 = vmatpush1.bf16.msra.mxu0 %v1096
    %1460 = vmatprep.mubr.bf16.mxu0 %v1167
    %1461 = vmatmul.mubr.bf16.gmra.mrb[0].mxu0 %v1166
    %v1462 = vpop.f32.mrb[0].mxu0
    %v1463 = vadd.f32 %v1420, %v1462
    %v1464 = vpop.f32.mrb[0].mxu0
    %v1465 = vadd.f32 %v1422, %v1464
    %v1466 = vpop.f32.mrb[0].mxu0
    %v1467 = vadd.f32 %v1424, %v1466
    %v1468 = vpop.f32.mrb[0].mxu0
    %v1469 = vadd.f32 %v1426, %v1468
    %1470 = vdwg.mxu0
    %1471 = vmatprep.subr.bf16.mxu0 %v1101
    %1472 = vmatpush1.bf16.msra.mxu0 %v1100
    %1473 = vmatprep.subr.bf16.mxu0 %v1105
    %1474 = vmatpush1.bf16.msra.mxu0 %v1104
    %1475 = vmatprep.subr.bf16.mxu0 %v1109
    %1476 = vmatpush1.bf16.msra.mxu0 %v1108
    %1477 = vmatprep.subr.bf16.mxu0 %v1113
    %1478 = vmatpush1.bf16.msra.mxu0 %v1112
    %1479 = vmatprep.subr.bf16.mxu0 %v1117
    %1480 = vmatpush1.bf16.msra.mxu0 %v1116
    %1481 = vmatprep.subr.bf16.mxu0 %v1121
    %1482 = vmatpush1.bf16.msra.mxu0 %v1120
    %1483 = vmatprep.subr.bf16.mxu0 %v1125
    %1484 = vmatpush1.bf16.msra.mxu0 %v1124
    %1485 = vmatprep.subr.bf16.mxu0 %v1129
    %1486 = vmatpush1.bf16.msra.mxu0 %v1128
    %1487 = vmatprep.subr.bf16.mxu0 %v1133
    %1488 = vmatpush1.bf16.msra.mxu0 %v1132
    %1489 = vmatprep.subr.bf16.mxu0 %v1137
    %1490 = vmatpush1.bf16.msra.mxu0 %v1136
    %1491 = vmatprep.subr.bf16.mxu0 %v1141
    %1492 = vmatpush1.bf16.msra.mxu0 %v1140
    %1493 = vmatprep.subr.bf16.mxu0 %v1145
    %1494 = vmatpush1.bf16.msra.mxu0 %v1144
    %1495 = vmatprep.subr.bf16.mxu0 %v1149
    %1496 = vmatpush1.bf16.msra.mxu0 %v1148
    %1497 = vmatprep.subr.bf16.mxu0 %v1153
    %1498 = vmatpush1.bf16.msra.mxu0 %v1152
    %1499 = vmatprep.subr.bf16.mxu0 %v1157
    %1500 = vmatpush1.bf16.msra.mxu0 %v1156
    %1501 = vmatprep.subr.bf16.mxu0 %v1161
    %1502 = vmatpush1.bf16.msra.mxu0 %v1160
    %1503 = vmatprep.mubr.bf16.mxu0 %v1169
    %1504 = vmatmul.mubr.bf16.gmra.mrb[0].mxu0 %v1168
    %v1505 = vpop.f32.mrb[0].mxu0
    %v1506 = vadd.f32 %v1463, %v1505
    %v1507 = vpop.f32.mrb[0].mxu0
    %v1508 = vadd.f32 %v1465, %v1507
    %v1509 = vpop.f32.mrb[0].mxu0
    %v1510 = vadd.f32 %v1467, %v1509
    %v1511 = vpop.f32.mrb[0].mxu0
    %v1512 = vadd.f32 %v1469, %v1511
    %1513 = vdwg.mxu0
    %v1514 = vpack.c.bf16 %v1338, %v1334
    %v1515 = vpack.c.bf16 %v1340, %v1336
    %v1516 = vpack.c.bf16 %v1510, %v1506
    %v1517 = vpack.c.bf16 %v1512, %v1508
    %v1520 = vunpack.c.l.b16 %v884
    %v1521 = vunpack.c.l.b16 %v885
    %v1522 = vpack.c.b16 %v1521, %v1520
    %vm1523 = vcmask 130048
    %v1525 = vsel %vm1523, %v1522, 0
    %1527 = vmatprep.subr.bf16.mxu0 %v1515
    %1528 = vmatpush1.bf16.msra.mxu0 %v1514
    %1529 = vmatprep.subr.bf16.mxu0 0
    %1530 = vmatpush1.bf16.msra.mxu0 0
    %1531 = vmatprep.subr.bf16.mxu0 0
    %1532 = vmatpush1.bf16.msra.mxu0 0
    %1533 = vmatprep.subr.bf16.mxu0 0
    %1534 = vmatpush1.bf16.msra.mxu0 0
    %1535 = vmatprep.subr.bf16.mxu0 0
    %1536 = vmatpush1.bf16.msra.mxu0 0
    %1537 = vmatprep.subr.bf16.mxu0 0
    %1538 = vmatpush1.bf16.msra.mxu0 0
    %1539 = vmatprep.subr.bf16.mxu0 0
    %1540 = vmatpush1.bf16.msra.mxu0 0
    %1541 = vmatprep.subr.bf16.mxu0 0
    %1542 = vmatpush1.bf16.msra.mxu0 0
    %1543 = vmatprep.subr.bf16.mxu0 0
    %1544 = vmatpush1.bf16.msra.mxu0 0
    %1545 = vmatprep.subr.bf16.mxu0 0
    %1546 = vmatpush1.bf16.msra.mxu0 0
    %1547 = vmatprep.subr.bf16.mxu0 0
    %1548 = vmatpush1.bf16.msra.mxu0 0
    %1549 = vmatprep.subr.bf16.mxu0 0
    %1550 = vmatpush1.bf16.msra.mxu0 0
    %1551 = vmatprep.subr.bf16.mxu0 0
    %1552 = vmatpush1.bf16.msra.mxu0 0
    %1553 = vmatprep.subr.bf16.mxu0 0
    %1554 = vmatpush1.bf16.msra.mxu0 0
    %1555 = vmatprep.subr.bf16.mxu0 0
    %1556 = vmatpush1.bf16.msra.mxu0 0
    %1557 = vmatprep.subr.bf16.mxu0 0
    %1558 = vmatpush1.bf16.msra.mxu0 0
    %1559 = vmatprep.mubr.bf16.mxu0 0
    %1560 = vmatmul.mubr.bf16.gmra.mrb[0].mxu0 %v1525
    %v1561 = vpop.f32.mrb[0].mxu0
    %v1562 = vadd.f32 0.0, %v1561
    %v1563 = vpop.f32.mrb[0].mxu0
    %v1564 = vadd.f32 0.0, %v1563
    %v1565 = vpop.f32.mrb[0].mxu0
    %v1566 = vadd.f32 0.0, %v1565
    %v1567 = vpop.f32.mrb[0].mxu0
    %v1568 = vadd.f32 0.0, %v1567
    %1569 = vdwg.mxu0
    %1570 = vmatprep.subr.bf16.mxu0 %v1517
    %1571 = vmatpush1.bf16.msra.mxu0 %v1516
    %1572 = vmatprep.subr.bf16.mxu0 0
    %1573 = vmatpush1.bf16.msra.mxu0 0
    %1574 = vmatprep.subr.bf16.mxu0 0
    %1575 = vmatpush1.bf16.msra.mxu0 0
    %1576 = vmatprep.subr.bf16.mxu0 0
    %1577 = vmatpush1.bf16.msra.mxu0 0
    %1578 = vmatprep.subr.bf16.mxu0 0
    %1579 = vmatpush1.bf16.msra.mxu0 0
    %1580 = vmatprep.subr.bf16.mxu0 0
    %1581 = vmatpush1.bf16.msra.mxu0 0
    %1582 = vmatprep.subr.bf16.mxu0 0
    %1583 = vmatpush1.bf16.msra.mxu0 0
    %1584 = vmatprep.subr.bf16.mxu0 0
    %1585 = vmatpush1.bf16.msra.mxu0 0
    %1586 = vmatprep.subr.bf16.mxu0 0
    %1587 = vmatpush1.bf16.msra.mxu0 0
    %1588 = vmatprep.subr.bf16.mxu0 0
    %1589 = vmatpush1.bf16.msra.mxu0 0
    %1590 = vmatprep.subr.bf16.mxu0 0
    %1591 = vmatpush1.bf16.msra.mxu0 0
    %1592 = vmatprep.subr.bf16.mxu0 0
    %1593 = vmatpush1.bf16.msra.mxu0 0
    %1594 = vmatprep.subr.bf16.mxu0 0
    %1595 = vmatpush1.bf16.msra.mxu0 0
    %1596 = vmatprep.subr.bf16.mxu0 0
    %1597 = vmatpush1.bf16.msra.mxu0 0
    %1598 = vmatprep.subr.bf16.mxu0 0
    %1599 = vmatpush1.bf16.msra.mxu0 0
    %1600 = vmatprep.subr.bf16.mxu0 0
    %1601 = vmatpush1.bf16.msra.mxu0 0
    %1602 = vmatprep.mubr.bf16.mxu0 0
    %1603 = vmatmul.mubr.bf16.gmra.mrb[0].mxu0 %v1525
    %v1604 = vpop.f32.mrb[0].mxu0
    %v1605 = vadd.f32 0.0, %v1604
    %v1606 = vpop.f32.mrb[0].mxu0
    %v1607 = vadd.f32 0.0, %v1606
    %v1608 = vpop.f32.mrb[0].mxu0
    %v1609 = vadd.f32 0.0, %v1608
    %v1610 = vpop.f32.mrb[0].mxu0
    %v1611 = vadd.f32 0.0, %v1610
    %1612 = vdwg.mxu0
    %v1613 = vadd.f32 %v1562, %v1564
    %v1614 = vadd.f32 %v1613, %v1605
    %v1615 = vadd.f32 %v1614, %v1607
    %v1616 = vadd.f32 %v1615, %v1566
    %v1617 = vadd.f32 %v1616, %v1568
    %v1618 = vadd.f32 %v1617, %v1609
    %v1619 = vadd.f32 %v1618, %v1611
    %1620 = vadd.xlane.f32.xlu0 %v1619
    %v1621 = vpop.xlane.xlu0 %1620
    %v1622 = vmul.f32 %v1562, %v1562
    %v1623 = vmul.f32 %v1564, %v1564
    %v1624 = vmul.f32 %v1605, %v1605
    %v1625 = vmul.f32 %v1607, %v1607
    %v1626 = vmul.f32 %v1566, %v1566
    %v1627 = vmul.f32 %v1568, %v1568
    %v1628 = vmul.f32 %v1609, %v1609
    %v1629 = vmul.f32 %v1611, %v1611
    %v1630 = vadd.f32 %v1622, %v1623
    %v1631 = vadd.f32 %v1630, %v1624
    %v1632 = vadd.f32 %v1631, %v1625
    %v1633 = vadd.f32 %v1632, %v1626
    %v1634 = vadd.f32 %v1633, %v1627
    %v1635 = vadd.f32 %v1634, %v1628
    %v1636 = vadd.f32 %v1635, %v1629
    %1637 = vadd.xlane.f32.xlu0 %v1636
    %v1638 = vpop.xlane.xlu0 %1637
    %v1639 = vmul.f32 %v1621, 0.0009765625
    %v1640 = vmul.f32 %v1638, 0.0009765625
    %v1641 = vmul.f32 %v1639, %v1639
    %v1642 = vsub.f32 %v1640, %v1641
    %v1643 = vld [vmem:[%s2] sm:$0xff]
    %v1644 = vadd.f32 %v1642, 1e-05
    %v1645 = vrsqrt.pop %v1644
    %v1646 = vmul.f32 %v1643, %v1645
    %v1647 = vld [vmem:[%s3] sm:$0xff]
    %v1648 = vmul.f32 %v1639, %v1646
    %v1649 = vsub.f32 %v1647, %v1648
    %1651 = vset.pattern.permute.xlu0 0
    %1652 = vperm.xlu0 %1651, %v1646
    %v1653 = vpop.permute.xlu0 %1652
    %v1655 = vmul.f32 %v1562, %v1653
    %v1656 = vmul.f32 %v1564, %v1653
    %v1657 = vmul.f32 %v1605, %v1653
    %v1658 = vmul.f32 %v1607, %v1653
    %v1659 = vmul.f32 %v1566, %v1653
    %v1660 = vmul.f32 %v1568, %v1653
    %v1661 = vmul.f32 %v1609, %v1653
    %v1662 = vmul.f32 %v1611, %v1653
    %1664 = vset.pattern.permute.xlu0 0
    %1665 = vperm.xlu0 %1664, %v1649
    %v1666 = vpop.permute.xlu0 %1665
    %v1668 = vadd.f32 %v1655, %v1666
    %v1669 = vadd.f32 %v1656, %v1666
    %v1670 = vadd.f32 %v1657, %v1666
    %v1671 = vadd.f32 %v1658, %v1666
    %v1672 = vadd.f32 %v1659, %v1666
    %v1673 = vadd.f32 %v1660, %v1666
    %v1674 = vadd.f32 %v1661, %v1666
    %v1675 = vadd.f32 %v1662, %v1666
    %v1676 = vmin.f32 %v1668, 20.0
    %v1677 = vmin.f32 %v1669, 20.0
    %v1678 = vmin.f32 %v1670, 20.0
    %v1679 = vmin.f32 %v1671, 20.0
    %v1680 = vmin.f32 %v1672, 20.0
    %v1681 = vmin.f32 %v1673, 20.0
    %v1682 = vmin.f32 %v1674, 20.0
    %v1683 = vmin.f32 %v1675, 20.0
    %vm1684 = vcmp.gt.f32.partialorder %v1668, 20.0
    %vm1685 = vcmp.gt.f32.partialorder %v1669, 20.0
    %vm1686 = vcmp.gt.f32.partialorder %v1670, 20.0
    %vm1687 = vcmp.gt.f32.partialorder %v1671, 20.0
    %vm1688 = vcmp.gt.f32.partialorder %v1672, 20.0
    %vm1689 = vcmp.gt.f32.partialorder %v1673, 20.0
    %vm1690 = vcmp.gt.f32.partialorder %v1674, 20.0
    %vm1691 = vcmp.gt.f32.partialorder %v1675, 20.0
    %v1692 = vmul.f32 %v1676, 1.442695
    %v1693 = vpow.pop %v1692
    %v1694 = vmul.f32 %v1677, 1.442695
    %v1695 = vpow.pop %v1694
    %v1696 = vmul.f32 %v1678, 1.442695
    %v1697 = vpow.pop %v1696
    %v1698 = vmul.f32 %v1679, 1.442695
    %v1699 = vpow.pop %v1698
    %v1700 = vmul.f32 %v1680, 1.442695
    %v1701 = vpow.pop %v1700
    %v1702 = vmul.f32 %v1681, 1.442695
    %v1703 = vpow.pop %v1702
    %v1704 = vmul.f32 %v1682, 1.442695
    %v1705 = vpow.pop %v1704
    %v1706 = vmul.f32 %v1683, 1.442695
    %v1707 = vpow.pop %v1706
    %v1708 = vadd.f32 %v1693, 1.0
    %v1709 = vlog2.pop %v1708
    %v1710 = vmul.f32 %v1709, 0.6931472
    %v1711 = vmul.f32 -0.5, %v1693
    %v1712 = vadd.f32 %v1711, 1.0
    %v1713 = vmul.f32 %v1712, %v1693
    %v1714 = vand.u32 2147483647, %v1693
    %vm1715 = vcmp.lt.f32.partialorder %v1714, 0.0004427343
    %v1716 = vsel %vm1715, %v1713, %v1710
    %v1717 = vadd.f32 %v1695, 1.0
    %v1718 = vlog2.pop %v1717
    %v1719 = vmul.f32 %v1718, 0.6931472
    %v1720 = vmul.f32 -0.5, %v1695
    %v1721 = vadd.f32 %v1720, 1.0
    %v1722 = vmul.f32 %v1721, %v1695
    %v1723 = vand.u32 2147483647, %v1695
    %vm1724 = vcmp.lt.f32.partialorder %v1723, 0.0004427343
    %v1725 = vsel %vm1724, %v1722, %v1719
    %v1726 = vadd.f32 %v1697, 1.0
    %v1727 = vlog2.pop %v1726
    %v1728 = vmul.f32 %v1727, 0.6931472
    %v1729 = vmul.f32 -0.5, %v1697
    %v1730 = vadd.f32 %v1729, 1.0
    %v1731 = vmul.f32 %v1730, %v1697
    %v1732 = vand.u32 2147483647, %v1697
    %vm1733 = vcmp.lt.f32.partialorder %v1732, 0.0004427343
    %v1734 = vsel %vm1733, %v1731, %v1728
    %v1735 = vadd.f32 %v1699, 1.0
    %v1736 = vlog2.pop %v1735
    %v1737 = vmul.f32 %v1736, 0.6931472
    %v1738 = vmul.f32 -0.5, %v1699
    %v1739 = vadd.f32 %v1738, 1.0
    %v1740 = vmul.f32 %v1739, %v1699
    %v1741 = vand.u32 2147483647, %v1699
    %vm1742 = vcmp.lt.f32.partialorder %v1741, 0.0004427343
    %v1743 = vsel %vm1742, %v1740, %v1737
    %v1744 = vadd.f32 %v1701, 1.0
    %v1745 = vlog2.pop %v1744
    %v1746 = vmul.f32 %v1745, 0.6931472
    %v1747 = vmul.f32 -0.5, %v1701
    %v1748 = vadd.f32 %v1747, 1.0
    %v1749 = vmul.f32 %v1748, %v1701
    %v1750 = vand.u32 2147483647, %v1701
    %vm1751 = vcmp.lt.f32.partialorder %v1750, 0.0004427343
    %v1752 = vsel %vm1751, %v1749, %v1746
    %v1753 = vadd.f32 %v1703, 1.0
    %v1754 = vlog2.pop %v1753
    %v1755 = vmul.f32 %v1754, 0.6931472
    %v1756 = vmul.f32 -0.5, %v1703
    %v1757 = vadd.f32 %v1756, 1.0
    %v1758 = vmul.f32 %v1757, %v1703
    %v1759 = vand.u32 2147483647, %v1703
    %vm1760 = vcmp.lt.f32.partialorder %v1759, 0.0004427343
    %v1761 = vsel %vm1760, %v1758, %v1755
    %v1762 = vadd.f32 %v1705, 1.0
    %v1763 = vlog2.pop %v1762
    %v1764 = vmul.f32 %v1763, 0.6931472
    %v1765 = vmul.f32 -0.5, %v1705
    %v1766 = vadd.f32 %v1765, 1.0
    %v1767 = vmul.f32 %v1766, %v1705
    %v1768 = vand.u32 2147483647, %v1705
    %vm1769 = vcmp.lt.f32.partialorder %v1768, 0.0004427343
    %v1770 = vsel %vm1769, %v1767, %v1764
    %v1771 = vadd.f32 %v1707, 1.0
    %v1772 = vlog2.pop %v1771
    %v1773 = vmul.f32 %v1772, 0.6931472
    %v1774 = vmul.f32 -0.5, %v1707
    %v1775 = vadd.f32 %v1774, 1.0
    %v1776 = vmul.f32 %v1775, %v1707
    %v1777 = vand.u32 2147483647, %v1707
    %vm1778 = vcmp.lt.f32.partialorder %v1777, 0.0004427343
    %v1779 = vsel %vm1778, %v1776, %v1773
    %v1780 = vsel %vm1684, %v1668, %v1716
    %v1781 = vsel %vm1685, %v1669, %v1725
    %v1782 = vsel %vm1686, %v1670, %v1734
    %v1783 = vsel %vm1687, %v1671, %v1743
    %v1784 = vsel %vm1688, %v1672, %v1752
    %v1785 = vsel %vm1689, %v1673, %v1761
    %v1786 = vsel %vm1690, %v1674, %v1770
    %v1787 = vsel %vm1691, %v1675, %v1779
    %s1788 = smul.u32 4, 64
    %s1789 = smul.u32 %s1788, 4
    %s1790 = sshll.u32 %s1789, 4
    %1791 = dma.done %s84, %s1790
    %v1792 = vld [vmem:[#allocation3] sm:$0xff]
    %v1793 = vld [vmem:[#allocation3 + $0x8] sm:$0xff]
    %v1794 = vld [vmem:[#allocation3 + $0x10] sm:$0xff]
    %v1795 = vld [vmem:[#allocation3 + $0x18] sm:$0xff]
    %v1796 = vld [vmem:[#allocation3 + $0x20] sm:$0xff]
    %v1797 = vld [vmem:[#allocation3 + $0x28] sm:$0xff]
    %v1798 = vld [vmem:[#allocation3 + $0x30] sm:$0xff]
    %v1799 = vld [vmem:[#allocation3 + $0x38] sm:$0xff]
    %v1800 = vld [vmem:[#allocation3 + $0x40] sm:$0xff]
    %v1801 = vld [vmem:[#allocation3 + $0x48] sm:$0xff]
    %v1802 = vld [vmem:[#allocation3 + $0x50] sm:$0xff]
    %v1803 = vld [vmem:[#allocation3 + $0x58] sm:$0xff]
    %v1804 = vld [vmem:[#allocation3 + $0x60] sm:$0xff]
    %v1805 = vld [vmem:[#allocation3 + $0x68] sm:$0xff]
    %v1806 = vld [vmem:[#allocation3 + $0x70] sm:$0xff]
    %v1807 = vld [vmem:[#allocation3 + $0x78] sm:$0xff]
    %v1808 = vld [vmem:[#allocation3 + $0x80] sm:$0xff]
    %v1809 = vld [vmem:[#allocation3 + $0x88] sm:$0xff]
    %v1810 = vld [vmem:[#allocation3 + $0x90] sm:$0xff]
    %v1811 = vld [vmem:[#allocation3 + $0x98] sm:$0xff]
    %v1812 = vld [vmem:[#allocation3 + $0xa0] sm:$0xff]
    %v1813 = vld [vmem:[#allocation3 + $0xa8] sm:$0xff]
    %v1814 = vld [vmem:[#allocation3 + $0xb0] sm:$0xff]
    %v1815 = vld [vmem:[#allocation3 + $0xb8] sm:$0xff]
    %v1816 = vld [vmem:[#allocation3 + $0xc0] sm:$0xff]
    %v1817 = vld [vmem:[#allocation3 + $0xc8] sm:$0xff]
    %v1818 = vld [vmem:[#allocation3 + $0xd0] sm:$0xff]
    %v1819 = vld [vmem:[#allocation3 + $0xd8] sm:$0xff]
    %v1820 = vld [vmem:[#allocation3 + $0xe0] sm:$0xff]
    %v1821 = vld [vmem:[#allocation3 + $0xe8] sm:$0xff]
    %v1822 = vld [vmem:[#allocation3 + $0xf0] sm:$0xff]
    %v1823 = vld [vmem:[#allocation3 + $0xf8] sm:$0xff]
    %v1824 = vld [vmem:[#allocation3 + $0x100] sm:$0xff]
    %v1825 = vld [vmem:[#allocation3 + $0x108] sm:$0xff]
    %v1826 = vld [vmem:[#allocation3 + $0x110] sm:$0xff]
    %v1827 = vld [vmem:[#allocation3 + $0x118] sm:$0xff]
    %v1828 = vld [vmem:[#allocation3 + $0x120] sm:$0xff]
    %v1829 = vld [vmem:[#allocation3 + $0x128] sm:$0xff]
    %v1830 = vld [vmem:[#allocation3 + $0x130] sm:$0xff]
    %v1831 = vld [vmem:[#allocation3 + $0x138] sm:$0xff]
    %v1832 = vld [vmem:[#allocation3 + $0x140] sm:$0xff]
    %v1833 = vld [vmem:[#allocation3 + $0x148] sm:$0xff]
    %v1834 = vld [vmem:[#allocation3 + $0x150] sm:$0xff]
    %v1835 = vld [vmem:[#allocation3 + $0x158] sm:$0xff]
    %v1836 = vld [vmem:[#allocation3 + $0x160] sm:$0xff]
    %v1837 = vld [vmem:[#allocation3 + $0x168] sm:$0xff]
    %v1838 = vld [vmem:[#allocation3 + $0x170] sm:$0xff]
    %v1839 = vld [vmem:[#allocation3 + $0x178] sm:$0xff]
    %v1840 = vld [vmem:[#allocation3 + $0x180] sm:$0xff]
    %v1841 = vld [vmem:[#allocation3 + $0x188] sm:$0xff]
    %v1842 = vld [vmem:[#allocation3 + $0x190] sm:$0xff]
    %v1843 = vld [vmem:[#allocation3 + $0x198] sm:$0xff]
    %v1844 = vld [vmem:[#allocation3 + $0x1a0] sm:$0xff]
    %v1845 = vld [vmem:[#allocation3 + $0x1a8] sm:$0xff]
    %v1846 = vld [vmem:[#allocation3 + $0x1b0] sm:$0xff]
    %v1847 = vld [vmem:[#allocation3 + $0x1b8] sm:$0xff]
    %v1848 = vld [vmem:[#allocation3 + $0x1c0] sm:$0xff]
    %v1849 = vld [vmem:[#allocation3 + $0x1c8] sm:$0xff]
    %v1850 = vld [vmem:[#allocation3 + $0x1d0] sm:$0xff]
    %v1851 = vld [vmem:[#allocation3 + $0x1d8] sm:$0xff]
    %v1852 = vld [vmem:[#allocation3 + $0x1e0] sm:$0xff]
    %v1853 = vld [vmem:[#allocation3 + $0x1e8] sm:$0xff]
    %v1854 = vld [vmem:[#allocation3 + $0x1f0] sm:$0xff]
    %v1855 = vld [vmem:[#allocation3 + $0x1f8] sm:$0xff]
    %v1856 = vld [vmem:[#allocation3 + $0x200] sm:$0xff]
    %v1857 = vld [vmem:[#allocation3 + $0x208] sm:$0xff]
    %v1858 = vld [vmem:[#allocation3 + $0x210] sm:$0xff]
    %v1859 = vld [vmem:[#allocation3 + $0x218] sm:$0xff]
    %v1860 = vld [vmem:[#allocation3 + $0x220] sm:$0xff]
    %v1861 = vld [vmem:[#allocation3 + $0x228] sm:$0xff]
    %v1862 = vld [vmem:[#allocation3 + $0x230] sm:$0xff]
    %v1863 = vld [vmem:[#allocation3 + $0x238] sm:$0xff]
    %v1864 = vld [vmem:[#allocation3 + $0x240] sm:$0xff]
    %v1865 = vld [vmem:[#allocation3 + $0x248] sm:$0xff]
    %v1866 = vld [vmem:[#allocation3 + $0x250] sm:$0xff]
    %v1867 = vld [vmem:[#allocation3 + $0x258] sm:$0xff]
    %v1868 = vld [vmem:[#allocation3 + $0x260] sm:$0xff]
    %v1869 = vld [vmem:[#allocation3 + $0x268] sm:$0xff]
    %v1870 = vld [vmem:[#allocation3 + $0x270] sm:$0xff]
    %v1871 = vld [vmem:[#allocation3 + $0x278] sm:$0xff]
    %v1872 = vld [vmem:[#allocation3 + $0x280] sm:$0xff]
    %v1873 = vld [vmem:[#allocation3 + $0x288] sm:$0xff]
    %v1874 = vld [vmem:[#allocation3 + $0x290] sm:$0xff]
    %v1875 = vld [vmem:[#allocation3 + $0x298] sm:$0xff]
    %v1876 = vld [vmem:[#allocation3 + $0x2a0] sm:$0xff]
    %v1877 = vld [vmem:[#allocation3 + $0x2a8] sm:$0xff]
    %v1878 = vld [vmem:[#allocation3 + $0x2b0] sm:$0xff]
    %v1879 = vld [vmem:[#allocation3 + $0x2b8] sm:$0xff]
    %v1880 = vld [vmem:[#allocation3 + $0x2c0] sm:$0xff]
    %v1881 = vld [vmem:[#allocation3 + $0x2c8] sm:$0xff]
    %v1882 = vld [vmem:[#allocation3 + $0x2d0] sm:$0xff]
    %v1883 = vld [vmem:[#allocation3 + $0x2d8] sm:$0xff]
    %v1884 = vld [vmem:[#allocation3 + $0x2e0] sm:$0xff]
    %v1885 = vld [vmem:[#allocation3 + $0x2e8] sm:$0xff]
    %v1886 = vld [vmem:[#allocation3 + $0x2f0] sm:$0xff]
    %v1887 = vld [vmem:[#allocation3 + $0x2f8] sm:$0xff]
    %v1888 = vld [vmem:[#allocation3 + $0x300] sm:$0xff]
    %v1889 = vld [vmem:[#allocation3 + $0x308] sm:$0xff]
    %v1890 = vld [vmem:[#allocation3 + $0x310] sm:$0xff]
    %v1891 = vld [vmem:[#allocation3 + $0x318] sm:$0xff]
    %v1892 = vld [vmem:[#allocation3 + $0x320] sm:$0xff]
    %v1893 = vld [vmem:[#allocation3 + $0x328] sm:$0xff]
    %v1894 = vld [vmem:[#allocation3 + $0x330] sm:$0xff]
    %v1895 = vld [vmem:[#allocation3 + $0x338] sm:$0xff]
    %v1896 = vld [vmem:[#allocation3 + $0x340] sm:$0xff]
    %v1897 = vld [vmem:[#allocation3 + $0x348] sm:$0xff]
    %v1898 = vld [vmem:[#allocation3 + $0x350] sm:$0xff]
    %v1899 = vld [vmem:[#allocation3 + $0x358] sm:$0xff]
    %v1900 = vld [vmem:[#allocation3 + $0x360] sm:$0xff]
    %v1901 = vld [vmem:[#allocation3 + $0x368] sm:$0xff]
    %v1902 = vld [vmem:[#allocation3 + $0x370] sm:$0xff]
    %v1903 = vld [vmem:[#allocation3 + $0x378] sm:$0xff]
    %v1904 = vld [vmem:[#allocation3 + $0x380] sm:$0xff]
    %v1905 = vld [vmem:[#allocation3 + $0x388] sm:$0xff]
    %v1906 = vld [vmem:[#allocation3 + $0x390] sm:$0xff]
    %v1907 = vld [vmem:[#allocation3 + $0x398] sm:$0xff]
    %v1908 = vld [vmem:[#allocation3 + $0x3a0] sm:$0xff]
    %v1909 = vld [vmem:[#allocation3 + $0x3a8] sm:$0xff]
    %v1910 = vld [vmem:[#allocation3 + $0x3b0] sm:$0xff]
    %v1911 = vld [vmem:[#allocation3 + $0x3b8] sm:$0xff]
    %v1912 = vld [vmem:[#allocation3 + $0x3c0] sm:$0xff]
    %v1913 = vld [vmem:[#allocation3 + $0x3c8] sm:$0xff]
    %v1914 = vld [vmem:[#allocation3 + $0x3d0] sm:$0xff]
    %v1915 = vld [vmem:[#allocation3 + $0x3d8] sm:$0xff]
    %v1916 = vld [vmem:[#allocation3 + $0x3e0] sm:$0xff]
    %v1917 = vld [vmem:[#allocation3 + $0x3e8] sm:$0xff]
    %v1918 = vld [vmem:[#allocation3 + $0x3f0] sm:$0xff]
    %v1919 = vld [vmem:[#allocation3 + $0x3f8] sm:$0xff]
    %v1920 = vpack.c.bf16 %v1784, %v1780
    %v1921 = vpack.c.bf16 %v1785, %v1781
    %v1922 = vpack.c.bf16 %v1786, %v1782
    %v1923 = vpack.c.bf16 %v1787, %v1783
    %1924 = vmatprep.subr.bf16.mxu0 %v1793
    %1925 = vmatpush1.bf16.msra.mxu0 %v1792
    %1926 = vmatprep.subr.bf16.mxu0 %v1797
    %1927 = vmatpush1.bf16.msra.mxu0 %v1796
    %1928 = vmatprep.subr.bf16.mxu0 %v1801
    %1929 = vmatpush1.bf16.msra.mxu0 %v1800
    %1930 = vmatprep.subr.bf16.mxu0 %v1805
    %1931 = vmatpush1.bf16.msra.mxu0 %v1804
    %1932 = vmatprep.subr.bf16.mxu0 %v1809
    %1933 = vmatpush1.bf16.msra.mxu0 %v1808
    %1934 = vmatprep.subr.bf16.mxu0 %v1813
    %1935 = vmatpush1.bf16.msra.mxu0 %v1812
    %1936 = vmatprep.subr.bf16.mxu0 %v1817
    %1937 = vmatpush1.bf16.msra.mxu0 %v1816
    %1938 = vmatprep.subr.bf16.mxu0 %v1821
    %1939 = vmatpush1.bf16.msra.mxu0 %v1820
    %1940 = vmatprep.subr.bf16.mxu0 %v1825
    %1941 = vmatpush1.bf16.msra.mxu0 %v1824
    %1942 = vmatprep.subr.bf16.mxu0 %v1829
    %1943 = vmatpush1.bf16.msra.mxu0 %v1828
    %1944 = vmatprep.subr.bf16.mxu0 %v1833
    %1945 = vmatpush1.bf16.msra.mxu0 %v1832
    %1946 = vmatprep.subr.bf16.mxu0 %v1837
    %1947 = vmatpush1.bf16.msra.mxu0 %v1836
    %1948 = vmatprep.subr.bf16.mxu0 %v1841
    %1949 = vmatpush1.bf16.msra.mxu0 %v1840
    %1950 = vmatprep.subr.bf16.mxu0 %v1845
    %1951 = vmatpush1.bf16.msra.mxu0 %v1844
    %1952 = vmatprep.subr.bf16.mxu0 %v1849
    %1953 = vmatpush1.bf16.msra.mxu0 %v1848
    %1954 = vmatprep.subr.bf16.mxu0 %v1853
    %1955 = vmatpush1.bf16.msra.mxu0 %v1852
    %1956 = vmatprep.mubr.bf16.mxu0 %v1921
    %1957 = vmatmul.mubr.bf16.gmra.mrb[0].mxu0 %v1920
    %v1958 = vpop.f32.mrb[0].mxu0
    %v1959 = vadd.f32 0.0, %v1958
    %v1960 = vpop.f32.mrb[0].mxu0
    %v1961 = vadd.f32 0.0, %v1960
    %v1962 = vpop.f32.mrb[0].mxu0
    %v1963 = vadd.f32 0.0, %v1962
    %v1964 = vpop.f32.mrb[0].mxu0
    %v1965 = vadd.f32 0.0, %v1964
    %1966 = vdwg.mxu0
    %1967 = vmatprep.subr.bf16.mxu0 %v1857
    %1968 = vmatpush1.bf16.msra.mxu0 %v1856
    %1969 = vmatprep.subr.bf16.mxu0 %v1861
    %1970 = vmatpush1.bf16.msra.mxu0 %v1860
    %1971 = vmatprep.subr.bf16.mxu0 %v1865
    %1972 = vmatpush1.bf16.msra.mxu0 %v1864
    %1973 = vmatprep.subr.bf16.mxu0 %v1869
    %1974 = vmatpush1.bf16.msra.mxu0 %v1868
    %1975 = vmatprep.subr.bf16.mxu0 %v1873
    %1976 = vmatpush1.bf16.msra.mxu0 %v1872
    %1977 = vmatprep.subr.bf16.mxu0 %v1877
    %1978 = vmatpush1.bf16.msra.mxu0 %v1876
    %1979 = vmatprep.subr.bf16.mxu0 %v1881
    %1980 = vmatpush1.bf16.msra.mxu0 %v1880
    %1981 = vmatprep.subr.bf16.mxu0 %v1885
    %1982 = vmatpush1.bf16.msra.mxu0 %v1884
    %1983 = vmatprep.subr.bf16.mxu0 %v1889
    %1984 = vmatpush1.bf16.msra.mxu0 %v1888
    %1985 = vmatprep.subr.bf16.mxu0 %v1893
    %1986 = vmatpush1.bf16.msra.mxu0 %v1892
    %1987 = vmatprep.subr.bf16.mxu0 %v1897
    %1988 = vmatpush1.bf16.msra.mxu0 %v1896
    %1989 = vmatprep.subr.bf16.mxu0 %v1901
    %1990 = vmatpush1.bf16.msra.mxu0 %v1900
    %1991 = vmatprep.subr.bf16.mxu0 %v1905
    %1992 = vmatpush1.bf16.msra.mxu0 %v1904
    %1993 = vmatprep.subr.bf16.mxu0 %v1909
    %1994 = vmatpush1.bf16.msra.mxu0 %v1908
    %1995 = vmatprep.subr.bf16.mxu0 %v1913
    %1996 = vmatpush1.bf16.msra.mxu0 %v1912
    %1997 = vmatprep.subr.bf16.mxu0 %v1917
    %1998 = vmatpush1.bf16.msra.mxu0 %v1916
    %1999 = vmatprep.mubr.bf16.mxu0 %v1923
    %2000 = vmatmul.mubr.bf16.gmra.mrb[0].mxu0 %v1922
    %v2001 = vpop.f32.mrb[0].mxu0
    %v2002 = vadd.f32 %v1959, %v2001
    %v2003 = vpop.f32.mrb[0].mxu0
    %v2004 = vadd.f32 %v1961, %v2003
    %v2005 = vpop.f32.mrb[0].mxu0
    %v2006 = vadd.f32 %v1963, %v2005
    %v2007 = vpop.f32.mrb[0].mxu0
    %v2008 = vadd.f32 %v1965, %v2007
    %2009 = vdwg.mxu0
    %2010 = vmatprep.subr.bf16.mxu0 %v1795
    %2011 = vmatpush1.bf16.msra.mxu0 %v1794
    %2012 = vmatprep.subr.bf16.mxu0 %v1799
    %2013 = vmatpush1.bf16.msra.mxu0 %v1798
    %2014 = vmatprep.subr.bf16.mxu0 %v1803
    %2015 = vmatpush1.bf16.msra.mxu0 %v1802
    %2016 = vmatprep.subr.bf16.mxu0 %v1807
    %2017 = vmatpush1.bf16.msra.mxu0 %v1806
    %2018 = vmatprep.subr.bf16.mxu0 %v1811
    %2019 = vmatpush1.bf16.msra.mxu0 %v1810
    %2020 = vmatprep.subr.bf16.mxu0 %v1815
    %2021 = vmatpush1.bf16.msra.mxu0 %v1814
    %2022 = vmatprep.subr.bf16.mxu0 %v1819
    %2023 = vmatpush1.bf16.msra.mxu0 %v1818
    %2024 = vmatprep.subr.bf16.mxu0 %v1823
    %2025 = vmatpush1.bf16.msra.mxu0 %v1822
    %2026 = vmatprep.subr.bf16.mxu0 %v1827
    %2027 = vmatpush1.bf16.msra.mxu0 %v1826
    %2028 = vmatprep.subr.bf16.mxu0 %v1831
    %2029 = vmatpush1.bf16.msra.mxu0 %v1830
    %2030 = vmatprep.subr.bf16.mxu0 %v1835
    %2031 = vmatpush1.bf16.msra.mxu0 %v1834
    %2032 = vmatprep.subr.bf16.mxu0 %v1839
    %2033 = vmatpush1.bf16.msra.mxu0 %v1838
    %2034 = vmatprep.subr.bf16.mxu0 %v1843
    %2035 = vmatpush1.bf16.msra.mxu0 %v1842
    %2036 = vmatprep.subr.bf16.mxu0 %v1847
    %2037 = vmatpush1.bf16.msra.mxu0 %v1846
    %2038 = vmatprep.subr.bf16.mxu0 %v1851
    %2039 = vmatpush1.bf16.msra.mxu0 %v1850
    %2040 = vmatprep.subr.bf16.mxu0 %v1855
    %2041 = vmatpush1.bf16.msra.mxu0 %v1854
    %2042 = vmatprep.mubr.bf16.mxu0 %v1921
    %2043 = vmatmul.mubr.bf16.gmra.mrb[0].mxu0 %v1920
    %v2044 = vpop.f32.mrb[0].mxu0
    %v2045 = vadd.f32 0.0, %v2044
    %v2046 = vpop.f32.mrb[0].mxu0
    %v2047 = vadd.f32 0.0, %v2046
    %v2048 = vpop.f32.mrb[0].mxu0
    %v2049 = vadd.f32 0.0, %v2048
    %v2050 = vpop.f32.mrb[0].mxu0
    %v2051 = vadd.f32 0.0, %v2050
    %2052 = vdwg.mxu0
    %2053 = vmatprep.subr.bf16.mxu0 %v1859
    %2054 = vmatpush1.bf16.msra.mxu0 %v1858
    %2055 = vmatprep.subr.bf16.mxu0 %v1863
    %2056 = vmatpush1.bf16.msra.mxu0 %v1862
    %2057 = vmatprep.subr.bf16.mxu0 %v1867
    %2058 = vmatpush1.bf16.msra.mxu0 %v1866
    %2059 = vmatprep.subr.bf16.mxu0 %v1871
    %2060 = vmatpush1.bf16.msra.mxu0 %v1870
    %2061 = vmatprep.subr.bf16.mxu0 %v1875
    %2062 = vmatpush1.bf16.msra.mxu0 %v1874
    %2063 = vmatprep.subr.bf16.mxu0 %v1879
    %2064 = vmatpush1.bf16.msra.mxu0 %v1878
    %2065 = vmatprep.subr.bf16.mxu0 %v1883
    %2066 = vmatpush1.bf16.msra.mxu0 %v1882
    %2067 = vmatprep.subr.bf16.mxu0 %v1887
    %2068 = vmatpush1.bf16.msra.mxu0 %v1886
    %2069 = vmatprep.subr.bf16.mxu0 %v1891
    %2070 = vmatpush1.bf16.msra.mxu0 %v1890
    %2071 = vmatprep.subr.bf16.mxu0 %v1895
    %2072 = vmatpush1.bf16.msra.mxu0 %v1894
    %2073 = vmatprep.subr.bf16.mxu0 %v1899
    %2074 = vmatpush1.bf16.msra.mxu0 %v1898
    %2075 = vmatprep.subr.bf16.mxu0 %v1903
    %2076 = vmatpush1.bf16.msra.mxu0 %v1902
    %2077 = vmatprep.subr.bf16.mxu0 %v1907
    %2078 = vmatpush1.bf16.msra.mxu0 %v1906
    %2079 = vmatprep.subr.bf16.mxu0 %v1911
    %2080 = vmatpush1.bf16.msra.mxu0 %v1910
    %2081 = vmatprep.subr.bf16.mxu0 %v1915
    %2082 = vmatpush1.bf16.msra.mxu0 %v1914
    %2083 = vmatprep.subr.bf16.mxu0 %v1919
    %2084 = vmatpush1.bf16.msra.mxu0 %v1918
    %2085 = vmatprep.mubr.bf16.mxu0 %v1923
    %2086 = vmatmul.mubr.bf16.gmra.mrb[0].mxu0 %v1922
    %v2087 = vpop.f32.mrb[0].mxu0
    %v2088 = vadd.f32 %v2045, %v2087
    %v2089 = vpop.f32.mrb[0].mxu0
    %v2090 = vadd.f32 %v2047, %v2089
    %v2091 = vpop.f32.mrb[0].mxu0
    %v2092 = vadd.f32 %v2049, %v2091
    %v2093 = vpop.f32.mrb[0].mxu0
    %v2094 = vadd.f32 %v2051, %v2093
    %2095 = vdwg.mxu0
    %v2096 = vpack.c.bf16 %v2006, %v2002
    %v2097 = vpack.c.bf16 %v2008, %v2004
    %v2098 = vpack.c.bf16 %v2092, %v2088
    %v2099 = vpack.c.bf16 %v2094, %v2090
    %2100 = vmatprep.subr.bf16.mxu0 %v2097
    %2101 = vmatpush1.bf16.msra.mxu0 %v2096
    %2102 = vmatprep.subr.bf16.mxu0 0
    %2103 = vmatpush1.bf16.msra.mxu0 0
    %2104 = vmatprep.subr.bf16.mxu0 0
    %2105 = vmatpush1.bf16.msra.mxu0 0
    %2106 = vmatprep.subr.bf16.mxu0 0
    %2107 = vmatpush1.bf16.msra.mxu0 0
    %2108 = vmatprep.subr.bf16.mxu0 0
    %2109 = vmatpush1.bf16.msra.mxu0 0
    %2110 = vmatprep.subr.bf16.mxu0 0
    %2111 = vmatpush1.bf16.msra.mxu0 0
    %2112 = vmatprep.subr.bf16.mxu0 0
    %2113 = vmatpush1.bf16.msra.mxu0 0
    %2114 = vmatprep.subr.bf16.mxu0 0
    %2115 = vmatpush1.bf16.msra.mxu0 0
    %2116 = vmatprep.subr.bf16.mxu0 0
    %2117 = vmatpush1.bf16.msra.mxu0 0
    %2118 = vmatprep.subr.bf16.mxu0 0
    %2119 = vmatpush1.bf16.msra.mxu0 0
    %2120 = vmatprep.subr.bf16.mxu0 0
    %2121 = vmatpush1.bf16.msra.mxu0 0
    %2122 = vmatprep.subr.bf16.mxu0 0
    %2123 = vmatpush1.bf16.msra.mxu0 0
    %2124 = vmatprep.subr.bf16.mxu0 0
    %2125 = vmatpush1.bf16.msra.mxu0 0
    %2126 = vmatprep.subr.bf16.mxu0 0
    %2127 = vmatpush1.bf16.msra.mxu0 0
    %2128 = vmatprep.subr.bf16.mxu0 0
    %2129 = vmatpush1.bf16.msra.mxu0 0
    %2130 = vmatprep.subr.bf16.mxu0 0
    %2131 = vmatpush1.bf16.msra.mxu0 0
    %2132 = vmatprep.mubr.bf16.mxu0 0
    %2133 = vmatmul.mubr.bf16.gmra.mrb[0].mxu0 %v1525
    %v2134 = vpop.f32.mrb[0].mxu0
    %v2135 = vadd.f32 0.0, %v2134
    %v2136 = vpop.f32.mrb[0].mxu0
    %v2137 = vadd.f32 0.0, %v2136
    %v2138 = vpop.f32.mrb[0].mxu0
    %v2139 = vadd.f32 0.0, %v2138
    %v2140 = vpop.f32.mrb[0].mxu0
    %v2141 = vadd.f32 0.0, %v2140
    %2142 = vdwg.mxu0
    %2143 = vmatprep.subr.bf16.mxu0 %v2099
    %2144 = vmatpush1.bf16.msra.mxu0 %v2098
    %2145 = vmatprep.subr.bf16.mxu0 0
    %2146 = vmatpush1.bf16.msra.mxu0 0
    %2147 = vmatprep.subr.bf16.mxu0 0
    %2148 = vmatpush1.bf16.msra.mxu0 0
    %2149 = vmatprep.subr.bf16.mxu0 0
    %2150 = vmatpush1.bf16.msra.mxu0 0
    %2151 = vmatprep.subr.bf16.mxu0 0
    %2152 = vmatpush1.bf16.msra.mxu0 0
    %2153 = vmatprep.subr.bf16.mxu0 0
    %2154 = vmatpush1.bf16.msra.mxu0 0
    %2155 = vmatprep.subr.bf16.mxu0 0
    %2156 = vmatpush1.bf16.msra.mxu0 0
    %2157 = vmatprep.subr.bf16.mxu0 0
    %2158 = vmatpush1.bf16.msra.mxu0 0
    %2159 = vmatprep.subr.bf16.mxu0 0
    %2160 = vmatpush1.bf16.msra.mxu0 0
    %2161 = vmatprep.subr.bf16.mxu0 0
    %2162 = vmatpush1.bf16.msra.mxu0 0
    %2163 = vmatprep.subr.bf16.mxu0 0
    %2164 = vmatpush1.bf16.msra.mxu0 0
    %2165 = vmatprep.subr.bf16.mxu0 0
    %2166 = vmatpush1.bf16.msra.mxu0 0
    %2167 = vmatprep.subr.bf16.mxu0 0
    %2168 = vmatpush1.bf16.msra.mxu0 0
    %2169 = vmatprep.subr.bf16.mxu0 0
    %2170 = vmatpush1.bf16.msra.mxu0 0
    %2171 = vmatprep.subr.bf16.mxu0 0
    %2172 = vmatpush1.bf16.msra.mxu0 0
    %2173 = vmatprep.subr.bf16.mxu0 0
    %2174 = vmatpush1.bf16.msra.mxu0 0
    %2175 = vmatprep.mubr.bf16.mxu0 0
    %2176 = vmatmul.mubr.bf16.gmra.mrb[0].mxu0 %v1525
    %v2177 = vpop.f32.mrb[0].mxu0
    %v2178 = vadd.f32 0.0, %v2177
    %v2179 = vpop.f32.mrb[0].mxu0
    %v2180 = vadd.f32 0.0, %v2179
    %v2181 = vpop.f32.mrb[0].mxu0
    %v2182 = vadd.f32 0.0, %v2181
    %v2183 = vpop.f32.mrb[0].mxu0
    %v2184 = vadd.f32 0.0, %v2183
    %2185 = vdwg.mxu0
    %v2186 = vadd.f32 %v2135, %v2137
    %v2187 = vadd.f32 %v2186, %v2178
    %v2188 = vadd.f32 %v2187, %v2180
    %v2189 = vadd.f32 %v2188, %v2139
    %v2190 = vadd.f32 %v2189, %v2141
    %v2191 = vadd.f32 %v2190, %v2182
    %v2192 = vadd.f32 %v2191, %v2184
    %2193 = vadd.xlane.f32.xlu0 %v2192
    %v2194 = vpop.xlane.xlu0 %2193
    %v2195 = vmul.f32 %v2135, %v2135
    %v2196 = vmul.f32 %v2137, %v2137
    %v2197 = vmul.f32 %v2178, %v2178
    %v2198 = vmul.f32 %v2180, %v2180
    %v2199 = vmul.f32 %v2139, %v2139
    %v2200 = vmul.f32 %v2141, %v2141
    %v2201 = vmul.f32 %v2182, %v2182
    %v2202 = vmul.f32 %v2184, %v2184
    %v2203 = vadd.f32 %v2195, %v2196
    %v2204 = vadd.f32 %v2203, %v2197
    %v2205 = vadd.f32 %v2204, %v2198
    %v2206 = vadd.f32 %v2205, %v2199
    %v2207 = vadd.f32 %v2206, %v2200
    %v2208 = vadd.f32 %v2207, %v2201
    %v2209 = vadd.f32 %v2208, %v2202
    %2210 = vadd.xlane.f32.xlu0 %v2209
    %v2211 = vpop.xlane.xlu0 %2210
    %v2212 = vmul.f32 %v2194, 0.0009765625
    %v2213 = vmul.f32 %v2211, 0.0009765625
    %v2214 = vmul.f32 %v2212, %v2212
    %v2215 = vsub.f32 %v2213, %v2214
    %s2216 = scalar_lea.vmem %s2, 8
    %v2217 = vld [vmem:[%s2216] sm:$0xff]
    %v2218 = vadd.f32 %v2215, 1e-05
    %v2219 = vrsqrt.pop %v2218
    %v2220 = vmul.f32 %v2217, %v2219
    %s2221 = scalar_lea.vmem %s3, 8
    %v2222 = vld [vmem:[%s2221] sm:$0xff]
    %v2223 = vmul.f32 %v2212, %v2220
    %v2224 = vsub.f32 %v2222, %v2223
    %2226 = vset.pattern.permute.xlu0 0
    %2227 = vperm.xlu0 %2226, %v2220
    %v2228 = vpop.permute.xlu0 %2227
    %v2230 = vmul.f32 %v2135, %v2228
    %v2231 = vmul.f32 %v2137, %v2228
    %v2232 = vmul.f32 %v2178, %v2228
    %v2233 = vmul.f32 %v2180, %v2228
    %v2234 = vmul.f32 %v2139, %v2228
    %v2235 = vmul.f32 %v2141, %v2228
    %v2236 = vmul.f32 %v2182, %v2228
    %v2237 = vmul.f32 %v2184, %v2228
    %2239 = vset.pattern.permute.xlu0 0
    %2240 = vperm.xlu0 %2239, %v2224
    %v2241 = vpop.permute.xlu0 %2240
    %v2243 = vadd.f32 %v2230, %v2241
    %v2244 = vadd.f32 %v2231, %v2241
    %v2245 = vadd.f32 %v2232, %v2241
    %v2246 = vadd.f32 %v2233, %v2241
    %v2247 = vadd.f32 %v2234, %v2241
    %v2248 = vadd.f32 %v2235, %v2241
    %v2249 = vadd.f32 %v2236, %v2241
    %v2250 = vadd.f32 %v2237, %v2241
    %v2251 = vadd.f32 %v2243, %v1780
    %v2252 = vadd.f32 %v2244, %v1781
    %v2253 = vadd.f32 %v2245, %v1782
    %v2254 = vadd.f32 %v2246, %v1783
    %v2255 = vadd.f32 %v2247, %v1784
    %v2256 = vadd.f32 %v2248, %v1785
    %v2257 = vadd.f32 %v2249, %v1786
    %v2258 = vadd.f32 %v2250, %v1787
    %v2259 = vmin.f32 %v2251, 20.0
    %v2260 = vmin.f32 %v2252, 20.0
    %v2261 = vmin.f32 %v2253, 20.0
    %v2262 = vmin.f32 %v2254, 20.0
    %v2263 = vmin.f32 %v2255, 20.0
    %v2264 = vmin.f32 %v2256, 20.0
    %v2265 = vmin.f32 %v2257, 20.0
    %v2266 = vmin.f32 %v2258, 20.0
    %vm2267 = vcmp.gt.f32.partialorder %v2251, 20.0
    %vm2268 = vcmp.gt.f32.partialorder %v2252, 20.0
    %vm2269 = vcmp.gt.f32.partialorder %v2253, 20.0
    %vm2270 = vcmp.gt.f32.partialorder %v2254, 20.0
    %vm2271 = vcmp.gt.f32.partialorder %v2255, 20.0
    %vm2272 = vcmp.gt.f32.partialorder %v2256, 20.0
    %vm2273 = vcmp.gt.f32.partialorder %v2257, 20.0
    %vm2274 = vcmp.gt.f32.partialorder %v2258, 20.0
    %v2275 = vmul.f32 %v2259, 1.442695
    %v2276 = vpow.pop %v2275
    %v2277 = vmul.f32 %v2260, 1.442695
    %v2278 = vpow.pop %v2277
    %v2279 = vmul.f32 %v2261, 1.442695
    %v2280 = vpow.pop %v2279
    %v2281 = vmul.f32 %v2262, 1.442695
    %v2282 = vpow.pop %v2281
    %v2283 = vmul.f32 %v2263, 1.442695
    %v2284 = vpow.pop %v2283
    %v2285 = vmul.f32 %v2264, 1.442695
    %v2286 = vpow.pop %v2285
    %v2287 = vmul.f32 %v2265, 1.442695
    %v2288 = vpow.pop %v2287
    %v2289 = vmul.f32 %v2266, 1.442695
    %v2290 = vpow.pop %v2289
    %v2291 = vadd.f32 %v2276, 1.0
    %v2292 = vlog2.pop %v2291
    %v2293 = vmul.f32 %v2292, 0.6931472
    %v2294 = vmul.f32 -0.5, %v2276
    %v2295 = vadd.f32 %v2294, 1.0
    %v2296 = vmul.f32 %v2295, %v2276
    %v2297 = vand.u32 2147483647, %v2276
    %vm2298 = vcmp.lt.f32.partialorder %v2297, 0.0004427343
    %v2299 = vsel %vm2298, %v2296, %v2293
    %v2300 = vadd.f32 %v2278, 1.0
    %v2301 = vlog2.pop %v2300
    %v2302 = vmul.f32 %v2301, 0.6931472
    %v2303 = vmul.f32 -0.5, %v2278
    %v2304 = vadd.f32 %v2303, 1.0
    %v2305 = vmul.f32 %v2304, %v2278
    %v2306 = vand.u32 2147483647, %v2278
    %vm2307 = vcmp.lt.f32.partialorder %v2306, 0.0004427343
    %v2308 = vsel %vm2307, %v2305, %v2302
    %v2309 = vadd.f32 %v2280, 1.0
    %v2310 = vlog2.pop %v2309
    %v2311 = vmul.f32 %v2310, 0.6931472
    %v2312 = vmul.f32 -0.5, %v2280
    %v2313 = vadd.f32 %v2312, 1.0
    %v2314 = vmul.f32 %v2313, %v2280
    %v2315 = vand.u32 2147483647, %v2280
    %vm2316 = vcmp.lt.f32.partialorder %v2315, 0.0004427343
    %v2317 = vsel %vm2316, %v2314, %v2311
    %v2318 = vadd.f32 %v2282, 1.0
    %v2319 = vlog2.pop %v2318
    %v2320 = vmul.f32 %v2319, 0.6931472
    %v2321 = vmul.f32 -0.5, %v2282
    %v2322 = vadd.f32 %v2321, 1.0
    %v2323 = vmul.f32 %v2322, %v2282
    %v2324 = vand.u32 2147483647, %v2282
    %vm2325 = vcmp.lt.f32.partialorder %v2324, 0.0004427343
    %v2326 = vsel %vm2325, %v2323, %v2320
    %v2327 = vadd.f32 %v2284, 1.0
    %v2328 = vlog2.pop %v2327
    %v2329 = vmul.f32 %v2328, 0.6931472
    %v2330 = vmul.f32 -0.5, %v2284
    %v2331 = vadd.f32 %v2330, 1.0
    %v2332 = vmul.f32 %v2331, %v2284
    %v2333 = vand.u32 2147483647, %v2284
    %vm2334 = vcmp.lt.f32.partialorder %v2333, 0.0004427343
    %v2335 = vsel %vm2334, %v2332, %v2329
    %v2336 = vadd.f32 %v2286, 1.0
    %v2337 = vlog2.pop %v2336
    %v2338 = vmul.f32 %v2337, 0.6931472
    %v2339 = vmul.f32 -0.5, %v2286
    %v2340 = vadd.f32 %v2339, 1.0
    %v2341 = vmul.f32 %v2340, %v2286
    %v2342 = vand.u32 2147483647, %v2286
    %vm2343 = vcmp.lt.f32.partialorder %v2342, 0.0004427343
    %v2344 = vsel %vm2343, %v2341, %v2338
    %v2345 = vadd.f32 %v2288, 1.0
    %v2346 = vlog2.pop %v2345
    %v2347 = vmul.f32 %v2346, 0.6931472
    %v2348 = vmul.f32 -0.5, %v2288
    %v2349 = vadd.f32 %v2348, 1.0
    %v2350 = vmul.f32 %v2349, %v2288
    %v2351 = vand.u32 2147483647, %v2288
    %vm2352 = vcmp.lt.f32.partialorder %v2351, 0.0004427343
    %v2353 = vsel %vm2352, %v2350, %v2347
    %v2354 = vadd.f32 %v2290, 1.0
    %v2355 = vlog2.pop %v2354
    %v2356 = vmul.f32 %v2355, 0.6931472
    %v2357 = vmul.f32 -0.5, %v2290
    %v2358 = vadd.f32 %v2357, 1.0
    %v2359 = vmul.f32 %v2358, %v2290
    %v2360 = vand.u32 2147483647, %v2290
    %vm2361 = vcmp.lt.f32.partialorder %v2360, 0.0004427343
    %v2362 = vsel %vm2361, %v2359, %v2356
    %v2363 = vsel %vm2267, %v2251, %v2299
    %v2364 = vsel %vm2268, %v2252, %v2308
    %v2365 = vsel %vm2269, %v2253, %v2317
    %v2366 = vsel %vm2270, %v2254, %v2326
    %v2367 = vsel %vm2271, %v2255, %v2335
    %v2368 = vsel %vm2272, %v2256, %v2344
    %v2369 = vsel %vm2273, %v2257, %v2353
    %v2370 = vsel %vm2274, %v2258, %v2362
    %s2371 = sshll.u32 %s1789, 4
    %2372 = dma.done %s119, %s2371
    %v2373 = vld [vmem:[#allocation4] sm:$0xff]
    %v2374 = vld [vmem:[#allocation4 + $0x8] sm:$0xff]
    %v2375 = vld [vmem:[#allocation4 + $0x10] sm:$0xff]
    %v2376 = vld [vmem:[#allocation4 + $0x18] sm:$0xff]
    %v2377 = vld [vmem:[#allocation4 + $0x20] sm:$0xff]
    %v2378 = vld [vmem:[#allocation4 + $0x28] sm:$0xff]
    %v2379 = vld [vmem:[#allocation4 + $0x30] sm:$0xff]
    %v2380 = vld [vmem:[#allocation4 + $0x38] sm:$0xff]
    %v2381 = vld [vmem:[#allocation4 + $0x40] sm:$0xff]
    %v2382 = vld [vmem:[#allocation4 + $0x48] sm:$0xff]
    %v2383 = vld [vmem:[#allocation4 + $0x50] sm:$0xff]
    %v2384 = vld [vmem:[#allocation4 + $0x58] sm:$0xff]
    %v2385 = vld [vmem:[#allocation4 + $0x60] sm:$0xff]
    %v2386 = vld [vmem:[#allocation4 + $0x68] sm:$0xff]
    %v2387 = vld [vmem:[#allocation4 + $0x70] sm:$0xff]
    %v2388 = vld [vmem:[#allocation4 + $0x78] sm:$0xff]
    %v2389 = vld [vmem:[#allocation4 + $0x80] sm:$0xff]
    %v2390 = vld [vmem:[#allocation4 + $0x88] sm:$0xff]
    %v2391 = vld [vmem:[#allocation4 + $0x90] sm:$0xff]
    %v2392 = vld [vmem:[#allocation4 + $0x98] sm:$0xff]
    %v2393 = vld [vmem:[#allocation4 + $0xa0] sm:$0xff]
    %v2394 = vld [vmem:[#allocation4 + $0xa8] sm:$0xff]
    %v2395 = vld [vmem:[#allocation4 + $0xb0] sm:$0xff]
    %v2396 = vld [vmem:[#allocation4 + $0xb8] sm:$0xff]
    %v2397 = vld [vmem:[#allocation4 + $0xc0] sm:$0xff]
    %v2398 = vld [vmem:[#allocation4 + $0xc8] sm:$0xff]
    %v2399 = vld [vmem:[#allocation4 + $0xd0] sm:$0xff]
    %v2400 = vld [vmem:[#allocation4 + $0xd8] sm:$0xff]
    %v2401 = vld [vmem:[#allocation4 + $0xe0] sm:$0xff]
    %v2402 = vld [vmem:[#allocation4 + $0xe8] sm:$0xff]
    %v2403 = vld [vmem:[#allocation4 + $0xf0] sm:$0xff]
    %v2404 = vld [vmem:[#allocation4 + $0xf8] sm:$0xff]
    %v2405 = vld [vmem:[#allocation4 + $0x100] sm:$0xff]
    %v2406 = vld [vmem:[#allocation4 + $0x108] sm:$0xff]
    %v2407 = vld [vmem:[#allocation4 + $0x110] sm:$0xff]
    %v2408 = vld [vmem:[#allocation4 + $0x118] sm:$0xff]
    %v2409 = vld [vmem:[#allocation4 + $0x120] sm:$0xff]
    %v2410 = vld [vmem:[#allocation4 + $0x128] sm:$0xff]
    %v2411 = vld [vmem:[#allocation4 + $0x130] sm:$0xff]
    %v2412 = vld [vmem:[#allocation4 + $0x138] sm:$0xff]
    %v2413 = vld [vmem:[#allocation4 + $0x140] sm:$0xff]
    %v2414 = vld [vmem:[#allocation4 + $0x148] sm:$0xff]
    %v2415 = vld [vmem:[#allocation4 + $0x150] sm:$0xff]
    %v2416 = vld [vmem:[#allocation4 + $0x158] sm:$0xff]
    %v2417 = vld [vmem:[#allocation4 + $0x160] sm:$0xff]
    %v2418 = vld [vmem:[#allocation4 + $0x168] sm:$0xff]
    %v2419 = vld [vmem:[#allocation4 + $0x170] sm:$0xff]
    %v2420 = vld [vmem:[#allocation4 + $0x178] sm:$0xff]
    %v2421 = vld [vmem:[#allocation4 + $0x180] sm:$0xff]
    %v2422 = vld [vmem:[#allocation4 + $0x188] sm:$0xff]
    %v2423 = vld [vmem:[#allocation4 + $0x190] sm:$0xff]
    %v2424 = vld [vmem:[#allocation4 + $0x198] sm:$0xff]
    %v2425 = vld [vmem:[#allocation4 + $0x1a0] sm:$0xff]
    %v2426 = vld [vmem:[#allocation4 + $0x1a8] sm:$0xff]
    %v2427 = vld [vmem:[#allocation4 + $0x1b0] sm:$0xff]
    %v2428 = vld [vmem:[#allocation4 + $0x1b8] sm:$0xff]
    %v2429 = vld [vmem:[#allocation4 + $0x1c0] sm:$0xff]
    %v2430 = vld [vmem:[#allocation4 + $0x1c8] sm:$0xff]
    %v2431 = vld [vmem:[#allocation4 + $0x1d0] sm:$0xff]
    %v2432 = vld [vmem:[#allocation4 + $0x1d8] sm:$0xff]
    %v2433 = vld [vmem:[#allocation4 + $0x1e0] sm:$0xff]
    %v2434 = vld [vmem:[#allocation4 + $0x1e8] sm:$0xff]
    %v2435 = vld [vmem:[#allocation4 + $0x1f0] sm:$0xff]
    %v2436 = vld [vmem:[#allocation4 + $0x1f8] sm:$0xff]
    %v2437 = vld [vmem:[#allocation4 + $0x200] sm:$0xff]
    %v2438 = vld [vmem:[#allocation4 + $0x208] sm:$0xff]
    %v2439 = vld [vmem:[#allocation4 + $0x210] sm:$0xff]
    %v2440 = vld [vmem:[#allocation4 + $0x218] sm:$0xff]
    %v2441 = vld [vmem:[#allocation4 + $0x220] sm:$0xff]
    %v2442 = vld [vmem:[#allocation4 + $0x228] sm:$0xff]
    %v2443 = vld [vmem:[#allocation4 + $0x230] sm:$0xff]
    %v2444 = vld [vmem:[#allocation4 + $0x238] sm:$0xff]
    %v2445 = vld [vmem:[#allocation4 + $0x240] sm:$0xff]
    %v2446 = vld [vmem:[#allocation4 + $0x248] sm:$0xff]
    %v2447 = vld [vmem:[#allocation4 + $0x250] sm:$0xff]
    %v2448 = vld [vmem:[#allocation4 + $0x258] sm:$0xff]
    %v2449 = vld [vmem:[#allocation4 + $0x260] sm:$0xff]
    %v2450 = vld [vmem:[#allocation4 + $0x268] sm:$0xff]
    %v2451 = vld [vmem:[#allocation4 + $0x270] sm:$0xff]
    %v2452 = vld [vmem:[#allocation4 + $0x278] sm:$0xff]
    %v2453 = vld [vmem:[#allocation4 + $0x280] sm:$0xff]
    %v2454 = vld [vmem:[#allocation4 + $0x288] sm:$0xff]
    %v2455 = vld [vmem:[#allocation4 + $0x290] sm:$0xff]
    %v2456 = vld [vmem:[#allocation4 + $0x298] sm:$0xff]
    %v2457 = vld [vmem:[#allocation4 + $0x2a0] sm:$0xff]
    %v2458 = vld [vmem:[#allocation4 + $0x2a8] sm:$0xff]
    %v2459 = vld [vmem:[#allocation4 + $0x2b0] sm:$0xff]
    %v2460 = vld [vmem:[#allocation4 + $0x2b8] sm:$0xff]
    %v2461 = vld [vmem:[#allocation4 + $0x2c0] sm:$0xff]
    %v2462 = vld [vmem:[#allocation4 + $0x2c8] sm:$0xff]
    %v2463 = vld [vmem:[#allocation4 + $0x2d0] sm:$0xff]
    %v2464 = vld [vmem:[#allocation4 + $0x2d8] sm:$0xff]
    %v2465 = vld [vmem:[#allocation4 + $0x2e0] sm:$0xff]
    %v2466 = vld [vmem:[#allocation4 + $0x2e8] sm:$0xff]
    %v2467 = vld [vmem:[#allocation4 + $0x2f0] sm:$0xff]
    %v2468 = vld [vmem:[#allocation4 + $0x2f8] sm:$0xff]
    %v2469 = vld [vmem:[#allocation4 + $0x300] sm:$0xff]
    %v2470 = vld [vmem:[#allocation4 + $0x308] sm:$0xff]
    %v2471 = vld [vmem:[#allocation4 + $0x310] sm:$0xff]
    %v2472 = vld [vmem:[#allocation4 + $0x318] sm:$0xff]
    %v2473 = vld [vmem:[#allocation4 + $0x320] sm:$0xff]
    %v2474 = vld [vmem:[#allocation4 + $0x328] sm:$0xff]
    %v2475 = vld [vmem:[#allocation4 + $0x330] sm:$0xff]
    %v2476 = vld [vmem:[#allocation4 + $0x338] sm:$0xff]
    %v2477 = vld [vmem:[#allocation4 + $0x340] sm:$0xff]
    %v2478 = vld [vmem:[#allocation4 + $0x348] sm:$0xff]
    %v2479 = vld [vmem:[#allocation4 + $0x350] sm:$0xff]
    %v2480 = vld [vmem:[#allocation4 + $0x358] sm:$0xff]
    %v2481 = vld [vmem:[#allocation4 + $0x360] sm:$0xff]
    %v2482 = vld [vmem:[#allocation4 + $0x368] sm:$0xff]
    %v2483 = vld [vmem:[#allocation4 + $0x370] sm:$0xff]
    %v2484 = vld [vmem:[#allocation4 + $0x378] sm:$0xff]
    %v2485 = vld [vmem:[#allocation4 + $0x380] sm:$0xff]
    %v2486 = vld [vmem:[#allocation4 + $0x388] sm:$0xff]
    %v2487 = vld [vmem:[#allocation4 + $0x390] sm:$0xff]
    %v2488 = vld [vmem:[#allocation4 + $0x398] sm:$0xff]
    %v2489 = vld [vmem:[#allocation4 + $0x3a0] sm:$0xff]
    %v2490 = vld [vmem:[#allocation4 + $0x3a8] sm:$0xff]
    %v2491 = vld [vmem:[#allocation4 + $0x3b0] sm:$0xff]
    %v2492 = vld [vmem:[#allocation4 + $0x3b8] sm:$0xff]
    %v2493 = vld [vmem:[#allocation4 + $0x3c0] sm:$0xff]
    %v2494 = vld [vmem:[#allocation4 + $0x3c8] sm:$0xff]
    %v2495 = vld [vmem:[#allocation4 + $0x3d0] sm:$0xff]
    %v2496 = vld [vmem:[#allocation4 + $0x3d8] sm:$0xff]
    %v2497 = vld [vmem:[#allocation4 + $0x3e0] sm:$0xff]
    %v2498 = vld [vmem:[#allocation4 + $0x3e8] sm:$0xff]
    %v2499 = vld [vmem:[#allocation4 + $0x3f0] sm:$0xff]
    %v2500 = vld [vmem:[#allocation4 + $0x3f8] sm:$0xff]
    %v2501 = vpack.c.bf16 %v2367, %v2363
    %v2502 = vpack.c.bf16 %v2368, %v2364
    %v2503 = vpack.c.bf16 %v2369, %v2365
    %v2504 = vpack.c.bf16 %v2370, %v2366
    %2505 = vmatprep.subr.bf16.mxu0 %v2374
    %2506 = vmatpush1.bf16.msra.mxu0 %v2373
    %2507 = vmatprep.subr.bf16.mxu0 %v2378
    %2508 = vmatpush1.bf16.msra.mxu0 %v2377
    %2509 = vmatprep.subr.bf16.mxu0 %v2382
    %2510 = vmatpush1.bf16.msra.mxu0 %v2381
    %2511 = vmatprep.subr.bf16.mxu0 %v2386
    %2512 = vmatpush1.bf16.msra.mxu0 %v2385
    %2513 = vmatprep.subr.bf16.mxu0 %v2390
    %2514 = vmatpush1.bf16.msra.mxu0 %v2389
    %2515 = vmatprep.subr.bf16.mxu0 %v2394
    %2516 = vmatpush1.bf16.msra.mxu0 %v2393
    %2517 = vmatprep.subr.bf16.mxu0 %v2398
    %2518 = vmatpush1.bf16.msra.mxu0 %v2397
    %2519 = vmatprep.subr.bf16.mxu0 %v2402
    %2520 = vmatpush1.bf16.msra.mxu0 %v2401
    %2521 = vmatprep.subr.bf16.mxu0 %v2406
    %2522 = vmatpush1.bf16.msra.mxu0 %v2405
    %2523 = vmatprep.subr.bf16.mxu0 %v2410
    %2524 = vmatpush1.bf16.msra.mxu0 %v2409
    %2525 = vmatprep.subr.bf16.mxu0 %v2414
    %2526 = vmatpush1.bf16.msra.mxu0 %v2413
    %2527 = vmatprep.subr.bf16.mxu0 %v2418
    %2528 = vmatpush1.bf16.msra.mxu0 %v2417
    %2529 = vmatprep.subr.bf16.mxu0 %v2422
    %2530 = vmatpush1.bf16.msra.mxu0 %v2421
    %2531 = vmatprep.subr.bf16.mxu0 %v2426
    %2532 = vmatpush1.bf16.msra.mxu0 %v2425
    %2533 = vmatprep.subr.bf16.mxu0 %v2430
    %2534 = vmatpush1.bf16.msra.mxu0 %v2429
    %2535 = vmatprep.subr.bf16.mxu0 %v2434
    %2536 = vmatpush1.bf16.msra.mxu0 %v2433
    %2537 = vmatprep.mubr.bf16.mxu0 %v2502
    %2538 = vmatmul.mubr.bf16.gmra.mrb[0].mxu0 %v2501
    %v2539 = vpop.f32.mrb[0].mxu0
    %v2540 = vadd.f32 0.0, %v2539
    %v2541 = vpop.f32.mrb[0].mxu0
    %v2542 = vadd.f32 0.0, %v2541
    %v2543 = vpop.f32.mrb[0].mxu0
    %v2544 = vadd.f32 0.0, %v2543
    %v2545 = vpop.f32.mrb[0].mxu0
    %v2546 = vadd.f32 0.0, %v2545
    %2547 = vdwg.mxu0
    %2548 = vmatprep.subr.bf16.mxu0 %v2438
    %2549 = vmatpush1.bf16.msra.mxu0 %v2437
    %2550 = vmatprep.subr.bf16.mxu0 %v2442
    %2551 = vmatpush1.bf16.msra.mxu0 %v2441
    %2552 = vmatprep.subr.bf16.mxu0 %v2446
    %2553 = vmatpush1.bf16.msra.mxu0 %v2445
    %2554 = vmatprep.subr.bf16.mxu0 %v2450
    %2555 = vmatpush1.bf16.msra.mxu0 %v2449
    %2556 = vmatprep.subr.bf16.mxu0 %v2454
    %2557 = vmatpush1.bf16.msra.mxu0 %v2453
    %2558 = vmatprep.subr.bf16.mxu0 %v2458
    %2559 = vmatpush1.bf16.msra.mxu0 %v2457
    %2560 = vmatprep.subr.bf16.mxu0 %v2462
    %2561 = vmatpush1.bf16.msra.mxu0 %v2461
    %2562 = vmatprep.subr.bf16.mxu0 %v2466
    %2563 = vmatpush1.bf16.msra.mxu0 %v2465
    %2564 = vmatprep.subr.bf16.mxu0 %v2470
    %2565 = vmatpush1.bf16.msra.mxu0 %v2469
    %2566 = vmatprep.subr.bf16.mxu0 %v2474
    %2567 = vmatpush1.bf16.msra.mxu0 %v2473
    %2568 = vmatprep.subr.bf16.mxu0 %v2478
    %2569 = vmatpush1.bf16.msra.mxu0 %v2477
    %2570 = vmatprep.subr.bf16.mxu0 %v2482
    %2571 = vmatpush1.bf16.msra.mxu0 %v2481
    %2572 = vmatprep.subr.bf16.mxu0 %v2486
    %2573 = vmatpush1.bf16.msra.mxu0 %v2485
    %2574 = vmatprep.subr.bf16.mxu0 %v2490
    %2575 = vmatpush1.bf16.msra.mxu0 %v2489
    %2576 = vmatprep.subr.bf16.mxu0 %v2494
    %2577 = vmatpush1.bf16.msra.mxu0 %v2493
    %2578 = vmatprep.subr.bf16.mxu0 %v2498
    %2579 = vmatpush1.bf16.msra.mxu0 %v2497
    %2580 = vmatprep.mubr.bf16.mxu0 %v2504
    %2581 = vmatmul.mubr.bf16.gmra.mrb[0].mxu0 %v2503
    %v2582 = vpop.f32.mrb[0].mxu0
    %v2583 = vadd.f32 %v2540, %v2582
    %v2584 = vpop.f32.mrb[0].mxu0
    %v2585 = vadd.f32 %v2542, %v2584
    %v2586 = vpop.f32.mrb[0].mxu0
    %v2587 = vadd.f32 %v2544, %v2586
    %v2588 = vpop.f32.mrb[0].mxu0
    %v2589 = vadd.f32 %v2546, %v2588
    %2590 = vdwg.mxu0
    %2591 = vmatprep.subr.bf16.mxu0 %v2376
    %2592 = vmatpush1.bf16.msra.mxu0 %v2375
    %2593 = vmatprep.subr.bf16.mxu0 %v2380
    %2594 = vmatpush1.bf16.msra.mxu0 %v2379
    %2595 = vmatprep.subr.bf16.mxu0 %v2384
    %2596 = vmatpush1.bf16.msra.mxu0 %v2383
    %2597 = vmatprep.subr.bf16.mxu0 %v2388
    %2598 = vmatpush1.bf16.msra.mxu0 %v2387
    %2599 = vmatprep.subr.bf16.mxu0 %v2392
    %2600 = vmatpush1.bf16.msra.mxu0 %v2391
    %2601 = vmatprep.subr.bf16.mxu0 %v2396
    %2602 = vmatpush1.bf16.msra.mxu0 %v2395
    %2603 = vmatprep.subr.bf16.mxu0 %v2400
    %2604 = vmatpush1.bf16.msra.mxu0 %v2399
    %2605 = vmatprep.subr.bf16.mxu0 %v2404
    %2606 = vmatpush1.bf16.msra.mxu0 %v2403
    %2607 = vmatprep.subr.bf16.mxu0 %v2408
    %2608 = vmatpush1.bf16.msra.mxu0 %v2407
    %2609 = vmatprep.subr.bf16.mxu0 %v2412
    %2610 = vmatpush1.bf16.msra.mxu0 %v2411
    %2611 = vmatprep.subr.bf16.mxu0 %v2416
    %2612 = vmatpush1.bf16.msra.mxu0 %v2415
    %2613 = vmatprep.subr.bf16.mxu0 %v2420
    %2614 = vmatpush1.bf16.msra.mxu0 %v2419
    %2615 = vmatprep.subr.bf16.mxu0 %v2424
    %2616 = vmatpush1.bf16.msra.mxu0 %v2423
    %2617 = vmatprep.subr.bf16.mxu0 %v2428
    %2618 = vmatpush1.bf16.msra.mxu0 %v2427
    %2619 = vmatprep.subr.bf16.mxu0 %v2432
    %2620 = vmatpush1.bf16.msra.mxu0 %v2431
    %2621 = vmatprep.subr.bf16.mxu0 %v2436
    %2622 = vmatpush1.bf16.msra.mxu0 %v2435
    %2623 = vmatprep.mubr.bf16.mxu0 %v2502
    %2624 = vmatmul.mubr.bf16.gmra.mrb[0].mxu0 %v2501
    %v2625 = vpop.f32.mrb[0].mxu0
    %v2626 = vadd.f32 0.0, %v2625
    %v2627 = vpop.f32.mrb[0].mxu0
    %v2628 = vadd.f32 0.0, %v2627
    %v2629 = vpop.f32.mrb[0].mxu0
    %v2630 = vadd.f32 0.0, %v2629
    %v2631 = vpop.f32.mrb[0].mxu0
    %v2632 = vadd.f32 0.0, %v2631
    %2633 = vdwg.mxu0
    %2634 = vmatprep.subr.bf16.mxu0 %v2440
    %2635 = vmatpush1.bf16.msra.mxu0 %v2439
    %2636 = vmatprep.subr.bf16.mxu0 %v2444
    %2637 = vmatpush1.bf16.msra.mxu0 %v2443
    %2638 = vmatprep.subr.bf16.mxu0 %v2448
    %2639 = vmatpush1.bf16.msra.mxu0 %v2447
    %2640 = vmatprep.subr.bf16.mxu0 %v2452
    %2641 = vmatpush1.bf16.msra.mxu0 %v2451
    %2642 = vmatprep.subr.bf16.mxu0 %v2456
    %2643 = vmatpush1.bf16.msra.mxu0 %v2455
    %2644 = vmatprep.subr.bf16.mxu0 %v2460
    %2645 = vmatpush1.bf16.msra.mxu0 %v2459
    %2646 = vmatprep.subr.bf16.mxu0 %v2464
    %2647 = vmatpush1.bf16.msra.mxu0 %v2463
    %2648 = vmatprep.subr.bf16.mxu0 %v2468
    %2649 = vmatpush1.bf16.msra.mxu0 %v2467
    %2650 = vmatprep.subr.bf16.mxu0 %v2472
    %2651 = vmatpush1.bf16.msra.mxu0 %v2471
    %2652 = vmatprep.subr.bf16.mxu0 %v2476
    %2653 = vmatpush1.bf16.msra.mxu0 %v2475
    %2654 = vmatprep.subr.bf16.mxu0 %v2480
    %2655 = vmatpush1.bf16.msra.mxu0 %v2479
    %2656 = vmatprep.subr.bf16.mxu0 %v2484
    %2657 = vmatpush1.bf16.msra.mxu0 %v2483
    %2658 = vmatprep.subr.bf16.mxu0 %v2488
    %2659 = vmatpush1.bf16.msra.mxu0 %v2487
    %2660 = vmatprep.subr.bf16.mxu0 %v2492
    %2661 = vmatpush1.bf16.msra.mxu0 %v2491
    %2662 = vmatprep.subr.bf16.mxu0 %v2496
    %2663 = vmatpush1.bf16.msra.mxu0 %v2495
    %2664 = vmatprep.subr.bf16.mxu0 %v2500
    %2665 = vmatpush1.bf16.msra.mxu0 %v2499
    %2666 = vmatprep.mubr.bf16.mxu0 %v2504
    %2667 = vmatmul.mubr.bf16.gmra.mrb[0].mxu0 %v2503
    %v2668 = vpop.f32.mrb[0].mxu0
    %v2669 = vadd.f32 %v2626, %v2668
    %v2670 = vpop.f32.mrb[0].mxu0
    %v2671 = vadd.f32 %v2628, %v2670
    %v2672 = vpop.f32.mrb[0].mxu0
    %v2673 = vadd.f32 %v2630, %v2672
    %v2674 = vpop.f32.mrb[0].mxu0
    %v2675 = vadd.f32 %v2632, %v2674
    %2676 = vdwg.mxu0
    %v2677 = vpack.c.bf16 %v2587, %v2583
    %v2678 = vpack.c.bf16 %v2589, %v2585
    %v2679 = vpack.c.bf16 %v2673, %v2669
    %v2680 = vpack.c.bf16 %v2675, %v2671
    %2681 = vmatprep.subr.bf16.mxu0 %v2678
    %2682 = vmatpush1.bf16.msra.mxu0 %v2677
    %2683 = vmatprep.subr.bf16.mxu0 0
    %2684 = vmatpush1.bf16.msra.mxu0 0
    %2685 = vmatprep.subr.bf16.mxu0 0
    %2686 = vmatpush1.bf16.msra.mxu0 0
    %2687 = vmatprep.subr.bf16.mxu0 0
    %2688 = vmatpush1.bf16.msra.mxu0 0
    %2689 = vmatprep.subr.bf16.mxu0 0
    %2690 = vmatpush1.bf16.msra.mxu0 0
    %2691 = vmatprep.subr.bf16.mxu0 0
    %2692 = vmatpush1.bf16.msra.mxu0 0
    %2693 = vmatprep.subr.bf16.mxu0 0
    %2694 = vmatpush1.bf16.msra.mxu0 0
    %2695 = vmatprep.subr.bf16.mxu0 0
    %2696 = vmatpush1.bf16.msra.mxu0 0
    %2697 = vmatprep.subr.bf16.mxu0 0
    %2698 = vmatpush1.bf16.msra.mxu0 0
    %2699 = vmatprep.subr.bf16.mxu0 0
    %2700 = vmatpush1.bf16.msra.mxu0 0
    %2701 = vmatprep.subr.bf16.mxu0 0
    %2702 = vmatpush1.bf16.msra.mxu0 0
    %2703 = vmatprep.subr.bf16.mxu0 0
    %2704 = vmatpush1.bf16.msra.mxu0 0
    %2705 = vmatprep.subr.bf16.mxu0 0
    %2706 = vmatpush1.bf16.msra.mxu0 0
    %2707 = vmatprep.subr.bf16.mxu0 0
    %2708 = vmatpush1.bf16.msra.mxu0 0
    %2709 = vmatprep.subr.bf16.mxu0 0
    %2710 = vmatpush1.bf16.msra.mxu0 0
    %2711 = vmatprep.subr.bf16.mxu0 0
    %2712 = vmatpush1.bf16.msra.mxu0 0
    %2713 = vmatprep.mubr.bf16.mxu0 0
    %2714 = vmatmul.mubr.bf16.gmra.mrb[0].mxu0 %v1525
    %v2715 = vpop.f32.mrb[0].mxu0
    %v2716 = vadd.f32 0.0, %v2715
    %v2717 = vpop.f32.mrb[0].mxu0
    %v2718 = vadd.f32 0.0, %v2717
    %v2719 = vpop.f32.mrb[0].mxu0
    %v2720 = vadd.f32 0.0, %v2719
    %v2721 = vpop.f32.mrb[0].mxu0
    %v2722 = vadd.f32 0.0, %v2721
    %2723 = vdwg.mxu0
    %2724 = vmatprep.subr.bf16.mxu0 %v2680
    %2725 = vmatpush1.bf16.msra.mxu0 %v2679
    %2726 = vmatprep.subr.bf16.mxu0 0
    %2727 = vmatpush1.bf16.msra.mxu0 0
    %2728 = vmatprep.subr.bf16.mxu0 0
    %2729 = vmatpush1.bf16.msra.mxu0 0
    %2730 = vmatprep.subr.bf16.mxu0 0
    %2731 = vmatpush1.bf16.msra.mxu0 0
    %2732 = vmatprep.subr.bf16.mxu0 0
    %2733 = vmatpush1.bf16.msra.mxu0 0
    %2734 = vmatprep.subr.bf16.mxu0 0
    %2735 = vmatpush1.bf16.msra.mxu0 0
    %2736 = vmatprep.subr.bf16.mxu0 0
    %2737 = vmatpush1.bf16.msra.mxu0 0
    %2738 = vmatprep.subr.bf16.mxu0 0
    %2739 = vmatpush1.bf16.msra.mxu0 0
    %2740 = vmatprep.subr.bf16.mxu0 0
    %2741 = vmatpush1.bf16.msra.mxu0 0
    %2742 = vmatprep.subr.bf16.mxu0 0
    %2743 = vmatpush1.bf16.msra.mxu0 0
    %2744 = vmatprep.subr.bf16.mxu0 0
    %2745 = vmatpush1.bf16.msra.mxu0 0
    %2746 = vmatprep.subr.bf16.mxu0 0
    %2747 = vmatpush1.bf16.msra.mxu0 0
    %2748 = vmatprep.subr.bf16.mxu0 0
    %2749 = vmatpush1.bf16.msra.mxu0 0
    %2750 = vmatprep.subr.bf16.mxu0 0
    %2751 = vmatpush1.bf16.msra.mxu0 0
    %2752 = vmatprep.subr.bf16.mxu0 0
    %2753 = vmatpush1.bf16.msra.mxu0 0
    %2754 = vmatprep.subr.bf16.mxu0 0
    %2755 = vmatpush1.bf16.msra.mxu0 0
    %2756 = vmatprep.mubr.bf16.mxu0 0
    %2757 = vmatmul.mubr.bf16.gmra.mrb[0].mxu0 %v1525
    %v2758 = vpop.f32.mrb[0].mxu0
    %v2759 = vadd.f32 0.0, %v2758
    %v2760 = vpop.f32.mrb[0].mxu0
    %v2761 = vadd.f32 0.0, %v2760
    %v2762 = vpop.f32.mrb[0].mxu0
    %v2763 = vadd.f32 0.0, %v2762
    %v2764 = vpop.f32.mrb[0].mxu0
    %v2765 = vadd.f32 0.0, %v2764
    %2766 = vdwg.mxu0
    %v2767 = vadd.f32 %v2716, %v2718
    %v2768 = vadd.f32 %v2767, %v2759
    %v2769 = vadd.f32 %v2768, %v2761
    %v2770 = vadd.f32 %v2769, %v2720
    %v2771 = vadd.f32 %v2770, %v2722
    %v2772 = vadd.f32 %v2771, %v2763
    %v2773 = vadd.f32 %v2772, %v2765
    %2774 = vadd.xlane.f32.xlu0 %v2773
    %v2775 = vpop.xlane.xlu0 %2774
    %v2776 = vmul.f32 %v2716, %v2716
    %v2777 = vmul.f32 %v2718, %v2718
    %v2778 = vmul.f32 %v2759, %v2759
    %v2779 = vmul.f32 %v2761, %v2761
    %v2780 = vmul.f32 %v2720, %v2720
    %v2781 = vmul.f32 %v2722, %v2722
    %v2782 = vmul.f32 %v2763, %v2763
    %v2783 = vmul.f32 %v2765, %v2765
    %v2784 = vadd.f32 %v2776, %v2777
    %v2785 = vadd.f32 %v2784, %v2778
    %v2786 = vadd.f32 %v2785, %v2779
    %v2787 = vadd.f32 %v2786, %v2780
    %v2788 = vadd.f32 %v2787, %v2781
    %v2789 = vadd.f32 %v2788, %v2782
    %v2790 = vadd.f32 %v2789, %v2783
    %2791 = vadd.xlane.f32.xlu0 %v2790
    %v2792 = vpop.xlane.xlu0 %2791
    %v2793 = vmul.f32 %v2775, 0.0009765625
    %v2794 = vmul.f32 %v2792, 0.0009765625
    %v2795 = vmul.f32 %v2793, %v2793
    %v2796 = vsub.f32 %v2794, %v2795
    %s2797 = scalar_lea.vmem %s2, 16
    %v2798 = vld [vmem:[%s2797] sm:$0xff]
    %v2799 = vadd.f32 %v2796, 1e-05
    %v2800 = vrsqrt.pop %v2799
    %v2801 = vmul.f32 %v2798, %v2800
    %s2802 = scalar_lea.vmem %s3, 16
    %v2803 = vld [vmem:[%s2802] sm:$0xff]
    %v2804 = vmul.f32 %v2793, %v2801
    %v2805 = vsub.f32 %v2803, %v2804
    %2807 = vset.pattern.permute.xlu0 0
    %2808 = vperm.xlu0 %2807, %v2801
    %v2809 = vpop.permute.xlu0 %2808
    %v2811 = vmul.f32 %v2716, %v2809
    %v2812 = vmul.f32 %v2718, %v2809
    %v2813 = vmul.f32 %v2759, %v2809
    %v2814 = vmul.f32 %v2761, %v2809
    %v2815 = vmul.f32 %v2720, %v2809
    %v2816 = vmul.f32 %v2722, %v2809
    %v2817 = vmul.f32 %v2763, %v2809
    %v2818 = vmul.f32 %v2765, %v2809
    %2820 = vset.pattern.permute.xlu0 0
    %2821 = vperm.xlu0 %2820, %v2805
    %v2822 = vpop.permute.xlu0 %2821
    %v2824 = vadd.f32 %v2811, %v2822
    %v2825 = vadd.f32 %v2812, %v2822
    %v2826 = vadd.f32 %v2813, %v2822
    %v2827 = vadd.f32 %v2814, %v2822
    %v2828 = vadd.f32 %v2815, %v2822
    %v2829 = vadd.f32 %v2816, %v2822
    %v2830 = vadd.f32 %v2817, %v2822
    %v2831 = vadd.f32 %v2818, %v2822
    %v2832 = vadd.f32 %v2824, %v1780
    %v2833 = vadd.f32 %v2825, %v1781
    %v2834 = vadd.f32 %v2826, %v1782
    %v2835 = vadd.f32 %v2827, %v1783
    %v2836 = vadd.f32 %v2828, %v1784
    %v2837 = vadd.f32 %v2829, %v1785
    %v2838 = vadd.f32 %v2830, %v1786
    %v2839 = vadd.f32 %v2831, %v1787
    %v2840 = vmin.f32 %v2832, 20.0
    %v2841 = vmin.f32 %v2833, 20.0
    %v2842 = vmin.f32 %v2834, 20.0
    %v2843 = vmin.f32 %v2835, 20.0
    %v2844 = vmin.f32 %v2836, 20.0
    %v2845 = vmin.f32 %v2837, 20.0
    %v2846 = vmin.f32 %v2838, 20.0
    %v2847 = vmin.f32 %v2839, 20.0
    %vm2848 = vcmp.gt.f32.partialorder %v2832, 20.0
    %vm2849 = vcmp.gt.f32.partialorder %v2833, 20.0
    %vm2850 = vcmp.gt.f32.partialorder %v2834, 20.0
    %vm2851 = vcmp.gt.f32.partialorder %v2835, 20.0
    %vm2852 = vcmp.gt.f32.partialorder %v2836, 20.0
    %vm2853 = vcmp.gt.f32.partialorder %v2837, 20.0
    %vm2854 = vcmp.gt.f32.partialorder %v2838, 20.0
    %vm2855 = vcmp.gt.f32.partialorder %v2839, 20.0
    %v2856 = vmul.f32 %v2840, 1.442695
    %v2857 = vpow.pop %v2856
    %v2858 = vmul.f32 %v2841, 1.442695
    %v2859 = vpow.pop %v2858
    %v2860 = vmul.f32 %v2842, 1.442695
    %v2861 = vpow.pop %v2860
    %v2862 = vmul.f32 %v2843, 1.442695
    %v2863 = vpow.pop %v2862
    %v2864 = vmul.f32 %v2844, 1.442695
    %v2865 = vpow.pop %v2864
    %v2866 = vmul.f32 %v2845, 1.442695
    %v2867 = vpow.pop %v2866
    %v2868 = vmul.f32 %v2846, 1.442695
    %v2869 = vpow.pop %v2868
    %v2870 = vmul.f32 %v2847, 1.442695
    %v2871 = vpow.pop %v2870
    %v2872 = vadd.f32 %v2857, 1.0
    %v2873 = vlog2.pop %v2872
    %v2874 = vmul.f32 %v2873, 0.6931472
    %v2875 = vmul.f32 -0.5, %v2857
    %v2876 = vadd.f32 %v2875, 1.0
    %v2877 = vmul.f32 %v2876, %v2857
    %v2878 = vand.u32 2147483647, %v2857
    %vm2879 = vcmp.lt.f32.partialorder %v2878, 0.0004427343
    %v2880 = vsel %vm2879, %v2877, %v2874
    %v2881 = vadd.f32 %v2859, 1.0
    %v2882 = vlog2.pop %v2881
    %v2883 = vmul.f32 %v2882, 0.6931472
    %v2884 = vmul.f32 -0.5, %v2859
    %v2885 = vadd.f32 %v2884, 1.0
    %v2886 = vmul.f32 %v2885, %v2859
    %v2887 = vand.u32 2147483647, %v2859
    %vm2888 = vcmp.lt.f32.partialorder %v2887, 0.0004427343
    %v2889 = vsel %vm2888, %v2886, %v2883
    %v2890 = vadd.f32 %v2861, 1.0
    %v2891 = vlog2.pop %v2890
    %v2892 = vmul.f32 %v2891, 0.6931472
    %v2893 = vmul.f32 -0.5, %v2861
    %v2894 = vadd.f32 %v2893, 1.0
    %v2895 = vmul.f32 %v2894, %v2861
    %v2896 = vand.u32 2147483647, %v2861
    %vm2897 = vcmp.lt.f32.partialorder %v2896, 0.0004427343
    %v2898 = vsel %vm2897, %v2895, %v2892
    %v2899 = vadd.f32 %v2863, 1.0
    %v2900 = vlog2.pop %v2899
    %v2901 = vmul.f32 %v2900, 0.6931472
    %v2902 = vmul.f32 -0.5, %v2863
    %v2903 = vadd.f32 %v2902, 1.0
    %v2904 = vmul.f32 %v2903, %v2863
    %v2905 = vand.u32 2147483647, %v2863
    %vm2906 = vcmp.lt.f32.partialorder %v2905, 0.0004427343
    %v2907 = vsel %vm2906, %v2904, %v2901
    %v2908 = vadd.f32 %v2865, 1.0
    %v2909 = vlog2.pop %v2908
    %v2910 = vmul.f32 %v2909, 0.6931472
    %v2911 = vmul.f32 -0.5, %v2865
    %v2912 = vadd.f32 %v2911, 1.0
    %v2913 = vmul.f32 %v2912, %v2865
    %v2914 = vand.u32 2147483647, %v2865
    %vm2915 = vcmp.lt.f32.partialorder %v2914, 0.0004427343
    %v2916 = vsel %vm2915, %v2913, %v2910
    %v2917 = vadd.f32 %v2867, 1.0
    %v2918 = vlog2.pop %v2917
    %v2919 = vmul.f32 %v2918, 0.6931472
    %v2920 = vmul.f32 -0.5, %v2867
    %v2921 = vadd.f32 %v2920, 1.0
    %v2922 = vmul.f32 %v2921, %v2867
    %v2923 = vand.u32 2147483647, %v2867
    %vm2924 = vcmp.lt.f32.partialorder %v2923, 0.0004427343
    %v2925 = vsel %vm2924, %v2922, %v2919
    %v2926 = vadd.f32 %v2869, 1.0
    %v2927 = vlog2.pop %v2926
    %v2928 = vmul.f32 %v2927, 0.6931472
    %v2929 = vmul.f32 -0.5, %v2869
    %v2930 = vadd.f32 %v2929, 1.0
    %v2931 = vmul.f32 %v2930, %v2869
    %v2932 = vand.u32 2147483647, %v2869
    %vm2933 = vcmp.lt.f32.partialorder %v2932, 0.0004427343
    %v2934 = vsel %vm2933, %v2931, %v2928
    %v2935 = vadd.f32 %v2871, 1.0
    %v2936 = vlog2.pop %v2935
    %v2937 = vmul.f32 %v2936, 0.6931472
    %v2938 = vmul.f32 -0.5, %v2871
    %v2939 = vadd.f32 %v2938, 1.0
    %v2940 = vmul.f32 %v2939, %v2871
    %v2941 = vand.u32 2147483647, %v2871
    %vm2942 = vcmp.lt.f32.partialorder %v2941, 0.0004427343
    %v2943 = vsel %vm2942, %v2940, %v2937
    %v2944 = vsel %vm2848, %v2832, %v2880
    %v2945 = vsel %vm2849, %v2833, %v2889
    %v2946 = vsel %vm2850, %v2834, %v2898
    %v2947 = vsel %vm2851, %v2835, %v2907
    %v2948 = vsel %vm2852, %v2836, %v2916
    %v2949 = vsel %vm2853, %v2837, %v2925
    %v2950 = vsel %vm2854, %v2838, %v2934
    %v2951 = vsel %vm2855, %v2839, %v2943
    %s2952 = sshll.u32 %s1789, 4
    %2953 = dma.done %s154, %s2952
    %v2954 = vld [vmem:[#allocation5] sm:$0xff]
    %v2955 = vld [vmem:[#allocation5 + $0x8] sm:$0xff]
    %v2956 = vld [vmem:[#allocation5 + $0x10] sm:$0xff]
    %v2957 = vld [vmem:[#allocation5 + $0x18] sm:$0xff]
    %v2958 = vld [vmem:[#allocation5 + $0x20] sm:$0xff]
    %v2959 = vld [vmem:[#allocation5 + $0x28] sm:$0xff]
    %v2960 = vld [vmem:[#allocation5 + $0x30] sm:$0xff]
    %v2961 = vld [vmem:[#allocation5 + $0x38] sm:$0xff]
    %v2962 = vld [vmem:[#allocation5 + $0x40] sm:$0xff]
    %v2963 = vld [vmem:[#allocation5 + $0x48] sm:$0xff]
    %v2964 = vld [vmem:[#allocation5 + $0x50] sm:$0xff]
    %v2965 = vld [vmem:[#allocation5 + $0x58] sm:$0xff]
    %v2966 = vld [vmem:[#allocation5 + $0x60] sm:$0xff]
    %v2967 = vld [vmem:[#allocation5 + $0x68] sm:$0xff]
    %v2968 = vld [vmem:[#allocation5 + $0x70] sm:$0xff]
    %v2969 = vld [vmem:[#allocation5 + $0x78] sm:$0xff]
    %v2970 = vld [vmem:[#allocation5 + $0x80] sm:$0xff]
    %v2971 = vld [vmem:[#allocation5 + $0x88] sm:$0xff]
    %v2972 = vld [vmem:[#allocation5 + $0x90] sm:$0xff]
    %v2973 = vld [vmem:[#allocation5 + $0x98] sm:$0xff]
    %v2974 = vld [vmem:[#allocation5 + $0xa0] sm:$0xff]
    %v2975 = vld [vmem:[#allocation5 + $0xa8] sm:$0xff]
    %v2976 = vld [vmem:[#allocation5 + $0xb0] sm:$0xff]
    %v2977 = vld [vmem:[#allocation5 + $0xb8] sm:$0xff]
    %v2978 = vld [vmem:[#allocation5 + $0xc0] sm:$0xff]
    %v2979 = vld [vmem:[#allocation5 + $0xc8] sm:$0xff]
    %v2980 = vld [vmem:[#allocation5 + $0xd0] sm:$0xff]
    %v2981 = vld [vmem:[#allocation5 + $0xd8] sm:$0xff]
    %v2982 = vld [vmem:[#allocation5 + $0xe0] sm:$0xff]
    %v2983 = vld [vmem:[#allocation5 + $0xe8] sm:$0xff]
    %v2984 = vld [vmem:[#allocation5 + $0xf0] sm:$0xff]
    %v2985 = vld [vmem:[#allocation5 + $0xf8] sm:$0xff]
    %v2986 = vld [vmem:[#allocation5 + $0x100] sm:$0xff]
    %v2987 = vld [vmem:[#allocation5 + $0x108] sm:$0xff]
    %v2988 = vld [vmem:[#allocation5 + $0x110] sm:$0xff]
    %v2989 = vld [vmem:[#allocation5 + $0x118] sm:$0xff]
    %v2990 = vld [vmem:[#allocation5 + $0x120] sm:$0xff]
    %v2991 = vld [vmem:[#allocation5 + $0x128] sm:$0xff]
    %v2992 = vld [vmem:[#allocation5 + $0x130] sm:$0xff]
    %v2993 = vld [vmem:[#allocation5 + $0x138] sm:$0xff]
    %v2994 = vld [vmem:[#allocation5 + $0x140] sm:$0xff]
    %v2995 = vld [vmem:[#allocation5 + $0x148] sm:$0xff]
    %v2996 = vld [vmem:[#allocation5 + $0x150] sm:$0xff]
    %v2997 = vld [vmem:[#allocation5 + $0x158] sm:$0xff]
    %v2998 = vld [vmem:[#allocation5 + $0x160] sm:$0xff]
    %v2999 = vld [vmem:[#allocation5 + $0x168] sm:$0xff]
    %v3000 = vld [vmem:[#allocation5 + $0x170] sm:$0xff]
    %v3001 = vld [vmem:[#allocation5 + $0x178] sm:$0xff]
    %v3002 = vld [vmem:[#allocation5 + $0x180] sm:$0xff]
    %v3003 = vld [vmem:[#allocation5 + $0x188] sm:$0xff]
    %v3004 = vld [vmem:[#allocation5 + $0x190] sm:$0xff]
    %v3005 = vld [vmem:[#allocation5 + $0x198] sm:$0xff]
    %v3006 = vld [vmem:[#allocation5 + $0x1a0] sm:$0xff]
    %v3007 = vld [vmem:[#allocation5 + $0x1a8] sm:$0xff]
    %v3008 = vld [vmem:[#allocation5 + $0x1b0] sm:$0xff]
    %v3009 = vld [vmem:[#allocation5 + $0x1b8] sm:$0xff]
    %v3010 = vld [vmem:[#allocation5 + $0x1c0] sm:$0xff]
    %v3011 = vld [vmem:[#allocation5 + $0x1c8] sm:$0xff]
    %v3012 = vld [vmem:[#allocation5 + $0x1d0] sm:$0xff]
    %v3013 = vld [vmem:[#allocation5 + $0x1d8] sm:$0xff]
    %v3014 = vld [vmem:[#allocation5 + $0x1e0] sm:$0xff]
    %v3015 = vld [vmem:[#allocation5 + $0x1e8] sm:$0xff]
    %v3016 = vld [vmem:[#allocation5 + $0x1f0] sm:$0xff]
    %v3017 = vld [vmem:[#allocation5 + $0x1f8] sm:$0xff]
    %v3018 = vld [vmem:[#allocation5 + $0x200] sm:$0xff]
    %v3019 = vld [vmem:[#allocation5 + $0x208] sm:$0xff]
    %v3020 = vld [vmem:[#allocation5 + $0x210] sm:$0xff]
    %v3021 = vld [vmem:[#allocation5 + $0x218] sm:$0xff]
    %v3022 = vld [vmem:[#allocation5 + $0x220] sm:$0xff]
    %v3023 = vld [vmem:[#allocation5 + $0x228] sm:$0xff]
    %v3024 = vld [vmem:[#allocation5 + $0x230] sm:$0xff]
    %v3025 = vld [vmem:[#allocation5 + $0x238] sm:$0xff]
    %v3026 = vld [vmem:[#allocation5 + $0x240] sm:$0xff]
    %v3027 = vld [vmem:[#allocation5 + $0x248] sm:$0xff]
    %v3028 = vld [vmem:[#allocation5 + $0x250] sm:$0xff]
    %v3029 = vld [vmem:[#allocation5 + $0x258] sm:$0xff]
    %v3030 = vld [vmem:[#allocation5 + $0x260] sm:$0xff]
    %v3031 = vld [vmem:[#allocation5 + $0x268] sm:$0xff]
    %v3032 = vld [vmem:[#allocation5 + $0x270] sm:$0xff]
    %v3033 = vld [vmem:[#allocation5 + $0x278] sm:$0xff]
    %v3034 = vld [vmem:[#allocation5 + $0x280] sm:$0xff]
    %v3035 = vld [vmem:[#allocation5 + $0x288] sm:$0xff]
    %v3036 = vld [vmem:[#allocation5 + $0x290] sm:$0xff]
    %v3037 = vld [vmem:[#allocation5 + $0x298] sm:$0xff]
    %v3038 = vld [vmem:[#allocation5 + $0x2a0] sm:$0xff]
    %v3039 = vld [vmem:[#allocation5 + $0x2a8] sm:$0xff]
    %v3040 = vld [vmem:[#allocation5 + $0x2b0] sm:$0xff]
    %v3041 = vld [vmem:[#allocation5 + $0x2b8] sm:$0xff]
    %v3042 = vld [vmem:[#allocation5 + $0x2c0] sm:$0xff]
    %v3043 = vld [vmem:[#allocation5 + $0x2c8] sm:$0xff]
    %v3044 = vld [vmem:[#allocation5 + $0x2d0] sm:$0xff]
    %v3045 = vld [vmem:[#allocation5 + $0x2d8] sm:$0xff]
    %v3046 = vld [vmem:[#allocation5 + $0x2e0] sm:$0xff]
    %v3047 = vld [vmem:[#allocation5 + $0x2e8] sm:$0xff]
    %v3048 = vld [vmem:[#allocation5 + $0x2f0] sm:$0xff]
    %v3049 = vld [vmem:[#allocation5 + $0x2f8] sm:$0xff]
    %v3050 = vld [vmem:[#allocation5 + $0x300] sm:$0xff]
    %v3051 = vld [vmem:[#allocation5 + $0x308] sm:$0xff]
    %v3052 = vld [vmem:[#allocation5 + $0x310] sm:$0xff]
    %v3053 = vld [vmem:[#allocation5 + $0x318] sm:$0xff]
    %v3054 = vld [vmem:[#allocation5 + $0x320] sm:$0xff]
    %v3055 = vld [vmem:[#allocation5 + $0x328] sm:$0xff]
    %v3056 = vld [vmem:[#allocation5 + $0x330] sm:$0xff]
    %v3057 = vld [vmem:[#allocation5 + $0x338] sm:$0xff]
    %v3058 = vld [vmem:[#allocation5 + $0x340] sm:$0xff]
    %v3059 = vld [vmem:[#allocation5 + $0x348] sm:$0xff]
    %v3060 = vld [vmem:[#allocation5 + $0x350] sm:$0xff]
    %v3061 = vld [vmem:[#allocation5 + $0x358] sm:$0xff]
    %v3062 = vld [vmem:[#allocation5 + $0x360] sm:$0xff]
    %v3063 = vld [vmem:[#allocation5 + $0x368] sm:$0xff]
    %v3064 = vld [vmem:[#allocation5 + $0x370] sm:$0xff]
    %v3065 = vld [vmem:[#allocation5 + $0x378] sm:$0xff]
    %v3066 = vld [vmem:[#allocation5 + $0x380] sm:$0xff]
    %v3067 = vld [vmem:[#allocation5 + $0x388] sm:$0xff]
    %v3068 = vld [vmem:[#allocation5 + $0x390] sm:$0xff]
    %v3069 = vld [vmem:[#allocation5 + $0x398] sm:$0xff]
    %v3070 = vld [vmem:[#allocation5 + $0x3a0] sm:$0xff]
    %v3071 = vld [vmem:[#allocation5 + $0x3a8] sm:$0xff]
    %v3072 = vld [vmem:[#allocation5 + $0x3b0] sm:$0xff]
    %v3073 = vld [vmem:[#allocation5 + $0x3b8] sm:$0xff]
    %v3074 = vld [vmem:[#allocation5 + $0x3c0] sm:$0xff]
    %v3075 = vld [vmem:[#allocation5 + $0x3c8] sm:$0xff]
    %v3076 = vld [vmem:[#allocation5 + $0x3d0] sm:$0xff]
    %v3077 = vld [vmem:[#allocation5 + $0x3d8] sm:$0xff]
    %v3078 = vld [vmem:[#allocation5 + $0x3e0] sm:$0xff]
    %v3079 = vld [vmem:[#allocation5 + $0x3e8] sm:$0xff]
    %v3080 = vld [vmem:[#allocation5 + $0x3f0] sm:$0xff]
    %v3081 = vld [vmem:[#allocation5 + $0x3f8] sm:$0xff]
    %v3082 = vpack.c.bf16 %v2948, %v2944
    %v3083 = vpack.c.bf16 %v2949, %v2945
    %v3084 = vpack.c.bf16 %v2950, %v2946
    %v3085 = vpack.c.bf16 %v2951, %v2947
    %3086 = vmatprep.subr.bf16.mxu0 %v2955
    %3087 = vmatpush1.bf16.msra.mxu0 %v2954
    %3088 = vmatprep.subr.bf16.mxu0 %v2959
    %3089 = vmatpush1.bf16.msra.mxu0 %v2958
    %3090 = vmatprep.subr.bf16.mxu0 %v2963
    %3091 = vmatpush1.bf16.msra.mxu0 %v2962
    %3092 = vmatprep.subr.bf16.mxu0 %v2967
    %3093 = vmatpush1.bf16.msra.mxu0 %v2966
    %3094 = vmatprep.subr.bf16.mxu0 %v2971
    %3095 = vmatpush1.bf16.msra.mxu0 %v2970
    %3096 = vmatprep.subr.bf16.mxu0 %v2975
    %3097 = vmatpush1.bf16.msra.mxu0 %v2974
    %3098 = vmatprep.subr.bf16.mxu0 %v2979
    %3099 = vmatpush1.bf16.msra.mxu0 %v2978
    %3100 = vmatprep.subr.bf16.mxu0 %v2983
    %3101 = vmatpush1.bf16.msra.mxu0 %v2982
    %3102 = vmatprep.subr.bf16.mxu0 %v2987
    %3103 = vmatpush1.bf16.msra.mxu0 %v2986
    %3104 = vmatprep.subr.bf16.mxu0 %v2991
    %3105 = vmatpush1.bf16.msra.mxu0 %v2990
    %3106 = vmatprep.subr.bf16.mxu0 %v2995
    %3107 = vmatpush1.bf16.msra.mxu0 %v2994
    %3108 = vmatprep.subr.bf16.mxu0 %v2999
    %3109 = vmatpush1.bf16.msra.mxu0 %v2998
    %3110 = vmatprep.subr.bf16.mxu0 %v3003
    %3111 = vmatpush1.bf16.msra.mxu0 %v3002
    %3112 = vmatprep.subr.bf16.mxu0 %v3007
    %3113 = vmatpush1.bf16.msra.mxu0 %v3006
    %3114 = vmatprep.subr.bf16.mxu0 %v3011
    %3115 = vmatpush1.bf16.msra.mxu0 %v3010
    %3116 = vmatprep.subr.bf16.mxu0 %v3015
    %3117 = vmatpush1.bf16.msra.mxu0 %v3014
    %3118 = vmatprep.mubr.bf16.mxu0 %v3083
    %3119 = vmatmul.mubr.bf16.gmra.mrb[0].mxu0 %v3082
    %v3120 = vpop.f32.mrb[0].mxu0
    %v3121 = vadd.f32 0.0, %v3120
    %v3122 = vpop.f32.mrb[0].mxu0
    %v3123 = vadd.f32 0.0, %v3122
    %v3124 = vpop.f32.mrb[0].mxu0
    %v3125 = vadd.f32 0.0, %v3124
    %v3126 = vpop.f32.mrb[0].mxu0
    %v3127 = vadd.f32 0.0, %v3126
    %3128 = vdwg.mxu0
    %3129 = vmatprep.subr.bf16.mxu0 %v3019
    %3130 = vmatpush1.bf16.msra.mxu0 %v3018
    %3131 = vmatprep.subr.bf16.mxu0 %v3023
    %3132 = vmatpush1.bf16.msra.mxu0 %v3022
    %3133 = vmatprep.subr.bf16.mxu0 %v3027
    %3134 = vmatpush1.bf16.msra.mxu0 %v3026
    %3135 = vmatprep.subr.bf16.mxu0 %v3031
    %3136 = vmatpush1.bf16.msra.mxu0 %v3030
    %3137 = vmatprep.subr.bf16.mxu0 %v3035
    %3138 = vmatpush1.bf16.msra.mxu0 %v3034
    %3139 = vmatprep.subr.bf16.mxu0 %v3039
    %3140 = vmatpush1.bf16.msra.mxu0 %v3038
    %3141 = vmatprep.subr.bf16.mxu0 %v3043
    %3142 = vmatpush1.bf16.msra.mxu0 %v3042
    %3143 = vmatprep.subr.bf16.mxu0 %v3047
    %3144 = vmatpush1.bf16.msra.mxu0 %v3046
    %3145 = vmatprep.subr.bf16.mxu0 %v3051
    %3146 = vmatpush1.bf16.msra.mxu0 %v3050
    %3147 = vmatprep.subr.bf16.mxu0 %v3055
    %3148 = vmatpush1.bf16.msra.mxu0 %v3054
    %3149 = vmatprep.subr.bf16.mxu0 %v3059
    %3150 = vmatpush1.bf16.msra.mxu0 %v3058
    %3151 = vmatprep.subr.bf16.mxu0 %v3063
    %3152 = vmatpush1.bf16.msra.mxu0 %v3062
    %3153 = vmatprep.subr.bf16.mxu0 %v3067
    %3154 = vmatpush1.bf16.msra.mxu0 %v3066
    %3155 = vmatprep.subr.bf16.mxu0 %v3071
    %3156 = vmatpush1.bf16.msra.mxu0 %v3070
    %3157 = vmatprep.subr.bf16.mxu0 %v3075
    %3158 = vmatpush1.bf16.msra.mxu0 %v3074
    %3159 = vmatprep.subr.bf16.mxu0 %v3079
    %3160 = vmatpush1.bf16.msra.mxu0 %v3078
    %3161 = vmatprep.mubr.bf16.mxu0 %v3085
    %3162 = vmatmul.mubr.bf16.gmra.mrb[0].mxu0 %v3084
    %v3163 = vpop.f32.mrb[0].mxu0
    %v3164 = vadd.f32 %v3121, %v3163
    %v3165 = vpop.f32.mrb[0].mxu0
    %v3166 = vadd.f32 %v3123, %v3165
    %v3167 = vpop.f32.mrb[0].mxu0
    %v3168 = vadd.f32 %v3125, %v3167
    %v3169 = vpop.f32.mrb[0].mxu0
    %v3170 = vadd.f32 %v3127, %v3169
    %3171 = vdwg.mxu0
    %3172 = vmatprep.subr.bf16.mxu0 %v2957
    %3173 = vmatpush1.bf16.msra.mxu0 %v2956
    %3174 = vmatprep.subr.bf16.mxu0 %v2961
    %3175 = vmatpush1.bf16.msra.mxu0 %v2960
    %3176 = vmatprep.subr.bf16.mxu0 %v2965
    %3177 = vmatpush1.bf16.msra.mxu0 %v2964
    %3178 = vmatprep.subr.bf16.mxu0 %v2969
    %3179 = vmatpush1.bf16.msra.mxu0 %v2968
    %3180 = vmatprep.subr.bf16.mxu0 %v2973
    %3181 = vmatpush1.bf16.msra.mxu0 %v2972
    %3182 = vmatprep.subr.bf16.mxu0 %v2977
    %3183 = vmatpush1.bf16.msra.mxu0 %v2976
    %3184 = vmatprep.subr.bf16.mxu0 %v2981
    %3185 = vmatpush1.bf16.msra.mxu0 %v2980
    %3186 = vmatprep.subr.bf16.mxu0 %v2985
    %3187 = vmatpush1.bf16.msra.mxu0 %v2984
    %3188 = vmatprep.subr.bf16.mxu0 %v2989
    %3189 = vmatpush1.bf16.msra.mxu0 %v2988
    %3190 = vmatprep.subr.bf16.mxu0 %v2993
    %3191 = vmatpush1.bf16.msra.mxu0 %v2992
    %3192 = vmatprep.subr.bf16.mxu0 %v2997
    %3193 = vmatpush1.bf16.msra.mxu0 %v2996
    %3194 = vmatprep.subr.bf16.mxu0 %v3001
    %3195 = vmatpush1.bf16.msra.mxu0 %v3000
    %3196 = vmatprep.subr.bf16.mxu0 %v3005
    %3197 = vmatpush1.bf16.msra.mxu0 %v3004
    %3198 = vmatprep.subr.bf16.mxu0 %v3009
    %3199 = vmatpush1.bf16.msra.mxu0 %v3008
    %3200 = vmatprep.subr.bf16.mxu0 %v3013
    %3201 = vmatpush1.bf16.msra.mxu0 %v3012
    %3202 = vmatprep.subr.bf16.mxu0 %v3017
    %3203 = vmatpush1.bf16.msra.mxu0 %v3016
    %3204 = vmatprep.mubr.bf16.mxu0 %v3083
    %3205 = vmatmul.mubr.bf16.gmra.mrb[0].mxu0 %v3082
    %v3206 = vpop.f32.mrb[0].mxu0
    %v3207 = vadd.f32 0.0, %v3206
    %v3208 = vpop.f32.mrb[0].mxu0
    %v3209 = vadd.f32 0.0, %v3208
    %v3210 = vpop.f32.mrb[0].mxu0
    %v3211 = vadd.f32 0.0, %v3210
    %v3212 = vpop.f32.mrb[0].mxu0
    %v3213 = vadd.f32 0.0, %v3212
    %3214 = vdwg.mxu0
    %3215 = vmatprep.subr.bf16.mxu0 %v3021
    %3216 = vmatpush1.bf16.msra.mxu0 %v3020
    %3217 = vmatprep.subr.bf16.mxu0 %v3025
    %3218 = vmatpush1.bf16.msra.mxu0 %v3024
    %3219 = vmatprep.subr.bf16.mxu0 %v3029
    %3220 = vmatpush1.bf16.msra.mxu0 %v3028
    %3221 = vmatprep.subr.bf16.mxu0 %v3033
    %3222 = vmatpush1.bf16.msra.mxu0 %v3032
    %3223 = vmatprep.subr.bf16.mxu0 %v3037
    %3224 = vmatpush1.bf16.msra.mxu0 %v3036
    %3225 = vmatprep.subr.bf16.mxu0 %v3041
    %3226 = vmatpush1.bf16.msra.mxu0 %v3040
    %3227 = vmatprep.subr.bf16.mxu0 %v3045
    %3228 = vmatpush1.bf16.msra.mxu0 %v3044
    %3229 = vmatprep.subr.bf16.mxu0 %v3049
    %3230 = vmatpush1.bf16.msra.mxu0 %v3048
    %3231 = vmatprep.subr.bf16.mxu0 %v3053
    %3232 = vmatpush1.bf16.msra.mxu0 %v3052
    %3233 = vmatprep.subr.bf16.mxu0 %v3057
    %3234 = vmatpush1.bf16.msra.mxu0 %v3056
    %3235 = vmatprep.subr.bf16.mxu0 %v3061
    %3236 = vmatpush1.bf16.msra.mxu0 %v3060
    %3237 = vmatprep.subr.bf16.mxu0 %v3065
    %3238 = vmatpush1.bf16.msra.mxu0 %v3064
    %3239 = vmatprep.subr.bf16.mxu0 %v3069
    %3240 = vmatpush1.bf16.msra.mxu0 %v3068
    %3241 = vmatprep.subr.bf16.mxu0 %v3073
    %3242 = vmatpush1.bf16.msra.mxu0 %v3072
    %3243 = vmatprep.subr.bf16.mxu0 %v3077
    %3244 = vmatpush1.bf16.msra.mxu0 %v3076
    %3245 = vmatprep.subr.bf16.mxu0 %v3081
    %3246 = vmatpush1.bf16.msra.mxu0 %v3080
    %3247 = vmatprep.mubr.bf16.mxu0 %v3085
    %3248 = vmatmul.mubr.bf16.gmra.mrb[0].mxu0 %v3084
    %v3249 = vpop.f32.mrb[0].mxu0
    %v3250 = vadd.f32 %v3207, %v3249
    %v3251 = vpop.f32.mrb[0].mxu0
    %v3252 = vadd.f32 %v3209, %v3251
    %v3253 = vpop.f32.mrb[0].mxu0
    %v3254 = vadd.f32 %v3211, %v3253
    %v3255 = vpop.f32.mrb[0].mxu0
    %v3256 = vadd.f32 %v3213, %v3255
    %3257 = vdwg.mxu0
    %v3258 = vpack.c.bf16 %v3168, %v3164
    %v3259 = vpack.c.bf16 %v3170, %v3166
    %v3260 = vpack.c.bf16 %v3254, %v3250
    %v3261 = vpack.c.bf16 %v3256, %v3252
    %3262 = vmatprep.subr.bf16.mxu0 %v3259
    %3263 = vmatpush1.bf16.msra.mxu0 %v3258
    %3264 = vmatprep.subr.bf16.mxu0 0
    %3265 = vmatpush1.bf16.msra.mxu0 0
    %3266 = vmatprep.subr.bf16.mxu0 0
    %3267 = vmatpush1.bf16.msra.mxu0 0
    %3268 = vmatprep.subr.bf16.mxu0 0
    %3269 = vmatpush1.bf16.msra.mxu0 0
    %3270 = vmatprep.subr.bf16.mxu0 0
    %3271 = vmatpush1.bf16.msra.mxu0 0
    %3272 = vmatprep.subr.bf16.mxu0 0
    %3273 = vmatpush1.bf16.msra.mxu0 0
    %3274 = vmatprep.subr.bf16.mxu0 0
    %3275 = vmatpush1.bf16.msra.mxu0 0
    %3276 = vmatprep.subr.bf16.mxu0 0
    %3277 = vmatpush1.bf16.msra.mxu0 0
    %3278 = vmatprep.subr.bf16.mxu0 0
    %3279 = vmatpush1.bf16.msra.mxu0 0
    %3280 = vmatprep.subr.bf16.mxu0 0
    %3281 = vmatpush1.bf16.msra.mxu0 0
    %3282 = vmatprep.subr.bf16.mxu0 0
    %3283 = vmatpush1.bf16.msra.mxu0 0
    %3284 = vmatprep.subr.bf16.mxu0 0
    %3285 = vmatpush1.bf16.msra.mxu0 0
    %3286 = vmatprep.subr.bf16.mxu0 0
    %3287 = vmatpush1.bf16.msra.mxu0 0
    %3288 = vmatprep.subr.bf16.mxu0 0
    %3289 = vmatpush1.bf16.msra.mxu0 0
    %3290 = vmatprep.subr.bf16.mxu0 0
    %3291 = vmatpush1.bf16.msra.mxu0 0
    %3292 = vmatprep.subr.bf16.mxu0 0
    %3293 = vmatpush1.bf16.msra.mxu0 0
    %3294 = vmatprep.mubr.bf16.mxu0 0
    %3295 = vmatmul.mubr.bf16.gmra.mrb[0].mxu0 %v1525
    %v3296 = vpop.f32.mrb[0].mxu0
    %v3297 = vadd.f32 0.0, %v3296
    %v3298 = vpop.f32.mrb[0].mxu0
    %v3299 = vadd.f32 0.0, %v3298
    %v3300 = vpop.f32.mrb[0].mxu0
    %v3301 = vadd.f32 0.0, %v3300
    %v3302 = vpop.f32.mrb[0].mxu0
    %v3303 = vadd.f32 0.0, %v3302
    %3304 = vdwg.mxu0
    %3305 = vmatprep.subr.bf16.mxu0 %v3261
    %3306 = vmatpush1.bf16.msra.mxu0 %v3260
    %3307 = vmatprep.subr.bf16.mxu0 0
    %3308 = vmatpush1.bf16.msra.mxu0 0
    %3309 = vmatprep.subr.bf16.mxu0 0
    %3310 = vmatpush1.bf16.msra.mxu0 0
    %3311 = vmatprep.subr.bf16.mxu0 0
    %3312 = vmatpush1.bf16.msra.mxu0 0
    %3313 = vmatprep.subr.bf16.mxu0 0
    %3314 = vmatpush1.bf16.msra.mxu0 0
    %3315 = vmatprep.subr.bf16.mxu0 0
    %3316 = vmatpush1.bf16.msra.mxu0 0
    %3317 = vmatprep.subr.bf16.mxu0 0
    %3318 = vmatpush1.bf16.msra.mxu0 0
    %3319 = vmatprep.subr.bf16.mxu0 0
    %3320 = vmatpush1.bf16.msra.mxu0 0
    %3321 = vmatprep.subr.bf16.mxu0 0
    %3322 = vmatpush1.bf16.msra.mxu0 0
    %3323 = vmatprep.subr.bf16.mxu0 0
    %3324 = vmatpush1.bf16.msra.mxu0 0
    %3325 = vmatprep.subr.bf16.mxu0 0
    %3326 = vmatpush1.bf16.msra.mxu0 0
    %3327 = vmatprep.subr.bf16.mxu0 0
    %3328 = vmatpush1.bf16.msra.mxu0 0
    %3329 = vmatprep.subr.bf16.mxu0 0
    %3330 = vmatpush1.bf16.msra.mxu0 0
    %3331 = vmatprep.subr.bf16.mxu0 0
    %3332 = vmatpush1.bf16.msra.mxu0 0
    %3333 = vmatprep.subr.bf16.mxu0 0
    %3334 = vmatpush1.bf16.msra.mxu0 0
    %3335 = vmatprep.subr.bf16.mxu0 0
    %3336 = vmatpush1.bf16.msra.mxu0 0
    %3337 = vmatprep.mubr.bf16.mxu0 0
    %3338 = vmatmul.mubr.bf16.gmra.mrb[0].mxu0 %v1525
    %v3339 = vpop.f32.mrb[0].mxu0
    %v3340 = vadd.f32 0.0, %v3339
    %v3341 = vpop.f32.mrb[0].mxu0
    %v3342 = vadd.f32 0.0, %v3341
    %v3343 = vpop.f32.mrb[0].mxu0
    %v3344 = vadd.f32 0.0, %v3343
    %v3345 = vpop.f32.mrb[0].mxu0
    %v3346 = vadd.f32 0.0, %v3345
    %3347 = vdwg.mxu0
    %v3348 = vadd.f32 %v3297, %v3299
    %v3349 = vadd.f32 %v3348, %v3340
    %v3350 = vadd.f32 %v3349, %v3342
    %v3351 = vadd.f32 %v3350, %v3301
    %v3352 = vadd.f32 %v3351, %v3303
    %v3353 = vadd.f32 %v3352, %v3344
    %v3354 = vadd.f32 %v3353, %v3346
    %3355 = vadd.xlane.f32.xlu0 %v3354
    %v3356 = vpop.xlane.xlu0 %3355
    %v3357 = vmul.f32 %v3297, %v3297
    %v3358 = vmul.f32 %v3299, %v3299
    %v3359 = vmul.f32 %v3340, %v3340
    %v3360 = vmul.f32 %v3342, %v3342
    %v3361 = vmul.f32 %v3301, %v3301
    %v3362 = vmul.f32 %v3303, %v3303
    %v3363 = vmul.f32 %v3344, %v3344
    %v3364 = vmul.f32 %v3346, %v3346
    %v3365 = vadd.f32 %v3357, %v3358
    %v3366 = vadd.f32 %v3365, %v3359
    %v3367 = vadd.f32 %v3366, %v3360
    %v3368 = vadd.f32 %v3367, %v3361
    %v3369 = vadd.f32 %v3368, %v3362
    %v3370 = vadd.f32 %v3369, %v3363
    %v3371 = vadd.f32 %v3370, %v3364
    %3372 = vadd.xlane.f32.xlu0 %v3371
    %v3373 = vpop.xlane.xlu0 %3372
    %v3374 = vmul.f32 %v3356, 0.0009765625
    %v3375 = vmul.f32 %v3373, 0.0009765625
    %v3376 = vmul.f32 %v3374, %v3374
    %v3377 = vsub.f32 %v3375, %v3376
    %s3378 = scalar_lea.vmem %s2, 24
    %v3379 = vld [vmem:[%s3378] sm:$0xff]
    %v3380 = vadd.f32 %v3377, 1e-05
    %v3381 = vrsqrt.pop %v3380
    %v3382 = vmul.f32 %v3379, %v3381
    %s3383 = scalar_lea.vmem %s3, 24
    %v3384 = vld [vmem:[%s3383] sm:$0xff]
    %v3385 = vmul.f32 %v3374, %v3382
    %v3386 = vsub.f32 %v3384, %v3385
    %3388 = vset.pattern.permute.xlu0 0
    %3389 = vperm.xlu0 %3388, %v3382
    %v3390 = vpop.permute.xlu0 %3389
    %v3392 = vmul.f32 %v3297, %v3390
    %v3393 = vmul.f32 %v3299, %v3390
    %v3394 = vmul.f32 %v3340, %v3390
    %v3395 = vmul.f32 %v3342, %v3390
    %v3396 = vmul.f32 %v3301, %v3390
    %v3397 = vmul.f32 %v3303, %v3390
    %v3398 = vmul.f32 %v3344, %v3390
    %v3399 = vmul.f32 %v3346, %v3390
    %3401 = vset.pattern.permute.xlu0 0
    %3402 = vperm.xlu0 %3401, %v3386
    %v3403 = vpop.permute.xlu0 %3402
    %v3405 = vadd.f32 %v3392, %v3403
    %v3406 = vadd.f32 %v3393, %v3403
    %v3407 = vadd.f32 %v3394, %v3403
    %v3408 = vadd.f32 %v3395, %v3403
    %v3409 = vadd.f32 %v3396, %v3403
    %v3410 = vadd.f32 %v3397, %v3403
    %v3411 = vadd.f32 %v3398, %v3403
    %v3412 = vadd.f32 %v3399, %v3403
    %v3413 = vadd.f32 %v3405, %v1780
    %v3414 = vadd.f32 %v3406, %v1781
    %v3415 = vadd.f32 %v3407, %v1782
    %v3416 = vadd.f32 %v3408, %v1783
    %v3417 = vadd.f32 %v3409, %v1784
    %v3418 = vadd.f32 %v3410, %v1785
    %v3419 = vadd.f32 %v3411, %v1786
    %v3420 = vadd.f32 %v3412, %v1787
    %v3421 = vmin.f32 %v3413, 20.0
    %v3422 = vmin.f32 %v3414, 20.0
    %v3423 = vmin.f32 %v3415, 20.0
    %v3424 = vmin.f32 %v3416, 20.0
    %v3425 = vmin.f32 %v3417, 20.0
    %v3426 = vmin.f32 %v3418, 20.0
    %v3427 = vmin.f32 %v3419, 20.0
    %v3428 = vmin.f32 %v3420, 20.0
    %vm3429 = vcmp.gt.f32.partialorder %v3413, 20.0
    %vm3430 = vcmp.gt.f32.partialorder %v3414, 20.0
    %vm3431 = vcmp.gt.f32.partialorder %v3415, 20.0
    %vm3432 = vcmp.gt.f32.partialorder %v3416, 20.0
    %vm3433 = vcmp.gt.f32.partialorder %v3417, 20.0
    %vm3434 = vcmp.gt.f32.partialorder %v3418, 20.0
    %vm3435 = vcmp.gt.f32.partialorder %v3419, 20.0
    %vm3436 = vcmp.gt.f32.partialorder %v3420, 20.0
    %v3437 = vmul.f32 %v3421, 1.442695
    %v3438 = vpow.pop %v3437
    %v3439 = vmul.f32 %v3422, 1.442695
    %v3440 = vpow.pop %v3439
    %v3441 = vmul.f32 %v3423, 1.442695
    %v3442 = vpow.pop %v3441
    %v3443 = vmul.f32 %v3424, 1.442695
    %v3444 = vpow.pop %v3443
    %v3445 = vmul.f32 %v3425, 1.442695
    %v3446 = vpow.pop %v3445
    %v3447 = vmul.f32 %v3426, 1.442695
    %v3448 = vpow.pop %v3447
    %v3449 = vmul.f32 %v3427, 1.442695
    %v3450 = vpow.pop %v3449
    %v3451 = vmul.f32 %v3428, 1.442695
    %v3452 = vpow.pop %v3451
    %v3453 = vadd.f32 %v3438, 1.0
    %v3454 = vlog2.pop %v3453
    %v3455 = vmul.f32 %v3454, 0.6931472
    %v3456 = vmul.f32 -0.5, %v3438
    %v3457 = vadd.f32 %v3456, 1.0
    %v3458 = vmul.f32 %v3457, %v3438
    %v3459 = vand.u32 2147483647, %v3438
    %vm3460 = vcmp.lt.f32.partialorder %v3459, 0.0004427343
    %v3461 = vsel %vm3460, %v3458, %v3455
    %v3462 = vadd.f32 %v3440, 1.0
    %v3463 = vlog2.pop %v3462
    %v3464 = vmul.f32 %v3463, 0.6931472
    %v3465 = vmul.f32 -0.5, %v3440
    %v3466 = vadd.f32 %v3465, 1.0
    %v3467 = vmul.f32 %v3466, %v3440
    %v3468 = vand.u32 2147483647, %v3440
    %vm3469 = vcmp.lt.f32.partialorder %v3468, 0.0004427343
    %v3470 = vsel %vm3469, %v3467, %v3464
    %v3471 = vadd.f32 %v3442, 1.0
    %v3472 = vlog2.pop %v3471
    %v3473 = vmul.f32 %v3472, 0.6931472
    %v3474 = vmul.f32 -0.5, %v3442
    %v3475 = vadd.f32 %v3474, 1.0
    %v3476 = vmul.f32 %v3475, %v3442
    %v3477 = vand.u32 2147483647, %v3442
    %vm3478 = vcmp.lt.f32.partialorder %v3477, 0.0004427343
    %v3479 = vsel %vm3478, %v3476, %v3473
    %v3480 = vadd.f32 %v3444, 1.0
    %v3481 = vlog2.pop %v3480
    %v3482 = vmul.f32 %v3481, 0.6931472
    %v3483 = vmul.f32 -0.5, %v3444
    %v3484 = vadd.f32 %v3483, 1.0
    %v3485 = vmul.f32 %v3484, %v3444
    %v3486 = vand.u32 2147483647, %v3444
    %vm3487 = vcmp.lt.f32.partialorder %v3486, 0.0004427343
    %v3488 = vsel %vm3487, %v3485, %v3482
    %v3489 = vadd.f32 %v3446, 1.0
    %v3490 = vlog2.pop %v3489
    %v3491 = vmul.f32 %v3490, 0.6931472
    %v3492 = vmul.f32 -0.5, %v3446
    %v3493 = vadd.f32 %v3492, 1.0
    %v3494 = vmul.f32 %v3493, %v3446
    %v3495 = vand.u32 2147483647, %v3446
    %vm3496 = vcmp.lt.f32.partialorder %v3495, 0.0004427343
    %v3497 = vsel %vm3496, %v3494, %v3491
    %v3498 = vadd.f32 %v3448, 1.0
    %v3499 = vlog2.pop %v3498
    %v3500 = vmul.f32 %v3499, 0.6931472
    %v3501 = vmul.f32 -0.5, %v3448
    %v3502 = vadd.f32 %v3501, 1.0
    %v3503 = vmul.f32 %v3502, %v3448
    %v3504 = vand.u32 2147483647, %v3448
    %vm3505 = vcmp.lt.f32.partialorder %v3504, 0.0004427343
    %v3506 = vsel %vm3505, %v3503, %v3500
    %v3507 = vadd.f32 %v3450, 1.0
    %v3508 = vlog2.pop %v3507
    %v3509 = vmul.f32 %v3508, 0.6931472
    %v3510 = vmul.f32 -0.5, %v3450
    %v3511 = vadd.f32 %v3510, 1.0
    %v3512 = vmul.f32 %v3511, %v3450
    %v3513 = vand.u32 2147483647, %v3450
    %vm3514 = vcmp.lt.f32.partialorder %v3513, 0.0004427343
    %v3515 = vsel %vm3514, %v3512, %v3509
    %v3516 = vadd.f32 %v3452, 1.0
    %v3517 = vlog2.pop %v3516
    %v3518 = vmul.f32 %v3517, 0.6931472
    %v3519 = vmul.f32 -0.5, %v3452
    %v3520 = vadd.f32 %v3519, 1.0
    %v3521 = vmul.f32 %v3520, %v3452
    %v3522 = vand.u32 2147483647, %v3452
    %vm3523 = vcmp.lt.f32.partialorder %v3522, 0.0004427343
    %v3524 = vsel %vm3523, %v3521, %v3518
    %v3525 = vsel %vm3429, %v3413, %v3461
    %v3526 = vsel %vm3430, %v3414, %v3470
    %v3527 = vsel %vm3431, %v3415, %v3479
    %v3528 = vsel %vm3432, %v3416, %v3488
    %v3529 = vsel %vm3433, %v3417, %v3497
    %v3530 = vsel %vm3434, %v3418, %v3506
    %v3531 = vsel %vm3435, %v3419, %v3515
    %v3532 = vsel %vm3436, %v3420, %v3524
    %s3533 = smul.u32 %s1788, 2
    %s3534 = sshll.u32 %s3533, 4
    %3535 = dma.done %s189, %s3534
    %v3536 = vld [vmem:[#allocation6] sm:$0xff]
    %v3537 = vld [vmem:[#allocation6 + $0x8] sm:$0xff]
    %v3538 = vld [vmem:[#allocation6 + $0x10] sm:$0xff]
    %v3539 = vld [vmem:[#allocation6 + $0x18] sm:$0xff]
    %v3540 = vld [vmem:[#allocation6 + $0x20] sm:$0xff]
    %v3541 = vld [vmem:[#allocation6 + $0x28] sm:$0xff]
    %v3542 = vld [vmem:[#allocation6 + $0x30] sm:$0xff]
    %v3543 = vld [vmem:[#allocation6 + $0x38] sm:$0xff]
    %v3544 = vld [vmem:[#allocation6 + $0x40] sm:$0xff]
    %v3545 = vld [vmem:[#allocation6 + $0x48] sm:$0xff]
    %v3546 = vld [vmem:[#allocation6 + $0x50] sm:$0xff]
    %v3547 = vld [vmem:[#allocation6 + $0x58] sm:$0xff]
    %v3548 = vld [vmem:[#allocation6 + $0x60] sm:$0xff]
    %v3549 = vld [vmem:[#allocation6 + $0x68] sm:$0xff]
    %v3550 = vld [vmem:[#allocation6 + $0x70] sm:$0xff]
    %v3551 = vld [vmem:[#allocation6 + $0x78] sm:$0xff]
    %v3552 = vld [vmem:[#allocation6 + $0x80] sm:$0xff]
    %v3553 = vld [vmem:[#allocation6 + $0x88] sm:$0xff]
    %v3554 = vld [vmem:[#allocation6 + $0x90] sm:$0xff]
    %v3555 = vld [vmem:[#allocation6 + $0x98] sm:$0xff]
    %v3556 = vld [vmem:[#allocation6 + $0xa0] sm:$0xff]
    %v3557 = vld [vmem:[#allocation6 + $0xa8] sm:$0xff]
    %v3558 = vld [vmem:[#allocation6 + $0xb0] sm:$0xff]
    %v3559 = vld [vmem:[#allocation6 + $0xb8] sm:$0xff]
    %v3560 = vld [vmem:[#allocation6 + $0xc0] sm:$0xff]
    %v3561 = vld [vmem:[#allocation6 + $0xc8] sm:$0xff]
    %v3562 = vld [vmem:[#allocation6 + $0xd0] sm:$0xff]
    %v3563 = vld [vmem:[#allocation6 + $0xd8] sm:$0xff]
    %v3564 = vld [vmem:[#allocation6 + $0xe0] sm:$0xff]
    %v3565 = vld [vmem:[#allocation6 + $0xe8] sm:$0xff]
    %v3566 = vld [vmem:[#allocation6 + $0xf0] sm:$0xff]
    %v3567 = vld [vmem:[#allocation6 + $0xf8] sm:$0xff]
    %v3568 = vld [vmem:[#allocation6 + $0x100] sm:$0xff]
    %v3569 = vld [vmem:[#allocation6 + $0x108] sm:$0xff]
    %v3570 = vld [vmem:[#allocation6 + $0x110] sm:$0xff]
    %v3571 = vld [vmem:[#allocation6 + $0x118] sm:$0xff]
    %v3572 = vld [vmem:[#allocation6 + $0x120] sm:$0xff]
    %v3573 = vld [vmem:[#allocation6 + $0x128] sm:$0xff]
    %v3574 = vld [vmem:[#allocation6 + $0x130] sm:$0xff]
    %v3575 = vld [vmem:[#allocation6 + $0x138] sm:$0xff]
    %v3576 = vld [vmem:[#allocation6 + $0x140] sm:$0xff]
    %v3577 = vld [vmem:[#allocation6 + $0x148] sm:$0xff]
    %v3578 = vld [vmem:[#allocation6 + $0x150] sm:$0xff]
    %v3579 = vld [vmem:[#allocation6 + $0x158] sm:$0xff]
    %v3580 = vld [vmem:[#allocation6 + $0x160] sm:$0xff]
    %v3581 = vld [vmem:[#allocation6 + $0x168] sm:$0xff]
    %v3582 = vld [vmem:[#allocation6 + $0x170] sm:$0xff]
    %v3583 = vld [vmem:[#allocation6 + $0x178] sm:$0xff]
    %v3584 = vld [vmem:[#allocation6 + $0x180] sm:$0xff]
    %v3585 = vld [vmem:[#allocation6 + $0x188] sm:$0xff]
    %v3586 = vld [vmem:[#allocation6 + $0x190] sm:$0xff]
    %v3587 = vld [vmem:[#allocation6 + $0x198] sm:$0xff]
    %v3588 = vld [vmem:[#allocation6 + $0x1a0] sm:$0xff]
    %v3589 = vld [vmem:[#allocation6 + $0x1a8] sm:$0xff]
    %v3590 = vld [vmem:[#allocation6 + $0x1b0] sm:$0xff]
    %v3591 = vld [vmem:[#allocation6 + $0x1b8] sm:$0xff]
    %v3592 = vld [vmem:[#allocation6 + $0x1c0] sm:$0xff]
    %v3593 = vld [vmem:[#allocation6 + $0x1c8] sm:$0xff]
    %v3594 = vld [vmem:[#allocation6 + $0x1d0] sm:$0xff]
    %v3595 = vld [vmem:[#allocation6 + $0x1d8] sm:$0xff]
    %v3596 = vld [vmem:[#allocation6 + $0x1e0] sm:$0xff]
    %v3597 = vld [vmem:[#allocation6 + $0x1e8] sm:$0xff]
    %v3598 = vld [vmem:[#allocation6 + $0x1f0] sm:$0xff]
    %v3599 = vld [vmem:[#allocation6 + $0x1f8] sm:$0xff]
    %v3600 = vpack.c.bf16 %v3529, %v3525
    %v3601 = vpack.c.bf16 %v3530, %v3526
    %v3602 = vpack.c.bf16 %v3531, %v3527
    %v3603 = vpack.c.bf16 %v3532, %v3528
    %3604 = vmatprep.subr.bf16.mxu0 %v3537
    %3605 = vmatpush1.bf16.msra.mxu0 %v3536
    %3606 = vmatprep.subr.bf16.mxu0 %v3539
    %3607 = vmatpush1.bf16.msra.mxu0 %v3538
    %3608 = vmatprep.subr.bf16.mxu0 %v3541
    %3609 = vmatpush1.bf16.msra.mxu0 %v3540
    %3610 = vmatprep.subr.bf16.mxu0 %v3543
    %3611 = vmatpush1.bf16.msra.mxu0 %v3542
    %3612 = vmatprep.subr.bf16.mxu0 %v3545
    %3613 = vmatpush1.bf16.msra.mxu0 %v3544
    %3614 = vmatprep.subr.bf16.mxu0 %v3547
    %3615 = vmatpush1.bf16.msra.mxu0 %v3546
    %3616 = vmatprep.subr.bf16.mxu0 %v3549
    %3617 = vmatpush1.bf16.msra.mxu0 %v3548
    %3618 = vmatprep.subr.bf16.mxu0 %v3551
    %3619 = vmatpush1.bf16.msra.mxu0 %v3550
    %3620 = vmatprep.subr.bf16.mxu0 %v3553
    %3621 = vmatpush1.bf16.msra.mxu0 %v3552
    %3622 = vmatprep.subr.bf16.mxu0 %v3555
    %3623 = vmatpush1.bf16.msra.mxu0 %v3554
    %3624 = vmatprep.subr.bf16.mxu0 %v3557
    %3625 = vmatpush1.bf16.msra.mxu0 %v3556
    %3626 = vmatprep.subr.bf16.mxu0 %v3559
    %3627 = vmatpush1.bf16.msra.mxu0 %v3558
    %3628 = vmatprep.subr.bf16.mxu0 %v3561
    %3629 = vmatpush1.bf16.msra.mxu0 %v3560
    %3630 = vmatprep.subr.bf16.mxu0 %v3563
    %3631 = vmatpush1.bf16.msra.mxu0 %v3562
    %3632 = vmatprep.subr.bf16.mxu0 %v3565
    %3633 = vmatpush1.bf16.msra.mxu0 %v3564
    %3634 = vmatprep.subr.bf16.mxu0 %v3567
    %3635 = vmatpush1.bf16.msra.mxu0 %v3566
    %3636 = vmatprep.mubr.bf16.mxu0 %v3601
    %3637 = vmatmul.mubr.bf16.gmra.mrb[0].mxu0 %v3600
    %v3638 = vpop.f32.mrb[0].mxu0
    %v3639 = vadd.f32 0.0, %v3638
    %v3640 = vpop.f32.mrb[0].mxu0
    %v3641 = vadd.f32 0.0, %v3640
    %v3642 = vpop.f32.mrb[0].mxu0
    %v3643 = vadd.f32 0.0, %v3642
    %v3644 = vpop.f32.mrb[0].mxu0
    %v3645 = vadd.f32 0.0, %v3644
    %3646 = vdwg.mxu0
    %3647 = vmatprep.subr.bf16.mxu0 %v3569
    %3648 = vmatpush1.bf16.msra.mxu0 %v3568
    %3649 = vmatprep.subr.bf16.mxu0 %v3571
    %3650 = vmatpush1.bf16.msra.mxu0 %v3570
    %3651 = vmatprep.subr.bf16.mxu0 %v3573
    %3652 = vmatpush1.bf16.msra.mxu0 %v3572
    %3653 = vmatprep.subr.bf16.mxu0 %v3575
    %3654 = vmatpush1.bf16.msra.mxu0 %v3574
    %3655 = vmatprep.subr.bf16.mxu0 %v3577
    %3656 = vmatpush1.bf16.msra.mxu0 %v3576
    %3657 = vmatprep.subr.bf16.mxu0 %v3579
    %3658 = vmatpush1.bf16.msra.mxu0 %v3578
    %3659 = vmatprep.subr.bf16.mxu0 %v3581
    %3660 = vmatpush1.bf16.msra.mxu0 %v3580
    %3661 = vmatprep.subr.bf16.mxu0 %v3583
    %3662 = vmatpush1.bf16.msra.mxu0 %v3582
    %3663 = vmatprep.subr.bf16.mxu0 %v3585
    %3664 = vmatpush1.bf16.msra.mxu0 %v3584
    %3665 = vmatprep.subr.bf16.mxu0 %v3587
    %3666 = vmatpush1.bf16.msra.mxu0 %v3586
    %3667 = vmatprep.subr.bf16.mxu0 %v3589
    %3668 = vmatpush1.bf16.msra.mxu0 %v3588
    %3669 = vmatprep.subr.bf16.mxu0 %v3591
    %3670 = vmatpush1.bf16.msra.mxu0 %v3590
    %3671 = vmatprep.subr.bf16.mxu0 %v3593
    %3672 = vmatpush1.bf16.msra.mxu0 %v3592
    %3673 = vmatprep.subr.bf16.mxu0 %v3595
    %3674 = vmatpush1.bf16.msra.mxu0 %v3594
    %3675 = vmatprep.subr.bf16.mxu0 %v3597
    %3676 = vmatpush1.bf16.msra.mxu0 %v3596
    %3677 = vmatprep.subr.bf16.mxu0 %v3599
    %3678 = vmatpush1.bf16.msra.mxu0 %v3598
    %3679 = vmatprep.mubr.bf16.mxu0 %v3603
    %3680 = vmatmul.mubr.bf16.gmra.mrb[0].mxu0 %v3602
    %v3681 = vpop.f32.mrb[0].mxu0
    %v3682 = vadd.f32 %v3639, %v3681
    %v3683 = vpop.f32.mrb[0].mxu0
    %v3684 = vadd.f32 %v3641, %v3683
    %v3685 = vpop.f32.mrb[0].mxu0
    %v3686 = vadd.f32 %v3643, %v3685
    %v3687 = vpop.f32.mrb[0].mxu0
    %v3688 = vadd.f32 %v3645, %v3687
    %3689 = vdwg.mxu0
    %v3690 = vpack.c.bf16 %v3686, %v3682
    %v3691 = vpack.c.bf16 %v3688, %v3684
    %3692 = vmatprep.subr.bf16.mxu0 %v3691
    %3693 = vmatpush1.bf16.msra.mxu0 %v3690
    %3694 = vmatprep.subr.bf16.mxu0 0
    %3695 = vmatpush1.bf16.msra.mxu0 0
    %3696 = vmatprep.subr.bf16.mxu0 0
    %3697 = vmatpush1.bf16.msra.mxu0 0
    %3698 = vmatprep.subr.bf16.mxu0 0
    %3699 = vmatpush1.bf16.msra.mxu0 0
    %3700 = vmatprep.subr.bf16.mxu0 0
    %3701 = vmatpush1.bf16.msra.mxu0 0
    %3702 = vmatprep.subr.bf16.mxu0 0
    %3703 = vmatpush1.bf16.msra.mxu0 0
    %3704 = vmatprep.subr.bf16.mxu0 0
    %3705 = vmatpush1.bf16.msra.mxu0 0
    %3706 = vmatprep.subr.bf16.mxu0 0
    %3707 = vmatpush1.bf16.msra.mxu0 0
    %3708 = vmatprep.subr.bf16.mxu0 0
    %3709 = vmatpush1.bf16.msra.mxu0 0
    %3710 = vmatprep.subr.bf16.mxu0 0
    %3711 = vmatpush1.bf16.msra.mxu0 0
    %3712 = vmatprep.subr.bf16.mxu0 0
    %3713 = vmatpush1.bf16.msra.mxu0 0
    %3714 = vmatprep.subr.bf16.mxu0 0
    %3715 = vmatpush1.bf16.msra.mxu0 0
    %3716 = vmatprep.subr.bf16.mxu0 0
    %3717 = vmatpush1.bf16.msra.mxu0 0
    %3718 = vmatprep.subr.bf16.mxu0 0
    %3719 = vmatpush1.bf16.msra.mxu0 0
    %3720 = vmatprep.subr.bf16.mxu0 0
    %3721 = vmatpush1.bf16.msra.mxu0 0
    %3722 = vmatprep.subr.bf16.mxu0 0
    %3723 = vmatpush1.bf16.msra.mxu0 0
    %3724 = vmatprep.mubr.bf16.mxu0 0
    %3725 = vmatmul.mubr.bf16.gmra.mrb[0].mxu0 %v1525
    %v3726 = vpop.f32.mrb[0].mxu0
    %v3727 = vadd.f32 0.0, %v3726
    %v3728 = vpop.f32.mrb[0].mxu0
    %v3729 = vadd.f32 0.0, %v3728
    %v3730 = vpop.f32.mrb[0].mxu0
    %v3731 = vadd.f32 0.0, %v3730
    %v3732 = vpop.f32.mrb[0].mxu0
    %v3733 = vadd.f32 0.0, %v3732
    %3734 = vdwg.mxu0
    %v3735 = vadd.f32 %v3727, %v3729
    %v3736 = vadd.f32 %v3735, %v3731
    %v3737 = vadd.f32 %v3736, %v3733
    %3738 = vadd.xlane.f32.xlu0 %v3737
    %v3739 = vpop.xlane.xlu0 %3738
    %v3740 = vmul.f32 %v3727, %v3727
    %v3741 = vmul.f32 %v3729, %v3729
    %v3742 = vmul.f32 %v3731, %v3731
    %v3743 = vmul.f32 %v3733, %v3733
    %v3744 = vadd.f32 %v3740, %v3741
    %v3745 = vadd.f32 %v3744, %v3742
    %v3746 = vadd.f32 %v3745, %v3743
    %3747 = vadd.xlane.f32.xlu0 %v3746
    %v3748 = vpop.xlane.xlu0 %3747
    %v3749 = vmul.f32 %v3739, 0.001953125
    %v3750 = vmul.f32 %v3748, 0.001953125
    %v3751 = vmul.f32 %v3749, %v3749
    %v3752 = vsub.f32 %v3750, %v3751
    %s3753 = scalar_lea.vmem %s2, 32
    %v3754 = vld [vmem:[%s3753] sm:$0xff]
    %v3755 = vadd.f32 %v3752, 1e-05
    %v3756 = vrsqrt.pop %v3755
    %v3757 = vmul.f32 %v3754, %v3756
    %s3758 = scalar_lea.vmem %s3, 32
    %v3759 = vld [vmem:[%s3758] sm:$0xff]
    %v3760 = vmul.f32 %v3749, %v3757
    %v3761 = vsub.f32 %v3759, %v3760
    %3763 = vset.pattern.permute.xlu0 0
    %3764 = vperm.xlu0 %3763, %v3757
    %v3765 = vpop.permute.xlu0 %3764
    %v3767 = vmul.f32 %v3727, %v3765
    %v3768 = vmul.f32 %v3729, %v3765
    %v3769 = vmul.f32 %v3731, %v3765
    %v3770 = vmul.f32 %v3733, %v3765
    %3772 = vset.pattern.permute.xlu0 0
    %3773 = vperm.xlu0 %3772, %v3761
    %v3774 = vpop.permute.xlu0 %3773
    %v3776 = vadd.f32 %v3767, %v3774
    %v3777 = vadd.f32 %v3768, %v3774
    %v3778 = vadd.f32 %v3769, %v3774
    %v3779 = vadd.f32 %v3770, %v3774
    %v3780 = vmin.f32 %v3776, 20.0
    %v3781 = vmin.f32 %v3777, 20.0
    %v3782 = vmin.f32 %v3778, 20.0
    %v3783 = vmin.f32 %v3779, 20.0
    %vm3784 = vcmp.gt.f32.partialorder %v3776, 20.0
    %vm3785 = vcmp.gt.f32.partialorder %v3777, 20.0
    %vm3786 = vcmp.gt.f32.partialorder %v3778, 20.0
    %vm3787 = vcmp.gt.f32.partialorder %v3779, 20.0
    %v3788 = vmul.f32 %v3780, 1.442695
    %v3789 = vpow.pop %v3788
    %v3790 = vmul.f32 %v3781, 1.442695
    %v3791 = vpow.pop %v3790
    %v3792 = vmul.f32 %v3782, 1.442695
    %v3793 = vpow.pop %v3792
    %v3794 = vmul.f32 %v3783, 1.442695
    %v3795 = vpow.pop %v3794
    %v3796 = vadd.f32 %v3789, 1.0
    %v3797 = vlog2.pop %v3796
    %v3798 = vmul.f32 %v3797, 0.6931472
    %v3799 = vmul.f32 -0.5, %v3789
    %v3800 = vadd.f32 %v3799, 1.0
    %v3801 = vmul.f32 %v3800, %v3789
    %v3802 = vand.u32 2147483647, %v3789
    %vm3803 = vcmp.lt.f32.partialorder %v3802, 0.0004427343
    %v3804 = vsel %vm3803, %v3801, %v3798
    %v3805 = vadd.f32 %v3791, 1.0
    %v3806 = vlog2.pop %v3805
    %v3807 = vmul.f32 %v3806, 0.6931472
    %v3808 = vmul.f32 -0.5, %v3791
    %v3809 = vadd.f32 %v3808, 1.0
    %v3810 = vmul.f32 %v3809, %v3791
    %v3811 = vand.u32 2147483647, %v3791
    %vm3812 = vcmp.lt.f32.partialorder %v3811, 0.0004427343
    %v3813 = vsel %vm3812, %v3810, %v3807
    %v3814 = vadd.f32 %v3793, 1.0
    %v3815 = vlog2.pop %v3814
    %v3816 = vmul.f32 %v3815, 0.6931472
    %v3817 = vmul.f32 -0.5, %v3793
    %v3818 = vadd.f32 %v3817, 1.0
    %v3819 = vmul.f32 %v3818, %v3793
    %v3820 = vand.u32 2147483647, %v3793
    %vm3821 = vcmp.lt.f32.partialorder %v3820, 0.0004427343
    %v3822 = vsel %vm3821, %v3819, %v3816
    %v3823 = vadd.f32 %v3795, 1.0
    %v3824 = vlog2.pop %v3823
    %v3825 = vmul.f32 %v3824, 0.6931472
    %v3826 = vmul.f32 -0.5, %v3795
    %v3827 = vadd.f32 %v3826, 1.0
    %v3828 = vmul.f32 %v3827, %v3795
    %v3829 = vand.u32 2147483647, %v3795
    %vm3830 = vcmp.lt.f32.partialorder %v3829, 0.0004427343
    %v3831 = vsel %vm3830, %v3828, %v3825
    %v3832 = vsel %vm3784, %v3776, %v3804
    %v3833 = vsel %vm3785, %v3777, %v3813
    %v3834 = vsel %vm3786, %v3778, %v3822
    %v3835 = vsel %vm3787, %v3779, %v3831
    %s3836 = smul.u32 4, 32
    %s3837 = smul.u32 %s3836, 2
    %s3838 = sshll.u32 %s3837, 4
    %3839 = dma.done %s224, %s3838
    %v3840 = vld [vmem:[#allocation7] sm:$0xff]
    %v3841 = vld [vmem:[#allocation7 + $0x8] sm:$0xff]
    %v3842 = vld [vmem:[#allocation7 + $0x10] sm:$0xff]
    %v3843 = vld [vmem:[#allocation7 + $0x18] sm:$0xff]
    %v3844 = vld [vmem:[#allocation7 + $0x20] sm:$0xff]
    %v3845 = vld [vmem:[#allocation7 + $0x28] sm:$0xff]
    %v3846 = vld [vmem:[#allocation7 + $0x30] sm:$0xff]
    %v3847 = vld [vmem:[#allocation7 + $0x38] sm:$0xff]
    %v3848 = vld [vmem:[#allocation7 + $0x40] sm:$0xff]
    %v3849 = vld [vmem:[#allocation7 + $0x48] sm:$0xff]
    %v3850 = vld [vmem:[#allocation7 + $0x50] sm:$0xff]
    %v3851 = vld [vmem:[#allocation7 + $0x58] sm:$0xff]
    %v3852 = vld [vmem:[#allocation7 + $0x60] sm:$0xff]
    %v3853 = vld [vmem:[#allocation7 + $0x68] sm:$0xff]
    %v3854 = vld [vmem:[#allocation7 + $0x70] sm:$0xff]
    %v3855 = vld [vmem:[#allocation7 + $0x78] sm:$0xff]
    %v3856 = vld [vmem:[#allocation7 + $0x80] sm:$0xff]
    %v3857 = vld [vmem:[#allocation7 + $0x88] sm:$0xff]
    %v3858 = vld [vmem:[#allocation7 + $0x90] sm:$0xff]
    %v3859 = vld [vmem:[#allocation7 + $0x98] sm:$0xff]
    %v3860 = vld [vmem:[#allocation7 + $0xa0] sm:$0xff]
    %v3861 = vld [vmem:[#allocation7 + $0xa8] sm:$0xff]
    %v3862 = vld [vmem:[#allocation7 + $0xb0] sm:$0xff]
    %v3863 = vld [vmem:[#allocation7 + $0xb8] sm:$0xff]
    %v3864 = vld [vmem:[#allocation7 + $0xc0] sm:$0xff]
    %v3865 = vld [vmem:[#allocation7 + $0xc8] sm:$0xff]
    %v3866 = vld [vmem:[#allocation7 + $0xd0] sm:$0xff]
    %v3867 = vld [vmem:[#allocation7 + $0xd8] sm:$0xff]
    %v3868 = vld [vmem:[#allocation7 + $0xe0] sm:$0xff]
    %v3869 = vld [vmem:[#allocation7 + $0xe8] sm:$0xff]
    %v3870 = vld [vmem:[#allocation7 + $0xf0] sm:$0xff]
    %v3871 = vld [vmem:[#allocation7 + $0xf8] sm:$0xff]
    %v3872 = vpack.c.bf16 %v3834, %v3832
    %v3873 = vpack.c.bf16 %v3835, %v3833
    %3874 = vmatprep.subr.bf16.mxu0 %v3841
    %3875 = vmatpush1.bf16.msra.mxu0 %v3840
    %3876 = vmatprep.subr.bf16.mxu0 %v3843
    %3877 = vmatpush1.bf16.msra.mxu0 %v3842
    %3878 = vmatprep.subr.bf16.mxu0 %v3845
    %3879 = vmatpush1.bf16.msra.mxu0 %v3844
    %3880 = vmatprep.subr.bf16.mxu0 %v3847
    %3881 = vmatpush1.bf16.msra.mxu0 %v3846
    %3882 = vmatprep.subr.bf16.mxu0 %v3849
    %3883 = vmatpush1.bf16.msra.mxu0 %v3848
    %3884 = vmatprep.subr.bf16.mxu0 %v3851
    %3885 = vmatpush1.bf16.msra.mxu0 %v3850
    %3886 = vmatprep.subr.bf16.mxu0 %v3853
    %3887 = vmatpush1.bf16.msra.mxu0 %v3852
    %3888 = vmatprep.subr.bf16.mxu0 %v3855
    %3889 = vmatpush1.bf16.msra.mxu0 %v3854
    %3890 = vmatprep.subr.bf16.mxu0 %v3857
    %3891 = vmatpush1.bf16.msra.mxu0 %v3856
    %3892 = vmatprep.subr.bf16.mxu0 %v3859
    %3893 = vmatpush1.bf16.msra.mxu0 %v3858
    %3894 = vmatprep.subr.bf16.mxu0 %v3861
    %3895 = vmatpush1.bf16.msra.mxu0 %v3860
    %3896 = vmatprep.subr.bf16.mxu0 %v3863
    %3897 = vmatpush1.bf16.msra.mxu0 %v3862
    %3898 = vmatprep.subr.bf16.mxu0 %v3865
    %3899 = vmatpush1.bf16.msra.mxu0 %v3864
    %3900 = vmatprep.subr.bf16.mxu0 %v3867
    %3901 = vmatpush1.bf16.msra.mxu0 %v3866
    %3902 = vmatprep.subr.bf16.mxu0 %v3869
    %3903 = vmatpush1.bf16.msra.mxu0 %v3868
    %3904 = vmatprep.subr.bf16.mxu0 %v3871
    %3905 = vmatpush1.bf16.msra.mxu0 %v3870
    %3906 = vmatprep.mubr.bf16.mxu0 %v3873
    %3907 = vmatmul.mubr.bf16.gmra.mrb[0].mxu0 %v3872
    %v3908 = vpop.f32.mrb[0].mxu0
    %v3909 = vadd.f32 0.0, %v3908
    %v3910 = vpop.f32.mrb[0].mxu0
    %v3911 = vadd.f32 0.0, %v3910
    %v3912 = vpop.f32.mrb[0].mxu0
    %v3913 = vadd.f32 0.0, %v3912
    %v3914 = vpop.f32.mrb[0].mxu0
    %v3915 = vadd.f32 0.0, %v3914
    %3916 = vdwg.mxu0
    %v3917 = vpack.c.bf16 %v3913, %v3909
    %v3918 = vpack.c.bf16 %v3915, %v3911
    %3919 = vmatprep.subr.bf16.mxu0 %v3918
    %3920 = vmatpush1.bf16.msra.mxu0 %v3917
    %3921 = vmatprep.subr.bf16.mxu0 0
    %3922 = vmatpush1.bf16.msra.mxu0 0
    %3923 = vmatprep.subr.bf16.mxu0 0
    %3924 = vmatpush1.bf16.msra.mxu0 0
    %3925 = vmatprep.subr.bf16.mxu0 0
    %3926 = vmatpush1.bf16.msra.mxu0 0
    %3927 = vmatprep.subr.bf16.mxu0 0
    %3928 = vmatpush1.bf16.msra.mxu0 0
    %3929 = vmatprep.subr.bf16.mxu0 0
    %3930 = vmatpush1.bf16.msra.mxu0 0
    %3931 = vmatprep.subr.bf16.mxu0 0
    %3932 = vmatpush1.bf16.msra.mxu0 0
    %3933 = vmatprep.subr.bf16.mxu0 0
    %3934 = vmatpush1.bf16.msra.mxu0 0
    %3935 = vmatprep.subr.bf16.mxu0 0
    %3936 = vmatpush1.bf16.msra.mxu0 0
    %3937 = vmatprep.subr.bf16.mxu0 0
    %3938 = vmatpush1.bf16.msra.mxu0 0
    %3939 = vmatprep.subr.bf16.mxu0 0
    %3940 = vmatpush1.bf16.msra.mxu0 0
    %3941 = vmatprep.subr.bf16.mxu0 0
    %3942 = vmatpush1.bf16.msra.mxu0 0
    %3943 = vmatprep.subr.bf16.mxu0 0
    %3944 = vmatpush1.bf16.msra.mxu0 0
    %3945 = vmatprep.subr.bf16.mxu0 0
    %3946 = vmatpush1.bf16.msra.mxu0 0
    %3947 = vmatprep.subr.bf16.mxu0 0
    %3948 = vmatpush1.bf16.msra.mxu0 0
    %3949 = vmatprep.subr.bf16.mxu0 0
    %3950 = vmatpush1.bf16.msra.mxu0 0
    %3951 = vmatprep.mubr.bf16.mxu0 0
    %3952 = vmatmul.mubr.bf16.gmra.mrb[0].mxu0 %v1525
    %v3953 = vpop.f32.mrb[0].mxu0
    %v3954 = vadd.f32 0.0, %v3953
    %v3955 = vpop.f32.mrb[0].mxu0
    %v3956 = vadd.f32 0.0, %v3955
    %v3957 = vpop.f32.mrb[0].mxu0
    %v3958 = vadd.f32 0.0, %v3957
    %v3959 = vpop.f32.mrb[0].mxu0
    %v3960 = vadd.f32 0.0, %v3959
    %3961 = vdwg.mxu0
    %v3962 = vadd.f32 %v3954, %v3956
    %v3963 = vadd.f32 %v3962, %v3958
    %v3964 = vadd.f32 %v3963, %v3960
    %3965 = vadd.xlane.f32.xlu0 %v3964
    %v3966 = vpop.xlane.xlu0 %3965
    %v3967 = vmul.f32 %v3954, %v3954
    %v3968 = vmul.f32 %v3956, %v3956
    %v3969 = vmul.f32 %v3958, %v3958
    %v3970 = vmul.f32 %v3960, %v3960
    %v3971 = vadd.f32 %v3967, %v3968
    %v3972 = vadd.f32 %v3971, %v3969
    %v3973 = vadd.f32 %v3972, %v3970
    %3974 = vadd.xlane.f32.xlu0 %v3973
    %v3975 = vpop.xlane.xlu0 %3974
    %v3976 = vmul.f32 %v3966, 0.001953125
    %v3977 = vmul.f32 %v3975, 0.001953125
    %v3978 = vmul.f32 %v3976, %v3976
    %v3979 = vsub.f32 %v3977, %v3978
    %s3980 = scalar_lea.vmem %s2, 40
    %v3981 = vld [vmem:[%s3980] sm:$0xff]
    %v3982 = vadd.f32 %v3979, 1e-05
    %v3983 = vrsqrt.pop %v3982
    %v3984 = vmul.f32 %v3981, %v3983
    %s3985 = scalar_lea.vmem %s3, 40
    %v3986 = vld [vmem:[%s3985] sm:$0xff]
    %v3987 = vmul.f32 %v3976, %v3984
    %v3988 = vsub.f32 %v3986, %v3987
    %3990 = vset.pattern.permute.xlu0 0
    %3991 = vperm.xlu0 %3990, %v3984
    %v3992 = vpop.permute.xlu0 %3991
    %v3994 = vmul.f32 %v3954, %v3992
    %v3995 = vmul.f32 %v3956, %v3992
    %v3996 = vmul.f32 %v3958, %v3992
    %v3997 = vmul.f32 %v3960, %v3992
    %3999 = vset.pattern.permute.xlu0 0
    %4000 = vperm.xlu0 %3999, %v3988
    %v4001 = vpop.permute.xlu0 %4000
    %v4003 = vadd.f32 %v3994, %v4001
    %v4004 = vadd.f32 %v3995, %v4001
    %v4005 = vadd.f32 %v3996, %v4001
    %v4006 = vadd.f32 %v3997, %v4001
    %v4007 = vadd.f32 %v4003, %v3832
    %v4008 = vadd.f32 %v4004, %v3833
    %v4009 = vadd.f32 %v4005, %v3834
    %v4010 = vadd.f32 %v4006, %v3835
    %v4011 = vmin.f32 %v4007, 20.0
    %v4012 = vmin.f32 %v4008, 20.0
    %v4013 = vmin.f32 %v4009, 20.0
    %v4014 = vmin.f32 %v4010, 20.0
    %vm4015 = vcmp.gt.f32.partialorder %v4007, 20.0
    %vm4016 = vcmp.gt.f32.partialorder %v4008, 20.0
    %vm4017 = vcmp.gt.f32.partialorder %v4009, 20.0
    %vm4018 = vcmp.gt.f32.partialorder %v4010, 20.0
    %v4019 = vmul.f32 %v4011, 1.442695
    %v4020 = vpow.pop %v4019
    %v4021 = vmul.f32 %v4012, 1.442695
    %v4022 = vpow.pop %v4021
    %v4023 = vmul.f32 %v4013, 1.442695
    %v4024 = vpow.pop %v4023
    %v4025 = vmul.f32 %v4014, 1.442695
    %v4026 = vpow.pop %v4025
    %v4027 = vadd.f32 %v4020, 1.0
    %v4028 = vlog2.pop %v4027
    %v4029 = vmul.f32 %v4028, 0.6931472
    %v4030 = vmul.f32 -0.5, %v4020
    %v4031 = vadd.f32 %v4030, 1.0
    %v4032 = vmul.f32 %v4031, %v4020
    %v4033 = vand.u32 2147483647, %v4020
    %vm4034 = vcmp.lt.f32.partialorder %v4033, 0.0004427343
    %v4035 = vsel %vm4034, %v4032, %v4029
    %v4036 = vadd.f32 %v4022, 1.0
    %v4037 = vlog2.pop %v4036
    %v4038 = vmul.f32 %v4037, 0.6931472
    %v4039 = vmul.f32 -0.5, %v4022
    %v4040 = vadd.f32 %v4039, 1.0
    %v4041 = vmul.f32 %v4040, %v4022
    %v4042 = vand.u32 2147483647, %v4022
    %vm4043 = vcmp.lt.f32.partialorder %v4042, 0.0004427343
    %v4044 = vsel %vm4043, %v4041, %v4038
    %v4045 = vadd.f32 %v4024, 1.0
    %v4046 = vlog2.pop %v4045
    %v4047 = vmul.f32 %v4046, 0.6931472
    %v4048 = vmul.f32 -0.5, %v4024
    %v4049 = vadd.f32 %v4048, 1.0
    %v4050 = vmul.f32 %v4049, %v4024
    %v4051 = vand.u32 2147483647, %v4024
    %vm4052 = vcmp.lt.f32.partialorder %v4051, 0.0004427343
    %v4053 = vsel %vm4052, %v4050, %v4047
    %v4054 = vadd.f32 %v4026, 1.0
    %v4055 = vlog2.pop %v4054
    %v4056 = vmul.f32 %v4055, 0.6931472
    %v4057 = vmul.f32 -0.5, %v4026
    %v4058 = vadd.f32 %v4057, 1.0
    %v4059 = vmul.f32 %v4058, %v4026
    %v4060 = vand.u32 2147483647, %v4026
    %vm4061 = vcmp.lt.f32.partialorder %v4060, 0.0004427343
    %v4062 = vsel %vm4061, %v4059, %v4056
    %v4063 = vsel %vm4015, %v4007, %v4035
    %v4064 = vsel %vm4016, %v4008, %v4044
    %v4065 = vsel %vm4017, %v4009, %v4053
    %v4066 = vsel %vm4018, %v4010, %v4062
    %s4067 = sshll.u32 %s3837, 4
    %4068 = dma.done %s529, %s4067
    %v4069 = vld [vmem:[#allocation8] sm:$0xff]
    %v4070 = vld [vmem:[#allocation8 + $0x8] sm:$0xff]
    %v4071 = vld [vmem:[#allocation8 + $0x10] sm:$0xff]
    %v4072 = vld [vmem:[#allocation8 + $0x18] sm:$0xff]
    %v4073 = vld [vmem:[#allocation8 + $0x20] sm:$0xff]
    %v4074 = vld [vmem:[#allocation8 + $0x28] sm:$0xff]
    %v4075 = vld [vmem:[#allocation8 + $0x30] sm:$0xff]
    %v4076 = vld [vmem:[#allocation8 + $0x38] sm:$0xff]
    %v4077 = vld [vmem:[#allocation8 + $0x40] sm:$0xff]
    %v4078 = vld [vmem:[#allocation8 + $0x48] sm:$0xff]
    %v4079 = vld [vmem:[#allocation8 + $0x50] sm:$0xff]
    %v4080 = vld [vmem:[#allocation8 + $0x58] sm:$0xff]
    %v4081 = vld [vmem:[#allocation8 + $0x60] sm:$0xff]
    %v4082 = vld [vmem:[#allocation8 + $0x68] sm:$0xff]
    %v4083 = vld [vmem:[#allocation8 + $0x70] sm:$0xff]
    %v4084 = vld [vmem:[#allocation8 + $0x78] sm:$0xff]
    %v4085 = vld [vmem:[#allocation8 + $0x80] sm:$0xff]
    %v4086 = vld [vmem:[#allocation8 + $0x88] sm:$0xff]
    %v4087 = vld [vmem:[#allocation8 + $0x90] sm:$0xff]
    %v4088 = vld [vmem:[#allocation8 + $0x98] sm:$0xff]
    %v4089 = vld [vmem:[#allocation8 + $0xa0] sm:$0xff]
    %v4090 = vld [vmem:[#allocation8 + $0xa8] sm:$0xff]
    %v4091 = vld [vmem:[#allocation8 + $0xb0] sm:$0xff]
    %v4092 = vld [vmem:[#allocation8 + $0xb8] sm:$0xff]
    %v4093 = vld [vmem:[#allocation8 + $0xc0] sm:$0xff]
    %v4094 = vld [vmem:[#allocation8 + $0xc8] sm:$0xff]
    %v4095 = vld [vmem:[#allocation8 + $0xd0] sm:$0xff]
    %v4096 = vld [vmem:[#allocation8 + $0xd8] sm:$0xff]
    %v4097 = vld [vmem:[#allocation8 + $0xe0] sm:$0xff]
    %v4098 = vld [vmem:[#allocation8 + $0xe8] sm:$0xff]
    %v4099 = vld [vmem:[#allocation8 + $0xf0] sm:$0xff]
    %v4100 = vld [vmem:[#allocation8 + $0xf8] sm:$0xff]
    %v4101 = vpack.c.bf16 %v4065, %v4063
    %v4102 = vpack.c.bf16 %v4066, %v4064
    %4103 = vmatprep.subr.bf16.mxu0 %v4070
    %4104 = vmatpush1.bf16.msra.mxu0 %v4069
    %4105 = vmatprep.subr.bf16.mxu0 %v4072
    %4106 = vmatpush1.bf16.msra.mxu0 %v4071
    %4107 = vmatprep.subr.bf16.mxu0 %v4074
    %4108 = vmatpush1.bf16.msra.mxu0 %v4073
    %4109 = vmatprep.subr.bf16.mxu0 %v4076
    %4110 = vmatpush1.bf16.msra.mxu0 %v4075
    %4111 = vmatprep.subr.bf16.mxu0 %v4078
    %4112 = vmatpush1.bf16.msra.mxu0 %v4077
    %4113 = vmatprep.subr.bf16.mxu0 %v4080
    %4114 = vmatpush1.bf16.msra.mxu0 %v4079
    %4115 = vmatprep.subr.bf16.mxu0 %v4082
    %4116 = vmatpush1.bf16.msra.mxu0 %v4081
    %4117 = vmatprep.subr.bf16.mxu0 %v4084
    %4118 = vmatpush1.bf16.msra.mxu0 %v4083
    %4119 = vmatprep.subr.bf16.mxu0 %v4086
    %4120 = vmatpush1.bf16.msra.mxu0 %v4085
    %4121 = vmatprep.subr.bf16.mxu0 %v4088
    %4122 = vmatpush1.bf16.msra.mxu0 %v4087
    %4123 = vmatprep.subr.bf16.mxu0 %v4090
    %4124 = vmatpush1.bf16.msra.mxu0 %v4089
    %4125 = vmatprep.subr.bf16.mxu0 %v4092
    %4126 = vmatpush1.bf16.msra.mxu0 %v4091
    %4127 = vmatprep.subr.bf16.mxu0 %v4094
    %4128 = vmatpush1.bf16.msra.mxu0 %v4093
    %4129 = vmatprep.subr.bf16.mxu0 %v4096
    %4130 = vmatpush1.bf16.msra.mxu0 %v4095
    %4131 = vmatprep.subr.bf16.mxu0 %v4098
    %4132 = vmatpush1.bf16.msra.mxu0 %v4097
    %4133 = vmatprep.subr.bf16.mxu0 %v4100
    %4134 = vmatpush1.bf16.msra.mxu0 %v4099
    %4135 = vmatprep.mubr.bf16.mxu0 %v4102
    %4136 = vmatmul.mubr.bf16.gmra.mrb[0].mxu0 %v4101
    %v4137 = vpop.f32.mrb[0].mxu0
    %v4138 = vadd.f32 0.0, %v4137
    %v4139 = vpop.f32.mrb[0].mxu0
    %v4140 = vadd.f32 0.0, %v4139
    %v4141 = vpop.f32.mrb[0].mxu0
    %v4142 = vadd.f32 0.0, %v4141
    %v4143 = vpop.f32.mrb[0].mxu0
    %v4144 = vadd.f32 0.0, %v4143
    %4145 = vdwg.mxu0
    %v4146 = vpack.c.bf16 %v4142, %v4138
    %v4147 = vpack.c.bf16 %v4144, %v4140
    %4148 = vmatprep.subr.bf16.mxu0 %v4147
    %4149 = vmatpush1.bf16.msra.mxu0 %v4146
    %4150 = vmatprep.subr.bf16.mxu0 0
    %4151 = vmatpush1.bf16.msra.mxu0 0
    %4152 = vmatprep.subr.bf16.mxu0 0
    %4153 = vmatpush1.bf16.msra.mxu0 0
    %4154 = vmatprep.subr.bf16.mxu0 0
    %4155 = vmatpush1.bf16.msra.mxu0 0
    %4156 = vmatprep.subr.bf16.mxu0 0
    %4157 = vmatpush1.bf16.msra.mxu0 0
    %4158 = vmatprep.subr.bf16.mxu0 0
    %4159 = vmatpush1.bf16.msra.mxu0 0
    %4160 = vmatprep.subr.bf16.mxu0 0
    %4161 = vmatpush1.bf16.msra.mxu0 0
    %4162 = vmatprep.subr.bf16.mxu0 0
    %4163 = vmatpush1.bf16.msra.mxu0 0
    %4164 = vmatprep.subr.bf16.mxu0 0
    %4165 = vmatpush1.bf16.msra.mxu0 0
    %4166 = vmatprep.subr.bf16.mxu0 0
    %4167 = vmatpush1.bf16.msra.mxu0 0
    %4168 = vmatprep.subr.bf16.mxu0 0
    %4169 = vmatpush1.bf16.msra.mxu0 0
    %4170 = vmatprep.subr.bf16.mxu0 0
    %4171 = vmatpush1.bf16.msra.mxu0 0
    %4172 = vmatprep.subr.bf16.mxu0 0
    %4173 = vmatpush1.bf16.msra.mxu0 0
    %4174 = vmatprep.subr.bf16.mxu0 0
    %4175 = vmatpush1.bf16.msra.mxu0 0
    %4176 = vmatprep.subr.bf16.mxu0 0
    %4177 = vmatpush1.bf16.msra.mxu0 0
    %4178 = vmatprep.subr.bf16.mxu0 0
    %4179 = vmatpush1.bf16.msra.mxu0 0
    %4180 = vmatprep.mubr.bf16.mxu0 0
    %4181 = vmatmul.mubr.bf16.gmra.mrb[0].mxu0 %v1525
    %v4182 = vpop.f32.mrb[0].mxu0
    %v4183 = vadd.f32 0.0, %v4182
    %v4184 = vpop.f32.mrb[0].mxu0
    %v4185 = vadd.f32 0.0, %v4184
    %v4186 = vpop.f32.mrb[0].mxu0
    %v4187 = vadd.f32 0.0, %v4186
    %v4188 = vpop.f32.mrb[0].mxu0
    %v4189 = vadd.f32 0.0, %v4188
    %4190 = vdwg.mxu0
    %v4191 = vadd.f32 %v4183, %v4185
    %v4192 = vadd.f32 %v4191, %v4187
    %v4193 = vadd.f32 %v4192, %v4189
    %4194 = vadd.xlane.f32.xlu0 %v4193
    %v4195 = vpop.xlane.xlu0 %4194
    %v4196 = vmul.f32 %v4183, %v4183
    %v4197 = vmul.f32 %v4185, %v4185
    %v4198 = vmul.f32 %v4187, %v4187
    %v4199 = vmul.f32 %v4189, %v4189
    %v4200 = vadd.f32 %v4196, %v4197
    %v4201 = vadd.f32 %v4200, %v4198
    %v4202 = vadd.f32 %v4201, %v4199
    %4203 = vadd.xlane.f32.xlu0 %v4202
    %v4204 = vpop.xlane.xlu0 %4203
    %v4205 = vmul.f32 %v4195, 0.001953125
    %v4206 = vmul.f32 %v4204, 0.001953125
    %v4207 = vmul.f32 %v4205, %v4205
    %v4208 = vsub.f32 %v4206, %v4207
    %s4209 = scalar_lea.vmem %s2, 48
    %v4210 = vld [vmem:[%s4209] sm:$0xff]
    %v4211 = vadd.f32 %v4208, 1e-05
    %v4212 = vrsqrt.pop %v4211
    %v4213 = vmul.f32 %v4210, %v4212
    %s4214 = scalar_lea.vmem %s3, 48
    %v4215 = vld [vmem:[%s4214] sm:$0xff]
    %v4216 = vmul.f32 %v4205, %v4213
    %v4217 = vsub.f32 %v4215, %v4216
    %4219 = vset.pattern.permute.xlu0 0
    %4220 = vperm.xlu0 %4219, %v4213
    %v4221 = vpop.permute.xlu0 %4220
    %v4223 = vmul.f32 %v4183, %v4221
    %v4224 = vmul.f32 %v4185, %v4221
    %v4225 = vmul.f32 %v4187, %v4221
    %v4226 = vmul.f32 %v4189, %v4221
    %4228 = vset.pattern.permute.xlu0 0
    %4229 = vperm.xlu0 %4228, %v4217
    %v4230 = vpop.permute.xlu0 %4229
    %v4232 = vadd.f32 %v4223, %v4230
    %v4233 = vadd.f32 %v4224, %v4230
    %v4234 = vadd.f32 %v4225, %v4230
    %v4235 = vadd.f32 %v4226, %v4230
    %v4236 = vadd.f32 %v4232, %v3832
    %v4237 = vadd.f32 %v4233, %v3833
    %v4238 = vadd.f32 %v4234, %v3834
    %v4239 = vadd.f32 %v4235, %v3835
    %v4240 = vmin.f32 %v4236, 20.0
    %v4241 = vmin.f32 %v4237, 20.0
    %v4242 = vmin.f32 %v4238, 20.0
    %v4243 = vmin.f32 %v4239, 20.0
    %vm4244 = vcmp.gt.f32.partialorder %v4236, 20.0
    %vm4245 = vcmp.gt.f32.partialorder %v4237, 20.0
    %vm4246 = vcmp.gt.f32.partialorder %v4238, 20.0
    %vm4247 = vcmp.gt.f32.partialorder %v4239, 20.0
    %v4248 = vmul.f32 %v4240, 1.442695
    %v4249 = vpow.pop %v4248
    %v4250 = vmul.f32 %v4241, 1.442695
    %v4251 = vpow.pop %v4250
    %v4252 = vmul.f32 %v4242, 1.442695
    %v4253 = vpow.pop %v4252
    %v4254 = vmul.f32 %v4243, 1.442695
    %v4255 = vpow.pop %v4254
    %v4256 = vadd.f32 %v4249, 1.0
    %v4257 = vlog2.pop %v4256
    %v4258 = vmul.f32 %v4257, 0.6931472
    %v4259 = vmul.f32 -0.5, %v4249
    %v4260 = vadd.f32 %v4259, 1.0
    %v4261 = vmul.f32 %v4260, %v4249
    %v4262 = vand.u32 2147483647, %v4249
    %vm4263 = vcmp.lt.f32.partialorder %v4262, 0.0004427343
    %v4264 = vsel %vm4263, %v4261, %v4258
    %v4265 = vadd.f32 %v4251, 1.0
    %v4266 = vlog2.pop %v4265
    %v4267 = vmul.f32 %v4266, 0.6931472
    %v4268 = vmul.f32 -0.5, %v4251
    %v4269 = vadd.f32 %v4268, 1.0
    %v4270 = vmul.f32 %v4269, %v4251
    %v4271 = vand.u32 2147483647, %v4251
    %vm4272 = vcmp.lt.f32.partialorder %v4271, 0.0004427343
    %v4273 = vsel %vm4272, %v4270, %v4267
    %v4274 = vadd.f32 %v4253, 1.0
    %v4275 = vlog2.pop %v4274
    %v4276 = vmul.f32 %v4275, 0.6931472
    %v4277 = vmul.f32 -0.5, %v4253
    %v4278 = vadd.f32 %v4277, 1.0
    %v4279 = vmul.f32 %v4278, %v4253
    %v4280 = vand.u32 2147483647, %v4253
    %vm4281 = vcmp.lt.f32.partialorder %v4280, 0.0004427343
    %v4282 = vsel %vm4281, %v4279, %v4276
    %v4283 = vadd.f32 %v4255, 1.0
    %v4284 = vlog2.pop %v4283
    %v4285 = vmul.f32 %v4284, 0.6931472
    %v4286 = vmul.f32 -0.5, %v4255
    %v4287 = vadd.f32 %v4286, 1.0
    %v4288 = vmul.f32 %v4287, %v4255
    %v4289 = vand.u32 2147483647, %v4255
    %vm4290 = vcmp.lt.f32.partialorder %v4289, 0.0004427343
    %v4291 = vsel %vm4290, %v4288, %v4285
    %v4292 = vsel %vm4244, %v4236, %v4264
    %v4293 = vsel %vm4245, %v4237, %v4273
    %v4294 = vsel %vm4246, %v4238, %v4282
    %v4295 = vsel %vm4247, %v4239, %v4291
    %s4296 = sshll.u32 %s3837, 4
    %4297 = dma.done %s564, %s4296
    %v4298 = vld [vmem:[#allocation9] sm:$0xff]
    %v4299 = vld [vmem:[#allocation9 + $0x8] sm:$0xff]
    %v4300 = vld [vmem:[#allocation9 + $0x10] sm:$0xff]
    %v4301 = vld [vmem:[#allocation9 + $0x18] sm:$0xff]
    %v4302 = vld [vmem:[#allocation9 + $0x20] sm:$0xff]
    %v4303 = vld [vmem:[#allocation9 + $0x28] sm:$0xff]
    %v4304 = vld [vmem:[#allocation9 + $0x30] sm:$0xff]
    %v4305 = vld [vmem:[#allocation9 + $0x38] sm:$0xff]
    %v4306 = vld [vmem:[#allocation9 + $0x40] sm:$0xff]
    %v4307 = vld [vmem:[#allocation9 + $0x48] sm:$0xff]
    %v4308 = vld [vmem:[#allocation9 + $0x50] sm:$0xff]
    %v4309 = vld [vmem:[#allocation9 + $0x58] sm:$0xff]
    %v4310 = vld [vmem:[#allocation9 + $0x60] sm:$0xff]
    %v4311 = vld [vmem:[#allocation9 + $0x68] sm:$0xff]
    %v4312 = vld [vmem:[#allocation9 + $0x70] sm:$0xff]
    %v4313 = vld [vmem:[#allocation9 + $0x78] sm:$0xff]
    %v4314 = vld [vmem:[#allocation9 + $0x80] sm:$0xff]
    %v4315 = vld [vmem:[#allocation9 + $0x88] sm:$0xff]
    %v4316 = vld [vmem:[#allocation9 + $0x90] sm:$0xff]
    %v4317 = vld [vmem:[#allocation9 + $0x98] sm:$0xff]
    %v4318 = vld [vmem:[#allocation9 + $0xa0] sm:$0xff]
    %v4319 = vld [vmem:[#allocation9 + $0xa8] sm:$0xff]
    %v4320 = vld [vmem:[#allocation9 + $0xb0] sm:$0xff]
    %v4321 = vld [vmem:[#allocation9 + $0xb8] sm:$0xff]
    %v4322 = vld [vmem:[#allocation9 + $0xc0] sm:$0xff]
    %v4323 = vld [vmem:[#allocation9 + $0xc8] sm:$0xff]
    %v4324 = vld [vmem:[#allocation9 + $0xd0] sm:$0xff]
    %v4325 = vld [vmem:[#allocation9 + $0xd8] sm:$0xff]
    %v4326 = vld [vmem:[#allocation9 + $0xe0] sm:$0xff]
    %v4327 = vld [vmem:[#allocation9 + $0xe8] sm:$0xff]
    %v4328 = vld [vmem:[#allocation9 + $0xf0] sm:$0xff]
    %v4329 = vld [vmem:[#allocation9 + $0xf8] sm:$0xff]
    %v4330 = vpack.c.bf16 %v4294, %v4292
    %v4331 = vpack.c.bf16 %v4295, %v4293
    %4332 = vmatprep.subr.bf16.mxu0 %v4299
    %4333 = vmatpush1.bf16.msra.mxu0 %v4298
    %4334 = vmatprep.subr.bf16.mxu0 %v4301
    %4335 = vmatpush1.bf16.msra.mxu0 %v4300
    %4336 = vmatprep.subr.bf16.mxu0 %v4303
    %4337 = vmatpush1.bf16.msra.mxu0 %v4302
    %4338 = vmatprep.subr.bf16.mxu0 %v4305
    %4339 = vmatpush1.bf16.msra.mxu0 %v4304
    %4340 = vmatprep.subr.bf16.mxu0 %v4307
    %4341 = vmatpush1.bf16.msra.mxu0 %v4306
    %4342 = vmatprep.subr.bf16.mxu0 %v4309
    %4343 = vmatpush1.bf16.msra.mxu0 %v4308
    %4344 = vmatprep.subr.bf16.mxu0 %v4311
    %4345 = vmatpush1.bf16.msra.mxu0 %v4310
    %4346 = vmatprep.subr.bf16.mxu0 %v4313
    %4347 = vmatpush1.bf16.msra.mxu0 %v4312
    %4348 = vmatprep.subr.bf16.mxu0 %v4315
    %4349 = vmatpush1.bf16.msra.mxu0 %v4314
    %4350 = vmatprep.subr.bf16.mxu0 %v4317
    %4351 = vmatpush1.bf16.msra.mxu0 %v4316
    %4352 = vmatprep.subr.bf16.mxu0 %v4319
    %4353 = vmatpush1.bf16.msra.mxu0 %v4318
    %4354 = vmatprep.subr.bf16.mxu0 %v4321
    %4355 = vmatpush1.bf16.msra.mxu0 %v4320
    %4356 = vmatprep.subr.bf16.mxu0 %v4323
    %4357 = vmatpush1.bf16.msra.mxu0 %v4322
    %4358 = vmatprep.subr.bf16.mxu0 %v4325
    %4359 = vmatpush1.bf16.msra.mxu0 %v4324
    %4360 = vmatprep.subr.bf16.mxu0 %v4327
    %4361 = vmatpush1.bf16.msra.mxu0 %v4326
    %4362 = vmatprep.subr.bf16.mxu0 %v4329
    %4363 = vmatpush1.bf16.msra.mxu0 %v4328
    %4364 = vmatprep.mubr.bf16.mxu0 %v4331
    %4365 = vmatmul.mubr.bf16.gmra.mrb[0].mxu0 %v4330
    %v4366 = vpop.f32.mrb[0].mxu0
    %v4367 = vadd.f32 0.0, %v4366
    %v4368 = vpop.f32.mrb[0].mxu0
    %v4369 = vadd.f32 0.0, %v4368
    %v4370 = vpop.f32.mrb[0].mxu0
    %v4371 = vadd.f32 0.0, %v4370
    %v4372 = vpop.f32.mrb[0].mxu0
    %v4373 = vadd.f32 0.0, %v4372
    %4374 = vdwg.mxu0
    %v4375 = vpack.c.bf16 %v4371, %v4367
    %v4376 = vpack.c.bf16 %v4373, %v4369
    %4377 = vmatprep.subr.bf16.mxu0 %v4376
    %4378 = vmatpush1.bf16.msra.mxu0 %v4375
    %4379 = vmatprep.subr.bf16.mxu0 0
    %4380 = vmatpush1.bf16.msra.mxu0 0
    %4381 = vmatprep.subr.bf16.mxu0 0
    %4382 = vmatpush1.bf16.msra.mxu0 0
    %4383 = vmatprep.subr.bf16.mxu0 0
    %4384 = vmatpush1.bf16.msra.mxu0 0
    %4385 = vmatprep.subr.bf16.mxu0 0
    %4386 = vmatpush1.bf16.msra.mxu0 0
    %4387 = vmatprep.subr.bf16.mxu0 0
    %4388 = vmatpush1.bf16.msra.mxu0 0
    %4389 = vmatprep.subr.bf16.mxu0 0
    %4390 = vmatpush1.bf16.msra.mxu0 0
    %4391 = vmatprep.subr.bf16.mxu0 0
    %4392 = vmatpush1.bf16.msra.mxu0 0
    %4393 = vmatprep.subr.bf16.mxu0 0
    %4394 = vmatpush1.bf16.msra.mxu0 0
    %4395 = vmatprep.subr.bf16.mxu0 0
    %4396 = vmatpush1.bf16.msra.mxu0 0
    %4397 = vmatprep.subr.bf16.mxu0 0
    %4398 = vmatpush1.bf16.msra.mxu0 0
    %4399 = vmatprep.subr.bf16.mxu0 0
    %4400 = vmatpush1.bf16.msra.mxu0 0
    %4401 = vmatprep.subr.bf16.mxu0 0
    %4402 = vmatpush1.bf16.msra.mxu0 0
    %4403 = vmatprep.subr.bf16.mxu0 0
    %4404 = vmatpush1.bf16.msra.mxu0 0
    %4405 = vmatprep.subr.bf16.mxu0 0
    %4406 = vmatpush1.bf16.msra.mxu0 0
    %4407 = vmatprep.subr.bf16.mxu0 0
    %4408 = vmatpush1.bf16.msra.mxu0 0
    %4409 = vmatprep.mubr.bf16.mxu0 0
    %4410 = vmatmul.mubr.bf16.gmra.mrb[0].mxu0 %v1525
    %v4411 = vpop.f32.mrb[0].mxu0
    %v4412 = vadd.f32 0.0, %v4411
    %v4413 = vpop.f32.mrb[0].mxu0
    %v4414 = vadd.f32 0.0, %v4413
    %v4415 = vpop.f32.mrb[0].mxu0
    %v4416 = vadd.f32 0.0, %v4415
    %v4417 = vpop.f32.mrb[0].mxu0
    %v4418 = vadd.f32 0.0, %v4417
    %4419 = vdwg.mxu0
    %v4420 = vadd.f32 %v4412, %v4414
    %v4421 = vadd.f32 %v4420, %v4416
    %v4422 = vadd.f32 %v4421, %v4418
    %4423 = vadd.xlane.f32.xlu0 %v4422
    %v4424 = vpop.xlane.xlu0 %4423
    %v4425 = vmul.f32 %v4412, %v4412
    %v4426 = vmul.f32 %v4414, %v4414
    %v4427 = vmul.f32 %v4416, %v4416
    %v4428 = vmul.f32 %v4418, %v4418
    %v4429 = vadd.f32 %v4425, %v4426
    %v4430 = vadd.f32 %v4429, %v4427
    %v4431 = vadd.f32 %v4430, %v4428
    %4432 = vadd.xlane.f32.xlu0 %v4431
    %v4433 = vpop.xlane.xlu0 %4432
    %v4434 = vmul.f32 %v4424, 0.001953125
    %v4435 = vmul.f32 %v4433, 0.001953125
    %v4436 = vmul.f32 %v4434, %v4434
    %v4437 = vsub.f32 %v4435, %v4436
    %s4438 = scalar_lea.vmem %s2, 56
    %v4439 = vld [vmem:[%s4438] sm:$0xff]
    %v4440 = vadd.f32 %v4437, 1e-05
    %v4441 = vrsqrt.pop %v4440
    %v4442 = vmul.f32 %v4439, %v4441
    %s4443 = scalar_lea.vmem %s3, 56
    %v4444 = vld [vmem:[%s4443] sm:$0xff]
    %v4445 = vmul.f32 %v4434, %v4442
    %v4446 = vsub.f32 %v4444, %v4445
    %4448 = vset.pattern.permute.xlu0 0
    %4449 = vperm.xlu0 %4448, %v4442
    %v4450 = vpop.permute.xlu0 %4449
    %v4452 = vmul.f32 %v4412, %v4450
    %v4453 = vmul.f32 %v4414, %v4450
    %v4454 = vmul.f32 %v4416, %v4450
    %v4455 = vmul.f32 %v4418, %v4450
    %4457 = vset.pattern.permute.xlu0 0
    %4458 = vperm.xlu0 %4457, %v4446
    %v4459 = vpop.permute.xlu0 %4458
    %v4461 = vadd.f32 %v4452, %v4459
    %v4462 = vadd.f32 %v4453, %v4459
    %v4463 = vadd.f32 %v4454, %v4459
    %v4464 = vadd.f32 %v4455, %v4459
    %v4465 = vadd.f32 %v4461, %v3832
    %v4466 = vadd.f32 %v4462, %v3833
    %v4467 = vadd.f32 %v4463, %v3834
    %v4468 = vadd.f32 %v4464, %v3835
    %v4469 = vmin.f32 %v4465, 20.0
    %v4470 = vmin.f32 %v4466, 20.0
    %v4471 = vmin.f32 %v4467, 20.0
    %v4472 = vmin.f32 %v4468, 20.0
    %vm4473 = vcmp.gt.f32.partialorder %v4465, 20.0
    %vm4474 = vcmp.gt.f32.partialorder %v4466, 20.0
    %vm4475 = vcmp.gt.f32.partialorder %v4467, 20.0
    %vm4476 = vcmp.gt.f32.partialorder %v4468, 20.0
    %v4477 = vmul.f32 %v4469, 1.442695
    %v4478 = vpow.pop %v4477
    %v4479 = vmul.f32 %v4470, 1.442695
    %v4480 = vpow.pop %v4479
    %v4481 = vmul.f32 %v4471, 1.442695
    %v4482 = vpow.pop %v4481
    %v4483 = vmul.f32 %v4472, 1.442695
    %v4484 = vpow.pop %v4483
    %v4485 = vadd.f32 %v4478, 1.0
    %v4486 = vlog2.pop %v4485
    %v4487 = vmul.f32 %v4486, 0.6931472
    %v4488 = vmul.f32 -0.5, %v4478
    %v4489 = vadd.f32 %v4488, 1.0
    %v4490 = vmul.f32 %v4489, %v4478
    %v4491 = vand.u32 2147483647, %v4478
    %vm4492 = vcmp.lt.f32.partialorder %v4491, 0.0004427343
    %v4493 = vsel %vm4492, %v4490, %v4487
    %v4494 = vadd.f32 %v4480, 1.0
    %v4495 = vlog2.pop %v4494
    %v4496 = vmul.f32 %v4495, 0.6931472
    %v4497 = vmul.f32 -0.5, %v4480
    %v4498 = vadd.f32 %v4497, 1.0
    %v4499 = vmul.f32 %v4498, %v4480
    %v4500 = vand.u32 2147483647, %v4480
    %vm4501 = vcmp.lt.f32.partialorder %v4500, 0.0004427343
    %v4502 = vsel %vm4501, %v4499, %v4496
    %v4503 = vadd.f32 %v4482, 1.0
    %v4504 = vlog2.pop %v4503
    %v4505 = vmul.f32 %v4504, 0.6931472
    %v4506 = vmul.f32 -0.5, %v4482
    %v4507 = vadd.f32 %v4506, 1.0
    %v4508 = vmul.f32 %v4507, %v4482
    %v4509 = vand.u32 2147483647, %v4482
    %vm4510 = vcmp.lt.f32.partialorder %v4509, 0.0004427343
    %v4511 = vsel %vm4510, %v4508, %v4505
    %v4512 = vadd.f32 %v4484, 1.0
    %v4513 = vlog2.pop %v4512
    %v4514 = vmul.f32 %v4513, 0.6931472
    %v4515 = vmul.f32 -0.5, %v4484
    %v4516 = vadd.f32 %v4515, 1.0
    %v4517 = vmul.f32 %v4516, %v4484
    %v4518 = vand.u32 2147483647, %v4484
    %vm4519 = vcmp.lt.f32.partialorder %v4518, 0.0004427343
    %v4520 = vsel %vm4519, %v4517, %v4514
    %v4521 = vsel %vm4473, %v4465, %v4493
    %v4522 = vsel %vm4474, %v4466, %v4502
    %v4523 = vsel %vm4475, %v4467, %v4511
    %v4524 = vsel %vm4476, %v4468, %v4520
    %s4525 = smul.u32 %s3836, 1
    %s4526 = sshll.u32 %s4525, 4
    %4527 = dma.done %s599, %s4526
    %v4528 = vld [vmem:[#allocation10] sm:$0xff]
    %v4529 = vld [vmem:[#allocation10 + $0x8] sm:$0xff]
    %v4530 = vld [vmem:[#allocation10 + $0x10] sm:$0xff]
    %v4531 = vld [vmem:[#allocation10 + $0x18] sm:$0xff]
    %v4532 = vld [vmem:[#allocation10 + $0x20] sm:$0xff]
    %v4533 = vld [vmem:[#allocation10 + $0x28] sm:$0xff]
    %v4534 = vld [vmem:[#allocation10 + $0x30] sm:$0xff]
    %v4535 = vld [vmem:[#allocation10 + $0x38] sm:$0xff]
    %v4536 = vld [vmem:[#allocation10 + $0x40] sm:$0xff]
    %v4537 = vld [vmem:[#allocation10 + $0x48] sm:$0xff]
    %v4538 = vld [vmem:[#allocation10 + $0x50] sm:$0xff]
    %v4539 = vld [vmem:[#allocation10 + $0x58] sm:$0xff]
    %v4540 = vld [vmem:[#allocation10 + $0x60] sm:$0xff]
    %v4541 = vld [vmem:[#allocation10 + $0x68] sm:$0xff]
    %v4542 = vld [vmem:[#allocation10 + $0x70] sm:$0xff]
    %v4543 = vld [vmem:[#allocation10 + $0x78] sm:$0xff]
    %v4544 = vpack.c.bf16 %v4523, %v4521
    %v4545 = vpack.c.bf16 %v4524, %v4522
    %4546 = vmatprep.subr.bf16.mxu0 0
    %4547 = vmatpush1.bf16.msra.mxu0 %v4528
    %4548 = vmatprep.subr.bf16.mxu0 0
    %4549 = vmatpush1.bf16.msra.mxu0 %v4529
    %4550 = vmatprep.subr.bf16.mxu0 0
    %4551 = vmatpush1.bf16.msra.mxu0 %v4530
    %4552 = vmatprep.subr.bf16.mxu0 0
    %4553 = vmatpush1.bf16.msra.mxu0 %v4531
    %4554 = vmatprep.subr.bf16.mxu0 0
    %4555 = vmatpush1.bf16.msra.mxu0 %v4532
    %4556 = vmatprep.subr.bf16.mxu0 0
    %4557 = vmatpush1.bf16.msra.mxu0 %v4533
    %4558 = vmatprep.subr.bf16.mxu0 0
    %4559 = vmatpush1.bf16.msra.mxu0 %v4534
    %4560 = vmatprep.subr.bf16.mxu0 0
    %4561 = vmatpush1.bf16.msra.mxu0 %v4535
    %4562 = vmatprep.subr.bf16.mxu0 0
    %4563 = vmatpush1.bf16.msra.mxu0 %v4536
    %4564 = vmatprep.subr.bf16.mxu0 0
    %4565 = vmatpush1.bf16.msra.mxu0 %v4537
    %4566 = vmatprep.subr.bf16.mxu0 0
    %4567 = vmatpush1.bf16.msra.mxu0 %v4538
    %4568 = vmatprep.subr.bf16.mxu0 0
    %4569 = vmatpush1.bf16.msra.mxu0 %v4539
    %4570 = vmatprep.subr.bf16.mxu0 0
    %4571 = vmatpush1.bf16.msra.mxu0 %v4540
    %4572 = vmatprep.subr.bf16.mxu0 0
    %4573 = vmatpush1.bf16.msra.mxu0 %v4541
    %4574 = vmatprep.subr.bf16.mxu0 0
    %4575 = vmatpush1.bf16.msra.mxu0 %v4542
    %4576 = vmatprep.subr.bf16.mxu0 0
    %4577 = vmatpush1.bf16.msra.mxu0 %v4543
    %4578 = vmatprep.mubr.bf16.mxu0 %v4545
    %4579 = vmatmul.mubr.bf16.gmra.mrb[0].mxu0 %v4544
    %v4580 = vpop.f32.mrb[0].mxu0
    %v4581 = vadd.f32 0.0, %v4580
    %v4582 = vpop.f32.mrb[0].mxu0
    %v4583 = vpop.f32.mrb[0].mxu0
    %v4584 = vadd.f32 0.0, %v4583
    %v4585 = vpop.f32.mrb[0].mxu0
    %4586 = vdwg.mxu0
    %v4587 = vpack.c.bf16 %v4584, %v4581
    %4588 = vmatprep.subr.bf16.mxu0 0
    %4589 = vmatpush1.bf16.msra.mxu0 %v4587
    %4590 = vmatprep.subr.bf16.mxu0 0
    %4591 = vmatpush1.bf16.msra.mxu0 0
    %4592 = vmatprep.subr.bf16.mxu0 0
    %4593 = vmatpush1.bf16.msra.mxu0 0
    %4594 = vmatprep.subr.bf16.mxu0 0
    %4595 = vmatpush1.bf16.msra.mxu0 0
    %4596 = vmatprep.subr.bf16.mxu0 0
    %4597 = vmatpush1.bf16.msra.mxu0 0
    %4598 = vmatprep.subr.bf16.mxu0 0
    %4599 = vmatpush1.bf16.msra.mxu0 0
    %4600 = vmatprep.subr.bf16.mxu0 0
    %4601 = vmatpush1.bf16.msra.mxu0 0
    %4602 = vmatprep.subr.bf16.mxu0 0
    %4603 = vmatpush1.bf16.msra.mxu0 0
    %4604 = vmatprep.subr.bf16.mxu0 0
    %4605 = vmatpush1.bf16.msra.mxu0 0
    %4606 = vmatprep.subr.bf16.mxu0 0
    %4607 = vmatpush1.bf16.msra.mxu0 0
    %4608 = vmatprep.subr.bf16.mxu0 0
    %4609 = vmatpush1.bf16.msra.mxu0 0
    %4610 = vmatprep.subr.bf16.mxu0 0
    %4611 = vmatpush1.bf16.msra.mxu0 0
    %4612 = vmatprep.subr.bf16.mxu0 0
    %4613 = vmatpush1.bf16.msra.mxu0 0
    %4614 = vmatprep.subr.bf16.mxu0 0
    %4615 = vmatpush1.bf16.msra.mxu0 0
    %4616 = vmatprep.subr.bf16.mxu0 0
    %4617 = vmatpush1.bf16.msra.mxu0 0
    %4618 = vmatprep.subr.bf16.mxu0 0
    %4619 = vmatpush1.bf16.msra.mxu0 0
    %4620 = vmatprep.mubr.bf16.mxu0 0
    %4621 = vmatmul.mubr.bf16.gmra.mrb[0].mxu0 %v1525
    %v4622 = vpop.f32.mrb[0].mxu0
    %v4623 = vadd.f32 0.0, %v4622
    %v4624 = vpop.f32.mrb[0].mxu0
    %v4625 = vpop.f32.mrb[0].mxu0
    %v4626 = vadd.f32 0.0, %v4625
    %v4627 = vpop.f32.mrb[0].mxu0
    %4628 = vdwg.mxu0
    %v4629 = vadd.f32 %v4623, %v4626
    %4630 = vadd.xlane.f32.xlu0 %v4629
    %v4631 = vpop.xlane.xlu0 %4630
    %v4632 = vmul.f32 %v4623, %v4623
    %v4633 = vmul.f32 %v4626, %v4626
    %v4634 = vadd.f32 %v4632, %v4633
    %4635 = vadd.xlane.f32.xlu0 %v4634
    %v4636 = vpop.xlane.xlu0 %4635
    %v4637 = vmul.f32 %v4631, 0.00390625
    %v4638 = vmul.f32 %v4636, 0.00390625
    %v4639 = vmul.f32 %v4637, %v4637
    %v4640 = vsub.f32 %v4638, %v4639
    %s4641 = scalar_lea.vmem %s2, 64
    %v4642 = vld [vmem:[%s4641] sm:$0xff]
    %v4643 = vadd.f32 %v4640, 1e-05
    %v4644 = vrsqrt.pop %v4643
    %v4645 = vmul.f32 %v4642, %v4644
    %s4646 = scalar_lea.vmem %s3, 64
    %v4647 = vld [vmem:[%s4646] sm:$0xff]
    %v4648 = vmul.f32 %v4637, %v4645
    %v4649 = vsub.f32 %v4647, %v4648
    %4651 = vset.pattern.permute.xlu0 0
    %4652 = vperm.xlu0 %4651, %v4645
    %v4653 = vpop.permute.xlu0 %4652
    %v4655 = vmul.f32 %v4623, %v4653
    %v4656 = vmul.f32 %v4626, %v4653
    %4658 = vset.pattern.permute.xlu0 0
    %4659 = vperm.xlu0 %4658, %v4649
    %v4660 = vpop.permute.xlu0 %4659
    %v4662 = vadd.f32 %v4655, %v4660
    %v4663 = vadd.f32 %v4656, %v4660
    %v4664 = vmin.f32 %v4662, 20.0
    %v4665 = vmin.f32 %v4663, 20.0
    %vm4666 = vcmp.gt.f32.partialorder %v4662, 20.0
    %vm4667 = vcmp.gt.f32.partialorder %v4663, 20.0
    %v4668 = vmul.f32 %v4664, 1.442695
    %v4669 = vpow.pop %v4668
    %v4670 = vmul.f32 %v4665, 1.442695
    %v4671 = vpow.pop %v4670
    %v4672 = vadd.f32 %v4669, 1.0
    %v4673 = vlog2.pop %v4672
    %v4674 = vmul.f32 %v4673, 0.6931472
    %v4675 = vmul.f32 -0.5, %v4669
    %v4676 = vadd.f32 %v4675, 1.0
    %v4677 = vmul.f32 %v4676, %v4669
    %v4678 = vand.u32 2147483647, %v4669
    %vm4679 = vcmp.lt.f32.partialorder %v4678, 0.0004427343
    %v4680 = vsel %vm4679, %v4677, %v4674
    %v4681 = vadd.f32 %v4671, 1.0
    %v4682 = vlog2.pop %v4681
    %v4683 = vmul.f32 %v4682, 0.6931472
    %v4684 = vmul.f32 -0.5, %v4671
    %v4685 = vadd.f32 %v4684, 1.0
    %v4686 = vmul.f32 %v4685, %v4671
    %v4687 = vand.u32 2147483647, %v4671
    %vm4688 = vcmp.lt.f32.partialorder %v4687, 0.0004427343
    %v4689 = vsel %vm4688, %v4686, %v4683
    %v4690 = vsel %vm4666, %v4662, %v4680
    %v4691 = vsel %vm4667, %v4663, %v4689
    %s4692 = smul.u32 4, 16
    %s4693 = smul.u32 %s4692, 1
    %s4694 = sshll.u32 %s4693, 4
    %4695 = dma.done %s611, %s4694
    %v4696 = vld [vmem:[#allocation11] sm:$0xff]
    %v4697 = vld [vmem:[#allocation11 + $0x8] sm:$0xff]
    %v4698 = vld [vmem:[#allocation11 + $0x10] sm:$0xff]
    %v4699 = vld [vmem:[#allocation11 + $0x18] sm:$0xff]
    %v4700 = vld [vmem:[#allocation11 + $0x20] sm:$0xff]
    %v4701 = vld [vmem:[#allocation11 + $0x28] sm:$0xff]
    %v4702 = vld [vmem:[#allocation11 + $0x30] sm:$0xff]
    %v4703 = vld [vmem:[#allocation11 + $0x38] sm:$0xff]
    %v4704 = vpack.c.bf16 %v4691, %v4690
    %4705 = vmatprep.subr.bf16.mxu0 0
    %4706 = vmatpush1.bf16.msra.mxu0 %v4696
    %4707 = vmatprep.subr.bf16.mxu0 0
    %4708 = vmatpush1.bf16.msra.mxu0 %v4697
    %4709 = vmatprep.subr.bf16.mxu0 0
    %4710 = vmatpush1.bf16.msra.mxu0 %v4698
    %4711 = vmatprep.subr.bf16.mxu0 0
    %4712 = vmatpush1.bf16.msra.mxu0 %v4699
    %4713 = vmatprep.subr.bf16.mxu0 0
    %4714 = vmatpush1.bf16.msra.mxu0 %v4700
    %4715 = vmatprep.subr.bf16.mxu0 0
    %4716 = vmatpush1.bf16.msra.mxu0 %v4701
    %4717 = vmatprep.subr.bf16.mxu0 0
    %4718 = vmatpush1.bf16.msra.mxu0 %v4702
    %4719 = vmatprep.subr.bf16.mxu0 0
    %4720 = vmatpush1.bf16.msra.mxu0 %v4703
    %4721 = vmatprep.subr.bf16.mxu0 0
    %4722 = vmatpush1.bf16.msra.mxu0 0
    %4723 = vmatprep.subr.bf16.mxu0 0
    %4724 = vmatpush1.bf16.msra.mxu0 0
    %4725 = vmatprep.subr.bf16.mxu0 0
    %4726 = vmatpush1.bf16.msra.mxu0 0
    %4727 = vmatprep.subr.bf16.mxu0 0
    %4728 = vmatpush1.bf16.msra.mxu0 0
    %4729 = vmatprep.subr.bf16.mxu0 0
    %4730 = vmatpush1.bf16.msra.mxu0 0
    %4731 = vmatprep.subr.bf16.mxu0 0
    %4732 = vmatpush1.bf16.msra.mxu0 0
    %4733 = vmatprep.subr.bf16.mxu0 0
    %4734 = vmatpush1.bf16.msra.mxu0 0
    %4735 = vmatprep.subr.bf16.mxu0 0
    %4736 = vmatpush1.bf16.msra.mxu0 0
    %4737 = vmatprep.mubr.bf16.mxu0 0
    %4738 = vmatmul.mubr.bf16.gmra.mrb[0].mxu0 %v4704
    %v4739 = vpop.f32.mrb[0].mxu0
    %v4740 = vadd.f32 0.0, %v4739
    %v4741 = vpop.f32.mrb[0].mxu0
    %v4742 = vpop.f32.mrb[0].mxu0
    %v4743 = vadd.f32 0.0, %v4742
    %v4744 = vpop.f32.mrb[0].mxu0
    %4745 = vdwg.mxu0
    %v4746 = vpack.c.bf16 %v4743, %v4740
    %4747 = vmatprep.subr.bf16.mxu0 0
    %4748 = vmatpush1.bf16.msra.mxu0 %v4746
    %4749 = vmatprep.subr.bf16.mxu0 0
    %4750 = vmatpush1.bf16.msra.mxu0 0
    %4751 = vmatprep.subr.bf16.mxu0 0
    %4752 = vmatpush1.bf16.msra.mxu0 0
    %4753 = vmatprep.subr.bf16.mxu0 0
    %4754 = vmatpush1.bf16.msra.mxu0 0
    %4755 = vmatprep.subr.bf16.mxu0 0
    %4756 = vmatpush1.bf16.msra.mxu0 0
    %4757 = vmatprep.subr.bf16.mxu0 0
    %4758 = vmatpush1.bf16.msra.mxu0 0
    %4759 = vmatprep.subr.bf16.mxu0 0
    %4760 = vmatpush1.bf16.msra.mxu0 0
    %4761 = vmatprep.subr.bf16.mxu0 0
    %4762 = vmatpush1.bf16.msra.mxu0 0
    %4763 = vmatprep.subr.bf16.mxu0 0
    %4764 = vmatpush1.bf16.msra.mxu0 0
    %4765 = vmatprep.subr.bf16.mxu0 0
    %4766 = vmatpush1.bf16.msra.mxu0 0
    %4767 = vmatprep.subr.bf16.mxu0 0
    %4768 = vmatpush1.bf16.msra.mxu0 0
    %4769 = vmatprep.subr.bf16.mxu0 0
    %4770 = vmatpush1.bf16.msra.mxu0 0
    %4771 = vmatprep.subr.bf16.mxu0 0
    %4772 = vmatpush1.bf16.msra.mxu0 0
    %4773 = vmatprep.subr.bf16.mxu0 0
    %4774 = vmatpush1.bf16.msra.mxu0 0
    %4775 = vmatprep.subr.bf16.mxu0 0
    %4776 = vmatpush1.bf16.msra.mxu0 0
    %4777 = vmatprep.subr.bf16.mxu0 0
    %4778 = vmatpush1.bf16.msra.mxu0 0
    %4779 = vmatprep.mubr.bf16.mxu0 0
    %4780 = vmatmul.mubr.bf16.gmra.mrb[0].mxu0 %v1525
    %v4781 = vpop.f32.mrb[0].mxu0
    %v4782 = vadd.f32 0.0, %v4781
    %v4783 = vpop.f32.mrb[0].mxu0
    %v4784 = vpop.f32.mrb[0].mxu0
    %v4785 = vadd.f32 0.0, %v4784
    %v4786 = vpop.f32.mrb[0].mxu0
    %4787 = vdwg.mxu0
    %v4788 = vadd.f32 %v4782, %v4785
    %4789 = vadd.xlane.f32.xlu0 %v4788
    %v4790 = vpop.xlane.xlu0 %4789
    %v4791 = vmul.f32 %v4782, %v4782
    %v4792 = vmul.f32 %v4785, %v4785
    %v4793 = vadd.f32 %v4791, %v4792
    %4794 = vadd.xlane.f32.xlu0 %v4793
    %v4795 = vpop.xlane.xlu0 %4794
    %v4796 = vmul.f32 %v4790, 0.00390625
    %v4797 = vmul.f32 %v4795, 0.00390625
    %v4798 = vmul.f32 %v4796, %v4796
    %v4799 = vsub.f32 %v4797, %v4798
    %s4800 = scalar_lea.vmem %s2, 72
    %v4801 = vld [vmem:[%s4800] sm:$0xff]
    %v4802 = vadd.f32 %v4799, 1e-05
    %v4803 = vrsqrt.pop %v4802
    %v4804 = vmul.f32 %v4801, %v4803
    %s4805 = scalar_lea.vmem %s3, 72
    %v4806 = vld [vmem:[%s4805] sm:$0xff]
    %v4807 = vmul.f32 %v4796, %v4804
    %v4808 = vsub.f32 %v4806, %v4807
    %4810 = vset.pattern.permute.xlu0 0
    %4811 = vperm.xlu0 %4810, %v4804
    %v4812 = vpop.permute.xlu0 %4811
    %v4814 = vmul.f32 %v4782, %v4812
    %v4815 = vmul.f32 %v4785, %v4812
    %4817 = vset.pattern.permute.xlu0 0
    %4818 = vperm.xlu0 %4817, %v4808
    %v4819 = vpop.permute.xlu0 %4818
    %v4821 = vadd.f32 %v4814, %v4819
    %v4822 = vadd.f32 %v4815, %v4819
    %v4823 = vadd.f32 %v4821, %v4690
    %v4824 = vadd.f32 %v4822, %v4691
    %v4825 = vmin.f32 %v4823, 20.0
    %v4826 = vmin.f32 %v4824, 20.0
    %vm4827 = vcmp.gt.f32.partialorder %v4823, 20.0
    %vm4828 = vcmp.gt.f32.partialorder %v4824, 20.0
    %v4829 = vmul.f32 %v4825, 1.442695
    %v4830 = vpow.pop %v4829
    %v4831 = vmul.f32 %v4826, 1.442695
    %v4832 = vpow.pop %v4831
    %v4833 = vadd.f32 %v4830, 1.0
    %v4834 = vlog2.pop %v4833
    %v4835 = vmul.f32 %v4834, 0.6931472
    %v4836 = vmul.f32 -0.5, %v4830
    %v4837 = vadd.f32 %v4836, 1.0
    %v4838 = vmul.f32 %v4837, %v4830
    %v4839 = vand.u32 2147483647, %v4830
    %vm4840 = vcmp.lt.f32.partialorder %v4839, 0.0004427343
    %v4841 = vsel %vm4840, %v4838, %v4835
    %v4842 = vadd.f32 %v4832, 1.0
    %v4843 = vlog2.pop %v4842
    %v4844 = vmul.f32 %v4843, 0.6931472
    %v4845 = vmul.f32 -0.5, %v4832
    %v4846 = vadd.f32 %v4845, 1.0
    %v4847 = vmul.f32 %v4846, %v4832
    %v4848 = vand.u32 2147483647, %v4832
    %vm4849 = vcmp.lt.f32.partialorder %v4848, 0.0004427343
    %v4850 = vsel %vm4849, %v4847, %v4844
    %v4851 = vsel %vm4827, %v4823, %v4841
    %v4852 = vsel %vm4828, %v4824, %v4850
    %s4853 = sshll.u32 %s4693, 4
    %4854 = dma.done %s623, %s4853
    %v4855 = vld [vmem:[#allocation12] sm:$0xff]
    %v4856 = vld [vmem:[#allocation12 + $0x8] sm:$0xff]
    %v4857 = vld [vmem:[#allocation12 + $0x10] sm:$0xff]
    %v4858 = vld [vmem:[#allocation12 + $0x18] sm:$0xff]
    %v4859 = vld [vmem:[#allocation12 + $0x20] sm:$0xff]
    %v4860 = vld [vmem:[#allocation12 + $0x28] sm:$0xff]
    %v4861 = vld [vmem:[#allocation12 + $0x30] sm:$0xff]
    %v4862 = vld [vmem:[#allocation12 + $0x38] sm:$0xff]
    %v4863 = vpack.c.bf16 %v4852, %v4851
    %4864 = vmatprep.subr.bf16.mxu0 0
    %4865 = vmatpush1.bf16.msra.mxu0 %v4855
    %4866 = vmatprep.subr.bf16.mxu0 0
    %4867 = vmatpush1.bf16.msra.mxu0 %v4856
    %4868 = vmatprep.subr.bf16.mxu0 0
    %4869 = vmatpush1.bf16.msra.mxu0 %v4857
    %4870 = vmatprep.subr.bf16.mxu0 0
    %4871 = vmatpush1.bf16.msra.mxu0 %v4858
    %4872 = vmatprep.subr.bf16.mxu0 0
    %4873 = vmatpush1.bf16.msra.mxu0 %v4859
    %4874 = vmatprep.subr.bf16.mxu0 0
    %4875 = vmatpush1.bf16.msra.mxu0 %v4860
    %4876 = vmatprep.subr.bf16.mxu0 0
    %4877 = vmatpush1.bf16.msra.mxu0 %v4861
    %4878 = vmatprep.subr.bf16.mxu0 0
    %4879 = vmatpush1.bf16.msra.mxu0 %v4862
    %4880 = vmatprep.subr.bf16.mxu0 0
    %4881 = vmatpush1.bf16.msra.mxu0 0
    %4882 = vmatprep.subr.bf16.mxu0 0
    %4883 = vmatpush1.bf16.msra.mxu0 0
    %4884 = vmatprep.subr.bf16.mxu0 0
    %4885 = vmatpush1.bf16.msra.mxu0 0
    %4886 = vmatprep.subr.bf16.mxu0 0
    %4887 = vmatpush1.bf16.msra.mxu0 0
    %4888 = vmatprep.subr.bf16.mxu0 0
    %4889 = vmatpush1.bf16.msra.mxu0 0
    %4890 = vmatprep.subr.bf16.mxu0 0
    %4891 = vmatpush1.bf16.msra.mxu0 0
    %4892 = vmatprep.subr.bf16.mxu0 0
    %4893 = vmatpush1.bf16.msra.mxu0 0
    %4894 = vmatprep.subr.bf16.mxu0 0
    %4895 = vmatpush1.bf16.msra.mxu0 0
    %4896 = vmatprep.mubr.bf16.mxu0 0
    %4897 = vmatmul.mubr.bf16.gmra.mrb[0].mxu0 %v4863
    %v4898 = vpop.f32.mrb[0].mxu0
    %v4899 = vadd.f32 0.0, %v4898
    %v4900 = vpop.f32.mrb[0].mxu0
    %v4901 = vpop.f32.mrb[0].mxu0
    %v4902 = vadd.f32 0.0, %v4901
    %v4903 = vpop.f32.mrb[0].mxu0
    %4904 = vdwg.mxu0
    %v4905 = vpack.c.bf16 %v4902, %v4899
    %4906 = vmatprep.subr.bf16.mxu0 0
    %4907 = vmatpush1.bf16.msra.mxu0 %v4905
    %4908 = vmatprep.subr.bf16.mxu0 0
    %4909 = vmatpush1.bf16.msra.mxu0 0
    %4910 = vmatprep.subr.bf16.mxu0 0
    %4911 = vmatpush1.bf16.msra.mxu0 0
    %4912 = vmatprep.subr.bf16.mxu0 0
    %4913 = vmatpush1.bf16.msra.mxu0 0
    %4914 = vmatprep.subr.bf16.mxu0 0
    %4915 = vmatpush1.bf16.msra.mxu0 0
    %4916 = vmatprep.subr.bf16.mxu0 0
    %4917 = vmatpush1.bf16.msra.mxu0 0
    %4918 = vmatprep.subr.bf16.mxu0 0
    %4919 = vmatpush1.bf16.msra.mxu0 0
    %4920 = vmatprep.subr.bf16.mxu0 0
    %4921 = vmatpush1.bf16.msra.mxu0 0
    %4922 = vmatprep.subr.bf16.mxu0 0
    %4923 = vmatpush1.bf16.msra.mxu0 0
    %4924 = vmatprep.subr.bf16.mxu0 0
    %4925 = vmatpush1.bf16.msra.mxu0 0
    %4926 = vmatprep.subr.bf16.mxu0 0
    %4927 = vmatpush1.bf16.msra.mxu0 0
    %4928 = vmatprep.subr.bf16.mxu0 0
    %4929 = vmatpush1.bf16.msra.mxu0 0
    %4930 = vmatprep.subr.bf16.mxu0 0
    %4931 = vmatpush1.bf16.msra.mxu0 0
    %4932 = vmatprep.subr.bf16.mxu0 0
    %4933 = vmatpush1.bf16.msra.mxu0 0
    %4934 = vmatprep.subr.bf16.mxu0 0
    %4935 = vmatpush1.bf16.msra.mxu0 0
    %4936 = vmatprep.subr.bf16.mxu0 0
    %4937 = vmatpush1.bf16.msra.mxu0 0
    %4938 = vmatprep.mubr.bf16.mxu0 0
    %4939 = vmatmul.mubr.bf16.gmra.mrb[0].mxu0 %v1525
    %v4940 = vpop.f32.mrb[0].mxu0
    %v4941 = vadd.f32 0.0, %v4940
    %v4942 = vpop.f32.mrb[0].mxu0
    %v4943 = vpop.f32.mrb[0].mxu0
    %v4944 = vadd.f32 0.0, %v4943
    %v4945 = vpop.f32.mrb[0].mxu0
    %4946 = vdwg.mxu0
    %v4947 = vadd.f32 %v4941, %v4944
    %4948 = vadd.xlane.f32.xlu0 %v4947
    %v4949 = vpop.xlane.xlu0 %4948
    %v4950 = vmul.f32 %v4941, %v4941
    %v4951 = vmul.f32 %v4944, %v4944
    %v4952 = vadd.f32 %v4950, %v4951
    %4953 = vadd.xlane.f32.xlu0 %v4952
    %v4954 = vpop.xlane.xlu0 %4953
    %v4955 = vmul.f32 %v4949, 0.00390625
    %v4956 = vmul.f32 %v4954, 0.00390625
    %v4957 = vmul.f32 %v4955, %v4955
    %v4958 = vsub.f32 %v4956, %v4957
    %s4959 = scalar_lea.vmem %s2, 80
    %v4960 = vld [vmem:[%s4959] sm:$0xff]
    %v4961 = vadd.f32 %v4958, 1e-05
    %v4962 = vrsqrt.pop %v4961
    %v4963 = vmul.f32 %v4960, %v4962
    %s4964 = scalar_lea.vmem %s3, 80
    %v4965 = vld [vmem:[%s4964] sm:$0xff]
    %v4966 = vmul.f32 %v4955, %v4963
    %v4967 = vsub.f32 %v4965, %v4966
    %4969 = vset.pattern.permute.xlu0 0
    %4970 = vperm.xlu0 %4969, %v4963
    %v4971 = vpop.permute.xlu0 %4970
    %v4973 = vmul.f32 %v4941, %v4971
    %v4974 = vmul.f32 %v4944, %v4971
    %4976 = vset.pattern.permute.xlu0 0
    %4977 = vperm.xlu0 %4976, %v4967
    %v4978 = vpop.permute.xlu0 %4977
    %v4980 = vadd.f32 %v4973, %v4978
    %v4981 = vadd.f32 %v4974, %v4978
    %v4982 = vadd.f32 %v4980, %v4690
    %v4983 = vadd.f32 %v4981, %v4691
    %v4984 = vmin.f32 %v4982, 20.0
    %v4985 = vmin.f32 %v4983, 20.0
    %vm4986 = vcmp.gt.f32.partialorder %v4982, 20.0
    %vm4987 = vcmp.gt.f32.partialorder %v4983, 20.0
    %v4988 = vmul.f32 %v4984, 1.442695
    %v4989 = vpow.pop %v4988
    %v4990 = vmul.f32 %v4985, 1.442695
    %v4991 = vpow.pop %v4990
    %v4992 = vadd.f32 %v4989, 1.0
    %v4993 = vlog2.pop %v4992
    %v4994 = vmul.f32 %v4993, 0.6931472
    %v4995 = vmul.f32 -0.5, %v4989
    %v4996 = vadd.f32 %v4995, 1.0
    %v4997 = vmul.f32 %v4996, %v4989
    %v4998 = vand.u32 2147483647, %v4989
    %vm4999 = vcmp.lt.f32.partialorder %v4998, 0.0004427343
    %v5000 = vsel %vm4999, %v4997, %v4994
    %v5001 = vadd.f32 %v4991, 1.0
    %v5002 = vlog2.pop %v5001
    %v5003 = vmul.f32 %v5002, 0.6931472
    %v5004 = vmul.f32 -0.5, %v4991
    %v5005 = vadd.f32 %v5004, 1.0
    %v5006 = vmul.f32 %v5005, %v4991
    %v5007 = vand.u32 2147483647, %v4991
    %vm5008 = vcmp.lt.f32.partialorder %v5007, 0.0004427343
    %v5009 = vsel %vm5008, %v5006, %v5003
    %v5010 = vsel %vm4986, %v4982, %v5000
    %v5011 = vsel %vm4987, %v4983, %v5009
    %s5012 = sshll.u32 %s4693, 4
    %5013 = dma.done %s635, %s5012
    %v5014 = vld [vmem:[#allocation13] sm:$0xff]
    %v5015 = vld [vmem:[#allocation13 + $0x8] sm:$0xff]
    %v5016 = vld [vmem:[#allocation13 + $0x10] sm:$0xff]
    %v5017 = vld [vmem:[#allocation13 + $0x18] sm:$0xff]
    %v5018 = vld [vmem:[#allocation13 + $0x20] sm:$0xff]
    %v5019 = vld [vmem:[#allocation13 + $0x28] sm:$0xff]
    %v5020 = vld [vmem:[#allocation13 + $0x30] sm:$0xff]
    %v5021 = vld [vmem:[#allocation13 + $0x38] sm:$0xff]
    %v5022 = vpack.c.bf16 %v5011, %v5010
    %5023 = vmatprep.subr.bf16.mxu0 0
    %5024 = vmatpush1.bf16.msra.mxu0 %v5014
    %5025 = vmatprep.subr.bf16.mxu0 0
    %5026 = vmatpush1.bf16.msra.mxu0 %v5015
    %5027 = vmatprep.subr.bf16.mxu0 0
    %5028 = vmatpush1.bf16.msra.mxu0 %v5016
    %5029 = vmatprep.subr.bf16.mxu0 0
    %5030 = vmatpush1.bf16.msra.mxu0 %v5017
    %5031 = vmatprep.subr.bf16.mxu0 0
    %5032 = vmatpush1.bf16.msra.mxu0 %v5018
    %5033 = vmatprep.subr.bf16.mxu0 0
    %5034 = vmatpush1.bf16.msra.mxu0 %v5019
    %5035 = vmatprep.subr.bf16.mxu0 0
    %5036 = vmatpush1.bf16.msra.mxu0 %v5020
    %5037 = vmatprep.subr.bf16.mxu0 0
    %5038 = vmatpush1.bf16.msra.mxu0 %v5021
    %5039 = vmatprep.subr.bf16.mxu0 0
    %5040 = vmatpush1.bf16.msra.mxu0 0
    %5041 = vmatprep.subr.bf16.mxu0 0
    %5042 = vmatpush1.bf16.msra.mxu0 0
    %5043 = vmatprep.subr.bf16.mxu0 0
    %5044 = vmatpush1.bf16.msra.mxu0 0
    %5045 = vmatprep.subr.bf16.mxu0 0
    %5046 = vmatpush1.bf16.msra.mxu0 0
    %5047 = vmatprep.subr.bf16.mxu0 0
    %5048 = vmatpush1.bf16.msra.mxu0 0
    %5049 = vmatprep.subr.bf16.mxu0 0
    %5050 = vmatpush1.bf16.msra.mxu0 0
    %5051 = vmatprep.subr.bf16.mxu0 0
    %5052 = vmatpush1.bf16.msra.mxu0 0
    %5053 = vmatprep.subr.bf16.mxu0 0
    %5054 = vmatpush1.bf16.msra.mxu0 0
    %5055 = vmatprep.mubr.bf16.mxu0 0
    %5056 = vmatmul.mubr.bf16.gmra.mrb[0].mxu0 %v5022
    %v5057 = vpop.f32.mrb[0].mxu0
    %v5058 = vadd.f32 0.0, %v5057
    %v5059 = vpop.f32.mrb[0].mxu0
    %v5060 = vpop.f32.mrb[0].mxu0
    %v5061 = vadd.f32 0.0, %v5060
    %v5062 = vpop.f32.mrb[0].mxu0
    %5063 = vdwg.mxu0
    %v5064 = vpack.c.bf16 %v5061, %v5058
    %5065 = vmatprep.subr.bf16.mxu0 0
    %5066 = vmatpush1.bf16.msra.mxu0 %v5064
    %5067 = vmatprep.subr.bf16.mxu0 0
    %5068 = vmatpush1.bf16.msra.mxu0 0
    %5069 = vmatprep.subr.bf16.mxu0 0
    %5070 = vmatpush1.bf16.msra.mxu0 0
    %5071 = vmatprep.subr.bf16.mxu0 0
    %5072 = vmatpush1.bf16.msra.mxu0 0
    %5073 = vmatprep.subr.bf16.mxu0 0
    %5074 = vmatpush1.bf16.msra.mxu0 0
    %5075 = vmatprep.subr.bf16.mxu0 0
    %5076 = vmatpush1.bf16.msra.mxu0 0
    %5077 = vmatprep.subr.bf16.mxu0 0
    %5078 = vmatpush1.bf16.msra.mxu0 0
    %5079 = vmatprep.subr.bf16.mxu0 0
    %5080 = vmatpush1.bf16.msra.mxu0 0
    %5081 = vmatprep.subr.bf16.mxu0 0
    %5082 = vmatpush1.bf16.msra.mxu0 0
    %5083 = vmatprep.subr.bf16.mxu0 0
    %5084 = vmatpush1.bf16.msra.mxu0 0
    %5085 = vmatprep.subr.bf16.mxu0 0
    %5086 = vmatpush1.bf16.msra.mxu0 0
    %5087 = vmatprep.subr.bf16.mxu0 0
    %5088 = vmatpush1.bf16.msra.mxu0 0
    %5089 = vmatprep.subr.bf16.mxu0 0
    %5090 = vmatpush1.bf16.msra.mxu0 0
    %5091 = vmatprep.subr.bf16.mxu0 0
    %5092 = vmatpush1.bf16.msra.mxu0 0
    %5093 = vmatprep.subr.bf16.mxu0 0
    %5094 = vmatpush1.bf16.msra.mxu0 0
    %5095 = vmatprep.subr.bf16.mxu0 0
    %5096 = vmatpush1.bf16.msra.mxu0 0
    %5097 = vmatprep.mubr.bf16.mxu0 0
    %5098 = vmatmul.mubr.bf16.gmra.mrb[0].mxu0 %v1525
    %v5099 = vpop.f32.mrb[0].mxu0
    %v5100 = vadd.f32 0.0, %v5099
    %v5101 = vpop.f32.mrb[0].mxu0
    %v5102 = vpop.f32.mrb[0].mxu0
    %v5103 = vadd.f32 0.0, %v5102
    %v5104 = vpop.f32.mrb[0].mxu0
    %5105 = vdwg.mxu0
    %v5106 = vadd.f32 %v5100, %v5103
    %5107 = vadd.xlane.f32.xlu0 %v5106
    %v5108 = vpop.xlane.xlu0 %5107
    %v5109 = vmul.f32 %v5100, %v5100
    %v5110 = vmul.f32 %v5103, %v5103
    %v5111 = vadd.f32 %v5109, %v5110
    %5112 = vadd.xlane.f32.xlu0 %v5111
    %v5113 = vpop.xlane.xlu0 %5112
    %v5114 = vmul.f32 %v5108, 0.00390625
    %v5115 = vmul.f32 %v5113, 0.00390625
    %v5116 = vmul.f32 %v5114, %v5114
    %v5117 = vsub.f32 %v5115, %v5116
    %s5118 = scalar_lea.vmem %s2, 88
    %v5119 = vld [vmem:[%s5118] sm:$0xff]
    %v5120 = vadd.f32 %v5117, 1e-05
    %v5121 = vrsqrt.pop %v5120
    %v5122 = vmul.f32 %v5119, %v5121
    %s5123 = scalar_lea.vmem %s3, 88
    %v5124 = vld [vmem:[%s5123] sm:$0xff]
    %v5125 = vmul.f32 %v5114, %v5122
    %v5126 = vsub.f32 %v5124, %v5125
    %5128 = vset.pattern.permute.xlu0 0
    %5129 = vperm.xlu0 %5128, %v5122
    %v5130 = vpop.permute.xlu0 %5129
    %v5132 = vmul.f32 %v5100, %v5130
    %v5133 = vmul.f32 %v5103, %v5130
    %5135 = vset.pattern.permute.xlu0 0
    %5136 = vperm.xlu0 %5135, %v5126
    %v5137 = vpop.permute.xlu0 %5136
    %v5139 = vadd.f32 %v5132, %v5137
    %v5140 = vadd.f32 %v5133, %v5137
    %v5141 = vadd.f32 %v5139, %v4690
    %v5142 = vadd.f32 %v5140, %v4691
    %v5143 = vmin.f32 %v5141, 20.0
    %v5144 = vmin.f32 %v5142, 20.0
    %vm5145 = vcmp.gt.f32.partialorder %v5141, 20.0
    %vm5146 = vcmp.gt.f32.partialorder %v5142, 20.0
    %v5147 = vmul.f32 %v5143, 1.442695
    %v5148 = vpow.pop %v5147
    %v5149 = vmul.f32 %v5144, 1.442695
    %v5150 = vpow.pop %v5149
    %v5151 = vadd.f32 %v5148, 1.0
    %v5152 = vlog2.pop %v5151
    %v5153 = vmul.f32 %v5152, 0.6931472
    %v5154 = vmul.f32 -0.5, %v5148
    %v5155 = vadd.f32 %v5154, 1.0
    %v5156 = vmul.f32 %v5155, %v5148
    %v5157 = vand.u32 2147483647, %v5148
    %vm5158 = vcmp.lt.f32.partialorder %v5157, 0.0004427343
    %v5159 = vsel %vm5158, %v5156, %v5153
    %v5160 = vadd.f32 %v5150, 1.0
    %v5161 = vlog2.pop %v5160
    %v5162 = vmul.f32 %v5161, 0.6931472
    %v5163 = vmul.f32 -0.5, %v5150
    %v5164 = vadd.f32 %v5163, 1.0
    %v5165 = vmul.f32 %v5164, %v5150
    %v5166 = vand.u32 2147483647, %v5150
    %vm5167 = vcmp.lt.f32.partialorder %v5166, 0.0004427343
    %v5168 = vsel %vm5167, %v5165, %v5162
    %v5169 = vsel %vm5145, %v5141, %v5159
    %v5170 = vsel %vm5146, %v5142, %v5168
    %s5171 = sshll.u32 %s4693, 4
    %5172 = dma.done %s647, %s5171
    %v5173 = vld [vmem:[#allocation14] sm:$0xff]
    %v5174 = vld [vmem:[#allocation14 + $0x8] sm:$0xff]
    %v5175 = vld [vmem:[#allocation14 + $0x10] sm:$0xff]
    %v5176 = vld [vmem:[#allocation14 + $0x18] sm:$0xff]
    %v5177 = vld [vmem:[#allocation14 + $0x20] sm:$0xff]
    %v5178 = vld [vmem:[#allocation14 + $0x28] sm:$0xff]
    %v5179 = vld [vmem:[#allocation14 + $0x30] sm:$0xff]
    %v5180 = vld [vmem:[#allocation14 + $0x38] sm:$0xff]
    %v5181 = vpack.c.bf16 %v5170, %v5169
    %5182 = vmatprep.subr.bf16.mxu0 0
    %5183 = vmatpush1.bf16.msra.mxu0 %v5173
    %5184 = vmatprep.subr.bf16.mxu0 0
    %5185 = vmatpush1.bf16.msra.mxu0 %v5174
    %5186 = vmatprep.subr.bf16.mxu0 0
    %5187 = vmatpush1.bf16.msra.mxu0 %v5175
    %5188 = vmatprep.subr.bf16.mxu0 0
    %5189 = vmatpush1.bf16.msra.mxu0 %v5176
    %5190 = vmatprep.subr.bf16.mxu0 0
    %5191 = vmatpush1.bf16.msra.mxu0 %v5177
    %5192 = vmatprep.subr.bf16.mxu0 0
    %5193 = vmatpush1.bf16.msra.mxu0 %v5178
    %5194 = vmatprep.subr.bf16.mxu0 0
    %5195 = vmatpush1.bf16.msra.mxu0 %v5179
    %5196 = vmatprep.subr.bf16.mxu0 0
    %5197 = vmatpush1.bf16.msra.mxu0 %v5180
    %5198 = vmatprep.subr.bf16.mxu0 0
    %5199 = vmatpush1.bf16.msra.mxu0 0
    %5200 = vmatprep.subr.bf16.mxu0 0
    %5201 = vmatpush1.bf16.msra.mxu0 0
    %5202 = vmatprep.subr.bf16.mxu0 0
    %5203 = vmatpush1.bf16.msra.mxu0 0
    %5204 = vmatprep.subr.bf16.mxu0 0
    %5205 = vmatpush1.bf16.msra.mxu0 0
    %5206 = vmatprep.subr.bf16.mxu0 0
    %5207 = vmatpush1.bf16.msra.mxu0 0
    %5208 = vmatprep.subr.bf16.mxu0 0
    %5209 = vmatpush1.bf16.msra.mxu0 0
    %5210 = vmatprep.subr.bf16.mxu0 0
    %5211 = vmatpush1.bf16.msra.mxu0 0
    %5212 = vmatprep.subr.bf16.mxu0 0
    %5213 = vmatpush1.bf16.msra.mxu0 0
    %5214 = vmatprep.mubr.bf16.mxu0 0
    %5215 = vmatmul.mubr.bf16.gmra.mrb[0].mxu0 %v5181
    %v5216 = vpop.f32.mrb[0].mxu0
    %v5217 = vadd.f32 0.0, %v5216
    %v5218 = vpop.f32.mrb[0].mxu0
    %v5219 = vpop.f32.mrb[0].mxu0
    %v5220 = vadd.f32 0.0, %v5219
    %v5221 = vpop.f32.mrb[0].mxu0
    %5222 = vdwg.mxu0
    %v5223 = vpack.c.bf16 %v5220, %v5217
    %5224 = vmatprep.subr.bf16.mxu0 0
    %5225 = vmatpush1.bf16.msra.mxu0 %v5223
    %5226 = vmatprep.subr.bf16.mxu0 0
    %5227 = vmatpush1.bf16.msra.mxu0 0
    %5228 = vmatprep.subr.bf16.mxu0 0
    %5229 = vmatpush1.bf16.msra.mxu0 0
    %5230 = vmatprep.subr.bf16.mxu0 0
    %5231 = vmatpush1.bf16.msra.mxu0 0
    %5232 = vmatprep.subr.bf16.mxu0 0
    %5233 = vmatpush1.bf16.msra.mxu0 0
    %5234 = vmatprep.subr.bf16.mxu0 0
    %5235 = vmatpush1.bf16.msra.mxu0 0
    %5236 = vmatprep.subr.bf16.mxu0 0
    %5237 = vmatpush1.bf16.msra.mxu0 0
    %5238 = vmatprep.subr.bf16.mxu0 0
    %5239 = vmatpush1.bf16.msra.mxu0 0
    %5240 = vmatprep.subr.bf16.mxu0 0
    %5241 = vmatpush1.bf16.msra.mxu0 0
    %5242 = vmatprep.subr.bf16.mxu0 0
    %5243 = vmatpush1.bf16.msra.mxu0 0
    %5244 = vmatprep.subr.bf16.mxu0 0
    %5245 = vmatpush1.bf16.msra.mxu0 0
    %5246 = vmatprep.subr.bf16.mxu0 0
    %5247 = vmatpush1.bf16.msra.mxu0 0
    %5248 = vmatprep.subr.bf16.mxu0 0
    %5249 = vmatpush1.bf16.msra.mxu0 0
    %5250 = vmatprep.subr.bf16.mxu0 0
    %5251 = vmatpush1.bf16.msra.mxu0 0
    %5252 = vmatprep.subr.bf16.mxu0 0
    %5253 = vmatpush1.bf16.msra.mxu0 0
    %5254 = vmatprep.subr.bf16.mxu0 0
    %5255 = vmatpush1.bf16.msra.mxu0 0
    %5256 = vmatprep.mubr.bf16.mxu0 0
    %5257 = vmatmul.mubr.bf16.gmra.mrb[0].mxu0 %v1525
    %v5258 = vpop.f32.mrb[0].mxu0
    %v5259 = vadd.f32 0.0, %v5258
    %v5260 = vpop.f32.mrb[0].mxu0
    %v5261 = vpop.f32.mrb[0].mxu0
    %v5262 = vadd.f32 0.0, %v5261
    %v5263 = vpop.f32.mrb[0].mxu0
    %5264 = vdwg.mxu0
    %vm5265 = vcmask 261120
    %v5266 = vsel %vm5265, %v5259, 0.0
    %v5267 = vsel %vm5265, %v5262, 0.0
    %v5268 = vadd.f32 %v5266, %v5267
    %5269 = vadd.xlane.f32.xlu0 %v5268
    %v5270 = vpop.xlane.xlu0 %5269
    %v5271 = vmul.f32 %v5259, %v5259
    %v5272 = vmul.f32 %v5262, %v5262
    %v5273 = vsel %vm5265, %v5271, 0.0
    %v5274 = vsel %vm5265, %v5272, 0.0
    %v5275 = vadd.f32 %v5273, %v5274
    %5276 = vadd.xlane.f32.xlu0 %v5275
    %v5277 = vpop.xlane.xlu0 %5276
    %v5278 = vmul.f32 %v5270, 0.015625
    %v5279 = vmul.f32 %v5277, 0.015625
    %v5280 = vmul.f32 %v5278, %v5278
    %v5281 = vsub.f32 %v5279, %v5280
    %s5282 = scalar_lea.vmem %s2, 96
    %v5283 = vld [vmem:[%s5282] sm:$0xff]
    %v5284 = vadd.f32 %v5281, 1e-05
    %v5285 = vrsqrt.pop %v5284
    %v5286 = vmul.f32 %v5283, %v5285
    %s5287 = scalar_lea.vmem %s3, 96
    %v5288 = vld [vmem:[%s5287] sm:$0xff]
    %v5289 = vmul.f32 %v5278, %v5286
    %v5290 = vsub.f32 %v5288, %v5289
    %5292 = vset.pattern.permute.xlu0 0
    %5293 = vperm.xlu0 %5292, %v5286
    %v5294 = vpop.permute.xlu0 %5293
    %v5296 = vmul.f32 %v5259, %v5294
    %v5297 = vmul.f32 %v5262, %v5294
    %5299 = vset.pattern.permute.xlu0 0
    %5300 = vperm.xlu0 %5299, %v5290
    %v5301 = vpop.permute.xlu0 %5300
    %v5303 = vadd.f32 %v5296, %v5301
    %v5304 = vadd.f32 %v5297, %v5301
    %v5305 = vmin.f32 %v5303, 20.0
    %v5306 = vmin.f32 %v5304, 20.0
    %vm5307 = vcmp.gt.f32.partialorder %v5303, 20.0
    %vm5308 = vcmp.gt.f32.partialorder %v5304, 20.0
    %v5309 = vmul.f32 %v5305, 1.442695
    %v5310 = vpow.pop %v5309
    %v5311 = vmul.f32 %v5306, 1.442695
    %v5312 = vpow.pop %v5311
    %v5313 = vadd.f32 %v5310, 1.0
    %v5314 = vlog2.pop %v5313
    %v5315 = vmul.f32 %v5314, 0.6931472
    %v5316 = vmul.f32 -0.5, %v5310
    %v5317 = vadd.f32 %v5316, 1.0
    %v5318 = vmul.f32 %v5317, %v5310
    %v5319 = vand.u32 2147483647, %v5310
    %vm5320 = vcmp.lt.f32.partialorder %v5319, 0.0004427343
    %v5321 = vsel %vm5320, %v5318, %v5315
    %v5322 = vadd.f32 %v5312, 1.0
    %v5323 = vlog2.pop %v5322
    %v5324 = vmul.f32 %v5323, 0.6931472
    %v5325 = vmul.f32 -0.5, %v5312
    %v5326 = vadd.f32 %v5325, 1.0
    %v5327 = vmul.f32 %v5326, %v5312
    %v5328 = vand.u32 2147483647, %v5312
    %vm5329 = vcmp.lt.f32.partialorder %v5328, 0.0004427343
    %v5330 = vsel %vm5329, %v5327, %v5324
    %v5331 = vsel %vm5307, %v5303, %v5321
    %v5332 = vsel %vm5308, %v5304, %v5330
    %s5333 = smul.u32 4, 4
    %s5334 = smul.u32 %s5333, 1
    %s5335 = sshll.u32 %s5334, 4
    %5336 = dma.done %s704, %s5335
    %v5337 = vld [vmem:[#allocation15] sm:$0xff]
    %v5338 = vld [vmem:[#allocation15 + $0x8] sm:$0xff]
    %v5339 = vpack.c.bf16 %v5332, %v5331
    %v5341 = vsel %vm5265, %v5339, 0
    %5343 = vmatprep.subr.bf16.mxu0 0
    %5344 = vmatpush1.bf16.msra.mxu0 %v5337
    %5345 = vmatprep.subr.bf16.mxu0 0
    %5346 = vmatpush1.bf16.msra.mxu0 %v5338
    %5347 = vmatprep.subr.bf16.mxu0 0
    %5348 = vmatpush1.bf16.msra.mxu0 0
    %5349 = vmatprep.subr.bf16.mxu0 0
    %5350 = vmatpush1.bf16.msra.mxu0 0
    %5351 = vmatprep.subr.bf16.mxu0 0
    %5352 = vmatpush1.bf16.msra.mxu0 0
    %5353 = vmatprep.subr.bf16.mxu0 0
    %5354 = vmatpush1.bf16.msra.mxu0 0
    %5355 = vmatprep.subr.bf16.mxu0 0
    %5356 = vmatpush1.bf16.msra.mxu0 0
    %5357 = vmatprep.subr.bf16.mxu0 0
    %5358 = vmatpush1.bf16.msra.mxu0 0
    %5359 = vmatprep.subr.bf16.mxu0 0
    %5360 = vmatpush1.bf16.msra.mxu0 0
    %5361 = vmatprep.subr.bf16.mxu0 0
    %5362 = vmatpush1.bf16.msra.mxu0 0
    %5363 = vmatprep.subr.bf16.mxu0 0
    %5364 = vmatpush1.bf16.msra.mxu0 0
    %5365 = vmatprep.subr.bf16.mxu0 0
    %5366 = vmatpush1.bf16.msra.mxu0 0
    %5367 = vmatprep.subr.bf16.mxu0 0
    %5368 = vmatpush1.bf16.msra.mxu0 0
    %5369 = vmatprep.subr.bf16.mxu0 0
    %5370 = vmatpush1.bf16.msra.mxu0 0
    %5371 = vmatprep.subr.bf16.mxu0 0
    %5372 = vmatpush1.bf16.msra.mxu0 0
    %5373 = vmatprep.subr.bf16.mxu0 0
    %5374 = vmatpush1.bf16.msra.mxu0 0
    %5375 = vmatprep.mubr.bf16.mxu0 0
    %5376 = vmatmul.mubr.bf16.gmra.mrb[0].mxu0 %v5341
    %v5377 = vpop.f32.mrb[0].mxu0
    %v5378 = vadd.f32 0.0, %v5377
    %v5379 = vpop.f32.mrb[0].mxu0
    %v5380 = vpop.f32.mrb[0].mxu0
    %v5381 = vadd.f32 0.0, %v5380
    %v5382 = vpop.f32.mrb[0].mxu0
    %5383 = vdwg.mxu0
    %v5384 = vpack.c.bf16 %v5381, %v5378
    %5385 = vmatprep.subr.bf16.mxu0 0
    %5386 = vmatpush1.bf16.msra.mxu0 %v5384
    %5387 = vmatprep.subr.bf16.mxu0 0
    %5388 = vmatpush1.bf16.msra.mxu0 0
    %5389 = vmatprep.subr.bf16.mxu0 0
    %5390 = vmatpush1.bf16.msra.mxu0 0
    %5391 = vmatprep.subr.bf16.mxu0 0
    %5392 = vmatpush1.bf16.msra.mxu0 0
    %5393 = vmatprep.subr.bf16.mxu0 0
    %5394 = vmatpush1.bf16.msra.mxu0 0
    %5395 = vmatprep.subr.bf16.mxu0 0
    %5396 = vmatpush1.bf16.msra.mxu0 0
    %5397 = vmatprep.subr.bf16.mxu0 0
    %5398 = vmatpush1.bf16.msra.mxu0 0
    %5399 = vmatprep.subr.bf16.mxu0 0
    %5400 = vmatpush1.bf16.msra.mxu0 0
    %5401 = vmatprep.subr.bf16.mxu0 0
    %5402 = vmatpush1.bf16.msra.mxu0 0
    %5403 = vmatprep.subr.bf16.mxu0 0
    %5404 = vmatpush1.bf16.msra.mxu0 0
    %5405 = vmatprep.subr.bf16.mxu0 0
    %5406 = vmatpush1.bf16.msra.mxu0 0
    %5407 = vmatprep.subr.bf16.mxu0 0
    %5408 = vmatpush1.bf16.msra.mxu0 0
    %5409 = vmatprep.subr.bf16.mxu0 0
    %5410 = vmatpush1.bf16.msra.mxu0 0
    %5411 = vmatprep.subr.bf16.mxu0 0
    %5412 = vmatpush1.bf16.msra.mxu0 0
    %5413 = vmatprep.subr.bf16.mxu0 0
    %5414 = vmatpush1.bf16.msra.mxu0 0
    %5415 = vmatprep.subr.bf16.mxu0 0
    %5416 = vmatpush1.bf16.msra.mxu0 0
    %5417 = vmatprep.mubr.bf16.mxu0 0
    %5418 = vmatmul.mubr.bf16.gmra.mrb[0].mxu0 %v1525
    %v5419 = vpop.f32.mrb[0].mxu0
    %v5420 = vadd.f32 0.0, %v5419
    %v5421 = vpop.f32.mrb[0].mxu0
    %v5422 = vpop.f32.mrb[0].mxu0
    %v5423 = vadd.f32 0.0, %v5422
    %v5424 = vpop.f32.mrb[0].mxu0
    %5425 = vdwg.mxu0
    %v5426 = vsel %vm5265, %v5420, 0.0
    %v5427 = vsel %vm5265, %v5423, 0.0
    %v5428 = vadd.f32 %v5426, %v5427
    %5429 = vadd.xlane.f32.xlu0 %v5428
    %v5430 = vpop.xlane.xlu0 %5429
    %v5431 = vmul.f32 %v5420, %v5420
    %v5432 = vmul.f32 %v5423, %v5423
    %v5433 = vsel %vm5265, %v5431, 0.0
    %v5434 = vsel %vm5265, %v5432, 0.0
    %v5435 = vadd.f32 %v5433, %v5434
    %5436 = vadd.xlane.f32.xlu0 %v5435
    %v5437 = vpop.xlane.xlu0 %5436
    %v5438 = vmul.f32 %v5430, 0.015625
    %v5439 = vmul.f32 %v5437, 0.015625
    %v5440 = vmul.f32 %v5438, %v5438
    %v5441 = vsub.f32 %v5439, %v5440
    %s5442 = scalar_lea.vmem %s2, 104
    %v5443 = vld [vmem:[%s5442] sm:$0xff]
    %v5444 = vadd.f32 %v5441, 1e-05
    %v5445 = vrsqrt.pop %v5444
    %v5446 = vmul.f32 %v5443, %v5445
    %s5447 = scalar_lea.vmem %s3, 104
    %v5448 = vld [vmem:[%s5447] sm:$0xff]
    %v5449 = vmul.f32 %v5438, %v5446
    %v5450 = vsub.f32 %v5448, %v5449
    %5452 = vset.pattern.permute.xlu0 0
    %5453 = vperm.xlu0 %5452, %v5446
    %v5454 = vpop.permute.xlu0 %5453
    %v5456 = vmul.f32 %v5420, %v5454
    %v5457 = vmul.f32 %v5423, %v5454
    %5459 = vset.pattern.permute.xlu0 0
    %5460 = vperm.xlu0 %5459, %v5450
    %v5461 = vpop.permute.xlu0 %5460
    %v5463 = vadd.f32 %v5456, %v5461
    %v5464 = vadd.f32 %v5457, %v5461
    %v5465 = vadd.f32 %v5463, %v5331
    %v5466 = vadd.f32 %v5464, %v5332
    %v5467 = vmin.f32 %v5465, 20.0
    %v5468 = vmin.f32 %v5466, 20.0
    %vm5469 = vcmp.gt.f32.partialorder %v5465, 20.0
    %vm5470 = vcmp.gt.f32.partialorder %v5466, 20.0
    %v5471 = vmul.f32 %v5467, 1.442695
    %v5472 = vpow.pop %v5471
    %v5473 = vmul.f32 %v5468, 1.442695
    %v5474 = vpow.pop %v5473
    %v5475 = vadd.f32 %v5472, 1.0
    %v5476 = vlog2.pop %v5475
    %v5477 = vmul.f32 %v5476, 0.6931472
    %v5478 = vmul.f32 -0.5, %v5472
    %v5479 = vadd.f32 %v5478, 1.0
    %v5480 = vmul.f32 %v5479, %v5472
    %v5481 = vand.u32 2147483647, %v5472
    %vm5482 = vcmp.lt.f32.partialorder %v5481, 0.0004427343
    %v5483 = vsel %vm5482, %v5480, %v5477
    %v5484 = vadd.f32 %v5474, 1.0
    %v5485 = vlog2.pop %v5484
    %v5486 = vmul.f32 %v5485, 0.6931472
    %v5487 = vmul.f32 -0.5, %v5474
    %v5488 = vadd.f32 %v5487, 1.0
    %v5489 = vmul.f32 %v5488, %v5474
    %v5490 = vand.u32 2147483647, %v5474
    %vm5491 = vcmp.lt.f32.partialorder %v5490, 0.0004427343
    %v5492 = vsel %vm5491, %v5489, %v5486
    %v5493 = vsel %vm5469, %v5465, %v5483
    %v5494 = vsel %vm5470, %v5466, %v5492
    %s5495 = sshll.u32 %s5334, 4
    %5496 = dma.done %s749, %s5495
    %v5497 = vld [vmem:[#allocation16] sm:$0xff]
    %v5498 = vld [vmem:[#allocation16 + $0x8] sm:$0xff]
    %v5499 = vpack.c.bf16 %v5494, %v5493
    %v5501 = vsel %vm5265, %v5499, 0
    %5503 = vmatprep.subr.bf16.mxu0 0
    %5504 = vmatpush1.bf16.msra.mxu0 %v5497
    %5505 = vmatprep.subr.bf16.mxu0 0
    %5506 = vmatpush1.bf16.msra.mxu0 %v5498
    %5507 = vmatprep.subr.bf16.mxu0 0
    %5508 = vmatpush1.bf16.msra.mxu0 0
    %5509 = vmatprep.subr.bf16.mxu0 0
    %5510 = vmatpush1.bf16.msra.mxu0 0
    %5511 = vmatprep.subr.bf16.mxu0 0
    %5512 = vmatpush1.bf16.msra.mxu0 0
    %5513 = vmatprep.subr.bf16.mxu0 0
    %5514 = vmatpush1.bf16.msra.mxu0 0
    %5515 = vmatprep.subr.bf16.mxu0 0
    %5516 = vmatpush1.bf16.msra.mxu0 0
    %5517 = vmatprep.subr.bf16.mxu0 0
    %5518 = vmatpush1.bf16.msra.mxu0 0
    %5519 = vmatprep.subr.bf16.mxu0 0
    %5520 = vmatpush1.bf16.msra.mxu0 0
    %5521 = vmatprep.subr.bf16.mxu0 0
    %5522 = vmatpush1.bf16.msra.mxu0 0
    %5523 = vmatprep.subr.bf16.mxu0 0
    %5524 = vmatpush1.bf16.msra.mxu0 0
    %5525 = vmatprep.subr.bf16.mxu0 0
    %5526 = vmatpush1.bf16.msra.mxu0 0
    %5527 = vmatprep.subr.bf16.mxu0 0
    %5528 = vmatpush1.bf16.msra.mxu0 0
    %5529 = vmatprep.subr.bf16.mxu0 0
    %5530 = vmatpush1.bf16.msra.mxu0 0
    %5531 = vmatprep.subr.bf16.mxu0 0
    %5532 = vmatpush1.bf16.msra.mxu0 0
    %5533 = vmatprep.subr.bf16.mxu0 0
    %5534 = vmatpush1.bf16.msra.mxu0 0
    %5535 = vmatprep.mubr.bf16.mxu0 0
    %5536 = vmatmul.mubr.bf16.gmra.mrb[0].mxu0 %v5501
    %v5537 = vpop.f32.mrb[0].mxu0
    %v5538 = vadd.f32 0.0, %v5537
    %v5539 = vpop.f32.mrb[0].mxu0
    %v5540 = vpop.f32.mrb[0].mxu0
    %v5541 = vadd.f32 0.0, %v5540
    %v5542 = vpop.f32.mrb[0].mxu0
    %5543 = vdwg.mxu0
    %v5544 = vpack.c.bf16 %v5541, %v5538
    %5545 = vmatprep.subr.bf16.mxu0 0
    %5546 = vmatpush1.bf16.msra.mxu0 %v5544
    %5547 = vmatprep.subr.bf16.mxu0 0
    %5548 = vmatpush1.bf16.msra.mxu0 0
    %5549 = vmatprep.subr.bf16.mxu0 0
    %5550 = vmatpush1.bf16.msra.mxu0 0
    %5551 = vmatprep.subr.bf16.mxu0 0
    %5552 = vmatpush1.bf16.msra.mxu0 0
    %5553 = vmatprep.subr.bf16.mxu0 0
    %5554 = vmatpush1.bf16.msra.mxu0 0
    %5555 = vmatprep.subr.bf16.mxu0 0
    %5556 = vmatpush1.bf16.msra.mxu0 0
    %5557 = vmatprep.subr.bf16.mxu0 0
    %5558 = vmatpush1.bf16.msra.mxu0 0
    %5559 = vmatprep.subr.bf16.mxu0 0
    %5560 = vmatpush1.bf16.msra.mxu0 0
    %5561 = vmatprep.subr.bf16.mxu0 0
    %5562 = vmatpush1.bf16.msra.mxu0 0
    %5563 = vmatprep.subr.bf16.mxu0 0
    %5564 = vmatpush1.bf16.msra.mxu0 0
    %5565 = vmatprep.subr.bf16.mxu0 0
    %5566 = vmatpush1.bf16.msra.mxu0 0
    %5567 = vmatprep.subr.bf16.mxu0 0
    %5568 = vmatpush1.bf16.msra.mxu0 0
    %5569 = vmatprep.subr.bf16.mxu0 0
    %5570 = vmatpush1.bf16.msra.mxu0 0
    %5571 = vmatprep.subr.bf16.mxu0 0
    %5572 = vmatpush1.bf16.msra.mxu0 0
    %5573 = vmatprep.subr.bf16.mxu0 0
    %5574 = vmatpush1.bf16.msra.mxu0 0
    %5575 = vmatprep.subr.bf16.mxu0 0
    %5576 = vmatpush1.bf16.msra.mxu0 0
    %5577 = vmatprep.mubr.bf16.mxu0 0
    %5578 = vmatmul.mubr.bf16.gmra.mrb[0].mxu0 %v1525
    %v5579 = vpop.f32.mrb[0].mxu0
    %v5580 = vadd.f32 0.0, %v5579
    %v5581 = vpop.f32.mrb[0].mxu0
    %v5582 = vpop.f32.mrb[0].mxu0
    %v5583 = vadd.f32 0.0, %v5582
    %v5584 = vpop.f32.mrb[0].mxu0
    %5585 = vdwg.mxu0
    %v5586 = vsel %vm5265, %v5580, 0.0
    %v5587 = vsel %vm5265, %v5583, 0.0
    %v5588 = vadd.f32 %v5586, %v5587
    %5589 = vadd.xlane.f32.xlu0 %v5588
    %v5590 = vpop.xlane.xlu0 %5589
    %v5591 = vmul.f32 %v5580, %v5580
    %v5592 = vmul.f32 %v5583, %v5583
    %v5593 = vsel %vm5265, %v5591, 0.0
    %v5594 = vsel %vm5265, %v5592, 0.0
    %v5595 = vadd.f32 %v5593, %v5594
    %5596 = vadd.xlane.f32.xlu0 %v5595
    %v5597 = vpop.xlane.xlu0 %5596
    %v5598 = vmul.f32 %v5590, 0.015625
    %v5599 = vmul.f32 %v5597, 0.015625
    %v5600 = vmul.f32 %v5598, %v5598
    %v5601 = vsub.f32 %v5599, %v5600
    %s5602 = scalar_lea.vmem %s2, 112
    %v5603 = vld [vmem:[%s5602] sm:$0xff]
    %v5604 = vadd.f32 %v5601, 1e-05
    %v5605 = vrsqrt.pop %v5604
    %v5606 = vmul.f32 %v5603, %v5605
    %s5607 = scalar_lea.vmem %s3, 112
    %v5608 = vld [vmem:[%s5607] sm:$0xff]
    %v5609 = vmul.f32 %v5598, %v5606
    %v5610 = vsub.f32 %v5608, %v5609
    %5612 = vset.pattern.permute.xlu0 0
    %5613 = vperm.xlu0 %5612, %v5606
    %v5614 = vpop.permute.xlu0 %5613
    %v5616 = vmul.f32 %v5580, %v5614
    %v5617 = vmul.f32 %v5583, %v5614
    %5619 = vset.pattern.permute.xlu0 0
    %5620 = vperm.xlu0 %5619, %v5610
    %v5621 = vpop.permute.xlu0 %5620
    %v5623 = vadd.f32 %v5616, %v5621
    %v5624 = vadd.f32 %v5617, %v5621
    %v5625 = vadd.f32 %v5623, %v5331
    %v5626 = vadd.f32 %v5624, %v5332
    %v5627 = vmin.f32 %v5625, 20.0
    %v5628 = vmin.f32 %v5626, 20.0
    %vm5629 = vcmp.gt.f32.partialorder %v5625, 20.0
    %vm5630 = vcmp.gt.f32.partialorder %v5626, 20.0
    %v5631 = vmul.f32 %v5627, 1.442695
    %v5632 = vpow.pop %v5631
    %v5633 = vmul.f32 %v5628, 1.442695
    %v5634 = vpow.pop %v5633
    %v5635 = vadd.f32 %v5632, 1.0
    %v5636 = vlog2.pop %v5635
    %v5637 = vmul.f32 %v5636, 0.6931472
    %v5638 = vmul.f32 -0.5, %v5632
    %v5639 = vadd.f32 %v5638, 1.0
    %v5640 = vmul.f32 %v5639, %v5632
    %v5641 = vand.u32 2147483647, %v5632
    %vm5642 = vcmp.lt.f32.partialorder %v5641, 0.0004427343
    %v5643 = vsel %vm5642, %v5640, %v5637
    %v5644 = vadd.f32 %v5634, 1.0
    %v5645 = vlog2.pop %v5644
    %v5646 = vmul.f32 %v5645, 0.6931472
    %v5647 = vmul.f32 -0.5, %v5634
    %v5648 = vadd.f32 %v5647, 1.0
    %v5649 = vmul.f32 %v5648, %v5634
    %v5650 = vand.u32 2147483647, %v5634
    %vm5651 = vcmp.lt.f32.partialorder %v5650, 0.0004427343
    %v5652 = vsel %vm5651, %v5649, %v5646
    %v5653 = vsel %vm5629, %v5625, %v5643
    %v5654 = vsel %vm5630, %v5626, %v5652
    %s5655 = sshll.u32 %s5334, 4
    %5656 = dma.done %s794, %s5655
    %v5657 = vld [vmem:[#allocation17] sm:$0xff]
    %v5658 = vld [vmem:[#allocation17 + $0x8] sm:$0xff]
    %v5659 = vpack.c.bf16 %v5654, %v5653
    %v5661 = vsel %vm5265, %v5659, 0
    %5663 = vmatprep.subr.bf16.mxu0 0
    %5664 = vmatpush1.bf16.msra.mxu0 %v5657
    %5665 = vmatprep.subr.bf16.mxu0 0
    %5666 = vmatpush1.bf16.msra.mxu0 %v5658
    %5667 = vmatprep.subr.bf16.mxu0 0
    %5668 = vmatpush1.bf16.msra.mxu0 0
    %5669 = vmatprep.subr.bf16.mxu0 0
    %5670 = vmatpush1.bf16.msra.mxu0 0
    %5671 = vmatprep.subr.bf16.mxu0 0
    %5672 = vmatpush1.bf16.msra.mxu0 0
    %5673 = vmatprep.subr.bf16.mxu0 0
    %5674 = vmatpush1.bf16.msra.mxu0 0
    %5675 = vmatprep.subr.bf16.mxu0 0
    %5676 = vmatpush1.bf16.msra.mxu0 0
    %5677 = vmatprep.subr.bf16.mxu0 0
    %5678 = vmatpush1.bf16.msra.mxu0 0
    %5679 = vmatprep.subr.bf16.mxu0 0
    %5680 = vmatpush1.bf16.msra.mxu0 0
    %5681 = vmatprep.subr.bf16.mxu0 0
    %5682 = vmatpush1.bf16.msra.mxu0 0
    %5683 = vmatprep.subr.bf16.mxu0 0
    %5684 = vmatpush1.bf16.msra.mxu0 0
    %5685 = vmatprep.subr.bf16.mxu0 0
    %5686 = vmatpush1.bf16.msra.mxu0 0
    %5687 = vmatprep.subr.bf16.mxu0 0
    %5688 = vmatpush1.bf16.msra.mxu0 0
    %5689 = vmatprep.subr.bf16.mxu0 0
    %5690 = vmatpush1.bf16.msra.mxu0 0
    %5691 = vmatprep.subr.bf16.mxu0 0
    %5692 = vmatpush1.bf16.msra.mxu0 0
    %5693 = vmatprep.subr.bf16.mxu0 0
    %5694 = vmatpush1.bf16.msra.mxu0 0
    %5695 = vmatprep.mubr.bf16.mxu0 0
    %5696 = vmatmul.mubr.bf16.gmra.mrb[0].mxu0 %v5661
    %v5697 = vpop.f32.mrb[0].mxu0
    %v5698 = vadd.f32 0.0, %v5697
    %v5699 = vpop.f32.mrb[0].mxu0
    %v5700 = vpop.f32.mrb[0].mxu0
    %v5701 = vadd.f32 0.0, %v5700
    %v5702 = vpop.f32.mrb[0].mxu0
    %5703 = vdwg.mxu0
    %v5704 = vpack.c.bf16 %v5701, %v5698
    %5705 = vmatprep.subr.bf16.mxu0 0
    %5706 = vmatpush1.bf16.msra.mxu0 %v5704
    %5707 = vmatprep.subr.bf16.mxu0 0
    %5708 = vmatpush1.bf16.msra.mxu0 0
    %5709 = vmatprep.subr.bf16.mxu0 0
    %5710 = vmatpush1.bf16.msra.mxu0 0
    %5711 = vmatprep.subr.bf16.mxu0 0
    %5712 = vmatpush1.bf16.msra.mxu0 0
    %5713 = vmatprep.subr.bf16.mxu0 0
    %5714 = vmatpush1.bf16.msra.mxu0 0
    %5715 = vmatprep.subr.bf16.mxu0 0
    %5716 = vmatpush1.bf16.msra.mxu0 0
    %5717 = vmatprep.subr.bf16.mxu0 0
    %5718 = vmatpush1.bf16.msra.mxu0 0
    %5719 = vmatprep.subr.bf16.mxu0 0
    %5720 = vmatpush1.bf16.msra.mxu0 0
    %5721 = vmatprep.subr.bf16.mxu0 0
    %5722 = vmatpush1.bf16.msra.mxu0 0
    %5723 = vmatprep.subr.bf16.mxu0 0
    %5724 = vmatpush1.bf16.msra.mxu0 0
    %5725 = vmatprep.subr.bf16.mxu0 0
    %5726 = vmatpush1.bf16.msra.mxu0 0
    %5727 = vmatprep.subr.bf16.mxu0 0
    %5728 = vmatpush1.bf16.msra.mxu0 0
    %5729 = vmatprep.subr.bf16.mxu0 0
    %5730 = vmatpush1.bf16.msra.mxu0 0
    %5731 = vmatprep.subr.bf16.mxu0 0
    %5732 = vmatpush1.bf16.msra.mxu0 0
    %5733 = vmatprep.subr.bf16.mxu0 0
    %5734 = vmatpush1.bf16.msra.mxu0 0
    %5735 = vmatprep.subr.bf16.mxu0 0
    %5736 = vmatpush1.bf16.msra.mxu0 0
    %5737 = vmatprep.mubr.bf16.mxu0 0
    %5738 = vmatmul.mubr.bf16.gmra.mrb[0].mxu0 %v1525
    %v5739 = vpop.f32.mrb[0].mxu0
    %v5740 = vadd.f32 0.0, %v5739
    %v5741 = vpop.f32.mrb[0].mxu0
    %v5742 = vpop.f32.mrb[0].mxu0
    %v5743 = vadd.f32 0.0, %v5742
    %v5744 = vpop.f32.mrb[0].mxu0
    %5745 = vdwg.mxu0
    %v5746 = vsel %vm5265, %v5740, 0.0
    %v5747 = vsel %vm5265, %v5743, 0.0
    %v5748 = vadd.f32 %v5746, %v5747
    %5749 = vadd.xlane.f32.xlu0 %v5748
    %v5750 = vpop.xlane.xlu0 %5749
    %v5751 = vmul.f32 %v5740, %v5740
    %v5752 = vmul.f32 %v5743, %v5743
    %v5753 = vsel %vm5265, %v5751, 0.0
    %v5754 = vsel %vm5265, %v5752, 0.0
    %v5755 = vadd.f32 %v5753, %v5754
    %5756 = vadd.xlane.f32.xlu0 %v5755
    %v5757 = vpop.xlane.xlu0 %5756
    %v5758 = vmul.f32 %v5750, 0.015625
    %v5759 = vmul.f32 %v5757, 0.015625
    %v5760 = vmul.f32 %v5758, %v5758
    %v5761 = vsub.f32 %v5759, %v5760
    %s5762 = scalar_lea.vmem %s2, 120
    %v5763 = vld [vmem:[%s5762] sm:$0xff]
    %v5764 = vadd.f32 %v5761, 1e-05
    %v5765 = vrsqrt.pop %v5764
    %v5766 = vmul.f32 %v5763, %v5765
    %s5767 = scalar_lea.vmem %s3, 120
    %v5768 = vld [vmem:[%s5767] sm:$0xff]
    %v5769 = vmul.f32 %v5758, %v5766
    %v5770 = vsub.f32 %v5768, %v5769
    %5772 = vset.pattern.permute.xlu0 0
    %5773 = vperm.xlu0 %5772, %v5766
    %v5774 = vpop.permute.xlu0 %5773
    %v5776 = vmul.f32 %v5740, %v5774
    %v5777 = vmul.f32 %v5743, %v5774
    %5779 = vset.pattern.permute.xlu0 0
    %5780 = vperm.xlu0 %5779, %v5770
    %v5781 = vpop.permute.xlu0 %5780
    %v5783 = vadd.f32 %v5776, %v5781
    %v5784 = vadd.f32 %v5777, %v5781
    %v5785 = vadd.f32 %v5783, %v5331
    %v5786 = vadd.f32 %v5784, %v5332
    %v5787 = vmin.f32 %v5785, 20.0
    %v5788 = vmin.f32 %v5786, 20.0
    %vm5789 = vcmp.gt.f32.partialorder %v5785, 20.0
    %vm5790 = vcmp.gt.f32.partialorder %v5786, 20.0
    %v5791 = vmul.f32 %v5787, 1.442695
    %v5792 = vpow.pop %v5791
    %v5793 = vmul.f32 %v5788, 1.442695
    %v5794 = vpow.pop %v5793
    %v5795 = vadd.f32 %v5792, 1.0
    %v5796 = vlog2.pop %v5795
    %v5797 = vmul.f32 %v5796, 0.6931472
    %v5798 = vmul.f32 -0.5, %v5792
    %v5799 = vadd.f32 %v5798, 1.0
    %v5800 = vmul.f32 %v5799, %v5792
    %v5801 = vand.u32 2147483647, %v5792
    %vm5802 = vcmp.lt.f32.partialorder %v5801, 0.0004427343
    %v5803 = vsel %vm5802, %v5800, %v5797
    %v5804 = vadd.f32 %v5794, 1.0
    %v5805 = vlog2.pop %v5804
    %v5806 = vmul.f32 %v5805, 0.6931472
    %v5807 = vmul.f32 -0.5, %v5794
    %v5808 = vadd.f32 %v5807, 1.0
    %v5809 = vmul.f32 %v5808, %v5794
    %v5810 = vand.u32 2147483647, %v5794
    %vm5811 = vcmp.lt.f32.partialorder %v5810, 0.0004427343
    %v5812 = vsel %vm5811, %v5809, %v5806
    %v5813 = vsel %vm5789, %v5785, %v5803
    %v5814 = vsel %vm5790, %v5786, %v5812
    %s5815 = sshll.u32 %s5334, 4
    %5816 = dma.done %s839, %s5815
    %v5817 = vld [vmem:[#allocation18] sm:$0xff]
    %v5818 = vld [vmem:[#allocation18 + $0x8] sm:$0xff]
    %v5819 = vpack.c.bf16 %v5814, %v5813
    %v5821 = vsel %vm5265, %v5819, 0
    %5823 = vmatprep.subr.bf16.mxu0 0
    %5824 = vmatpush1.bf16.msra.mxu0 %v5817
    %5825 = vmatprep.subr.bf16.mxu0 0
    %5826 = vmatpush1.bf16.msra.mxu0 %v5818
    %5827 = vmatprep.subr.bf16.mxu0 0
    %5828 = vmatpush1.bf16.msra.mxu0 0
    %5829 = vmatprep.subr.bf16.mxu0 0
    %5830 = vmatpush1.bf16.msra.mxu0 0
    %5831 = vmatprep.subr.bf16.mxu0 0
    %5832 = vmatpush1.bf16.msra.mxu0 0
    %5833 = vmatprep.subr.bf16.mxu0 0
    %5834 = vmatpush1.bf16.msra.mxu0 0
    %5835 = vmatprep.subr.bf16.mxu0 0
    %5836 = vmatpush1.bf16.msra.mxu0 0
    %5837 = vmatprep.subr.bf16.mxu0 0
    %5838 = vmatpush1.bf16.msra.mxu0 0
    %5839 = vmatprep.subr.bf16.mxu0 0
    %5840 = vmatpush1.bf16.msra.mxu0 0
    %5841 = vmatprep.subr.bf16.mxu0 0
    %5842 = vmatpush1.bf16.msra.mxu0 0
    %5843 = vmatprep.subr.bf16.mxu0 0
    %5844 = vmatpush1.bf16.msra.mxu0 0
    %5845 = vmatprep.subr.bf16.mxu0 0
    %5846 = vmatpush1.bf16.msra.mxu0 0
    %5847 = vmatprep.subr.bf16.mxu0 0
    %5848 = vmatpush1.bf16.msra.mxu0 0
    %5849 = vmatprep.subr.bf16.mxu0 0
    %5850 = vmatpush1.bf16.msra.mxu0 0
    %5851 = vmatprep.subr.bf16.mxu0 0
    %5852 = vmatpush1.bf16.msra.mxu0 0
    %5853 = vmatprep.subr.bf16.mxu0 0
    %5854 = vmatpush1.bf16.msra.mxu0 0
    %5855 = vmatprep.mubr.bf16.mxu0 0
    %5856 = vmatmul.mubr.bf16.gmra.mrb[0].mxu0 %v5821
    %v5857 = vpop.f32.mrb[0].mxu0
    %v5858 = vadd.f32 0.0, %v5857
    %v5859 = vpop.f32.mrb[0].mxu0
    %v5860 = vpop.f32.mrb[0].mxu0
    %v5861 = vadd.f32 0.0, %v5860
    %v5862 = vpop.f32.mrb[0].mxu0
    %5863 = vdwg.mxu0
    %v5864 = vpack.c.bf16 %v5861, %v5858
    %5865 = vmatprep.subr.bf16.mxu0 0
    %5866 = vmatpush1.bf16.msra.mxu0 %v5864
    %5867 = vmatprep.subr.bf16.mxu0 0
    %5868 = vmatpush1.bf16.msra.mxu0 0
    %5869 = vmatprep.subr.bf16.mxu0 0
    %5870 = vmatpush1.bf16.msra.mxu0 0
    %5871 = vmatprep.subr.bf16.mxu0 0
    %5872 = vmatpush1.bf16.msra.mxu0 0
    %5873 = vmatprep.subr.bf16.mxu0 0
    %5874 = vmatpush1.bf16.msra.mxu0 0
    %5875 = vmatprep.subr.bf16.mxu0 0
    %5876 = vmatpush1.bf16.msra.mxu0 0
    %5877 = vmatprep.subr.bf16.mxu0 0
    %5878 = vmatpush1.bf16.msra.mxu0 0
    %5879 = vmatprep.subr.bf16.mxu0 0
    %5880 = vmatpush1.bf16.msra.mxu0 0
    %5881 = vmatprep.subr.bf16.mxu0 0
    %5882 = vmatpush1.bf16.msra.mxu0 0
    %5883 = vmatprep.subr.bf16.mxu0 0
    %5884 = vmatpush1.bf16.msra.mxu0 0
    %5885 = vmatprep.subr.bf16.mxu0 0
    %5886 = vmatpush1.bf16.msra.mxu0 0
    %5887 = vmatprep.subr.bf16.mxu0 0
    %5888 = vmatpush1.bf16.msra.mxu0 0
    %5889 = vmatprep.subr.bf16.mxu0 0
    %5890 = vmatpush1.bf16.msra.mxu0 0
    %5891 = vmatprep.subr.bf16.mxu0 0
    %5892 = vmatpush1.bf16.msra.mxu0 0
    %5893 = vmatprep.subr.bf16.mxu0 0
    %5894 = vmatpush1.bf16.msra.mxu0 0
    %5895 = vmatprep.subr.bf16.mxu0 0
    %5896 = vmatpush1.bf16.msra.mxu0 0
    %5897 = vmatprep.mubr.bf16.mxu0 0
    %5898 = vmatmul.mubr.bf16.gmra.mrb[0].mxu0 %v1525
    %v5899 = vpop.f32.mrb[0].mxu0
    %v5900 = vadd.f32 0.0, %v5899
    %v5901 = vpop.f32.mrb[0].mxu0
    %v5902 = vpop.f32.mrb[0].mxu0
    %v5903 = vadd.f32 0.0, %v5902
    %v5904 = vpop.f32.mrb[0].mxu0
    %5905 = vdwg.mxu0
    %v5906 = vmin.f32 %v5900, 20.0
    %v5907 = vmin.f32 %v5903, 20.0
    %vm5908 = vcmp.gt.f32.partialorder %v5900, 20.0
    %vm5909 = vcmp.gt.f32.partialorder %v5903, 20.0
    %v5910 = vmul.f32 %v5906, 1.442695
    %v5911 = vpow.pop %v5910
    %v5912 = vmul.f32 %v5907, 1.442695
    %v5913 = vpow.pop %v5912
    %v5914 = vadd.f32 %v5911, 1.0
    %v5915 = vlog2.pop %v5914
    %v5916 = vmul.f32 %v5915, 0.6931472
    %v5917 = vmul.f32 -0.5, %v5911
    %v5918 = vadd.f32 %v5917, 1.0
    %v5919 = vmul.f32 %v5918, %v5911
    %v5920 = vand.u32 2147483647, %v5911
    %vm5921 = vcmp.lt.f32.partialorder %v5920, 0.0004427343
    %v5922 = vsel %vm5921, %v5919, %v5916
    %v5923 = vadd.f32 %v5913, 1.0
    %v5924 = vlog2.pop %v5923
    %v5925 = vmul.f32 %v5924, 0.6931472
    %v5926 = vmul.f32 -0.5, %v5913
    %v5927 = vadd.f32 %v5926, 1.0
    %v5928 = vmul.f32 %v5927, %v5913
    %v5929 = vand.u32 2147483647, %v5913
    %vm5930 = vcmp.lt.f32.partialorder %v5929, 0.0004427343
    %v5931 = vsel %vm5930, %v5928, %v5925
    %v5932 = vsel %vm5908, %v5900, %v5922
    %v5933 = vsel %vm5909, %v5903, %v5931
    %vm5934 = vcmask 7168
    %5935 = vst.msk [vmem:[%s21] sm:$0xff] %vm5934, %v5932
    %5936 = vst.msk [vmem:[%s21 + $0x8] sm:$0xff] %vm5934, %v5933
    // Predicated region
    $region245: #{hgcnnet_forward.1} parent=1 // pred_check
      _
    $region246: #{hgcnnet_forward.1} parent=1 // pred_check_branch
      %5938 = sbr.rel (0) target = $region248
    $region247: #{hgcnnet_forward.1} parent=1 // pred_region
      _
    $region248: #{hgcnnet_forward.1} parent=1 // pred_fallthru
      _
    // Predicated region
    $region249: #{hgcnnet_forward.1} parent=1 // pred_check
      _
    $region250: #{hgcnnet_forward.1} parent=1 // pred_check_branch
      %5940 = sbr.rel (0) target = $region252
    $region251: #{hgcnnet_forward.1} parent=1 // pred_region
      _
    $region252: #{hgcnnet_forward.1} parent=1 // pred_fallthru
      _
    %5941 = vsyncpa [#allocation21], 1
  %5942 = vsyncmov [#allocation19]
  %s5943 = vpop.sfrf %5942
  %p5944 = scmp.eq.s32.totalorder %s5943, 0
  %p5945 = pneg %p5944
  %5947 = shalt.err (%p5945)
  %s5948 = scalar_lea.sflag [#allocation19], 1
  %5949 = vsyncmov %s5948
  %s5950 = vpop.sfrf %5949
  %p5951 = scmp.eq.s32.totalorder %s5950, 0
  %p5952 = pneg %p5951
  %5954 = shalt.err (%p5952)
  %s5955 = scalar_lea.sflag [#allocation19], 2
  %5956 = vsyncmov %s5955
  %s5957 = vpop.sfrf %5956
  %p5958 = scmp.eq.s32.totalorder %s5957, 0
  %p5959 = pneg %p5958
  %5961 = shalt.err (%p5959)
  %s5962 = scalar_lea.sflag [#allocation19], 3
  %5963 = vsyncmov %s5962
  %s5964 = vpop.sfrf %5963
  %p5965 = scmp.eq.s32.totalorder %s5964, 0
  %p5966 = pneg %p5965
  %5968 = shalt.err (%p5966)
  %s5969 = scalar_lea.sflag [#allocation19], 4
  %5970 = vsyncmov %s5969
  %s5971 = vpop.sfrf %5970
  %p5972 = scmp.eq.s32.totalorder %s5971, 0
  %p5973 = pneg %p5972
  %5975 = shalt.err (%p5973)
  %s5976 = scalar_lea.sflag [#allocation19], 5
  %5977 = vsyncmov %s5976
  %s5978 = vpop.sfrf %5977
  %p5979 = scmp.eq.s32.totalorder %s5978, 0
  %p5980 = pneg %p5979
  %5982 = shalt.err (%p5980)
  %s5983 = scalar_lea.sflag [#allocation19], 6
  %5984 = vsyncmov %s5983
  %s5985 = vpop.sfrf %5984
  %p5986 = scmp.eq.s32.totalorder %s5985, 0
  %p5987 = pneg %p5986
  %5989 = shalt.err (%p5987)
  %s5990 = scalar_lea.sflag [#allocation19], 7
  %5991 = vsyncmov %s5990
  %s5992 = vpop.sfrf %5991
  %p5993 = scmp.eq.s32.totalorder %s5992, 0
  %p5994 = pneg %p5993
  %5996 = shalt.err (%p5994)
  %s5997 = scalar_lea.sflag [#allocation19], 8
  %5998 = vsyncmov %s5997
  %s5999 = vpop.sfrf %5998
  %p6000 = scmp.eq.s32.totalorder %s5999, 0
  %p6001 = pneg %p6000
  %6003 = shalt.err (%p6001)
  %s6004 = scalar_lea.sflag [#allocation19], 9
  %6005 = vsyncmov %s6004
  %s6006 = vpop.sfrf %6005
  %p6007 = scmp.eq.s32.totalorder %s6006, 0
  %p6008 = pneg %p6007
  %6010 = shalt.err (%p6008)
  %s6011 = scalar_lea.sflag [#allocation19], 10
  %6012 = vsyncmov %s6011
  %s6013 = vpop.sfrf %6012
  %p6014 = scmp.eq.s32.totalorder %s6013, 0
  %p6015 = pneg %p6014
  %6017 = shalt.err (%p6015)
  %s6018 = scalar_lea.sflag [#allocation19], 11
  %6019 = vsyncmov %s6018
  %s6020 = vpop.sfrf %6019
  %p6021 = scmp.eq.s32.totalorder %s6020, 0
  %p6022 = pneg %p6021
  %6024 = shalt.err (%p6022)
  %s6025 = scalar_lea.sflag [#allocation19], 12
  %6026 = vsyncmov %s6025
  %s6027 = vpop.sfrf %6026
  %p6028 = scmp.eq.s32.totalorder %s6027, 0
  %p6029 = pneg %p6028
  %6031 = shalt.err (%p6029)
  %s6032 = scalar_lea.sflag [#allocation19], 13
  %6033 = vsyncmov %s6032
  %s6034 = vpop.sfrf %6033
  %p6035 = scmp.eq.s32.totalorder %s6034, 0
  %p6036 = pneg %p6035
  %6038 = shalt.err (%p6036)
  %s6039 = scalar_lea.sflag [#allocation19], 14
  %6040 = vsyncmov %s6039
  %s6041 = vpop.sfrf %6040
  %p6042 = scmp.eq.s32.totalorder %s6041, 0
  %p6043 = pneg %p6042
  %6045 = shalt.err (%p6043)
  %s6046 = scalar_lea.sflag [#allocation19], 15
  %6047 = vsyncmov %s6046
  %s6048 = vpop.sfrf %6047
  %p6049 = scmp.eq.s32.totalorder %s6048, 0
  %p6050 = pneg %p6049
  %6052 = shalt.err (%p6050)
  %s6053 = scalar_lea.sflag [#allocation19], 16
  %6054 = vsyncmov %s6053
  %s6055 = vpop.sfrf %6054
  %p6056 = scmp.eq.s32.totalorder %s6055, 0
  %p6057 = pneg %p6056
  %6059 = shalt.err (%p6057)

</llo_original>
